<compile_context>
chip_gen: v5e
topology: v5e:2x2
jax: 0.10.0
libtpu: 0.0.40
codegen_flags: <defaults>
</compile_context>

<pallas_src>
import jax
import jax.numpy as jnp
from jax.experimental import pallas as pl
from jax.experimental.pallas import tpu as pltpu


def _encoder_block_kernel(x_ref, w_ref, gamma_ref, beta_ref, o_ref, pad_ref):
    # x_ref:     (N, Cin, H, W)       VMEM  input
    # w_ref:     (Cout*Cin*9,)        SMEM  conv weights, (co, ci, kh, kw) row-major
    # gamma_ref: (Cout,)              SMEM  BN weight
    # beta_ref:  (Cout,)              SMEM  BN bias
    # o_ref:     (N, Cout, H, W)      VMEM  full output block (single invocation)
    # pad_ref:   (N, Cin, H+2, W+2)   VMEM  scratch: zero-padded input halo
    N, Cout, H, W = o_ref.shape
    Cin = x_ref.shape[1]

    # ---- In-kernel zero padding (replaces the wrapper-side jnp.pad HBM pass). ----
    pad_ref[...] = jnp.zeros_like(pad_ref)
    pad_ref[:, :, 1:H + 1, 1:W + 1] = x_ref[...]

    # ---- 3x3 conv, all Cout channels at once (VPU broadcast-FMA). ----
    # Outer loop over (ci, tap): each shifted window is sliced once and reused for every
    # output channel; per-channel accumulators live in registers (SSA), no VMEM scratch.
    # Conv bias intentionally omitted: it cancels exactly under train-mode BatchNorm.
    accs = [None] * Cout
    for ci in range(Cin):
        for t in range(9):
            kh, kw = divmod(t, 3)
            win = pad_ref[:, ci, kh:kh + H, kw:kw + W]          # (N, H, W)
            for co in range(Cout):
                contrib = w_ref[(co * Cin + ci) * 9 + t] * win
                accs[co] = contrib if accs[co] is None else accs[co] + contrib

    # ---- Fused BatchNorm2d (training: batch stats over N,H,W) + ReLU, per channel. ----
    inv_n = jnp.float32(1.0 / (N * H * W))
    eps = jnp.float32(1e-5)
    for co in range(Cout):
        y = accs[co]
        mean = jnp.sum(y) * inv_n
        yc = y - mean                                           # two-pass (robust) variance
        var = jnp.sum(yc * yc) * inv_n                          # biased, as PyTorch BN uses
        # rsqrt once per channel on one small lane-vector (EUP push), broadcast in the FMA.
        scale = jax.lax.rsqrt(jnp.full((W,), var + eps, jnp.float32)) * gamma_ref[co]
        o_ref[:, co, :, :] = jnp.maximum(yc * scale + beta_ref[co], jnp.float32(0.0))


def encoder_block_forward(x, conv_w, conv_b, bn_gamma, bn_beta):
    """Forward pass matching EncoderBlock.forward (train-mode BN). NCHW in / NCHW out.

    `conv_b` is accepted for API parity with nn.Conv2d(bias=True) but unused: under
    train-mode BatchNorm a per-channel bias cancels exactly in (y - mean).
    """
    # TODO(synk): BatchNorm2d running_mean/running_var buffer updates are stateful and not
    # produced here; reinstate conv_b + running stats if eval-mode BN is ever required.
    del conv_b
    N, Cin, H, W = x.shape
    Cout, _, kh, kw = conv_w.shape
    assert (kh, kw) == (3, 3)

    x_f32 = x.astype(jnp.float32)
    w_flat = conv_w.astype(jnp.float32).reshape(Cout * Cin * 9)   # (co,ci,kh,kw) row-major
    gamma = bn_gamma.astype(jnp.float32).reshape(Cout)
    beta = bn_beta.astype(jnp.float32).reshape(Cout)

    flops = 2 * 9 * N * H * W * Cin * Cout + 6 * N * H * W * Cout
    bytes_accessed = (x_f32.size + N * Cout * H * W + w_flat.size + 2 * Cout) * 4

    out = pl.pallas_call(
        _encoder_block_kernel,
        out_shape=jax.ShapeDtypeStruct((N, Cout, H, W), jnp.float32),
        grid=(1,),                                   # single step: no per-channel grid overhead
        in_specs=[
            pl.BlockSpec((N, Cin, H, W), lambda i: (0, 0, 0, 0)),
            pl.BlockSpec(memory_space=pltpu.MemorySpace.SMEM),    # conv weights (scalars)
            pl.BlockSpec(memory_space=pltpu.MemorySpace.SMEM),    # BN gamma
            pl.BlockSpec(memory_space=pltpu.MemorySpace.SMEM),    # BN beta
        ],
        out_specs=pl.BlockSpec((N, Cout, H, W), lambda i: (0, 0, 0, 0)),
        scratch_shapes=[pltpu.VMEM((N, Cin, H + 2, W + 2), jnp.float32)],
        compiler_params=pltpu.CompilerParams(
            dimension_semantics=("arbitrary",),
        ),
        cost_estimate=pl.CostEstimate(
            flops=flops,
            transcendentals=Cout * W,
            bytes_accessed=bytes_accessed,
        ),
    )(x_f32, w_flat, gamma, beta)
    return out


def _reference_forward(x, conv_w, conv_b, bn_gamma, bn_beta):
    """Pure-JAX reference mirroring the PyTorch module (train-mode BN)."""
    y = jax.lax.conv_general_dilated(
        x.astype(jnp.float32), conv_w.astype(jnp.float32),
        window_strides=(1, 1), padding=((1, 1), (1, 1)),
        dimension_numbers=("NCHW", "OIHW", "NCHW"),
        precision=jax.lax.Precision.HIGHEST)
    y = y + conv_b.reshape(1, -1, 1, 1)
    mean = jnp.mean(y, axis=(0, 2, 3), keepdims=True)
    var = jnp.mean((y - mean) ** 2, axis=(0, 2, 3), keepdims=True)   # biased
    yn = (y - mean) * jax.lax.rsqrt(var + 1e-5)
    yn = yn * bn_gamma.reshape(1, -1, 1, 1) + bn_beta.reshape(1, -1, 1, 1)
    return jnp.maximum(yn, 0.0)


if __name__ == "__main__":
    # EncoderBlock(in_channels=4, out_channels=8) on a (2, 4, 16, 16) input.
    N, Cin, Cout, H, W = 2, 4, 8, 16, 16

    key = jax.random.PRNGKey(0)
    kx, kw_, kb = jax.random.split(key, 3)
    x = jax.random.normal(kx, (N, Cin, H, W), jnp.float32)

    # Deterministic parameter init (Conv2d-style uniform bound); BN: gamma=1, beta=0.
    fan_in = Cin * 3 * 3
    bound = 1.0 / (fan_in ** 0.5)
    conv_w = jax.random.uniform(kw_, (Cout, Cin, 3, 3), jnp.float32, -bound, bound)
    conv_b = jax.random.uniform(kb, (Cout,), jnp.float32, -bound, bound)
    bn_gamma = jnp.ones((Cout,), jnp.float32)
    bn_beta = jnp.zeros((Cout,), jnp.float32)

    fwd = jax.jit(encoder_block_forward)
    out = jax.block_until_ready(fwd(x, conv_w, conv_b, bn_gamma, bn_beta))
    assert out.shape == (N, Cout, H, W)
    assert bool(jnp.all(out >= 0.0))                    # ReLU output is non-negative

    ref = jax.block_until_ready(_reference_forward(x, conv_w, conv_b, bn_gamma, bn_beta))
    max_err = float(jnp.max(jnp.abs(out - ref)))
    assert max_err < 2e-3, f"mismatch vs reference: {max_err}"

    print("KERNEL_OK")
</pallas_src>

<mosaic_0001>
module attributes {stable_mosaic.version = 11 : i64} {
  func.func @_encoder_block_kernel(%arg0: i32, %arg1: memref<2x4x16x16xf32, #tpu.memory_space<vmem>>, %arg2: memref<288xf32, #tpu.memory_space<smem>>, %arg3: memref<8xf32, #tpu.memory_space<smem>>, %arg4: memref<8xf32, #tpu.memory_space<smem>>, %arg5: memref<2x8x16x16xf32, #tpu.memory_space<vmem>>, %arg6: memref<2x4x18x18xf32, #tpu.memory_space<vmem>>) attributes {dimension_semantics = [#tpu.dimension_semantics<arbitrary>], iteration_bounds = array<i64: 1>, scalar_prefetch = 0 : i64, scratch_operands = 1 : i64, tpu.core_type = #tpu.core_type<tc>, window_params = [{pipeline_mode = #tpu.pipeline_mode<synchronous>, transform_indices = @transform_0, window_bounds = array<i64: 2, 4, 16, 16>}, {transform_indices = @transform_1, window_bounds = array<i64: 288>}, {transform_indices = @transform_2, window_bounds = array<i64: 8>}, {transform_indices = @transform_3, window_bounds = array<i64: 8>}, {pipeline_mode = #tpu.pipeline_mode<synchronous>, transform_indices = @transform_4, window_bounds = array<i64: 2, 8, 16, 16>}]} {
    %cst = arith.constant 0.000000e+00 : f32
    %0 = vector.broadcast %cst : f32 to vector<2x4x18x18xf32>
    %c0 = arith.constant 0 : index
    %c0_0 = arith.constant 0 : index
    %c0_1 = arith.constant 0 : index
    %c0_2 = arith.constant 0 : index
    %1 = vector.load %arg6[%c0, %c0_0, %c0_1, %c0_2] : memref<2x4x18x18xf32, #tpu.memory_space<vmem>>, vector<2x4x18x18xf32>
    tpu.vector_store %arg6[%c0, %c0_0, %c0_1, %c0_2], %0 {strides = array<i32>} : memref<2x4x18x18xf32, #tpu.memory_space<vmem>>, vector<2x4x18x18xf32>,
    %c0_3 = arith.constant 0 : index
    %c0_4 = arith.constant 0 : index
    %c0_5 = arith.constant 0 : index
    %c0_6 = arith.constant 0 : index
    %2 = vector.load %arg1[%c0_3, %c0_4, %c0_5, %c0_6] : memref<2x4x16x16xf32, #tpu.memory_space<vmem>>, vector<2x4x16x16xf32>
    %c0_7 = arith.constant 0 : index
    %c0_8 = arith.constant 0 : index
    %c1 = arith.constant 1 : index
    %c1_9 = arith.constant 1 : index
    %3 = vector.load %arg6[%c0_7, %c0_8, %c1, %c1_9] : memref<2x4x18x18xf32, #tpu.memory_space<vmem>>, vector<2x4x16x16xf32>
    tpu.vector_store %arg6[%c0_7, %c0_8, %c1, %c1_9], %2 {strides = array<i32>} : memref<2x4x18x18xf32, #tpu.memory_space<vmem>>, vector<2x4x16x16xf32>,
    %c0_10 = arith.constant 0 : index
    %c0_11 = arith.constant 0 : index
    %c0_12 = arith.constant 0 : index
    %c0_13 = arith.constant 0 : index
    %4 = vector.load %arg6[%c0_10, %c0_11, %c0_12, %c0_13] : memref<2x4x18x18xf32, #tpu.memory_space<vmem>>, vector<2x1x16x16xf32>
    %5 = vector.shape_cast %4 : vector<2x1x16x16xf32> to vector<2x16x16xf32>
    %c0_14 = arith.constant 0 : index
    %6 = memref.load %arg2[%c0_14] : memref<288xf32, #tpu.memory_space<smem>>
    %7 = vector.broadcast %6 : f32 to vector<2x16x16xf32>
    %8 = arith.mulf %7, %5 : vector<2x16x16xf32>
    %c36 = arith.constant 36 : index
    %9 = memref.load %arg2[%c36] : memref<288xf32, #tpu.memory_space<smem>>
    %10 = vector.broadcast %9 : f32 to vector<2x16x16xf32>
    %11 = arith.mulf %10, %5 : vector<2x16x16xf32>
    %c72 = arith.constant 72 : index
    %12 = memref.load %arg2[%c72] : memref<288xf32, #tpu.memory_space<smem>>
    %13 = vector.broadcast %12 : f32 to vector<2x16x16xf32>
    %14 = arith.mulf %13, %5 : vector<2x16x16xf32>
    %c108 = arith.constant 108 : index
    %15 = memref.load %arg2[%c108] : memref<288xf32, #tpu.memory_space<smem>>
    %16 = vector.broadcast %15 : f32 to vector<2x16x16xf32>
    %17 = arith.mulf %16, %5 : vector<2x16x16xf32>
    %c144 = arith.constant 144 : index
    %18 = memref.load %arg2[%c144] : memref<288xf32, #tpu.memory_space<smem>>
    %19 = vector.broadcast %18 : f32 to vector<2x16x16xf32>
    %20 = arith.mulf %19, %5 : vector<2x16x16xf32>
    %c180 = arith.constant 180 : index
    %21 = memref.load %arg2[%c180] : memref<288xf32, #tpu.memory_space<smem>>
    %22 = vector.broadcast %21 : f32 to vector<2x16x16xf32>
    %23 = arith.mulf %22, %5 : vector<2x16x16xf32>
    %c216 = arith.constant 216 : index
    %24 = memref.load %arg2[%c216] : memref<288xf32, #tpu.memory_space<smem>>
    %25 = vector.broadcast %24 : f32 to vector<2x16x16xf32>
    %26 = arith.mulf %25, %5 : vector<2x16x16xf32>
    %c252 = arith.constant 252 : index
    %27 = memref.load %arg2[%c252] : memref<288xf32, #tpu.memory_space<smem>>
    %28 = vector.broadcast %27 : f32 to vector<2x16x16xf32>
    %29 = arith.mulf %28, %5 : vector<2x16x16xf32>
    %c0_15 = arith.constant 0 : index
    %c0_16 = arith.constant 0 : index
    %c0_17 = arith.constant 0 : index
    %c1_18 = arith.constant 1 : index
    %30 = vector.load %arg6[%c0_15, %c0_16, %c0_17, %c1_18] : memref<2x4x18x18xf32, #tpu.memory_space<vmem>>, vector<2x1x16x16xf32>
    %31 = vector.shape_cast %30 : vector<2x1x16x16xf32> to vector<2x16x16xf32>
    %c1_19 = arith.constant 1 : index
    %32 = memref.load %arg2[%c1_19] : memref<288xf32, #tpu.memory_space<smem>>
    %33 = vector.broadcast %32 : f32 to vector<2x16x16xf32>
    %34 = arith.mulf %33, %31 : vector<2x16x16xf32>
    %35 = arith.addf %8, %34 : vector<2x16x16xf32>
    %c37 = arith.constant 37 : index
    %36 = memref.load %arg2[%c37] : memref<288xf32, #tpu.memory_space<smem>>
    %37 = vector.broadcast %36 : f32 to vector<2x16x16xf32>
    %38 = arith.mulf %37, %31 : vector<2x16x16xf32>
    %39 = arith.addf %11, %38 : vector<2x16x16xf32>
    %c73 = arith.constant 73 : index
    %40 = memref.load %arg2[%c73] : memref<288xf32, #tpu.memory_space<smem>>
    %41 = vector.broadcast %40 : f32 to vector<2x16x16xf32>
    %42 = arith.mulf %41, %31 : vector<2x16x16xf32>
    %43 = arith.addf %14, %42 : vector<2x16x16xf32>
    %c109 = arith.constant 109 : index
    %44 = memref.load %arg2[%c109] : memref<288xf32, #tpu.memory_space<smem>>
    %45 = vector.broadcast %44 : f32 to vector<2x16x16xf32>
    %46 = arith.mulf %45, %31 : vector<2x16x16xf32>
    %47 = arith.addf %17, %46 : vector<2x16x16xf32>
    %c145 = arith.constant 145 : index
    %48 = memref.load %arg2[%c145] : memref<288xf32, #tpu.memory_space<smem>>
    %49 = vector.broadcast %48 : f32 to vector<2x16x16xf32>
    %50 = arith.mulf %49, %31 : vector<2x16x16xf32>
    %51 = arith.addf %20, %50 : vector<2x16x16xf32>
    %c181 = arith.constant 181 : index
    %52 = memref.load %arg2[%c181] : memref<288xf32, #tpu.memory_space<smem>>
    %53 = vector.broadcast %52 : f32 to vector<2x16x16xf32>
    %54 = arith.mulf %53, %31 : vector<2x16x16xf32>
    %55 = arith.addf %23, %54 : vector<2x16x16xf32>
    %c217 = arith.constant 217 : index
    %56 = memref.load %arg2[%c217] : memref<288xf32, #tpu.memory_space<smem>>
    %57 = vector.broadcast %56 : f32 to vector<2x16x16xf32>
    %58 = arith.mulf %57, %31 : vector<2x16x16xf32>
    %59 = arith.addf %26, %58 : vector<2x16x16xf32>
    %c253 = arith.constant 253 : index
    %60 = memref.load %arg2[%c253] : memref<288xf32, #tpu.memory_space<smem>>
    %61 = vector.broadcast %60 : f32 to vector<2x16x16xf32>
    %62 = arith.mulf %61, %31 : vector<2x16x16xf32>
    %63 = arith.addf %29, %62 : vector<2x16x16xf32>
    %c0_20 = arith.constant 0 : index
    %c0_21 = arith.constant 0 : index
    %c0_22 = arith.constant 0 : index
    %c2 = arith.constant 2 : index
    %64 = vector.load %arg6[%c0_20, %c0_21, %c0_22, %c2] : memref<2x4x18x18xf32, #tpu.memory_space<vmem>>, vector<2x1x16x16xf32>
    %65 = vector.shape_cast %64 : vector<2x1x16x16xf32> to vector<2x16x16xf32>
    %c2_23 = arith.constant 2 : index
    %66 = memref.load %arg2[%c2_23] : memref<288xf32, #tpu.memory_space<smem>>
    %67 = vector.broadcast %66 : f32 to vector<2x16x16xf32>
    %68 = arith.mulf %67, %65 : vector<2x16x16xf32>
    %69 = arith.addf %35, %68 : vector<2x16x16xf32>
    %c38 = arith.constant 38 : index
    %70 = memref.load %arg2[%c38] : memref<288xf32, #tpu.memory_space<smem>>
    %71 = vector.broadcast %70 : f32 to vector<2x16x16xf32>
    %72 = arith.mulf %71, %65 : vector<2x16x16xf32>
    %73 = arith.addf %39, %72 : vector<2x16x16xf32>
    %c74 = arith.constant 74 : index
    %74 = memref.load %arg2[%c74] : memref<288xf32, #tpu.memory_space<smem>>
    %75 = vector.broadcast %74 : f32 to vector<2x16x16xf32>
    %76 = arith.mulf %75, %65 : vector<2x16x16xf32>
    %77 = arith.addf %43, %76 : vector<2x16x16xf32>
    %c110 = arith.constant 110 : index
    %78 = memref.load %arg2[%c110] : memref<288xf32, #tpu.memory_space<smem>>
    %79 = vector.broadcast %78 : f32 to vector<2x16x16xf32>
    %80 = arith.mulf %79, %65 : vector<2x16x16xf32>
    %81 = arith.addf %47, %80 : vector<2x16x16xf32>
    %c146 = arith.constant 146 : index
    %82 = memref.load %arg2[%c146] : memref<288xf32, #tpu.memory_space<smem>>
    %83 = vector.broadcast %82 : f32 to vector<2x16x16xf32>
    %84 = arith.mulf %83, %65 : vector<2x16x16xf32>
    %85 = arith.addf %51, %84 : vector<2x16x16xf32>
    %c182 = arith.constant 182 : index
    %86 = memref.load %arg2[%c182] : memref<288xf32, #tpu.memory_space<smem>>
    %87 = vector.broadcast %86 : f32 to vector<2x16x16xf32>
    %88 = arith.mulf %87, %65 : vector<2x16x16xf32>
    %89 = arith.addf %55, %88 : vector<2x16x16xf32>
    %c218 = arith.constant 218 : index
    %90 = memref.load %arg2[%c218] : memref<288xf32, #tpu.memory_space<smem>>
    %91 = vector.broadcast %90 : f32 to vector<2x16x16xf32>
    %92 = arith.mulf %91, %65 : vector<2x16x16xf32>
    %93 = arith.addf %59, %92 : vector<2x16x16xf32>
    %c254 = arith.constant 254 : index
    %94 = memref.load %arg2[%c254] : memref<288xf32, #tpu.memory_space<smem>>
    %95 = vector.broadcast %94 : f32 to vector<2x16x16xf32>
    %96 = arith.mulf %95, %65 : vector<2x16x16xf32>
    %97 = arith.addf %63, %96 : vector<2x16x16xf32>
    %c0_24 = arith.constant 0 : index
    %c0_25 = arith.constant 0 : index
    %c1_26 = arith.constant 1 : index
    %c0_27 = arith.constant 0 : index
    %98 = vector.load %arg6[%c0_24, %c0_25, %c1_26, %c0_27] : memref<2x4x18x18xf32, #tpu.memory_space<vmem>>, vector<2x1x16x16xf32>
    %99 = vector.shape_cast %98 : vector<2x1x16x16xf32> to vector<2x16x16xf32>
    %c3 = arith.constant 3 : index
    %100 = memref.load %arg2[%c3] : memref<288xf32, #tpu.memory_space<smem>>
    %101 = vector.broadcast %100 : f32 to vector<2x16x16xf32>
    %102 = arith.mulf %101, %99 : vector<2x16x16xf32>
    %103 = arith.addf %69, %102 : vector<2x16x16xf32>
    %c39 = arith.constant 39 : index
    %104 = memref.load %arg2[%c39] : memref<288xf32, #tpu.memory_space<smem>>
    %105 = vector.broadcast %104 : f32 to vector<2x16x16xf32>
    %106 = arith.mulf %105, %99 : vector<2x16x16xf32>
    %107 = arith.addf %73, %106 : vector<2x16x16xf32>
    %c75 = arith.constant 75 : index
    %108 = memref.load %arg2[%c75] : memref<288xf32, #tpu.memory_space<smem>>
    %109 = vector.broadcast %108 : f32 to vector<2x16x16xf32>
    %110 = arith.mulf %109, %99 : vector<2x16x16xf32>
    %111 = arith.addf %77, %110 : vector<2x16x16xf32>
    %c111 = arith.constant 111 : index
    %112 = memref.load %arg2[%c111] : memref<288xf32, #tpu.memory_space<smem>>
    %113 = vector.broadcast %112 : f32 to vector<2x16x16xf32>
    %114 = arith.mulf %113, %99 : vector<2x16x16xf32>
    %115 = arith.addf %81, %114 : vector<2x16x16xf32>
    %c147 = arith.constant 147 : index
    %116 = memref.load %arg2[%c147] : memref<288xf32, #tpu.memory_space<smem>>
    %117 = vector.broadcast %116 : f32 to vector<2x16x16xf32>
    %118 = arith.mulf %117, %99 : vector<2x16x16xf32>
    %119 = arith.addf %85, %118 : vector<2x16x16xf32>
    %c183 = arith.constant 183 : index
    %120 = memref.load %arg2[%c183] : memref<288xf32, #tpu.memory_space<smem>>
    %121 = vector.broadcast %120 : f32 to vector<2x16x16xf32>
    %122 = arith.mulf %121, %99 : vector<2x16x16xf32>
    %123 = arith.addf %89, %122 : vector<2x16x16xf32>
    %c219 = arith.constant 219 : index
    %124 = memref.load %arg2[%c219] : memref<288xf32, #tpu.memory_space<smem>>
    %125 = vector.broadcast %124 : f32 to vector<2x16x16xf32>
    %126 = arith.mulf %125, %99 : vector<2x16x16xf32>
    %127 = arith.addf %93, %126 : vector<2x16x16xf32>
    %c255 = arith.constant 255 : index
    %128 = memref.load %arg2[%c255] : memref<288xf32, #tpu.memory_space<smem>>
    %129 = vector.broadcast %128 : f32 to vector<2x16x16xf32>
    %130 = arith.mulf %129, %99 : vector<2x16x16xf32>
    %131 = arith.addf %97, %130 : vector<2x16x16xf32>
    %c0_28 = arith.constant 0 : index
    %c0_29 = arith.constant 0 : index
    %c1_30 = arith.constant 1 : index
    %c1_31 = arith.constant 1 : index
    %132 = vector.load %arg6[%c0_28, %c0_29, %c1_30, %c1_31] : memref<2x4x18x18xf32, #tpu.memory_space<vmem>>, vector<2x1x16x16xf32>
    %133 = vector.shape_cast %132 : vector<2x1x16x16xf32> to vector<2x16x16xf32>
    %c4 = arith.constant 4 : index
    %134 = memref.load %arg2[%c4] : memref<288xf32, #tpu.memory_space<smem>>
    %135 = vector.broadcast %134 : f32 to vector<2x16x16xf32>
    %136 = arith.mulf %135, %133 : vector<2x16x16xf32>
    %137 = arith.addf %103, %136 : vector<2x16x16xf32>
    %c40 = arith.constant 40 : index
    %138 = memref.load %arg2[%c40] : memref<288xf32, #tpu.memory_space<smem>>
    %139 = vector.broadcast %138 : f32 to vector<2x16x16xf32>
    %140 = arith.mulf %139, %133 : vector<2x16x16xf32>
    %141 = arith.addf %107, %140 : vector<2x16x16xf32>
    %c76 = arith.constant 76 : index
    %142 = memref.load %arg2[%c76] : memref<288xf32, #tpu.memory_space<smem>>
    %143 = vector.broadcast %142 : f32 to vector<2x16x16xf32>
    %144 = arith.mulf %143, %133 : vector<2x16x16xf32>
    %145 = arith.addf %111, %144 : vector<2x16x16xf32>
    %c112 = arith.constant 112 : index
    %146 = memref.load %arg2[%c112] : memref<288xf32, #tpu.memory_space<smem>>
    %147 = vector.broadcast %146 : f32 to vector<2x16x16xf32>
    %148 = arith.mulf %147, %133 : vector<2x16x16xf32>
    %149 = arith.addf %115, %148 : vector<2x16x16xf32>
    %c148 = arith.constant 148 : index
    %150 = memref.load %arg2[%c148] : memref<288xf32, #tpu.memory_space<smem>>
    %151 = vector.broadcast %150 : f32 to vector<2x16x16xf32>
    %152 = arith.mulf %151, %133 : vector<2x16x16xf32>
    %153 = arith.addf %119, %152 : vector<2x16x16xf32>
    %c184 = arith.constant 184 : index
    %154 = memref.load %arg2[%c184] : memref<288xf32, #tpu.memory_space<smem>>
    %155 = vector.broadcast %154 : f32 to vector<2x16x16xf32>
    %156 = arith.mulf %155, %133 : vector<2x16x16xf32>
    %157 = arith.addf %123, %156 : vector<2x16x16xf32>
    %c220 = arith.constant 220 : index
    %158 = memref.load %arg2[%c220] : memref<288xf32, #tpu.memory_space<smem>>
    %159 = vector.broadcast %158 : f32 to vector<2x16x16xf32>
    %160 = arith.mulf %159, %133 : vector<2x16x16xf32>
    %161 = arith.addf %127, %160 : vector<2x16x16xf32>
    %c256 = arith.constant 256 : index
    %162 = memref.load %arg2[%c256] : memref<288xf32, #tpu.memory_space<smem>>
    %163 = vector.broadcast %162 : f32 to vector<2x16x16xf32>
    %164 = arith.mulf %163, %133 : vector<2x16x16xf32>
    %165 = arith.addf %131, %164 : vector<2x16x16xf32>
    %c0_32 = arith.constant 0 : index
    %c0_33 = arith.constant 0 : index
    %c1_34 = arith.constant 1 : index
    %c2_35 = arith.constant 2 : index
    %166 = vector.load %arg6[%c0_32, %c0_33, %c1_34, %c2_35] : memref<2x4x18x18xf32, #tpu.memory_space<vmem>>, vector<2x1x16x16xf32>
    %167 = vector.shape_cast %166 : vector<2x1x16x16xf32> to vector<2x16x16xf32>
    %c5 = arith.constant 5 : index
    %168 = memref.load %arg2[%c5] : memref<288xf32, #tpu.memory_space<smem>>
    %169 = vector.broadcast %168 : f32 to vector<2x16x16xf32>
    %170 = arith.mulf %169, %167 : vector<2x16x16xf32>
    %171 = arith.addf %137, %170 : vector<2x16x16xf32>
    %c41 = arith.constant 41 : index
    %172 = memref.load %arg2[%c41] : memref<288xf32, #tpu.memory_space<smem>>
    %173 = vector.broadcast %172 : f32 to vector<2x16x16xf32>
    %174 = arith.mulf %173, %167 : vector<2x16x16xf32>
    %175 = arith.addf %141, %174 : vector<2x16x16xf32>
    %c77 = arith.constant 77 : index
    %176 = memref.load %arg2[%c77] : memref<288xf32, #tpu.memory_space<smem>>
    %177 = vector.broadcast %176 : f32 to vector<2x16x16xf32>
    %178 = arith.mulf %177, %167 : vector<2x16x16xf32>
    %179 = arith.addf %145, %178 : vector<2x16x16xf32>
    %c113 = arith.constant 113 : index
    %180 = memref.load %arg2[%c113] : memref<288xf32, #tpu.memory_space<smem>>
    %181 = vector.broadcast %180 : f32 to vector<2x16x16xf32>
    %182 = arith.mulf %181, %167 : vector<2x16x16xf32>
    %183 = arith.addf %149, %182 : vector<2x16x16xf32>
    %c149 = arith.constant 149 : index
    %184 = memref.load %arg2[%c149] : memref<288xf32, #tpu.memory_space<smem>>
    %185 = vector.broadcast %184 : f32 to vector<2x16x16xf32>
    %186 = arith.mulf %185, %167 : vector<2x16x16xf32>
    %187 = arith.addf %153, %186 : vector<2x16x16xf32>
    %c185 = arith.constant 185 : index
    %188 = memref.load %arg2[%c185] : memref<288xf32, #tpu.memory_space<smem>>
    %189 = vector.broadcast %188 : f32 to vector<2x16x16xf32>
    %190 = arith.mulf %189, %167 : vector<2x16x16xf32>
    %191 = arith.addf %157, %190 : vector<2x16x16xf32>
    %c221 = arith.constant 221 : index
    %192 = memref.load %arg2[%c221] : memref<288xf32, #tpu.memory_space<smem>>
    %193 = vector.broadcast %192 : f32 to vector<2x16x16xf32>
    %194 = arith.mulf %193, %167 : vector<2x16x16xf32>
    %195 = arith.addf %161, %194 : vector<2x16x16xf32>
    %c257 = arith.constant 257 : index
    %196 = memref.load %arg2[%c257] : memref<288xf32, #tpu.memory_space<smem>>
    %197 = vector.broadcast %196 : f32 to vector<2x16x16xf32>
    %198 = arith.mulf %197, %167 : vector<2x16x16xf32>
    %199 = arith.addf %165, %198 : vector<2x16x16xf32>
    %c0_36 = arith.constant 0 : index
    %c0_37 = arith.constant 0 : index
    %c2_38 = arith.constant 2 : index
    %c0_39 = arith.constant 0 : index
    %200 = vector.load %arg6[%c0_36, %c0_37, %c2_38, %c0_39] : memref<2x4x18x18xf32, #tpu.memory_space<vmem>>, vector<2x1x16x16xf32>
    %201 = vector.shape_cast %200 : vector<2x1x16x16xf32> to vector<2x16x16xf32>
    %c6 = arith.constant 6 : index
    %202 = memref.load %arg2[%c6] : memref<288xf32, #tpu.memory_space<smem>>
    %203 = vector.broadcast %202 : f32 to vector<2x16x16xf32>
    %204 = arith.mulf %203, %201 : vector<2x16x16xf32>
    %205 = arith.addf %171, %204 : vector<2x16x16xf32>
    %c42 = arith.constant 42 : index
    %206 = memref.load %arg2[%c42] : memref<288xf32, #tpu.memory_space<smem>>
    %207 = vector.broadcast %206 : f32 to vector<2x16x16xf32>
    %208 = arith.mulf %207, %201 : vector<2x16x16xf32>
    %209 = arith.addf %175, %208 : vector<2x16x16xf32>
    %c78 = arith.constant 78 : index
    %210 = memref.load %arg2[%c78] : memref<288xf32, #tpu.memory_space<smem>>
    %211 = vector.broadcast %210 : f32 to vector<2x16x16xf32>
    %212 = arith.mulf %211, %201 : vector<2x16x16xf32>
    %213 = arith.addf %179, %212 : vector<2x16x16xf32>
    %c114 = arith.constant 114 : index
    %214 = memref.load %arg2[%c114] : memref<288xf32, #tpu.memory_space<smem>>
    %215 = vector.broadcast %214 : f32 to vector<2x16x16xf32>
    %216 = arith.mulf %215, %201 : vector<2x16x16xf32>
    %217 = arith.addf %183, %216 : vector<2x16x16xf32>
    %c150 = arith.constant 150 : index
    %218 = memref.load %arg2[%c150] : memref<288xf32, #tpu.memory_space<smem>>
    %219 = vector.broadcast %218 : f32 to vector<2x16x16xf32>
    %220 = arith.mulf %219, %201 : vector<2x16x16xf32>
    %221 = arith.addf %187, %220 : vector<2x16x16xf32>
    %c186 = arith.constant 186 : index
    %222 = memref.load %arg2[%c186] : memref<288xf32, #tpu.memory_space<smem>>
    %223 = vector.broadcast %222 : f32 to vector<2x16x16xf32>
    %224 = arith.mulf %223, %201 : vector<2x16x16xf32>
    %225 = arith.addf %191, %224 : vector<2x16x16xf32>
    %c222 = arith.constant 222 : index
    %226 = memref.load %arg2[%c222] : memref<288xf32, #tpu.memory_space<smem>>
    %227 = vector.broadcast %226 : f32 to vector<2x16x16xf32>
    %228 = arith.mulf %227, %201 : vector<2x16x16xf32>
    %229 = arith.addf %195, %228 : vector<2x16x16xf32>
    %c258 = arith.constant 258 : index
    %230 = memref.load %arg2[%c258] : memref<288xf32, #tpu.memory_space<smem>>
    %231 = vector.broadcast %230 : f32 to vector<2x16x16xf32>
    %232 = arith.mulf %231, %201 : vector<2x16x16xf32>
    %233 = arith.addf %199, %232 : vector<2x16x16xf32>
    %c0_40 = arith.constant 0 : index
    %c0_41 = arith.constant 0 : index
    %c2_42 = arith.constant 2 : index
    %c1_43 = arith.constant 1 : index
    %234 = vector.load %arg6[%c0_40, %c0_41, %c2_42, %c1_43] : memref<2x4x18x18xf32, #tpu.memory_space<vmem>>, vector<2x1x16x16xf32>
    %235 = vector.shape_cast %234 : vector<2x1x16x16xf32> to vector<2x16x16xf32>
    %c7 = arith.constant 7 : index
    %236 = memref.load %arg2[%c7] : memref<288xf32, #tpu.memory_space<smem>>
    %237 = vector.broadcast %236 : f32 to vector<2x16x16xf32>
    %238 = arith.mulf %237, %235 : vector<2x16x16xf32>
    %239 = arith.addf %205, %238 : vector<2x16x16xf32>
    %c43 = arith.constant 43 : index
    %240 = memref.load %arg2[%c43] : memref<288xf32, #tpu.memory_space<smem>>
    %241 = vector.broadcast %240 : f32 to vector<2x16x16xf32>
    %242 = arith.mulf %241, %235 : vector<2x16x16xf32>
    %243 = arith.addf %209, %242 : vector<2x16x16xf32>
    %c79 = arith.constant 79 : index
    %244 = memref.load %arg2[%c79] : memref<288xf32, #tpu.memory_space<smem>>
    %245 = vector.broadcast %244 : f32 to vector<2x16x16xf32>
    %246 = arith.mulf %245, %235 : vector<2x16x16xf32>
    %247 = arith.addf %213, %246 : vector<2x16x16xf32>
    %c115 = arith.constant 115 : index
    %248 = memref.load %arg2[%c115] : memref<288xf32, #tpu.memory_space<smem>>
    %249 = vector.broadcast %248 : f32 to vector<2x16x16xf32>
    %250 = arith.mulf %249, %235 : vector<2x16x16xf32>
    %251 = arith.addf %217, %250 : vector<2x16x16xf32>
    %c151 = arith.constant 151 : index
    %252 = memref.load %arg2[%c151] : memref<288xf32, #tpu.memory_space<smem>>
    %253 = vector.broadcast %252 : f32 to vector<2x16x16xf32>
    %254 = arith.mulf %253, %235 : vector<2x16x16xf32>
    %255 = arith.addf %221, %254 : vector<2x16x16xf32>
    %c187 = arith.constant 187 : index
    %256 = memref.load %arg2[%c187] : memref<288xf32, #tpu.memory_space<smem>>
    %257 = vector.broadcast %256 : f32 to vector<2x16x16xf32>
    %258 = arith.mulf %257, %235 : vector<2x16x16xf32>
    %259 = arith.addf %225, %258 : vector<2x16x16xf32>
    %c223 = arith.constant 223 : index
    %260 = memref.load %arg2[%c223] : memref<288xf32, #tpu.memory_space<smem>>
    %261 = vector.broadcast %260 : f32 to vector<2x16x16xf32>
    %262 = arith.mulf %261, %235 : vector<2x16x16xf32>
    %263 = arith.addf %229, %262 : vector<2x16x16xf32>
    %c259 = arith.constant 259 : index
    %264 = memref.load %arg2[%c259] : memref<288xf32, #tpu.memory_space<smem>>
    %265 = vector.broadcast %264 : f32 to vector<2x16x16xf32>
    %266 = arith.mulf %265, %235 : vector<2x16x16xf32>
    %267 = arith.addf %233, %266 : vector<2x16x16xf32>
    %c0_44 = arith.constant 0 : index
    %c0_45 = arith.constant 0 : index
    %c2_46 = arith.constant 2 : index
    %c2_47 = arith.constant 2 : index
    %268 = vector.load %arg6[%c0_44, %c0_45, %c2_46, %c2_47] : memref<2x4x18x18xf32, #tpu.memory_space<vmem>>, vector<2x1x16x16xf32>
    %269 = vector.shape_cast %268 : vector<2x1x16x16xf32> to vector<2x16x16xf32>
    %c8 = arith.constant 8 : index
    %270 = memref.load %arg2[%c8] : memref<288xf32, #tpu.memory_space<smem>>
    %271 = vector.broadcast %270 : f32 to vector<2x16x16xf32>
    %272 = arith.mulf %271, %269 : vector<2x16x16xf32>
    %273 = arith.addf %239, %272 : vector<2x16x16xf32>
    %c44 = arith.constant 44 : index
    %274 = memref.load %arg2[%c44] : memref<288xf32, #tpu.memory_space<smem>>
    %275 = vector.broadcast %274 : f32 to vector<2x16x16xf32>
    %276 = arith.mulf %275, %269 : vector<2x16x16xf32>
    %277 = arith.addf %243, %276 : vector<2x16x16xf32>
    %c80 = arith.constant 80 : index
    %278 = memref.load %arg2[%c80] : memref<288xf32, #tpu.memory_space<smem>>
    %279 = vector.broadcast %278 : f32 to vector<2x16x16xf32>
    %280 = arith.mulf %279, %269 : vector<2x16x16xf32>
    %281 = arith.addf %247, %280 : vector<2x16x16xf32>
    %c116 = arith.constant 116 : index
    %282 = memref.load %arg2[%c116] : memref<288xf32, #tpu.memory_space<smem>>
    %283 = vector.broadcast %282 : f32 to vector<2x16x16xf32>
    %284 = arith.mulf %283, %269 : vector<2x16x16xf32>
    %285 = arith.addf %251, %284 : vector<2x16x16xf32>
    %c152 = arith.constant 152 : index
    %286 = memref.load %arg2[%c152] : memref<288xf32, #tpu.memory_space<smem>>
    %287 = vector.broadcast %286 : f32 to vector<2x16x16xf32>
    %288 = arith.mulf %287, %269 : vector<2x16x16xf32>
    %289 = arith.addf %255, %288 : vector<2x16x16xf32>
    %c188 = arith.constant 188 : index
    %290 = memref.load %arg2[%c188] : memref<288xf32, #tpu.memory_space<smem>>
    %291 = vector.broadcast %290 : f32 to vector<2x16x16xf32>
    %292 = arith.mulf %291, %269 : vector<2x16x16xf32>
    %293 = arith.addf %259, %292 : vector<2x16x16xf32>
    %c224 = arith.constant 224 : index
    %294 = memref.load %arg2[%c224] : memref<288xf32, #tpu.memory_space<smem>>
    %295 = vector.broadcast %294 : f32 to vector<2x16x16xf32>
    %296 = arith.mulf %295, %269 : vector<2x16x16xf32>
    %297 = arith.addf %263, %296 : vector<2x16x16xf32>
    %c260 = arith.constant 260 : index
    %298 = memref.load %arg2[%c260] : memref<288xf32, #tpu.memory_space<smem>>
    %299 = vector.broadcast %298 : f32 to vector<2x16x16xf32>
    %300 = arith.mulf %299, %269 : vector<2x16x16xf32>
    %301 = arith.addf %267, %300 : vector<2x16x16xf32>
    %c0_48 = arith.constant 0 : index
    %c1_49 = arith.constant 1 : index
    %c0_50 = arith.constant 0 : index
    %c0_51 = arith.constant 0 : index
    %302 = vector.load %arg6[%c0_48, %c1_49, %c0_50, %c0_51] : memref<2x4x18x18xf32, #tpu.memory_space<vmem>>, vector<2x1x16x16xf32>
    %303 = vector.shape_cast %302 : vector<2x1x16x16xf32> to vector<2x16x16xf32>
    %c9 = arith.constant 9 : index
    %304 = memref.load %arg2[%c9] : memref<288xf32, #tpu.memory_space<smem>>
    %305 = vector.broadcast %304 : f32 to vector<2x16x16xf32>
    %306 = arith.mulf %305, %303 : vector<2x16x16xf32>
    %307 = arith.addf %273, %306 : vector<2x16x16xf32>
    %c45 = arith.constant 45 : index
    %308 = memref.load %arg2[%c45] : memref<288xf32, #tpu.memory_space<smem>>
    %309 = vector.broadcast %308 : f32 to vector<2x16x16xf32>
    %310 = arith.mulf %309, %303 : vector<2x16x16xf32>
    %311 = arith.addf %277, %310 : vector<2x16x16xf32>
    %c81 = arith.constant 81 : index
    %312 = memref.load %arg2[%c81] : memref<288xf32, #tpu.memory_space<smem>>
    %313 = vector.broadcast %312 : f32 to vector<2x16x16xf32>
    %314 = arith.mulf %313, %303 : vector<2x16x16xf32>
    %315 = arith.addf %281, %314 : vector<2x16x16xf32>
    %c117 = arith.constant 117 : index
    %316 = memref.load %arg2[%c117] : memref<288xf32, #tpu.memory_space<smem>>
    %317 = vector.broadcast %316 : f32 to vector<2x16x16xf32>
    %318 = arith.mulf %317, %303 : vector<2x16x16xf32>
    %319 = arith.addf %285, %318 : vector<2x16x16xf32>
    %c153 = arith.constant 153 : index
    %320 = memref.load %arg2[%c153] : memref<288xf32, #tpu.memory_space<smem>>
    %321 = vector.broadcast %320 : f32 to vector<2x16x16xf32>
    %322 = arith.mulf %321, %303 : vector<2x16x16xf32>
    %323 = arith.addf %289, %322 : vector<2x16x16xf32>
    %c189 = arith.constant 189 : index
    %324 = memref.load %arg2[%c189] : memref<288xf32, #tpu.memory_space<smem>>
    %325 = vector.broadcast %324 : f32 to vector<2x16x16xf32>
    %326 = arith.mulf %325, %303 : vector<2x16x16xf32>
    %327 = arith.addf %293, %326 : vector<2x16x16xf32>
    %c225 = arith.constant 225 : index
    %328 = memref.load %arg2[%c225] : memref<288xf32, #tpu.memory_space<smem>>
    %329 = vector.broadcast %328 : f32 to vector<2x16x16xf32>
    %330 = arith.mulf %329, %303 : vector<2x16x16xf32>
    %331 = arith.addf %297, %330 : vector<2x16x16xf32>
    %c261 = arith.constant 261 : index
    %332 = memref.load %arg2[%c261] : memref<288xf32, #tpu.memory_space<smem>>
    %333 = vector.broadcast %332 : f32 to vector<2x16x16xf32>
    %334 = arith.mulf %333, %303 : vector<2x16x16xf32>
    %335 = arith.addf %301, %334 : vector<2x16x16xf32>
    %c0_52 = arith.constant 0 : index
    %c1_53 = arith.constant 1 : index
    %c0_54 = arith.constant 0 : index
    %c1_55 = arith.constant 1 : index
    %336 = vector.load %arg6[%c0_52, %c1_53, %c0_54, %c1_55] : memref<2x4x18x18xf32, #tpu.memory_space<vmem>>, vector<2x1x16x16xf32>
    %337 = vector.shape_cast %336 : vector<2x1x16x16xf32> to vector<2x16x16xf32>
    %c10 = arith.constant 10 : index
    %338 = memref.load %arg2[%c10] : memref<288xf32, #tpu.memory_space<smem>>
    %339 = vector.broadcast %338 : f32 to vector<2x16x16xf32>
    %340 = arith.mulf %339, %337 : vector<2x16x16xf32>
    %341 = arith.addf %307, %340 : vector<2x16x16xf32>
    %c46 = arith.constant 46 : index
    %342 = memref.load %arg2[%c46] : memref<288xf32, #tpu.memory_space<smem>>
    %343 = vector.broadcast %342 : f32 to vector<2x16x16xf32>
    %344 = arith.mulf %343, %337 : vector<2x16x16xf32>
    %345 = arith.addf %311, %344 : vector<2x16x16xf32>
    %c82 = arith.constant 82 : index
    %346 = memref.load %arg2[%c82] : memref<288xf32, #tpu.memory_space<smem>>
    %347 = vector.broadcast %346 : f32 to vector<2x16x16xf32>
    %348 = arith.mulf %347, %337 : vector<2x16x16xf32>
    %349 = arith.addf %315, %348 : vector<2x16x16xf32>
    %c118 = arith.constant 118 : index
    %350 = memref.load %arg2[%c118] : memref<288xf32, #tpu.memory_space<smem>>
    %351 = vector.broadcast %350 : f32 to vector<2x16x16xf32>
    %352 = arith.mulf %351, %337 : vector<2x16x16xf32>
    %353 = arith.addf %319, %352 : vector<2x16x16xf32>
    %c154 = arith.constant 154 : index
    %354 = memref.load %arg2[%c154] : memref<288xf32, #tpu.memory_space<smem>>
    %355 = vector.broadcast %354 : f32 to vector<2x16x16xf32>
    %356 = arith.mulf %355, %337 : vector<2x16x16xf32>
    %357 = arith.addf %323, %356 : vector<2x16x16xf32>
    %c190 = arith.constant 190 : index
    %358 = memref.load %arg2[%c190] : memref<288xf32, #tpu.memory_space<smem>>
    %359 = vector.broadcast %358 : f32 to vector<2x16x16xf32>
    %360 = arith.mulf %359, %337 : vector<2x16x16xf32>
    %361 = arith.addf %327, %360 : vector<2x16x16xf32>
    %c226 = arith.constant 226 : index
    %362 = memref.load %arg2[%c226] : memref<288xf32, #tpu.memory_space<smem>>
    %363 = vector.broadcast %362 : f32 to vector<2x16x16xf32>
    %364 = arith.mulf %363, %337 : vector<2x16x16xf32>
    %365 = arith.addf %331, %364 : vector<2x16x16xf32>
    %c262 = arith.constant 262 : index
    %366 = memref.load %arg2[%c262] : memref<288xf32, #tpu.memory_space<smem>>
    %367 = vector.broadcast %366 : f32 to vector<2x16x16xf32>
    %368 = arith.mulf %367, %337 : vector<2x16x16xf32>
    %369 = arith.addf %335, %368 : vector<2x16x16xf32>
    %c0_56 = arith.constant 0 : index
    %c1_57 = arith.constant 1 : index
    %c0_58 = arith.constant 0 : index
    %c2_59 = arith.constant 2 : index
    %370 = vector.load %arg6[%c0_56, %c1_57, %c0_58, %c2_59] : memref<2x4x18x18xf32, #tpu.memory_space<vmem>>, vector<2x1x16x16xf32>
    %371 = vector.shape_cast %370 : vector<2x1x16x16xf32> to vector<2x16x16xf32>
    %c11 = arith.constant 11 : index
    %372 = memref.load %arg2[%c11] : memref<288xf32, #tpu.memory_space<smem>>
    %373 = vector.broadcast %372 : f32 to vector<2x16x16xf32>
    %374 = arith.mulf %373, %371 : vector<2x16x16xf32>
    %375 = arith.addf %341, %374 : vector<2x16x16xf32>
    %c47 = arith.constant 47 : index
    %376 = memref.load %arg2[%c47] : memref<288xf32, #tpu.memory_space<smem>>
    %377 = vector.broadcast %376 : f32 to vector<2x16x16xf32>
    %378 = arith.mulf %377, %371 : vector<2x16x16xf32>
    %379 = arith.addf %345, %378 : vector<2x16x16xf32>
    %c83 = arith.constant 83 : index
    %380 = memref.load %arg2[%c83] : memref<288xf32, #tpu.memory_space<smem>>
    %381 = vector.broadcast %380 : f32 to vector<2x16x16xf32>
    %382 = arith.mulf %381, %371 : vector<2x16x16xf32>
    %383 = arith.addf %349, %382 : vector<2x16x16xf32>
    %c119 = arith.constant 119 : index
    %384 = memref.load %arg2[%c119] : memref<288xf32, #tpu.memory_space<smem>>
    %385 = vector.broadcast %384 : f32 to vector<2x16x16xf32>
    %386 = arith.mulf %385, %371 : vector<2x16x16xf32>
    %387 = arith.addf %353, %386 : vector<2x16x16xf32>
    %c155 = arith.constant 155 : index
    %388 = memref.load %arg2[%c155] : memref<288xf32, #tpu.memory_space<smem>>
    %389 = vector.broadcast %388 : f32 to vector<2x16x16xf32>
    %390 = arith.mulf %389, %371 : vector<2x16x16xf32>
    %391 = arith.addf %357, %390 : vector<2x16x16xf32>
    %c191 = arith.constant 191 : index
    %392 = memref.load %arg2[%c191] : memref<288xf32, #tpu.memory_space<smem>>
    %393 = vector.broadcast %392 : f32 to vector<2x16x16xf32>
    %394 = arith.mulf %393, %371 : vector<2x16x16xf32>
    %395 = arith.addf %361, %394 : vector<2x16x16xf32>
    %c227 = arith.constant 227 : index
    %396 = memref.load %arg2[%c227] : memref<288xf32, #tpu.memory_space<smem>>
    %397 = vector.broadcast %396 : f32 to vector<2x16x16xf32>
    %398 = arith.mulf %397, %371 : vector<2x16x16xf32>
    %399 = arith.addf %365, %398 : vector<2x16x16xf32>
    %c263 = arith.constant 263 : index
    %400 = memref.load %arg2[%c263] : memref<288xf32, #tpu.memory_space<smem>>
    %401 = vector.broadcast %400 : f32 to vector<2x16x16xf32>
    %402 = arith.mulf %401, %371 : vector<2x16x16xf32>
    %403 = arith.addf %369, %402 : vector<2x16x16xf32>
    %c0_60 = arith.constant 0 : index
    %c1_61 = arith.constant 1 : index
    %c1_62 = arith.constant 1 : index
    %c0_63 = arith.constant 0 : index
    %404 = vector.load %arg6[%c0_60, %c1_61, %c1_62, %c0_63] : memref<2x4x18x18xf32, #tpu.memory_space<vmem>>, vector<2x1x16x16xf32>
    %405 = vector.shape_cast %404 : vector<2x1x16x16xf32> to vector<2x16x16xf32>
    %c12 = arith.constant 12 : index
    %406 = memref.load %arg2[%c12] : memref<288xf32, #tpu.memory_space<smem>>
    %407 = vector.broadcast %406 : f32 to vector<2x16x16xf32>
    %408 = arith.mulf %407, %405 : vector<2x16x16xf32>
    %409 = arith.addf %375, %408 : vector<2x16x16xf32>
    %c48 = arith.constant 48 : index
    %410 = memref.load %arg2[%c48] : memref<288xf32, #tpu.memory_space<smem>>
    %411 = vector.broadcast %410 : f32 to vector<2x16x16xf32>
    %412 = arith.mulf %411, %405 : vector<2x16x16xf32>
    %413 = arith.addf %379, %412 : vector<2x16x16xf32>
    %c84 = arith.constant 84 : index
    %414 = memref.load %arg2[%c84] : memref<288xf32, #tpu.memory_space<smem>>
    %415 = vector.broadcast %414 : f32 to vector<2x16x16xf32>
    %416 = arith.mulf %415, %405 : vector<2x16x16xf32>
    %417 = arith.addf %383, %416 : vector<2x16x16xf32>
    %c120 = arith.constant 120 : index
    %418 = memref.load %arg2[%c120] : memref<288xf32, #tpu.memory_space<smem>>
    %419 = vector.broadcast %418 : f32 to vector<2x16x16xf32>
    %420 = arith.mulf %419, %405 : vector<2x16x16xf32>
    %421 = arith.addf %387, %420 : vector<2x16x16xf32>
    %c156 = arith.constant 156 : index
    %422 = memref.load %arg2[%c156] : memref<288xf32, #tpu.memory_space<smem>>
    %423 = vector.broadcast %422 : f32 to vector<2x16x16xf32>
    %424 = arith.mulf %423, %405 : vector<2x16x16xf32>
    %425 = arith.addf %391, %424 : vector<2x16x16xf32>
    %c192 = arith.constant 192 : index
    %426 = memref.load %arg2[%c192] : memref<288xf32, #tpu.memory_space<smem>>
    %427 = vector.broadcast %426 : f32 to vector<2x16x16xf32>
    %428 = arith.mulf %427, %405 : vector<2x16x16xf32>
    %429 = arith.addf %395, %428 : vector<2x16x16xf32>
    %c228 = arith.constant 228 : index
    %430 = memref.load %arg2[%c228] : memref<288xf32, #tpu.memory_space<smem>>
    %431 = vector.broadcast %430 : f32 to vector<2x16x16xf32>
    %432 = arith.mulf %431, %405 : vector<2x16x16xf32>
    %433 = arith.addf %399, %432 : vector<2x16x16xf32>
    %c264 = arith.constant 264 : index
    %434 = memref.load %arg2[%c264] : memref<288xf32, #tpu.memory_space<smem>>
    %435 = vector.broadcast %434 : f32 to vector<2x16x16xf32>
    %436 = arith.mulf %435, %405 : vector<2x16x16xf32>
    %437 = arith.addf %403, %436 : vector<2x16x16xf32>
    %c0_64 = arith.constant 0 : index
    %c1_65 = arith.constant 1 : index
    %c1_66 = arith.constant 1 : index
    %c1_67 = arith.constant 1 : index
    %438 = vector.load %arg6[%c0_64, %c1_65, %c1_66, %c1_67] : memref<2x4x18x18xf32, #tpu.memory_space<vmem>>, vector<2x1x16x16xf32>
    %439 = vector.shape_cast %438 : vector<2x1x16x16xf32> to vector<2x16x16xf32>
    %c13 = arith.constant 13 : index
    %440 = memref.load %arg2[%c13] : memref<288xf32, #tpu.memory_space<smem>>
    %441 = vector.broadcast %440 : f32 to vector<2x16x16xf32>
    %442 = arith.mulf %441, %439 : vector<2x16x16xf32>
    %443 = arith.addf %409, %442 : vector<2x16x16xf32>
    %c49 = arith.constant 49 : index
    %444 = memref.load %arg2[%c49] : memref<288xf32, #tpu.memory_space<smem>>
    %445 = vector.broadcast %444 : f32 to vector<2x16x16xf32>
    %446 = arith.mulf %445, %439 : vector<2x16x16xf32>
    %447 = arith.addf %413, %446 : vector<2x16x16xf32>
    %c85 = arith.constant 85 : index
    %448 = memref.load %arg2[%c85] : memref<288xf32, #tpu.memory_space<smem>>
    %449 = vector.broadcast %448 : f32 to vector<2x16x16xf32>
    %450 = arith.mulf %449, %439 : vector<2x16x16xf32>
    %451 = arith.addf %417, %450 : vector<2x16x16xf32>
    %c121 = arith.constant 121 : index
    %452 = memref.load %arg2[%c121] : memref<288xf32, #tpu.memory_space<smem>>
    %453 = vector.broadcast %452 : f32 to vector<2x16x16xf32>
    %454 = arith.mulf %453, %439 : vector<2x16x16xf32>
    %455 = arith.addf %421, %454 : vector<2x16x16xf32>
    %c157 = arith.constant 157 : index
    %456 = memref.load %arg2[%c157] : memref<288xf32, #tpu.memory_space<smem>>
    %457 = vector.broadcast %456 : f32 to vector<2x16x16xf32>
    %458 = arith.mulf %457, %439 : vector<2x16x16xf32>
    %459 = arith.addf %425, %458 : vector<2x16x16xf32>
    %c193 = arith.constant 193 : index
    %460 = memref.load %arg2[%c193] : memref<288xf32, #tpu.memory_space<smem>>
    %461 = vector.broadcast %460 : f32 to vector<2x16x16xf32>
    %462 = arith.mulf %461, %439 : vector<2x16x16xf32>
    %463 = arith.addf %429, %462 : vector<2x16x16xf32>
    %c229 = arith.constant 229 : index
    %464 = memref.load %arg2[%c229] : memref<288xf32, #tpu.memory_space<smem>>
    %465 = vector.broadcast %464 : f32 to vector<2x16x16xf32>
    %466 = arith.mulf %465, %439 : vector<2x16x16xf32>
    %467 = arith.addf %433, %466 : vector<2x16x16xf32>
    %c265 = arith.constant 265 : index
    %468 = memref.load %arg2[%c265] : memref<288xf32, #tpu.memory_space<smem>>
    %469 = vector.broadcast %468 : f32 to vector<2x16x16xf32>
    %470 = arith.mulf %469, %439 : vector<2x16x16xf32>
    %471 = arith.addf %437, %470 : vector<2x16x16xf32>
    %c0_68 = arith.constant 0 : index
    %c1_69 = arith.constant 1 : index
    %c1_70 = arith.constant 1 : index
    %c2_71 = arith.constant 2 : index
    %472 = vector.load %arg6[%c0_68, %c1_69, %c1_70, %c2_71] : memref<2x4x18x18xf32, #tpu.memory_space<vmem>>, vector<2x1x16x16xf32>
    %473 = vector.shape_cast %472 : vector<2x1x16x16xf32> to vector<2x16x16xf32>
    %c14 = arith.constant 14 : index
    %474 = memref.load %arg2[%c14] : memref<288xf32, #tpu.memory_space<smem>>
    %475 = vector.broadcast %474 : f32 to vector<2x16x16xf32>
    %476 = arith.mulf %475, %473 : vector<2x16x16xf32>
    %477 = arith.addf %443, %476 : vector<2x16x16xf32>
    %c50 = arith.constant 50 : index
    %478 = memref.load %arg2[%c50] : memref<288xf32, #tpu.memory_space<smem>>
    %479 = vector.broadcast %478 : f32 to vector<2x16x16xf32>
    %480 = arith.mulf %479, %473 : vector<2x16x16xf32>
    %481 = arith.addf %447, %480 : vector<2x16x16xf32>
    %c86 = arith.constant 86 : index
    %482 = memref.load %arg2[%c86] : memref<288xf32, #tpu.memory_space<smem>>
    %483 = vector.broadcast %482 : f32 to vector<2x16x16xf32>
    %484 = arith.mulf %483, %473 : vector<2x16x16xf32>
    %485 = arith.addf %451, %484 : vector<2x16x16xf32>
    %c122 = arith.constant 122 : index
    %486 = memref.load %arg2[%c122] : memref<288xf32, #tpu.memory_space<smem>>
    %487 = vector.broadcast %486 : f32 to vector<2x16x16xf32>
    %488 = arith.mulf %487, %473 : vector<2x16x16xf32>
    %489 = arith.addf %455, %488 : vector<2x16x16xf32>
    %c158 = arith.constant 158 : index
    %490 = memref.load %arg2[%c158] : memref<288xf32, #tpu.memory_space<smem>>
    %491 = vector.broadcast %490 : f32 to vector<2x16x16xf32>
    %492 = arith.mulf %491, %473 : vector<2x16x16xf32>
    %493 = arith.addf %459, %492 : vector<2x16x16xf32>
    %c194 = arith.constant 194 : index
    %494 = memref.load %arg2[%c194] : memref<288xf32, #tpu.memory_space<smem>>
    %495 = vector.broadcast %494 : f32 to vector<2x16x16xf32>
    %496 = arith.mulf %495, %473 : vector<2x16x16xf32>
    %497 = arith.addf %463, %496 : vector<2x16x16xf32>
    %c230 = arith.constant 230 : index
    %498 = memref.load %arg2[%c230] : memref<288xf32, #tpu.memory_space<smem>>
    %499 = vector.broadcast %498 : f32 to vector<2x16x16xf32>
    %500 = arith.mulf %499, %473 : vector<2x16x16xf32>
    %501 = arith.addf %467, %500 : vector<2x16x16xf32>
    %c266 = arith.constant 266 : index
    %502 = memref.load %arg2[%c266] : memref<288xf32, #tpu.memory_space<smem>>
    %503 = vector.broadcast %502 : f32 to vector<2x16x16xf32>
    %504 = arith.mulf %503, %473 : vector<2x16x16xf32>
    %505 = arith.addf %471, %504 : vector<2x16x16xf32>
    %c0_72 = arith.constant 0 : index
    %c1_73 = arith.constant 1 : index
    %c2_74 = arith.constant 2 : index
    %c0_75 = arith.constant 0 : index
    %506 = vector.load %arg6[%c0_72, %c1_73, %c2_74, %c0_75] : memref<2x4x18x18xf32, #tpu.memory_space<vmem>>, vector<2x1x16x16xf32>
    %507 = vector.shape_cast %506 : vector<2x1x16x16xf32> to vector<2x16x16xf32>
    %c15 = arith.constant 15 : index
    %508 = memref.load %arg2[%c15] : memref<288xf32, #tpu.memory_space<smem>>
    %509 = vector.broadcast %508 : f32 to vector<2x16x16xf32>
    %510 = arith.mulf %509, %507 : vector<2x16x16xf32>
    %511 = arith.addf %477, %510 : vector<2x16x16xf32>
    %c51 = arith.constant 51 : index
    %512 = memref.load %arg2[%c51] : memref<288xf32, #tpu.memory_space<smem>>
    %513 = vector.broadcast %512 : f32 to vector<2x16x16xf32>
    %514 = arith.mulf %513, %507 : vector<2x16x16xf32>
    %515 = arith.addf %481, %514 : vector<2x16x16xf32>
    %c87 = arith.constant 87 : index
    %516 = memref.load %arg2[%c87] : memref<288xf32, #tpu.memory_space<smem>>
    %517 = vector.broadcast %516 : f32 to vector<2x16x16xf32>
    %518 = arith.mulf %517, %507 : vector<2x16x16xf32>
    %519 = arith.addf %485, %518 : vector<2x16x16xf32>
    %c123 = arith.constant 123 : index
    %520 = memref.load %arg2[%c123] : memref<288xf32, #tpu.memory_space<smem>>
    %521 = vector.broadcast %520 : f32 to vector<2x16x16xf32>
    %522 = arith.mulf %521, %507 : vector<2x16x16xf32>
    %523 = arith.addf %489, %522 : vector<2x16x16xf32>
    %c159 = arith.constant 159 : index
    %524 = memref.load %arg2[%c159] : memref<288xf32, #tpu.memory_space<smem>>
    %525 = vector.broadcast %524 : f32 to vector<2x16x16xf32>
    %526 = arith.mulf %525, %507 : vector<2x16x16xf32>
    %527 = arith.addf %493, %526 : vector<2x16x16xf32>
    %c195 = arith.constant 195 : index
    %528 = memref.load %arg2[%c195] : memref<288xf32, #tpu.memory_space<smem>>
    %529 = vector.broadcast %528 : f32 to vector<2x16x16xf32>
    %530 = arith.mulf %529, %507 : vector<2x16x16xf32>
    %531 = arith.addf %497, %530 : vector<2x16x16xf32>
    %c231 = arith.constant 231 : index
    %532 = memref.load %arg2[%c231] : memref<288xf32, #tpu.memory_space<smem>>
    %533 = vector.broadcast %532 : f32 to vector<2x16x16xf32>
    %534 = arith.mulf %533, %507 : vector<2x16x16xf32>
    %535 = arith.addf %501, %534 : vector<2x16x16xf32>
    %c267 = arith.constant 267 : index
    %536 = memref.load %arg2[%c267] : memref<288xf32, #tpu.memory_space<smem>>
    %537 = vector.broadcast %536 : f32 to vector<2x16x16xf32>
    %538 = arith.mulf %537, %507 : vector<2x16x16xf32>
    %539 = arith.addf %505, %538 : vector<2x16x16xf32>
    %c0_76 = arith.constant 0 : index
    %c1_77 = arith.constant 1 : index
    %c2_78 = arith.constant 2 : index
    %c1_79 = arith.constant 1 : index
    %540 = vector.load %arg6[%c0_76, %c1_77, %c2_78, %c1_79] : memref<2x4x18x18xf32, #tpu.memory_space<vmem>>, vector<2x1x16x16xf32>
    %541 = vector.shape_cast %540 : vector<2x1x16x16xf32> to vector<2x16x16xf32>
    %c16 = arith.constant 16 : index
    %542 = memref.load %arg2[%c16] : memref<288xf32, #tpu.memory_space<smem>>
    %543 = vector.broadcast %542 : f32 to vector<2x16x16xf32>
    %544 = arith.mulf %543, %541 : vector<2x16x16xf32>
    %545 = arith.addf %511, %544 : vector<2x16x16xf32>
    %c52 = arith.constant 52 : index
    %546 = memref.load %arg2[%c52] : memref<288xf32, #tpu.memory_space<smem>>
    %547 = vector.broadcast %546 : f32 to vector<2x16x16xf32>
    %548 = arith.mulf %547, %541 : vector<2x16x16xf32>
    %549 = arith.addf %515, %548 : vector<2x16x16xf32>
    %c88 = arith.constant 88 : index
    %550 = memref.load %arg2[%c88] : memref<288xf32, #tpu.memory_space<smem>>
    %551 = vector.broadcast %550 : f32 to vector<2x16x16xf32>
    %552 = arith.mulf %551, %541 : vector<2x16x16xf32>
    %553 = arith.addf %519, %552 : vector<2x16x16xf32>
    %c124 = arith.constant 124 : index
    %554 = memref.load %arg2[%c124] : memref<288xf32, #tpu.memory_space<smem>>
    %555 = vector.broadcast %554 : f32 to vector<2x16x16xf32>
    %556 = arith.mulf %555, %541 : vector<2x16x16xf32>
    %557 = arith.addf %523, %556 : vector<2x16x16xf32>
    %c160 = arith.constant 160 : index
    %558 = memref.load %arg2[%c160] : memref<288xf32, #tpu.memory_space<smem>>
    %559 = vector.broadcast %558 : f32 to vector<2x16x16xf32>
    %560 = arith.mulf %559, %541 : vector<2x16x16xf32>
    %561 = arith.addf %527, %560 : vector<2x16x16xf32>
    %c196 = arith.constant 196 : index
    %562 = memref.load %arg2[%c196] : memref<288xf32, #tpu.memory_space<smem>>
    %563 = vector.broadcast %562 : f32 to vector<2x16x16xf32>
    %564 = arith.mulf %563, %541 : vector<2x16x16xf32>
    %565 = arith.addf %531, %564 : vector<2x16x16xf32>
    %c232 = arith.constant 232 : index
    %566 = memref.load %arg2[%c232] : memref<288xf32, #tpu.memory_space<smem>>
    %567 = vector.broadcast %566 : f32 to vector<2x16x16xf32>
    %568 = arith.mulf %567, %541 : vector<2x16x16xf32>
    %569 = arith.addf %535, %568 : vector<2x16x16xf32>
    %c268 = arith.constant 268 : index
    %570 = memref.load %arg2[%c268] : memref<288xf32, #tpu.memory_space<smem>>
    %571 = vector.broadcast %570 : f32 to vector<2x16x16xf32>
    %572 = arith.mulf %571, %541 : vector<2x16x16xf32>
    %573 = arith.addf %539, %572 : vector<2x16x16xf32>
    %c0_80 = arith.constant 0 : index
    %c1_81 = arith.constant 1 : index
    %c2_82 = arith.constant 2 : index
    %c2_83 = arith.constant 2 : index
    %574 = vector.load %arg6[%c0_80, %c1_81, %c2_82, %c2_83] : memref<2x4x18x18xf32, #tpu.memory_space<vmem>>, vector<2x1x16x16xf32>
    %575 = vector.shape_cast %574 : vector<2x1x16x16xf32> to vector<2x16x16xf32>
    %c17 = arith.constant 17 : index
    %576 = memref.load %arg2[%c17] : memref<288xf32, #tpu.memory_space<smem>>
    %577 = vector.broadcast %576 : f32 to vector<2x16x16xf32>
    %578 = arith.mulf %577, %575 : vector<2x16x16xf32>
    %579 = arith.addf %545, %578 : vector<2x16x16xf32>
    %c53 = arith.constant 53 : index
    %580 = memref.load %arg2[%c53] : memref<288xf32, #tpu.memory_space<smem>>
    %581 = vector.broadcast %580 : f32 to vector<2x16x16xf32>
    %582 = arith.mulf %581, %575 : vector<2x16x16xf32>
    %583 = arith.addf %549, %582 : vector<2x16x16xf32>
    %c89 = arith.constant 89 : index
    %584 = memref.load %arg2[%c89] : memref<288xf32, #tpu.memory_space<smem>>
    %585 = vector.broadcast %584 : f32 to vector<2x16x16xf32>
    %586 = arith.mulf %585, %575 : vector<2x16x16xf32>
    %587 = arith.addf %553, %586 : vector<2x16x16xf32>
    %c125 = arith.constant 125 : index
    %588 = memref.load %arg2[%c125] : memref<288xf32, #tpu.memory_space<smem>>
    %589 = vector.broadcast %588 : f32 to vector<2x16x16xf32>
    %590 = arith.mulf %589, %575 : vector<2x16x16xf32>
    %591 = arith.addf %557, %590 : vector<2x16x16xf32>
    %c161 = arith.constant 161 : index
    %592 = memref.load %arg2[%c161] : memref<288xf32, #tpu.memory_space<smem>>
    %593 = vector.broadcast %592 : f32 to vector<2x16x16xf32>
    %594 = arith.mulf %593, %575 : vector<2x16x16xf32>
    %595 = arith.addf %561, %594 : vector<2x16x16xf32>
    %c197 = arith.constant 197 : index
    %596 = memref.load %arg2[%c197] : memref<288xf32, #tpu.memory_space<smem>>
    %597 = vector.broadcast %596 : f32 to vector<2x16x16xf32>
    %598 = arith.mulf %597, %575 : vector<2x16x16xf32>
    %599 = arith.addf %565, %598 : vector<2x16x16xf32>
    %c233 = arith.constant 233 : index
    %600 = memref.load %arg2[%c233] : memref<288xf32, #tpu.memory_space<smem>>
    %601 = vector.broadcast %600 : f32 to vector<2x16x16xf32>
    %602 = arith.mulf %601, %575 : vector<2x16x16xf32>
    %603 = arith.addf %569, %602 : vector<2x16x16xf32>
    %c269 = arith.constant 269 : index
    %604 = memref.load %arg2[%c269] : memref<288xf32, #tpu.memory_space<smem>>
    %605 = vector.broadcast %604 : f32 to vector<2x16x16xf32>
    %606 = arith.mulf %605, %575 : vector<2x16x16xf32>
    %607 = arith.addf %573, %606 : vector<2x16x16xf32>
    %c0_84 = arith.constant 0 : index
    %c2_85 = arith.constant 2 : index
    %c0_86 = arith.constant 0 : index
    %c0_87 = arith.constant 0 : index
    %608 = vector.load %arg6[%c0_84, %c2_85, %c0_86, %c0_87] : memref<2x4x18x18xf32, #tpu.memory_space<vmem>>, vector<2x1x16x16xf32>
    %609 = vector.shape_cast %608 : vector<2x1x16x16xf32> to vector<2x16x16xf32>
    %c18 = arith.constant 18 : index
    %610 = memref.load %arg2[%c18] : memref<288xf32, #tpu.memory_space<smem>>
    %611 = vector.broadcast %610 : f32 to vector<2x16x16xf32>
    %612 = arith.mulf %611, %609 : vector<2x16x16xf32>
    %613 = arith.addf %579, %612 : vector<2x16x16xf32>
    %c54 = arith.constant 54 : index
    %614 = memref.load %arg2[%c54] : memref<288xf32, #tpu.memory_space<smem>>
    %615 = vector.broadcast %614 : f32 to vector<2x16x16xf32>
    %616 = arith.mulf %615, %609 : vector<2x16x16xf32>
    %617 = arith.addf %583, %616 : vector<2x16x16xf32>
    %c90 = arith.constant 90 : index
    %618 = memref.load %arg2[%c90] : memref<288xf32, #tpu.memory_space<smem>>
    %619 = vector.broadcast %618 : f32 to vector<2x16x16xf32>
    %620 = arith.mulf %619, %609 : vector<2x16x16xf32>
    %621 = arith.addf %587, %620 : vector<2x16x16xf32>
    %c126 = arith.constant 126 : index
    %622 = memref.load %arg2[%c126] : memref<288xf32, #tpu.memory_space<smem>>
    %623 = vector.broadcast %622 : f32 to vector<2x16x16xf32>
    %624 = arith.mulf %623, %609 : vector<2x16x16xf32>
    %625 = arith.addf %591, %624 : vector<2x16x16xf32>
    %c162 = arith.constant 162 : index
    %626 = memref.load %arg2[%c162] : memref<288xf32, #tpu.memory_space<smem>>
    %627 = vector.broadcast %626 : f32 to vector<2x16x16xf32>
    %628 = arith.mulf %627, %609 : vector<2x16x16xf32>
    %629 = arith.addf %595, %628 : vector<2x16x16xf32>
    %c198 = arith.constant 198 : index
    %630 = memref.load %arg2[%c198] : memref<288xf32, #tpu.memory_space<smem>>
    %631 = vector.broadcast %630 : f32 to vector<2x16x16xf32>
    %632 = arith.mulf %631, %609 : vector<2x16x16xf32>
    %633 = arith.addf %599, %632 : vector<2x16x16xf32>
    %c234 = arith.constant 234 : index
    %634 = memref.load %arg2[%c234] : memref<288xf32, #tpu.memory_space<smem>>
    %635 = vector.broadcast %634 : f32 to vector<2x16x16xf32>
    %636 = arith.mulf %635, %609 : vector<2x16x16xf32>
    %637 = arith.addf %603, %636 : vector<2x16x16xf32>
    %c270 = arith.constant 270 : index
    %638 = memref.load %arg2[%c270] : memref<288xf32, #tpu.memory_space<smem>>
    %639 = vector.broadcast %638 : f32 to vector<2x16x16xf32>
    %640 = arith.mulf %639, %609 : vector<2x16x16xf32>
    %641 = arith.addf %607, %640 : vector<2x16x16xf32>
    %c0_88 = arith.constant 0 : index
    %c2_89 = arith.constant 2 : index
    %c0_90 = arith.constant 0 : index
    %c1_91 = arith.constant 1 : index
    %642 = vector.load %arg6[%c0_88, %c2_89, %c0_90, %c1_91] : memref<2x4x18x18xf32, #tpu.memory_space<vmem>>, vector<2x1x16x16xf32>
    %643 = vector.shape_cast %642 : vector<2x1x16x16xf32> to vector<2x16x16xf32>
    %c19 = arith.constant 19 : index
    %644 = memref.load %arg2[%c19] : memref<288xf32, #tpu.memory_space<smem>>
    %645 = vector.broadcast %644 : f32 to vector<2x16x16xf32>
    %646 = arith.mulf %645, %643 : vector<2x16x16xf32>
    %647 = arith.addf %613, %646 : vector<2x16x16xf32>
    %c55 = arith.constant 55 : index
    %648 = memref.load %arg2[%c55] : memref<288xf32, #tpu.memory_space<smem>>
    %649 = vector.broadcast %648 : f32 to vector<2x16x16xf32>
    %650 = arith.mulf %649, %643 : vector<2x16x16xf32>
    %651 = arith.addf %617, %650 : vector<2x16x16xf32>
    %c91 = arith.constant 91 : index
    %652 = memref.load %arg2[%c91] : memref<288xf32, #tpu.memory_space<smem>>
    %653 = vector.broadcast %652 : f32 to vector<2x16x16xf32>
    %654 = arith.mulf %653, %643 : vector<2x16x16xf32>
    %655 = arith.addf %621, %654 : vector<2x16x16xf32>
    %c127 = arith.constant 127 : index
    %656 = memref.load %arg2[%c127] : memref<288xf32, #tpu.memory_space<smem>>
    %657 = vector.broadcast %656 : f32 to vector<2x16x16xf32>
    %658 = arith.mulf %657, %643 : vector<2x16x16xf32>
    %659 = arith.addf %625, %658 : vector<2x16x16xf32>
    %c163 = arith.constant 163 : index
    %660 = memref.load %arg2[%c163] : memref<288xf32, #tpu.memory_space<smem>>
    %661 = vector.broadcast %660 : f32 to vector<2x16x16xf32>
    %662 = arith.mulf %661, %643 : vector<2x16x16xf32>
    %663 = arith.addf %629, %662 : vector<2x16x16xf32>
    %c199 = arith.constant 199 : index
    %664 = memref.load %arg2[%c199] : memref<288xf32, #tpu.memory_space<smem>>
    %665 = vector.broadcast %664 : f32 to vector<2x16x16xf32>
    %666 = arith.mulf %665, %643 : vector<2x16x16xf32>
    %667 = arith.addf %633, %666 : vector<2x16x16xf32>
    %c235 = arith.constant 235 : index
    %668 = memref.load %arg2[%c235] : memref<288xf32, #tpu.memory_space<smem>>
    %669 = vector.broadcast %668 : f32 to vector<2x16x16xf32>
    %670 = arith.mulf %669, %643 : vector<2x16x16xf32>
    %671 = arith.addf %637, %670 : vector<2x16x16xf32>
    %c271 = arith.constant 271 : index
    %672 = memref.load %arg2[%c271] : memref<288xf32, #tpu.memory_space<smem>>
    %673 = vector.broadcast %672 : f32 to vector<2x16x16xf32>
    %674 = arith.mulf %673, %643 : vector<2x16x16xf32>
    %675 = arith.addf %641, %674 : vector<2x16x16xf32>
    %c0_92 = arith.constant 0 : index
    %c2_93 = arith.constant 2 : index
    %c0_94 = arith.constant 0 : index
    %c2_95 = arith.constant 2 : index
    %676 = vector.load %arg6[%c0_92, %c2_93, %c0_94, %c2_95] : memref<2x4x18x18xf32, #tpu.memory_space<vmem>>, vector<2x1x16x16xf32>
    %677 = vector.shape_cast %676 : vector<2x1x16x16xf32> to vector<2x16x16xf32>
    %c20 = arith.constant 20 : index
    %678 = memref.load %arg2[%c20] : memref<288xf32, #tpu.memory_space<smem>>
    %679 = vector.broadcast %678 : f32 to vector<2x16x16xf32>
    %680 = arith.mulf %679, %677 : vector<2x16x16xf32>
    %681 = arith.addf %647, %680 : vector<2x16x16xf32>
    %c56 = arith.constant 56 : index
    %682 = memref.load %arg2[%c56] : memref<288xf32, #tpu.memory_space<smem>>
    %683 = vector.broadcast %682 : f32 to vector<2x16x16xf32>
    %684 = arith.mulf %683, %677 : vector<2x16x16xf32>
    %685 = arith.addf %651, %684 : vector<2x16x16xf32>
    %c92 = arith.constant 92 : index
    %686 = memref.load %arg2[%c92] : memref<288xf32, #tpu.memory_space<smem>>
    %687 = vector.broadcast %686 : f32 to vector<2x16x16xf32>
    %688 = arith.mulf %687, %677 : vector<2x16x16xf32>
    %689 = arith.addf %655, %688 : vector<2x16x16xf32>
    %c128 = arith.constant 128 : index
    %690 = memref.load %arg2[%c128] : memref<288xf32, #tpu.memory_space<smem>>
    %691 = vector.broadcast %690 : f32 to vector<2x16x16xf32>
    %692 = arith.mulf %691, %677 : vector<2x16x16xf32>
    %693 = arith.addf %659, %692 : vector<2x16x16xf32>
    %c164 = arith.constant 164 : index
    %694 = memref.load %arg2[%c164] : memref<288xf32, #tpu.memory_space<smem>>
    %695 = vector.broadcast %694 : f32 to vector<2x16x16xf32>
    %696 = arith.mulf %695, %677 : vector<2x16x16xf32>
    %697 = arith.addf %663, %696 : vector<2x16x16xf32>
    %c200 = arith.constant 200 : index
    %698 = memref.load %arg2[%c200] : memref<288xf32, #tpu.memory_space<smem>>
    %699 = vector.broadcast %698 : f32 to vector<2x16x16xf32>
    %700 = arith.mulf %699, %677 : vector<2x16x16xf32>
    %701 = arith.addf %667, %700 : vector<2x16x16xf32>
    %c236 = arith.constant 236 : index
    %702 = memref.load %arg2[%c236] : memref<288xf32, #tpu.memory_space<smem>>
    %703 = vector.broadcast %702 : f32 to vector<2x16x16xf32>
    %704 = arith.mulf %703, %677 : vector<2x16x16xf32>
    %705 = arith.addf %671, %704 : vector<2x16x16xf32>
    %c272 = arith.constant 272 : index
    %706 = memref.load %arg2[%c272] : memref<288xf32, #tpu.memory_space<smem>>
    %707 = vector.broadcast %706 : f32 to vector<2x16x16xf32>
    %708 = arith.mulf %707, %677 : vector<2x16x16xf32>
    %709 = arith.addf %675, %708 : vector<2x16x16xf32>
    %c0_96 = arith.constant 0 : index
    %c2_97 = arith.constant 2 : index
    %c1_98 = arith.constant 1 : index
    %c0_99 = arith.constant 0 : index
    %710 = vector.load %arg6[%c0_96, %c2_97, %c1_98, %c0_99] : memref<2x4x18x18xf32, #tpu.memory_space<vmem>>, vector<2x1x16x16xf32>
    %711 = vector.shape_cast %710 : vector<2x1x16x16xf32> to vector<2x16x16xf32>
    %c21 = arith.constant 21 : index
    %712 = memref.load %arg2[%c21] : memref<288xf32, #tpu.memory_space<smem>>
    %713 = vector.broadcast %712 : f32 to vector<2x16x16xf32>
    %714 = arith.mulf %713, %711 : vector<2x16x16xf32>
    %715 = arith.addf %681, %714 : vector<2x16x16xf32>
    %c57 = arith.constant 57 : index
    %716 = memref.load %arg2[%c57] : memref<288xf32, #tpu.memory_space<smem>>
    %717 = vector.broadcast %716 : f32 to vector<2x16x16xf32>
    %718 = arith.mulf %717, %711 : vector<2x16x16xf32>
    %719 = arith.addf %685, %718 : vector<2x16x16xf32>
    %c93 = arith.constant 93 : index
    %720 = memref.load %arg2[%c93] : memref<288xf32, #tpu.memory_space<smem>>
    %721 = vector.broadcast %720 : f32 to vector<2x16x16xf32>
    %722 = arith.mulf %721, %711 : vector<2x16x16xf32>
    %723 = arith.addf %689, %722 : vector<2x16x16xf32>
    %c129 = arith.constant 129 : index
    %724 = memref.load %arg2[%c129] : memref<288xf32, #tpu.memory_space<smem>>
    %725 = vector.broadcast %724 : f32 to vector<2x16x16xf32>
    %726 = arith.mulf %725, %711 : vector<2x16x16xf32>
    %727 = arith.addf %693, %726 : vector<2x16x16xf32>
    %c165 = arith.constant 165 : index
    %728 = memref.load %arg2[%c165] : memref<288xf32, #tpu.memory_space<smem>>
    %729 = vector.broadcast %728 : f32 to vector<2x16x16xf32>
    %730 = arith.mulf %729, %711 : vector<2x16x16xf32>
    %731 = arith.addf %697, %730 : vector<2x16x16xf32>
    %c201 = arith.constant 201 : index
    %732 = memref.load %arg2[%c201] : memref<288xf32, #tpu.memory_space<smem>>
    %733 = vector.broadcast %732 : f32 to vector<2x16x16xf32>
    %734 = arith.mulf %733, %711 : vector<2x16x16xf32>
    %735 = arith.addf %701, %734 : vector<2x16x16xf32>
    %c237 = arith.constant 237 : index
    %736 = memref.load %arg2[%c237] : memref<288xf32, #tpu.memory_space<smem>>
    %737 = vector.broadcast %736 : f32 to vector<2x16x16xf32>
    %738 = arith.mulf %737, %711 : vector<2x16x16xf32>
    %739 = arith.addf %705, %738 : vector<2x16x16xf32>
    %c273 = arith.constant 273 : index
    %740 = memref.load %arg2[%c273] : memref<288xf32, #tpu.memory_space<smem>>
    %741 = vector.broadcast %740 : f32 to vector<2x16x16xf32>
    %742 = arith.mulf %741, %711 : vector<2x16x16xf32>
    %743 = arith.addf %709, %742 : vector<2x16x16xf32>
    %c0_100 = arith.constant 0 : index
    %c2_101 = arith.constant 2 : index
    %c1_102 = arith.constant 1 : index
    %c1_103 = arith.constant 1 : index
    %744 = vector.load %arg6[%c0_100, %c2_101, %c1_102, %c1_103] : memref<2x4x18x18xf32, #tpu.memory_space<vmem>>, vector<2x1x16x16xf32>
    %745 = vector.shape_cast %744 : vector<2x1x16x16xf32> to vector<2x16x16xf32>
    %c22 = arith.constant 22 : index
    %746 = memref.load %arg2[%c22] : memref<288xf32, #tpu.memory_space<smem>>
    %747 = vector.broadcast %746 : f32 to vector<2x16x16xf32>
    %748 = arith.mulf %747, %745 : vector<2x16x16xf32>
    %749 = arith.addf %715, %748 : vector<2x16x16xf32>
    %c58 = arith.constant 58 : index
    %750 = memref.load %arg2[%c58] : memref<288xf32, #tpu.memory_space<smem>>
    %751 = vector.broadcast %750 : f32 to vector<2x16x16xf32>
    %752 = arith.mulf %751, %745 : vector<2x16x16xf32>
    %753 = arith.addf %719, %752 : vector<2x16x16xf32>
    %c94 = arith.constant 94 : index
    %754 = memref.load %arg2[%c94] : memref<288xf32, #tpu.memory_space<smem>>
    %755 = vector.broadcast %754 : f32 to vector<2x16x16xf32>
    %756 = arith.mulf %755, %745 : vector<2x16x16xf32>
    %757 = arith.addf %723, %756 : vector<2x16x16xf32>
    %c130 = arith.constant 130 : index
    %758 = memref.load %arg2[%c130] : memref<288xf32, #tpu.memory_space<smem>>
    %759 = vector.broadcast %758 : f32 to vector<2x16x16xf32>
    %760 = arith.mulf %759, %745 : vector<2x16x16xf32>
    %761 = arith.addf %727, %760 : vector<2x16x16xf32>
    %c166 = arith.constant 166 : index
    %762 = memref.load %arg2[%c166] : memref<288xf32, #tpu.memory_space<smem>>
    %763 = vector.broadcast %762 : f32 to vector<2x16x16xf32>
    %764 = arith.mulf %763, %745 : vector<2x16x16xf32>
    %765 = arith.addf %731, %764 : vector<2x16x16xf32>
    %c202 = arith.constant 202 : index
    %766 = memref.load %arg2[%c202] : memref<288xf32, #tpu.memory_space<smem>>
    %767 = vector.broadcast %766 : f32 to vector<2x16x16xf32>
    %768 = arith.mulf %767, %745 : vector<2x16x16xf32>
    %769 = arith.addf %735, %768 : vector<2x16x16xf32>
    %c238 = arith.constant 238 : index
    %770 = memref.load %arg2[%c238] : memref<288xf32, #tpu.memory_space<smem>>
    %771 = vector.broadcast %770 : f32 to vector<2x16x16xf32>
    %772 = arith.mulf %771, %745 : vector<2x16x16xf32>
    %773 = arith.addf %739, %772 : vector<2x16x16xf32>
    %c274 = arith.constant 274 : index
    %774 = memref.load %arg2[%c274] : memref<288xf32, #tpu.memory_space<smem>>
    %775 = vector.broadcast %774 : f32 to vector<2x16x16xf32>
    %776 = arith.mulf %775, %745 : vector<2x16x16xf32>
    %777 = arith.addf %743, %776 : vector<2x16x16xf32>
    %c0_104 = arith.constant 0 : index
    %c2_105 = arith.constant 2 : index
    %c1_106 = arith.constant 1 : index
    %c2_107 = arith.constant 2 : index
    %778 = vector.load %arg6[%c0_104, %c2_105, %c1_106, %c2_107] : memref<2x4x18x18xf32, #tpu.memory_space<vmem>>, vector<2x1x16x16xf32>
    %779 = vector.shape_cast %778 : vector<2x1x16x16xf32> to vector<2x16x16xf32>
    %c23 = arith.constant 23 : index
    %780 = memref.load %arg2[%c23] : memref<288xf32, #tpu.memory_space<smem>>
    %781 = vector.broadcast %780 : f32 to vector<2x16x16xf32>
    %782 = arith.mulf %781, %779 : vector<2x16x16xf32>
    %783 = arith.addf %749, %782 : vector<2x16x16xf32>
    %c59 = arith.constant 59 : index
    %784 = memref.load %arg2[%c59] : memref<288xf32, #tpu.memory_space<smem>>
    %785 = vector.broadcast %784 : f32 to vector<2x16x16xf32>
    %786 = arith.mulf %785, %779 : vector<2x16x16xf32>
    %787 = arith.addf %753, %786 : vector<2x16x16xf32>
    %c95 = arith.constant 95 : index
    %788 = memref.load %arg2[%c95] : memref<288xf32, #tpu.memory_space<smem>>
    %789 = vector.broadcast %788 : f32 to vector<2x16x16xf32>
    %790 = arith.mulf %789, %779 : vector<2x16x16xf32>
    %791 = arith.addf %757, %790 : vector<2x16x16xf32>
    %c131 = arith.constant 131 : index
    %792 = memref.load %arg2[%c131] : memref<288xf32, #tpu.memory_space<smem>>
    %793 = vector.broadcast %792 : f32 to vector<2x16x16xf32>
    %794 = arith.mulf %793, %779 : vector<2x16x16xf32>
    %795 = arith.addf %761, %794 : vector<2x16x16xf32>
    %c167 = arith.constant 167 : index
    %796 = memref.load %arg2[%c167] : memref<288xf32, #tpu.memory_space<smem>>
    %797 = vector.broadcast %796 : f32 to vector<2x16x16xf32>
    %798 = arith.mulf %797, %779 : vector<2x16x16xf32>
    %799 = arith.addf %765, %798 : vector<2x16x16xf32>
    %c203 = arith.constant 203 : index
    %800 = memref.load %arg2[%c203] : memref<288xf32, #tpu.memory_space<smem>>
    %801 = vector.broadcast %800 : f32 to vector<2x16x16xf32>
    %802 = arith.mulf %801, %779 : vector<2x16x16xf32>
    %803 = arith.addf %769, %802 : vector<2x16x16xf32>
    %c239 = arith.constant 239 : index
    %804 = memref.load %arg2[%c239] : memref<288xf32, #tpu.memory_space<smem>>
    %805 = vector.broadcast %804 : f32 to vector<2x16x16xf32>
    %806 = arith.mulf %805, %779 : vector<2x16x16xf32>
    %807 = arith.addf %773, %806 : vector<2x16x16xf32>
    %c275 = arith.constant 275 : index
    %808 = memref.load %arg2[%c275] : memref<288xf32, #tpu.memory_space<smem>>
    %809 = vector.broadcast %808 : f32 to vector<2x16x16xf32>
    %810 = arith.mulf %809, %779 : vector<2x16x16xf32>
    %811 = arith.addf %777, %810 : vector<2x16x16xf32>
    %c0_108 = arith.constant 0 : index
    %c2_109 = arith.constant 2 : index
    %c2_110 = arith.constant 2 : index
    %c0_111 = arith.constant 0 : index
    %812 = vector.load %arg6[%c0_108, %c2_109, %c2_110, %c0_111] : memref<2x4x18x18xf32, #tpu.memory_space<vmem>>, vector<2x1x16x16xf32>
    %813 = vector.shape_cast %812 : vector<2x1x16x16xf32> to vector<2x16x16xf32>
    %c24 = arith.constant 24 : index
    %814 = memref.load %arg2[%c24] : memref<288xf32, #tpu.memory_space<smem>>
    %815 = vector.broadcast %814 : f32 to vector<2x16x16xf32>
    %816 = arith.mulf %815, %813 : vector<2x16x16xf32>
    %817 = arith.addf %783, %816 : vector<2x16x16xf32>
    %c60 = arith.constant 60 : index
    %818 = memref.load %arg2[%c60] : memref<288xf32, #tpu.memory_space<smem>>
    %819 = vector.broadcast %818 : f32 to vector<2x16x16xf32>
    %820 = arith.mulf %819, %813 : vector<2x16x16xf32>
    %821 = arith.addf %787, %820 : vector<2x16x16xf32>
    %c96 = arith.constant 96 : index
    %822 = memref.load %arg2[%c96] : memref<288xf32, #tpu.memory_space<smem>>
    %823 = vector.broadcast %822 : f32 to vector<2x16x16xf32>
    %824 = arith.mulf %823, %813 : vector<2x16x16xf32>
    %825 = arith.addf %791, %824 : vector<2x16x16xf32>
    %c132 = arith.constant 132 : index
    %826 = memref.load %arg2[%c132] : memref<288xf32, #tpu.memory_space<smem>>
    %827 = vector.broadcast %826 : f32 to vector<2x16x16xf32>
    %828 = arith.mulf %827, %813 : vector<2x16x16xf32>
    %829 = arith.addf %795, %828 : vector<2x16x16xf32>
    %c168 = arith.constant 168 : index
    %830 = memref.load %arg2[%c168] : memref<288xf32, #tpu.memory_space<smem>>
    %831 = vector.broadcast %830 : f32 to vector<2x16x16xf32>
    %832 = arith.mulf %831, %813 : vector<2x16x16xf32>
    %833 = arith.addf %799, %832 : vector<2x16x16xf32>
    %c204 = arith.constant 204 : index
    %834 = memref.load %arg2[%c204] : memref<288xf32, #tpu.memory_space<smem>>
    %835 = vector.broadcast %834 : f32 to vector<2x16x16xf32>
    %836 = arith.mulf %835, %813 : vector<2x16x16xf32>
    %837 = arith.addf %803, %836 : vector<2x16x16xf32>
    %c240 = arith.constant 240 : index
    %838 = memref.load %arg2[%c240] : memref<288xf32, #tpu.memory_space<smem>>
    %839 = vector.broadcast %838 : f32 to vector<2x16x16xf32>
    %840 = arith.mulf %839, %813 : vector<2x16x16xf32>
    %841 = arith.addf %807, %840 : vector<2x16x16xf32>
    %c276 = arith.constant 276 : index
    %842 = memref.load %arg2[%c276] : memref<288xf32, #tpu.memory_space<smem>>
    %843 = vector.broadcast %842 : f32 to vector<2x16x16xf32>
    %844 = arith.mulf %843, %813 : vector<2x16x16xf32>
    %845 = arith.addf %811, %844 : vector<2x16x16xf32>
    %c0_112 = arith.constant 0 : index
    %c2_113 = arith.constant 2 : index
    %c2_114 = arith.constant 2 : index
    %c1_115 = arith.constant 1 : index
    %846 = vector.load %arg6[%c0_112, %c2_113, %c2_114, %c1_115] : memref<2x4x18x18xf32, #tpu.memory_space<vmem>>, vector<2x1x16x16xf32>
    %847 = vector.shape_cast %846 : vector<2x1x16x16xf32> to vector<2x16x16xf32>
    %c25 = arith.constant 25 : index
    %848 = memref.load %arg2[%c25] : memref<288xf32, #tpu.memory_space<smem>>
    %849 = vector.broadcast %848 : f32 to vector<2x16x16xf32>
    %850 = arith.mulf %849, %847 : vector<2x16x16xf32>
    %851 = arith.addf %817, %850 : vector<2x16x16xf32>
    %c61 = arith.constant 61 : index
    %852 = memref.load %arg2[%c61] : memref<288xf32, #tpu.memory_space<smem>>
    %853 = vector.broadcast %852 : f32 to vector<2x16x16xf32>
    %854 = arith.mulf %853, %847 : vector<2x16x16xf32>
    %855 = arith.addf %821, %854 : vector<2x16x16xf32>
    %c97 = arith.constant 97 : index
    %856 = memref.load %arg2[%c97] : memref<288xf32, #tpu.memory_space<smem>>
    %857 = vector.broadcast %856 : f32 to vector<2x16x16xf32>
    %858 = arith.mulf %857, %847 : vector<2x16x16xf32>
    %859 = arith.addf %825, %858 : vector<2x16x16xf32>
    %c133 = arith.constant 133 : index
    %860 = memref.load %arg2[%c133] : memref<288xf32, #tpu.memory_space<smem>>
    %861 = vector.broadcast %860 : f32 to vector<2x16x16xf32>
    %862 = arith.mulf %861, %847 : vector<2x16x16xf32>
    %863 = arith.addf %829, %862 : vector<2x16x16xf32>
    %c169 = arith.constant 169 : index
    %864 = memref.load %arg2[%c169] : memref<288xf32, #tpu.memory_space<smem>>
    %865 = vector.broadcast %864 : f32 to vector<2x16x16xf32>
    %866 = arith.mulf %865, %847 : vector<2x16x16xf32>
    %867 = arith.addf %833, %866 : vector<2x16x16xf32>
    %c205 = arith.constant 205 : index
    %868 = memref.load %arg2[%c205] : memref<288xf32, #tpu.memory_space<smem>>
    %869 = vector.broadcast %868 : f32 to vector<2x16x16xf32>
    %870 = arith.mulf %869, %847 : vector<2x16x16xf32>
    %871 = arith.addf %837, %870 : vector<2x16x16xf32>
    %c241 = arith.constant 241 : index
    %872 = memref.load %arg2[%c241] : memref<288xf32, #tpu.memory_space<smem>>
    %873 = vector.broadcast %872 : f32 to vector<2x16x16xf32>
    %874 = arith.mulf %873, %847 : vector<2x16x16xf32>
    %875 = arith.addf %841, %874 : vector<2x16x16xf32>
    %c277 = arith.constant 277 : index
    %876 = memref.load %arg2[%c277] : memref<288xf32, #tpu.memory_space<smem>>
    %877 = vector.broadcast %876 : f32 to vector<2x16x16xf32>
    %878 = arith.mulf %877, %847 : vector<2x16x16xf32>
    %879 = arith.addf %845, %878 : vector<2x16x16xf32>
    %c0_116 = arith.constant 0 : index
    %c2_117 = arith.constant 2 : index
    %c2_118 = arith.constant 2 : index
    %c2_119 = arith.constant 2 : index
    %880 = vector.load %arg6[%c0_116, %c2_117, %c2_118, %c2_119] : memref<2x4x18x18xf32, #tpu.memory_space<vmem>>, vector<2x1x16x16xf32>
    %881 = vector.shape_cast %880 : vector<2x1x16x16xf32> to vector<2x16x16xf32>
    %c26 = arith.constant 26 : index
    %882 = memref.load %arg2[%c26] : memref<288xf32, #tpu.memory_space<smem>>
    %883 = vector.broadcast %882 : f32 to vector<2x16x16xf32>
    %884 = arith.mulf %883, %881 : vector<2x16x16xf32>
    %885 = arith.addf %851, %884 : vector<2x16x16xf32>
    %c62 = arith.constant 62 : index
    %886 = memref.load %arg2[%c62] : memref<288xf32, #tpu.memory_space<smem>>
    %887 = vector.broadcast %886 : f32 to vector<2x16x16xf32>
    %888 = arith.mulf %887, %881 : vector<2x16x16xf32>
    %889 = arith.addf %855, %888 : vector<2x16x16xf32>
    %c98 = arith.constant 98 : index
    %890 = memref.load %arg2[%c98] : memref<288xf32, #tpu.memory_space<smem>>
    %891 = vector.broadcast %890 : f32 to vector<2x16x16xf32>
    %892 = arith.mulf %891, %881 : vector<2x16x16xf32>
    %893 = arith.addf %859, %892 : vector<2x16x16xf32>
    %c134 = arith.constant 134 : index
    %894 = memref.load %arg2[%c134] : memref<288xf32, #tpu.memory_space<smem>>
    %895 = vector.broadcast %894 : f32 to vector<2x16x16xf32>
    %896 = arith.mulf %895, %881 : vector<2x16x16xf32>
    %897 = arith.addf %863, %896 : vector<2x16x16xf32>
    %c170 = arith.constant 170 : index
    %898 = memref.load %arg2[%c170] : memref<288xf32, #tpu.memory_space<smem>>
    %899 = vector.broadcast %898 : f32 to vector<2x16x16xf32>
    %900 = arith.mulf %899, %881 : vector<2x16x16xf32>
    %901 = arith.addf %867, %900 : vector<2x16x16xf32>
    %c206 = arith.constant 206 : index
    %902 = memref.load %arg2[%c206] : memref<288xf32, #tpu.memory_space<smem>>
    %903 = vector.broadcast %902 : f32 to vector<2x16x16xf32>
    %904 = arith.mulf %903, %881 : vector<2x16x16xf32>
    %905 = arith.addf %871, %904 : vector<2x16x16xf32>
    %c242 = arith.constant 242 : index
    %906 = memref.load %arg2[%c242] : memref<288xf32, #tpu.memory_space<smem>>
    %907 = vector.broadcast %906 : f32 to vector<2x16x16xf32>
    %908 = arith.mulf %907, %881 : vector<2x16x16xf32>
    %909 = arith.addf %875, %908 : vector<2x16x16xf32>
    %c278 = arith.constant 278 : index
    %910 = memref.load %arg2[%c278] : memref<288xf32, #tpu.memory_space<smem>>
    %911 = vector.broadcast %910 : f32 to vector<2x16x16xf32>
    %912 = arith.mulf %911, %881 : vector<2x16x16xf32>
    %913 = arith.addf %879, %912 : vector<2x16x16xf32>
    %c0_120 = arith.constant 0 : index
    %c3_121 = arith.constant 3 : index
    %c0_122 = arith.constant 0 : index
    %c0_123 = arith.constant 0 : index
    %914 = vector.load %arg6[%c0_120, %c3_121, %c0_122, %c0_123] : memref<2x4x18x18xf32, #tpu.memory_space<vmem>>, vector<2x1x16x16xf32>
    %915 = vector.shape_cast %914 : vector<2x1x16x16xf32> to vector<2x16x16xf32>
    %c27 = arith.constant 27 : index
    %916 = memref.load %arg2[%c27] : memref<288xf32, #tpu.memory_space<smem>>
    %917 = vector.broadcast %916 : f32 to vector<2x16x16xf32>
    %918 = arith.mulf %917, %915 : vector<2x16x16xf32>
    %919 = arith.addf %885, %918 : vector<2x16x16xf32>
    %c63 = arith.constant 63 : index
    %920 = memref.load %arg2[%c63] : memref<288xf32, #tpu.memory_space<smem>>
    %921 = vector.broadcast %920 : f32 to vector<2x16x16xf32>
    %922 = arith.mulf %921, %915 : vector<2x16x16xf32>
    %923 = arith.addf %889, %922 : vector<2x16x16xf32>
    %c99 = arith.constant 99 : index
    %924 = memref.load %arg2[%c99] : memref<288xf32, #tpu.memory_space<smem>>
    %925 = vector.broadcast %924 : f32 to vector<2x16x16xf32>
    %926 = arith.mulf %925, %915 : vector<2x16x16xf32>
    %927 = arith.addf %893, %926 : vector<2x16x16xf32>
    %c135 = arith.constant 135 : index
    %928 = memref.load %arg2[%c135] : memref<288xf32, #tpu.memory_space<smem>>
    %929 = vector.broadcast %928 : f32 to vector<2x16x16xf32>
    %930 = arith.mulf %929, %915 : vector<2x16x16xf32>
    %931 = arith.addf %897, %930 : vector<2x16x16xf32>
    %c171 = arith.constant 171 : index
    %932 = memref.load %arg2[%c171] : memref<288xf32, #tpu.memory_space<smem>>
    %933 = vector.broadcast %932 : f32 to vector<2x16x16xf32>
    %934 = arith.mulf %933, %915 : vector<2x16x16xf32>
    %935 = arith.addf %901, %934 : vector<2x16x16xf32>
    %c207 = arith.constant 207 : index
    %936 = memref.load %arg2[%c207] : memref<288xf32, #tpu.memory_space<smem>>
    %937 = vector.broadcast %936 : f32 to vector<2x16x16xf32>
    %938 = arith.mulf %937, %915 : vector<2x16x16xf32>
    %939 = arith.addf %905, %938 : vector<2x16x16xf32>
    %c243 = arith.constant 243 : index
    %940 = memref.load %arg2[%c243] : memref<288xf32, #tpu.memory_space<smem>>
    %941 = vector.broadcast %940 : f32 to vector<2x16x16xf32>
    %942 = arith.mulf %941, %915 : vector<2x16x16xf32>
    %943 = arith.addf %909, %942 : vector<2x16x16xf32>
    %c279 = arith.constant 279 : index
    %944 = memref.load %arg2[%c279] : memref<288xf32, #tpu.memory_space<smem>>
    %945 = vector.broadcast %944 : f32 to vector<2x16x16xf32>
    %946 = arith.mulf %945, %915 : vector<2x16x16xf32>
    %947 = arith.addf %913, %946 : vector<2x16x16xf32>
    %c0_124 = arith.constant 0 : index
    %c3_125 = arith.constant 3 : index
    %c0_126 = arith.constant 0 : index
    %c1_127 = arith.constant 1 : index
    %948 = vector.load %arg6[%c0_124, %c3_125, %c0_126, %c1_127] : memref<2x4x18x18xf32, #tpu.memory_space<vmem>>, vector<2x1x16x16xf32>
    %949 = vector.shape_cast %948 : vector<2x1x16x16xf32> to vector<2x16x16xf32>
    %c28 = arith.constant 28 : index
    %950 = memref.load %arg2[%c28] : memref<288xf32, #tpu.memory_space<smem>>
    %951 = vector.broadcast %950 : f32 to vector<2x16x16xf32>
    %952 = arith.mulf %951, %949 : vector<2x16x16xf32>
    %953 = arith.addf %919, %952 : vector<2x16x16xf32>
    %c64 = arith.constant 64 : index
    %954 = memref.load %arg2[%c64] : memref<288xf32, #tpu.memory_space<smem>>
    %955 = vector.broadcast %954 : f32 to vector<2x16x16xf32>
    %956 = arith.mulf %955, %949 : vector<2x16x16xf32>
    %957 = arith.addf %923, %956 : vector<2x16x16xf32>
    %c100 = arith.constant 100 : index
    %958 = memref.load %arg2[%c100] : memref<288xf32, #tpu.memory_space<smem>>
    %959 = vector.broadcast %958 : f32 to vector<2x16x16xf32>
    %960 = arith.mulf %959, %949 : vector<2x16x16xf32>
    %961 = arith.addf %927, %960 : vector<2x16x16xf32>
    %c136 = arith.constant 136 : index
    %962 = memref.load %arg2[%c136] : memref<288xf32, #tpu.memory_space<smem>>
    %963 = vector.broadcast %962 : f32 to vector<2x16x16xf32>
    %964 = arith.mulf %963, %949 : vector<2x16x16xf32>
    %965 = arith.addf %931, %964 : vector<2x16x16xf32>
    %c172 = arith.constant 172 : index
    %966 = memref.load %arg2[%c172] : memref<288xf32, #tpu.memory_space<smem>>
    %967 = vector.broadcast %966 : f32 to vector<2x16x16xf32>
    %968 = arith.mulf %967, %949 : vector<2x16x16xf32>
    %969 = arith.addf %935, %968 : vector<2x16x16xf32>
    %c208 = arith.constant 208 : index
    %970 = memref.load %arg2[%c208] : memref<288xf32, #tpu.memory_space<smem>>
    %971 = vector.broadcast %970 : f32 to vector<2x16x16xf32>
    %972 = arith.mulf %971, %949 : vector<2x16x16xf32>
    %973 = arith.addf %939, %972 : vector<2x16x16xf32>
    %c244 = arith.constant 244 : index
    %974 = memref.load %arg2[%c244] : memref<288xf32, #tpu.memory_space<smem>>
    %975 = vector.broadcast %974 : f32 to vector<2x16x16xf32>
    %976 = arith.mulf %975, %949 : vector<2x16x16xf32>
    %977 = arith.addf %943, %976 : vector<2x16x16xf32>
    %c280 = arith.constant 280 : index
    %978 = memref.load %arg2[%c280] : memref<288xf32, #tpu.memory_space<smem>>
    %979 = vector.broadcast %978 : f32 to vector<2x16x16xf32>
    %980 = arith.mulf %979, %949 : vector<2x16x16xf32>
    %981 = arith.addf %947, %980 : vector<2x16x16xf32>
    %c0_128 = arith.constant 0 : index
    %c3_129 = arith.constant 3 : index
    %c0_130 = arith.constant 0 : index
    %c2_131 = arith.constant 2 : index
    %982 = vector.load %arg6[%c0_128, %c3_129, %c0_130, %c2_131] : memref<2x4x18x18xf32, #tpu.memory_space<vmem>>, vector<2x1x16x16xf32>
    %983 = vector.shape_cast %982 : vector<2x1x16x16xf32> to vector<2x16x16xf32>
    %c29 = arith.constant 29 : index
    %984 = memref.load %arg2[%c29] : memref<288xf32, #tpu.memory_space<smem>>
    %985 = vector.broadcast %984 : f32 to vector<2x16x16xf32>
    %986 = arith.mulf %985, %983 : vector<2x16x16xf32>
    %987 = arith.addf %953, %986 : vector<2x16x16xf32>
    %c65 = arith.constant 65 : index
    %988 = memref.load %arg2[%c65] : memref<288xf32, #tpu.memory_space<smem>>
    %989 = vector.broadcast %988 : f32 to vector<2x16x16xf32>
    %990 = arith.mulf %989, %983 : vector<2x16x16xf32>
    %991 = arith.addf %957, %990 : vector<2x16x16xf32>
    %c101 = arith.constant 101 : index
    %992 = memref.load %arg2[%c101] : memref<288xf32, #tpu.memory_space<smem>>
    %993 = vector.broadcast %992 : f32 to vector<2x16x16xf32>
    %994 = arith.mulf %993, %983 : vector<2x16x16xf32>
    %995 = arith.addf %961, %994 : vector<2x16x16xf32>
    %c137 = arith.constant 137 : index
    %996 = memref.load %arg2[%c137] : memref<288xf32, #tpu.memory_space<smem>>
    %997 = vector.broadcast %996 : f32 to vector<2x16x16xf32>
    %998 = arith.mulf %997, %983 : vector<2x16x16xf32>
    %999 = arith.addf %965, %998 : vector<2x16x16xf32>
    %c173 = arith.constant 173 : index
    %1000 = memref.load %arg2[%c173] : memref<288xf32, #tpu.memory_space<smem>>
    %1001 = vector.broadcast %1000 : f32 to vector<2x16x16xf32>
    %1002 = arith.mulf %1001, %983 : vector<2x16x16xf32>
    %1003 = arith.addf %969, %1002 : vector<2x16x16xf32>
    %c209 = arith.constant 209 : index
    %1004 = memref.load %arg2[%c209] : memref<288xf32, #tpu.memory_space<smem>>
    %1005 = vector.broadcast %1004 : f32 to vector<2x16x16xf32>
    %1006 = arith.mulf %1005, %983 : vector<2x16x16xf32>
    %1007 = arith.addf %973, %1006 : vector<2x16x16xf32>
    %c245 = arith.constant 245 : index
    %1008 = memref.load %arg2[%c245] : memref<288xf32, #tpu.memory_space<smem>>
    %1009 = vector.broadcast %1008 : f32 to vector<2x16x16xf32>
    %1010 = arith.mulf %1009, %983 : vector<2x16x16xf32>
    %1011 = arith.addf %977, %1010 : vector<2x16x16xf32>
    %c281 = arith.constant 281 : index
    %1012 = memref.load %arg2[%c281] : memref<288xf32, #tpu.memory_space<smem>>
    %1013 = vector.broadcast %1012 : f32 to vector<2x16x16xf32>
    %1014 = arith.mulf %1013, %983 : vector<2x16x16xf32>
    %1015 = arith.addf %981, %1014 : vector<2x16x16xf32>
    %c0_132 = arith.constant 0 : index
    %c3_133 = arith.constant 3 : index
    %c1_134 = arith.constant 1 : index
    %c0_135 = arith.constant 0 : index
    %1016 = vector.load %arg6[%c0_132, %c3_133, %c1_134, %c0_135] : memref<2x4x18x18xf32, #tpu.memory_space<vmem>>, vector<2x1x16x16xf32>
    %1017 = vector.shape_cast %1016 : vector<2x1x16x16xf32> to vector<2x16x16xf32>
    %c30 = arith.constant 30 : index
    %1018 = memref.load %arg2[%c30] : memref<288xf32, #tpu.memory_space<smem>>
    %1019 = vector.broadcast %1018 : f32 to vector<2x16x16xf32>
    %1020 = arith.mulf %1019, %1017 : vector<2x16x16xf32>
    %1021 = arith.addf %987, %1020 : vector<2x16x16xf32>
    %c66 = arith.constant 66 : index
    %1022 = memref.load %arg2[%c66] : memref<288xf32, #tpu.memory_space<smem>>
    %1023 = vector.broadcast %1022 : f32 to vector<2x16x16xf32>
    %1024 = arith.mulf %1023, %1017 : vector<2x16x16xf32>
    %1025 = arith.addf %991, %1024 : vector<2x16x16xf32>
    %c102 = arith.constant 102 : index
    %1026 = memref.load %arg2[%c102] : memref<288xf32, #tpu.memory_space<smem>>
    %1027 = vector.broadcast %1026 : f32 to vector<2x16x16xf32>
    %1028 = arith.mulf %1027, %1017 : vector<2x16x16xf32>
    %1029 = arith.addf %995, %1028 : vector<2x16x16xf32>
    %c138 = arith.constant 138 : index
    %1030 = memref.load %arg2[%c138] : memref<288xf32, #tpu.memory_space<smem>>
    %1031 = vector.broadcast %1030 : f32 to vector<2x16x16xf32>
    %1032 = arith.mulf %1031, %1017 : vector<2x16x16xf32>
    %1033 = arith.addf %999, %1032 : vector<2x16x16xf32>
    %c174 = arith.constant 174 : index
    %1034 = memref.load %arg2[%c174] : memref<288xf32, #tpu.memory_space<smem>>
    %1035 = vector.broadcast %1034 : f32 to vector<2x16x16xf32>
    %1036 = arith.mulf %1035, %1017 : vector<2x16x16xf32>
    %1037 = arith.addf %1003, %1036 : vector<2x16x16xf32>
    %c210 = arith.constant 210 : index
    %1038 = memref.load %arg2[%c210] : memref<288xf32, #tpu.memory_space<smem>>
    %1039 = vector.broadcast %1038 : f32 to vector<2x16x16xf32>
    %1040 = arith.mulf %1039, %1017 : vector<2x16x16xf32>
    %1041 = arith.addf %1007, %1040 : vector<2x16x16xf32>
    %c246 = arith.constant 246 : index
    %1042 = memref.load %arg2[%c246] : memref<288xf32, #tpu.memory_space<smem>>
    %1043 = vector.broadcast %1042 : f32 to vector<2x16x16xf32>
    %1044 = arith.mulf %1043, %1017 : vector<2x16x16xf32>
    %1045 = arith.addf %1011, %1044 : vector<2x16x16xf32>
    %c282 = arith.constant 282 : index
    %1046 = memref.load %arg2[%c282] : memref<288xf32, #tpu.memory_space<smem>>
    %1047 = vector.broadcast %1046 : f32 to vector<2x16x16xf32>
    %1048 = arith.mulf %1047, %1017 : vector<2x16x16xf32>
    %1049 = arith.addf %1015, %1048 : vector<2x16x16xf32>
    %c0_136 = arith.constant 0 : index
    %c3_137 = arith.constant 3 : index
    %c1_138 = arith.constant 1 : index
    %c1_139 = arith.constant 1 : index
    %1050 = vector.load %arg6[%c0_136, %c3_137, %c1_138, %c1_139] : memref<2x4x18x18xf32, #tpu.memory_space<vmem>>, vector<2x1x16x16xf32>
    %1051 = vector.shape_cast %1050 : vector<2x1x16x16xf32> to vector<2x16x16xf32>
    %c31 = arith.constant 31 : index
    %1052 = memref.load %arg2[%c31] : memref<288xf32, #tpu.memory_space<smem>>
    %1053 = vector.broadcast %1052 : f32 to vector<2x16x16xf32>
    %1054 = arith.mulf %1053, %1051 : vector<2x16x16xf32>
    %1055 = arith.addf %1021, %1054 : vector<2x16x16xf32>
    %c67 = arith.constant 67 : index
    %1056 = memref.load %arg2[%c67] : memref<288xf32, #tpu.memory_space<smem>>
    %1057 = vector.broadcast %1056 : f32 to vector<2x16x16xf32>
    %1058 = arith.mulf %1057, %1051 : vector<2x16x16xf32>
    %1059 = arith.addf %1025, %1058 : vector<2x16x16xf32>
    %c103 = arith.constant 103 : index
    %1060 = memref.load %arg2[%c103] : memref<288xf32, #tpu.memory_space<smem>>
    %1061 = vector.broadcast %1060 : f32 to vector<2x16x16xf32>
    %1062 = arith.mulf %1061, %1051 : vector<2x16x16xf32>
    %1063 = arith.addf %1029, %1062 : vector<2x16x16xf32>
    %c139 = arith.constant 139 : index
    %1064 = memref.load %arg2[%c139] : memref<288xf32, #tpu.memory_space<smem>>
    %1065 = vector.broadcast %1064 : f32 to vector<2x16x16xf32>
    %1066 = arith.mulf %1065, %1051 : vector<2x16x16xf32>
    %1067 = arith.addf %1033, %1066 : vector<2x16x16xf32>
    %c175 = arith.constant 175 : index
    %1068 = memref.load %arg2[%c175] : memref<288xf32, #tpu.memory_space<smem>>
    %1069 = vector.broadcast %1068 : f32 to vector<2x16x16xf32>
    %1070 = arith.mulf %1069, %1051 : vector<2x16x16xf32>
    %1071 = arith.addf %1037, %1070 : vector<2x16x16xf32>
    %c211 = arith.constant 211 : index
    %1072 = memref.load %arg2[%c211] : memref<288xf32, #tpu.memory_space<smem>>
    %1073 = vector.broadcast %1072 : f32 to vector<2x16x16xf32>
    %1074 = arith.mulf %1073, %1051 : vector<2x16x16xf32>
    %1075 = arith.addf %1041, %1074 : vector<2x16x16xf32>
    %c247 = arith.constant 247 : index
    %1076 = memref.load %arg2[%c247] : memref<288xf32, #tpu.memory_space<smem>>
    %1077 = vector.broadcast %1076 : f32 to vector<2x16x16xf32>
    %1078 = arith.mulf %1077, %1051 : vector<2x16x16xf32>
    %1079 = arith.addf %1045, %1078 : vector<2x16x16xf32>
    %c283 = arith.constant 283 : index
    %1080 = memref.load %arg2[%c283] : memref<288xf32, #tpu.memory_space<smem>>
    %1081 = vector.broadcast %1080 : f32 to vector<2x16x16xf32>
    %1082 = arith.mulf %1081, %1051 : vector<2x16x16xf32>
    %1083 = arith.addf %1049, %1082 : vector<2x16x16xf32>
    %c0_140 = arith.constant 0 : index
    %c3_141 = arith.constant 3 : index
    %c1_142 = arith.constant 1 : index
    %c2_143 = arith.constant 2 : index
    %1084 = vector.load %arg6[%c0_140, %c3_141, %c1_142, %c2_143] : memref<2x4x18x18xf32, #tpu.memory_space<vmem>>, vector<2x1x16x16xf32>
    %1085 = vector.shape_cast %1084 : vector<2x1x16x16xf32> to vector<2x16x16xf32>
    %c32 = arith.constant 32 : index
    %1086 = memref.load %arg2[%c32] : memref<288xf32, #tpu.memory_space<smem>>
    %1087 = vector.broadcast %1086 : f32 to vector<2x16x16xf32>
    %1088 = arith.mulf %1087, %1085 : vector<2x16x16xf32>
    %1089 = arith.addf %1055, %1088 : vector<2x16x16xf32>
    %c68 = arith.constant 68 : index
    %1090 = memref.load %arg2[%c68] : memref<288xf32, #tpu.memory_space<smem>>
    %1091 = vector.broadcast %1090 : f32 to vector<2x16x16xf32>
    %1092 = arith.mulf %1091, %1085 : vector<2x16x16xf32>
    %1093 = arith.addf %1059, %1092 : vector<2x16x16xf32>
    %c104 = arith.constant 104 : index
    %1094 = memref.load %arg2[%c104] : memref<288xf32, #tpu.memory_space<smem>>
    %1095 = vector.broadcast %1094 : f32 to vector<2x16x16xf32>
    %1096 = arith.mulf %1095, %1085 : vector<2x16x16xf32>
    %1097 = arith.addf %1063, %1096 : vector<2x16x16xf32>
    %c140 = arith.constant 140 : index
    %1098 = memref.load %arg2[%c140] : memref<288xf32, #tpu.memory_space<smem>>
    %1099 = vector.broadcast %1098 : f32 to vector<2x16x16xf32>
    %1100 = arith.mulf %1099, %1085 : vector<2x16x16xf32>
    %1101 = arith.addf %1067, %1100 : vector<2x16x16xf32>
    %c176 = arith.constant 176 : index
    %1102 = memref.load %arg2[%c176] : memref<288xf32, #tpu.memory_space<smem>>
    %1103 = vector.broadcast %1102 : f32 to vector<2x16x16xf32>
    %1104 = arith.mulf %1103, %1085 : vector<2x16x16xf32>
    %1105 = arith.addf %1071, %1104 : vector<2x16x16xf32>
    %c212 = arith.constant 212 : index
    %1106 = memref.load %arg2[%c212] : memref<288xf32, #tpu.memory_space<smem>>
    %1107 = vector.broadcast %1106 : f32 to vector<2x16x16xf32>
    %1108 = arith.mulf %1107, %1085 : vector<2x16x16xf32>
    %1109 = arith.addf %1075, %1108 : vector<2x16x16xf32>
    %c248 = arith.constant 248 : index
    %1110 = memref.load %arg2[%c248] : memref<288xf32, #tpu.memory_space<smem>>
    %1111 = vector.broadcast %1110 : f32 to vector<2x16x16xf32>
    %1112 = arith.mulf %1111, %1085 : vector<2x16x16xf32>
    %1113 = arith.addf %1079, %1112 : vector<2x16x16xf32>
    %c284 = arith.constant 284 : index
    %1114 = memref.load %arg2[%c284] : memref<288xf32, #tpu.memory_space<smem>>
    %1115 = vector.broadcast %1114 : f32 to vector<2x16x16xf32>
    %1116 = arith.mulf %1115, %1085 : vector<2x16x16xf32>
    %1117 = arith.addf %1083, %1116 : vector<2x16x16xf32>
    %c0_144 = arith.constant 0 : index
    %c3_145 = arith.constant 3 : index
    %c2_146 = arith.constant 2 : index
    %c0_147 = arith.constant 0 : index
    %1118 = vector.load %arg6[%c0_144, %c3_145, %c2_146, %c0_147] : memref<2x4x18x18xf32, #tpu.memory_space<vmem>>, vector<2x1x16x16xf32>
    %1119 = vector.shape_cast %1118 : vector<2x1x16x16xf32> to vector<2x16x16xf32>
    %c33 = arith.constant 33 : index
    %1120 = memref.load %arg2[%c33] : memref<288xf32, #tpu.memory_space<smem>>
    %1121 = vector.broadcast %1120 : f32 to vector<2x16x16xf32>
    %1122 = arith.mulf %1121, %1119 : vector<2x16x16xf32>
    %1123 = arith.addf %1089, %1122 : vector<2x16x16xf32>
    %c69 = arith.constant 69 : index
    %1124 = memref.load %arg2[%c69] : memref<288xf32, #tpu.memory_space<smem>>
    %1125 = vector.broadcast %1124 : f32 to vector<2x16x16xf32>
    %1126 = arith.mulf %1125, %1119 : vector<2x16x16xf32>
    %1127 = arith.addf %1093, %1126 : vector<2x16x16xf32>
    %c105 = arith.constant 105 : index
    %1128 = memref.load %arg2[%c105] : memref<288xf32, #tpu.memory_space<smem>>
    %1129 = vector.broadcast %1128 : f32 to vector<2x16x16xf32>
    %1130 = arith.mulf %1129, %1119 : vector<2x16x16xf32>
    %1131 = arith.addf %1097, %1130 : vector<2x16x16xf32>
    %c141 = arith.constant 141 : index
    %1132 = memref.load %arg2[%c141] : memref<288xf32, #tpu.memory_space<smem>>
    %1133 = vector.broadcast %1132 : f32 to vector<2x16x16xf32>
    %1134 = arith.mulf %1133, %1119 : vector<2x16x16xf32>
    %1135 = arith.addf %1101, %1134 : vector<2x16x16xf32>
    %c177 = arith.constant 177 : index
    %1136 = memref.load %arg2[%c177] : memref<288xf32, #tpu.memory_space<smem>>
    %1137 = vector.broadcast %1136 : f32 to vector<2x16x16xf32>
    %1138 = arith.mulf %1137, %1119 : vector<2x16x16xf32>
    %1139 = arith.addf %1105, %1138 : vector<2x16x16xf32>
    %c213 = arith.constant 213 : index
    %1140 = memref.load %arg2[%c213] : memref<288xf32, #tpu.memory_space<smem>>
    %1141 = vector.broadcast %1140 : f32 to vector<2x16x16xf32>
    %1142 = arith.mulf %1141, %1119 : vector<2x16x16xf32>
    %1143 = arith.addf %1109, %1142 : vector<2x16x16xf32>
    %c249 = arith.constant 249 : index
    %1144 = memref.load %arg2[%c249] : memref<288xf32, #tpu.memory_space<smem>>
    %1145 = vector.broadcast %1144 : f32 to vector<2x16x16xf32>
    %1146 = arith.mulf %1145, %1119 : vector<2x16x16xf32>
    %1147 = arith.addf %1113, %1146 : vector<2x16x16xf32>
    %c285 = arith.constant 285 : index
    %1148 = memref.load %arg2[%c285] : memref<288xf32, #tpu.memory_space<smem>>
    %1149 = vector.broadcast %1148 : f32 to vector<2x16x16xf32>
    %1150 = arith.mulf %1149, %1119 : vector<2x16x16xf32>
    %1151 = arith.addf %1117, %1150 : vector<2x16x16xf32>
    %c0_148 = arith.constant 0 : index
    %c3_149 = arith.constant 3 : index
    %c2_150 = arith.constant 2 : index
    %c1_151 = arith.constant 1 : index
    %1152 = vector.load %arg6[%c0_148, %c3_149, %c2_150, %c1_151] : memref<2x4x18x18xf32, #tpu.memory_space<vmem>>, vector<2x1x16x16xf32>
    %1153 = vector.shape_cast %1152 : vector<2x1x16x16xf32> to vector<2x16x16xf32>
    %c34 = arith.constant 34 : index
    %1154 = memref.load %arg2[%c34] : memref<288xf32, #tpu.memory_space<smem>>
    %1155 = vector.broadcast %1154 : f32 to vector<2x16x16xf32>
    %1156 = arith.mulf %1155, %1153 : vector<2x16x16xf32>
    %1157 = arith.addf %1123, %1156 : vector<2x16x16xf32>
    %c70 = arith.constant 70 : index
    %1158 = memref.load %arg2[%c70] : memref<288xf32, #tpu.memory_space<smem>>
    %1159 = vector.broadcast %1158 : f32 to vector<2x16x16xf32>
    %1160 = arith.mulf %1159, %1153 : vector<2x16x16xf32>
    %1161 = arith.addf %1127, %1160 : vector<2x16x16xf32>
    %c106 = arith.constant 106 : index
    %1162 = memref.load %arg2[%c106] : memref<288xf32, #tpu.memory_space<smem>>
    %1163 = vector.broadcast %1162 : f32 to vector<2x16x16xf32>
    %1164 = arith.mulf %1163, %1153 : vector<2x16x16xf32>
    %1165 = arith.addf %1131, %1164 : vector<2x16x16xf32>
    %c142 = arith.constant 142 : index
    %1166 = memref.load %arg2[%c142] : memref<288xf32, #tpu.memory_space<smem>>
    %1167 = vector.broadcast %1166 : f32 to vector<2x16x16xf32>
    %1168 = arith.mulf %1167, %1153 : vector<2x16x16xf32>
    %1169 = arith.addf %1135, %1168 : vector<2x16x16xf32>
    %c178 = arith.constant 178 : index
    %1170 = memref.load %arg2[%c178] : memref<288xf32, #tpu.memory_space<smem>>
    %1171 = vector.broadcast %1170 : f32 to vector<2x16x16xf32>
    %1172 = arith.mulf %1171, %1153 : vector<2x16x16xf32>
    %1173 = arith.addf %1139, %1172 : vector<2x16x16xf32>
    %c214 = arith.constant 214 : index
    %1174 = memref.load %arg2[%c214] : memref<288xf32, #tpu.memory_space<smem>>
    %1175 = vector.broadcast %1174 : f32 to vector<2x16x16xf32>
    %1176 = arith.mulf %1175, %1153 : vector<2x16x16xf32>
    %1177 = arith.addf %1143, %1176 : vector<2x16x16xf32>
    %c250 = arith.constant 250 : index
    %1178 = memref.load %arg2[%c250] : memref<288xf32, #tpu.memory_space<smem>>
    %1179 = vector.broadcast %1178 : f32 to vector<2x16x16xf32>
    %1180 = arith.mulf %1179, %1153 : vector<2x16x16xf32>
    %1181 = arith.addf %1147, %1180 : vector<2x16x16xf32>
    %c286 = arith.constant 286 : index
    %1182 = memref.load %arg2[%c286] : memref<288xf32, #tpu.memory_space<smem>>
    %1183 = vector.broadcast %1182 : f32 to vector<2x16x16xf32>
    %1184 = arith.mulf %1183, %1153 : vector<2x16x16xf32>
    %1185 = arith.addf %1151, %1184 : vector<2x16x16xf32>
    %c0_152 = arith.constant 0 : index
    %c3_153 = arith.constant 3 : index
    %c2_154 = arith.constant 2 : index
    %c2_155 = arith.constant 2 : index
    %1186 = vector.load %arg6[%c0_152, %c3_153, %c2_154, %c2_155] : memref<2x4x18x18xf32, #tpu.memory_space<vmem>>, vector<2x1x16x16xf32>
    %1187 = vector.shape_cast %1186 : vector<2x1x16x16xf32> to vector<2x16x16xf32>
    %c35 = arith.constant 35 : index
    %1188 = memref.load %arg2[%c35] : memref<288xf32, #tpu.memory_space<smem>>
    %1189 = vector.broadcast %1188 : f32 to vector<2x16x16xf32>
    %1190 = arith.mulf %1189, %1187 : vector<2x16x16xf32>
    %1191 = arith.addf %1157, %1190 : vector<2x16x16xf32>
    %c71 = arith.constant 71 : index
    %1192 = memref.load %arg2[%c71] : memref<288xf32, #tpu.memory_space<smem>>
    %1193 = vector.broadcast %1192 : f32 to vector<2x16x16xf32>
    %1194 = arith.mulf %1193, %1187 : vector<2x16x16xf32>
    %1195 = arith.addf %1161, %1194 : vector<2x16x16xf32>
    %c107 = arith.constant 107 : index
    %1196 = memref.load %arg2[%c107] : memref<288xf32, #tpu.memory_space<smem>>
    %1197 = vector.broadcast %1196 : f32 to vector<2x16x16xf32>
    %1198 = arith.mulf %1197, %1187 : vector<2x16x16xf32>
    %1199 = arith.addf %1165, %1198 : vector<2x16x16xf32>
    %c143 = arith.constant 143 : index
    %1200 = memref.load %arg2[%c143] : memref<288xf32, #tpu.memory_space<smem>>
    %1201 = vector.broadcast %1200 : f32 to vector<2x16x16xf32>
    %1202 = arith.mulf %1201, %1187 : vector<2x16x16xf32>
    %1203 = arith.addf %1169, %1202 : vector<2x16x16xf32>
    %c179 = arith.constant 179 : index
    %1204 = memref.load %arg2[%c179] : memref<288xf32, #tpu.memory_space<smem>>
    %1205 = vector.broadcast %1204 : f32 to vector<2x16x16xf32>
    %1206 = arith.mulf %1205, %1187 : vector<2x16x16xf32>
    %1207 = arith.addf %1173, %1206 : vector<2x16x16xf32>
    %c215 = arith.constant 215 : index
    %1208 = memref.load %arg2[%c215] : memref<288xf32, #tpu.memory_space<smem>>
    %1209 = vector.broadcast %1208 : f32 to vector<2x16x16xf32>
    %1210 = arith.mulf %1209, %1187 : vector<2x16x16xf32>
    %1211 = arith.addf %1177, %1210 : vector<2x16x16xf32>
    %c251 = arith.constant 251 : index
    %1212 = memref.load %arg2[%c251] : memref<288xf32, #tpu.memory_space<smem>>
    %1213 = vector.broadcast %1212 : f32 to vector<2x16x16xf32>
    %1214 = arith.mulf %1213, %1187 : vector<2x16x16xf32>
    %1215 = arith.addf %1181, %1214 : vector<2x16x16xf32>
    %c287 = arith.constant 287 : index
    %1216 = memref.load %arg2[%c287] : memref<288xf32, #tpu.memory_space<smem>>
    %1217 = vector.broadcast %1216 : f32 to vector<2x16x16xf32>
    %1218 = arith.mulf %1217, %1187 : vector<2x16x16xf32>
    %1219 = arith.addf %1185, %1218 : vector<2x16x16xf32>
    %1220 = vector.shape_cast %1191 : vector<2x16x16xf32> to vector<1x2x16x16xf32>
    %cst_156 = arith.constant dense<0.000000e+00> : vector<1xf32>
    %1221 = vector.multi_reduction <add>, %1220, %cst_156 [1, 2, 3] : vector<1x2x16x16xf32> to vector<1xf32>
    %1222 = vector.shape_cast %1221 : vector<1xf32> to vector<1x1x1x1xf32>
    %1223 = vector.extract %1222[0, 0, 0, 0] : f32 from vector<1x1x1x1xf32>
    %cst_157 = arith.constant 0.001953125 : f32
    %1224 = arith.mulf %1223, %cst_157 : f32
    %1225 = vector.broadcast %1224 : f32 to vector<2x16x16xf32>
    %1226 = arith.subf %1191, %1225 : vector<2x16x16xf32>
    %1227 = arith.mulf %1226, %1226 : vector<2x16x16xf32>
    %1228 = vector.shape_cast %1227 : vector<2x16x16xf32> to vector<1x2x16x16xf32>
    %cst_158 = arith.constant dense<0.000000e+00> : vector<1xf32>
    %1229 = vector.multi_reduction <add>, %1228, %cst_158 [1, 2, 3] : vector<1x2x16x16xf32> to vector<1xf32>
    %1230 = vector.shape_cast %1229 : vector<1xf32> to vector<1x1x1x1xf32>
    %1231 = vector.extract %1230[0, 0, 0, 0] : f32 from vector<1x1x1x1xf32>
    %cst_159 = arith.constant 0.001953125 : f32
    %1232 = arith.mulf %1231, %cst_159 : f32
    %cst_160 = arith.constant 9.99999974E-6 : f32
    %1233 = arith.addf %1232, %cst_160 : f32
    %1234 = vector.broadcast %1233 : f32 to vector<16xf32>
    %1235 = math.rsqrt %1234 : vector<16xf32>
    %c0_161 = arith.constant 0 : index
    %1236 = memref.load %arg3[%c0_161] : memref<8xf32, #tpu.memory_space<smem>>
    %1237 = vector.broadcast %1236 : f32 to vector<16xf32>
    %1238 = arith.mulf %1235, %1237 : vector<16xf32>
    %1239 = vector.shape_cast %1238 : vector<16xf32> to vector<1x1x16xf32>
    %1240 = vector.broadcast %1239 : vector<1x1x16xf32> to vector<2x16x16xf32>
    %1241 = arith.mulf %1226, %1240 : vector<2x16x16xf32>
    %c0_162 = arith.constant 0 : index
    %1242 = memref.load %arg4[%c0_162] : memref<8xf32, #tpu.memory_space<smem>>
    %1243 = vector.broadcast %1242 : f32 to vector<2x16x16xf32>
    %1244 = arith.addf %1241, %1243 : vector<2x16x16xf32>
    %cst_163 = arith.constant 0.000000e+00 : f32
    %1245 = vector.broadcast %cst_163 : f32 to vector<2x16x16xf32>
    %1246 = arith.maximumf %1244, %1245 : vector<2x16x16xf32>
    %c0_164 = arith.constant 0 : index
    %c0_165 = arith.constant 0 : index
    %c0_166 = arith.constant 0 : index
    %c0_167 = arith.constant 0 : index
    %1247 = vector.load %arg5[%c0_164, %c0_165, %c0_166, %c0_167] : memref<2x8x16x16xf32, #tpu.memory_space<vmem>>, vector<2x1x16x16xf32>
    %1248 = vector.shape_cast %1247 : vector<2x1x16x16xf32> to vector<2x16x16xf32>
    %1249 = vector.shape_cast %1246 : vector<2x16x16xf32> to vector<2x1x16x16xf32>
    tpu.vector_store %arg5[%c0_164, %c0_165, %c0_166, %c0_167], %1249 {strides = array<i32>} : memref<2x8x16x16xf32, #tpu.memory_space<vmem>>, vector<2x1x16x16xf32>,
    %1250 = vector.shape_cast %1195 : vector<2x16x16xf32> to vector<1x2x16x16xf32>
    %cst_168 = arith.constant dense<0.000000e+00> : vector<1xf32>
    %1251 = vector.multi_reduction <add>, %1250, %cst_168 [1, 2, 3] : vector<1x2x16x16xf32> to vector<1xf32>
    %1252 = vector.shape_cast %1251 : vector<1xf32> to vector<1x1x1x1xf32>
    %1253 = vector.extract %1252[0, 0, 0, 0] : f32 from vector<1x1x1x1xf32>
    %cst_169 = arith.constant 0.001953125 : f32
    %1254 = arith.mulf %1253, %cst_169 : f32
    %1255 = vector.broadcast %1254 : f32 to vector<2x16x16xf32>
    %1256 = arith.subf %1195, %1255 : vector<2x16x16xf32>
    %1257 = arith.mulf %1256, %1256 : vector<2x16x16xf32>
    %1258 = vector.shape_cast %1257 : vector<2x16x16xf32> to vector<1x2x16x16xf32>
    %cst_170 = arith.constant dense<0.000000e+00> : vector<1xf32>
    %1259 = vector.multi_reduction <add>, %1258, %cst_170 [1, 2, 3] : vector<1x2x16x16xf32> to vector<1xf32>
    %1260 = vector.shape_cast %1259 : vector<1xf32> to vector<1x1x1x1xf32>
    %1261 = vector.extract %1260[0, 0, 0, 0] : f32 from vector<1x1x1x1xf32>
    %cst_171 = arith.constant 0.001953125 : f32
    %1262 = arith.mulf %1261, %cst_171 : f32
    %cst_172 = arith.constant 9.99999974E-6 : f32
    %1263 = arith.addf %1262, %cst_172 : f32
    %1264 = vector.broadcast %1263 : f32 to vector<16xf32>
    %1265 = math.rsqrt %1264 : vector<16xf32>
    %c1_173 = arith.constant 1 : index
    %1266 = memref.load %arg3[%c1_173] : memref<8xf32, #tpu.memory_space<smem>>
    %1267 = vector.broadcast %1266 : f32 to vector<16xf32>
    %1268 = arith.mulf %1265, %1267 : vector<16xf32>
    %1269 = vector.shape_cast %1268 : vector<16xf32> to vector<1x1x16xf32>
    %1270 = vector.broadcast %1269 : vector<1x1x16xf32> to vector<2x16x16xf32>
    %1271 = arith.mulf %1256, %1270 : vector<2x16x16xf32>
    %c1_174 = arith.constant 1 : index
    %1272 = memref.load %arg4[%c1_174] : memref<8xf32, #tpu.memory_space<smem>>
    %1273 = vector.broadcast %1272 : f32 to vector<2x16x16xf32>
    %1274 = arith.addf %1271, %1273 : vector<2x16x16xf32>
    %cst_175 = arith.constant 0.000000e+00 : f32
    %1275 = vector.broadcast %cst_175 : f32 to vector<2x16x16xf32>
    %1276 = arith.maximumf %1274, %1275 : vector<2x16x16xf32>
    %c0_176 = arith.constant 0 : index
    %c1_177 = arith.constant 1 : index
    %c0_178 = arith.constant 0 : index
    %c0_179 = arith.constant 0 : index
    %1277 = vector.load %arg5[%c0_176, %c1_177, %c0_178, %c0_179] : memref<2x8x16x16xf32, #tpu.memory_space<vmem>>, vector<2x1x16x16xf32>
    %1278 = vector.shape_cast %1277 : vector<2x1x16x16xf32> to vector<2x16x16xf32>
    %1279 = vector.shape_cast %1276 : vector<2x16x16xf32> to vector<2x1x16x16xf32>
    tpu.vector_store %arg5[%c0_176, %c1_177, %c0_178, %c0_179], %1279 {strides = array<i32>} : memref<2x8x16x16xf32, #tpu.memory_space<vmem>>, vector<2x1x16x16xf32>,
    %1280 = vector.shape_cast %1199 : vector<2x16x16xf32> to vector<1x2x16x16xf32>
    %cst_180 = arith.constant dense<0.000000e+00> : vector<1xf32>
    %1281 = vector.multi_reduction <add>, %1280, %cst_180 [1, 2, 3] : vector<1x2x16x16xf32> to vector<1xf32>
    %1282 = vector.shape_cast %1281 : vector<1xf32> to vector<1x1x1x1xf32>
    %1283 = vector.extract %1282[0, 0, 0, 0] : f32 from vector<1x1x1x1xf32>
    %cst_181 = arith.constant 0.001953125 : f32
    %1284 = arith.mulf %1283, %cst_181 : f32
    %1285 = vector.broadcast %1284 : f32 to vector<2x16x16xf32>
    %1286 = arith.subf %1199, %1285 : vector<2x16x16xf32>
    %1287 = arith.mulf %1286, %1286 : vector<2x16x16xf32>
    %1288 = vector.shape_cast %1287 : vector<2x16x16xf32> to vector<1x2x16x16xf32>
    %cst_182 = arith.constant dense<0.000000e+00> : vector<1xf32>
    %1289 = vector.multi_reduction <add>, %1288, %cst_182 [1, 2, 3] : vector<1x2x16x16xf32> to vector<1xf32>
    %1290 = vector.shape_cast %1289 : vector<1xf32> to vector<1x1x1x1xf32>
    %1291 = vector.extract %1290[0, 0, 0, 0] : f32 from vector<1x1x1x1xf32>
    %cst_183 = arith.constant 0.001953125 : f32
    %1292 = arith.mulf %1291, %cst_183 : f32
    %cst_184 = arith.constant 9.99999974E-6 : f32
    %1293 = arith.addf %1292, %cst_184 : f32
    %1294 = vector.broadcast %1293 : f32 to vector<16xf32>
    %1295 = math.rsqrt %1294 : vector<16xf32>
    %c2_185 = arith.constant 2 : index
    %1296 = memref.load %arg3[%c2_185] : memref<8xf32, #tpu.memory_space<smem>>
    %1297 = vector.broadcast %1296 : f32 to vector<16xf32>
    %1298 = arith.mulf %1295, %1297 : vector<16xf32>
    %1299 = vector.shape_cast %1298 : vector<16xf32> to vector<1x1x16xf32>
    %1300 = vector.broadcast %1299 : vector<1x1x16xf32> to vector<2x16x16xf32>
    %1301 = arith.mulf %1286, %1300 : vector<2x16x16xf32>
    %c2_186 = arith.constant 2 : index
    %1302 = memref.load %arg4[%c2_186] : memref<8xf32, #tpu.memory_space<smem>>
    %1303 = vector.broadcast %1302 : f32 to vector<2x16x16xf32>
    %1304 = arith.addf %1301, %1303 : vector<2x16x16xf32>
    %cst_187 = arith.constant 0.000000e+00 : f32
    %1305 = vector.broadcast %cst_187 : f32 to vector<2x16x16xf32>
    %1306 = arith.maximumf %1304, %1305 : vector<2x16x16xf32>
    %c0_188 = arith.constant 0 : index
    %c2_189 = arith.constant 2 : index
    %c0_190 = arith.constant 0 : index
    %c0_191 = arith.constant 0 : index
    %1307 = vector.load %arg5[%c0_188, %c2_189, %c0_190, %c0_191] : memref<2x8x16x16xf32, #tpu.memory_space<vmem>>, vector<2x1x16x16xf32>
    %1308 = vector.shape_cast %1307 : vector<2x1x16x16xf32> to vector<2x16x16xf32>
    %1309 = vector.shape_cast %1306 : vector<2x16x16xf32> to vector<2x1x16x16xf32>
    tpu.vector_store %arg5[%c0_188, %c2_189, %c0_190, %c0_191], %1309 {strides = array<i32>} : memref<2x8x16x16xf32, #tpu.memory_space<vmem>>, vector<2x1x16x16xf32>,
    %1310 = vector.shape_cast %1203 : vector<2x16x16xf32> to vector<1x2x16x16xf32>
    %cst_192 = arith.constant dense<0.000000e+00> : vector<1xf32>
    %1311 = vector.multi_reduction <add>, %1310, %cst_192 [1, 2, 3] : vector<1x2x16x16xf32> to vector<1xf32>
    %1312 = vector.shape_cast %1311 : vector<1xf32> to vector<1x1x1x1xf32>
    %1313 = vector.extract %1312[0, 0, 0, 0] : f32 from vector<1x1x1x1xf32>
    %cst_193 = arith.constant 0.001953125 : f32
    %1314 = arith.mulf %1313, %cst_193 : f32
    %1315 = vector.broadcast %1314 : f32 to vector<2x16x16xf32>
    %1316 = arith.subf %1203, %1315 : vector<2x16x16xf32>
    %1317 = arith.mulf %1316, %1316 : vector<2x16x16xf32>
    %1318 = vector.shape_cast %1317 : vector<2x16x16xf32> to vector<1x2x16x16xf32>
    %cst_194 = arith.constant dense<0.000000e+00> : vector<1xf32>
    %1319 = vector.multi_reduction <add>, %1318, %cst_194 [1, 2, 3] : vector<1x2x16x16xf32> to vector<1xf32>
    %1320 = vector.shape_cast %1319 : vector<1xf32> to vector<1x1x1x1xf32>
    %1321 = vector.extract %1320[0, 0, 0, 0] : f32 from vector<1x1x1x1xf32>
    %cst_195 = arith.constant 0.001953125 : f32
    %1322 = arith.mulf %1321, %cst_195 : f32
    %cst_196 = arith.constant 9.99999974E-6 : f32
    %1323 = arith.addf %1322, %cst_196 : f32
    %1324 = vector.broadcast %1323 : f32 to vector<16xf32>
    %1325 = math.rsqrt %1324 : vector<16xf32>
    %c3_197 = arith.constant 3 : index
    %1326 = memref.load %arg3[%c3_197] : memref<8xf32, #tpu.memory_space<smem>>
    %1327 = vector.broadcast %1326 : f32 to vector<16xf32>
    %1328 = arith.mulf %1325, %1327 : vector<16xf32>
    %1329 = vector.shape_cast %1328 : vector<16xf32> to vector<1x1x16xf32>
    %1330 = vector.broadcast %1329 : vector<1x1x16xf32> to vector<2x16x16xf32>
    %1331 = arith.mulf %1316, %1330 : vector<2x16x16xf32>
    %c3_198 = arith.constant 3 : index
    %1332 = memref.load %arg4[%c3_198] : memref<8xf32, #tpu.memory_space<smem>>
    %1333 = vector.broadcast %1332 : f32 to vector<2x16x16xf32>
    %1334 = arith.addf %1331, %1333 : vector<2x16x16xf32>
    %cst_199 = arith.constant 0.000000e+00 : f32
    %1335 = vector.broadcast %cst_199 : f32 to vector<2x16x16xf32>
    %1336 = arith.maximumf %1334, %1335 : vector<2x16x16xf32>
    %c0_200 = arith.constant 0 : index
    %c3_201 = arith.constant 3 : index
    %c0_202 = arith.constant 0 : index
    %c0_203 = arith.constant 0 : index
    %1337 = vector.load %arg5[%c0_200, %c3_201, %c0_202, %c0_203] : memref<2x8x16x16xf32, #tpu.memory_space<vmem>>, vector<2x1x16x16xf32>
    %1338 = vector.shape_cast %1337 : vector<2x1x16x16xf32> to vector<2x16x16xf32>
    %1339 = vector.shape_cast %1336 : vector<2x16x16xf32> to vector<2x1x16x16xf32>
    tpu.vector_store %arg5[%c0_200, %c3_201, %c0_202, %c0_203], %1339 {strides = array<i32>} : memref<2x8x16x16xf32, #tpu.memory_space<vmem>>, vector<2x1x16x16xf32>,
    %1340 = vector.shape_cast %1207 : vector<2x16x16xf32> to vector<1x2x16x16xf32>
    %cst_204 = arith.constant dense<0.000000e+00> : vector<1xf32>
    %1341 = vector.multi_reduction <add>, %1340, %cst_204 [1, 2, 3] : vector<1x2x16x16xf32> to vector<1xf32>
    %1342 = vector.shape_cast %1341 : vector<1xf32> to vector<1x1x1x1xf32>
    %1343 = vector.extract %1342[0, 0, 0, 0] : f32 from vector<1x1x1x1xf32>
    %cst_205 = arith.constant 0.001953125 : f32
    %1344 = arith.mulf %1343, %cst_205 : f32
    %1345 = vector.broadcast %1344 : f32 to vector<2x16x16xf32>
    %1346 = arith.subf %1207, %1345 : vector<2x16x16xf32>
    %1347 = arith.mulf %1346, %1346 : vector<2x16x16xf32>
    %1348 = vector.shape_cast %1347 : vector<2x16x16xf32> to vector<1x2x16x16xf32>
    %cst_206 = arith.constant dense<0.000000e+00> : vector<1xf32>
    %1349 = vector.multi_reduction <add>, %1348, %cst_206 [1, 2, 3] : vector<1x2x16x16xf32> to vector<1xf32>
    %1350 = vector.shape_cast %1349 : vector<1xf32> to vector<1x1x1x1xf32>
    %1351 = vector.extract %1350[0, 0, 0, 0] : f32 from vector<1x1x1x1xf32>
    %cst_207 = arith.constant 0.001953125 : f32
    %1352 = arith.mulf %1351, %cst_207 : f32
    %cst_208 = arith.constant 9.99999974E-6 : f32
    %1353 = arith.addf %1352, %cst_208 : f32
    %1354 = vector.broadcast %1353 : f32 to vector<16xf32>
    %1355 = math.rsqrt %1354 : vector<16xf32>
    %c4_209 = arith.constant 4 : index
    %1356 = memref.load %arg3[%c4_209] : memref<8xf32, #tpu.memory_space<smem>>
    %1357 = vector.broadcast %1356 : f32 to vector<16xf32>
    %1358 = arith.mulf %1355, %1357 : vector<16xf32>
    %1359 = vector.shape_cast %1358 : vector<16xf32> to vector<1x1x16xf32>
    %1360 = vector.broadcast %1359 : vector<1x1x16xf32> to vector<2x16x16xf32>
    %1361 = arith.mulf %1346, %1360 : vector<2x16x16xf32>
    %c4_210 = arith.constant 4 : index
    %1362 = memref.load %arg4[%c4_210] : memref<8xf32, #tpu.memory_space<smem>>
    %1363 = vector.broadcast %1362 : f32 to vector<2x16x16xf32>
    %1364 = arith.addf %1361, %1363 : vector<2x16x16xf32>
    %cst_211 = arith.constant 0.000000e+00 : f32
    %1365 = vector.broadcast %cst_211 : f32 to vector<2x16x16xf32>
    %1366 = arith.maximumf %1364, %1365 : vector<2x16x16xf32>
    %c0_212 = arith.constant 0 : index
    %c4_213 = arith.constant 4 : index
    %c0_214 = arith.constant 0 : index
    %c0_215 = arith.constant 0 : index
    %1367 = vector.load %arg5[%c0_212, %c4_213, %c0_214, %c0_215] : memref<2x8x16x16xf32, #tpu.memory_space<vmem>>, vector<2x1x16x16xf32>
    %1368 = vector.shape_cast %1367 : vector<2x1x16x16xf32> to vector<2x16x16xf32>
    %1369 = vector.shape_cast %1366 : vector<2x16x16xf32> to vector<2x1x16x16xf32>
    tpu.vector_store %arg5[%c0_212, %c4_213, %c0_214, %c0_215], %1369 {strides = array<i32>} : memref<2x8x16x16xf32, #tpu.memory_space<vmem>>, vector<2x1x16x16xf32>,
    %1370 = vector.shape_cast %1211 : vector<2x16x16xf32> to vector<1x2x16x16xf32>
    %cst_216 = arith.constant dense<0.000000e+00> : vector<1xf32>
    %1371 = vector.multi_reduction <add>, %1370, %cst_216 [1, 2, 3] : vector<1x2x16x16xf32> to vector<1xf32>
    %1372 = vector.shape_cast %1371 : vector<1xf32> to vector<1x1x1x1xf32>
    %1373 = vector.extract %1372[0, 0, 0, 0] : f32 from vector<1x1x1x1xf32>
    %cst_217 = arith.constant 0.001953125 : f32
    %1374 = arith.mulf %1373, %cst_217 : f32
    %1375 = vector.broadcast %1374 : f32 to vector<2x16x16xf32>
    %1376 = arith.subf %1211, %1375 : vector<2x16x16xf32>
    %1377 = arith.mulf %1376, %1376 : vector<2x16x16xf32>
    %1378 = vector.shape_cast %1377 : vector<2x16x16xf32> to vector<1x2x16x16xf32>
    %cst_218 = arith.constant dense<0.000000e+00> : vector<1xf32>
    %1379 = vector.multi_reduction <add>, %1378, %cst_218 [1, 2, 3] : vector<1x2x16x16xf32> to vector<1xf32>
    %1380 = vector.shape_cast %1379 : vector<1xf32> to vector<1x1x1x1xf32>
    %1381 = vector.extract %1380[0, 0, 0, 0] : f32 from vector<1x1x1x1xf32>
    %cst_219 = arith.constant 0.001953125 : f32
    %1382 = arith.mulf %1381, %cst_219 : f32
    %cst_220 = arith.constant 9.99999974E-6 : f32
    %1383 = arith.addf %1382, %cst_220 : f32
    %1384 = vector.broadcast %1383 : f32 to vector<16xf32>
    %1385 = math.rsqrt %1384 : vector<16xf32>
    %c5_221 = arith.constant 5 : index
    %1386 = memref.load %arg3[%c5_221] : memref<8xf32, #tpu.memory_space<smem>>
    %1387 = vector.broadcast %1386 : f32 to vector<16xf32>
    %1388 = arith.mulf %1385, %1387 : vector<16xf32>
    %1389 = vector.shape_cast %1388 : vector<16xf32> to vector<1x1x16xf32>
    %1390 = vector.broadcast %1389 : vector<1x1x16xf32> to vector<2x16x16xf32>
    %1391 = arith.mulf %1376, %1390 : vector<2x16x16xf32>
    %c5_222 = arith.constant 5 : index
    %1392 = memref.load %arg4[%c5_222] : memref<8xf32, #tpu.memory_space<smem>>
    %1393 = vector.broadcast %1392 : f32 to vector<2x16x16xf32>
    %1394 = arith.addf %1391, %1393 : vector<2x16x16xf32>
    %cst_223 = arith.constant 0.000000e+00 : f32
    %1395 = vector.broadcast %cst_223 : f32 to vector<2x16x16xf32>
    %1396 = arith.maximumf %1394, %1395 : vector<2x16x16xf32>
    %c0_224 = arith.constant 0 : index
    %c5_225 = arith.constant 5 : index
    %c0_226 = arith.constant 0 : index
    %c0_227 = arith.constant 0 : index
    %1397 = vector.load %arg5[%c0_224, %c5_225, %c0_226, %c0_227] : memref<2x8x16x16xf32, #tpu.memory_space<vmem>>, vector<2x1x16x16xf32>
    %1398 = vector.shape_cast %1397 : vector<2x1x16x16xf32> to vector<2x16x16xf32>
    %1399 = vector.shape_cast %1396 : vector<2x16x16xf32> to vector<2x1x16x16xf32>
    tpu.vector_store %arg5[%c0_224, %c5_225, %c0_226, %c0_227], %1399 {strides = array<i32>} : memref<2x8x16x16xf32, #tpu.memory_space<vmem>>, vector<2x1x16x16xf32>,
    %1400 = vector.shape_cast %1215 : vector<2x16x16xf32> to vector<1x2x16x16xf32>
    %cst_228 = arith.constant dense<0.000000e+00> : vector<1xf32>
    %1401 = vector.multi_reduction <add>, %1400, %cst_228 [1, 2, 3] : vector<1x2x16x16xf32> to vector<1xf32>
    %1402 = vector.shape_cast %1401 : vector<1xf32> to vector<1x1x1x1xf32>
    %1403 = vector.extract %1402[0, 0, 0, 0] : f32 from vector<1x1x1x1xf32>
    %cst_229 = arith.constant 0.001953125 : f32
    %1404 = arith.mulf %1403, %cst_229 : f32
    %1405 = vector.broadcast %1404 : f32 to vector<2x16x16xf32>
    %1406 = arith.subf %1215, %1405 : vector<2x16x16xf32>
    %1407 = arith.mulf %1406, %1406 : vector<2x16x16xf32>
    %1408 = vector.shape_cast %1407 : vector<2x16x16xf32> to vector<1x2x16x16xf32>
    %cst_230 = arith.constant dense<0.000000e+00> : vector<1xf32>
    %1409 = vector.multi_reduction <add>, %1408, %cst_230 [1, 2, 3] : vector<1x2x16x16xf32> to vector<1xf32>
    %1410 = vector.shape_cast %1409 : vector<1xf32> to vector<1x1x1x1xf32>
    %1411 = vector.extract %1410[0, 0, 0, 0] : f32 from vector<1x1x1x1xf32>
    %cst_231 = arith.constant 0.001953125 : f32
    %1412 = arith.mulf %1411, %cst_231 : f32
    %cst_232 = arith.constant 9.99999974E-6 : f32
    %1413 = arith.addf %1412, %cst_232 : f32
    %1414 = vector.broadcast %1413 : f32 to vector<16xf32>
    %1415 = math.rsqrt %1414 : vector<16xf32>
    %c6_233 = arith.constant 6 : index
    %1416 = memref.load %arg3[%c6_233] : memref<8xf32, #tpu.memory_space<smem>>
    %1417 = vector.broadcast %1416 : f32 to vector<16xf32>
    %1418 = arith.mulf %1415, %1417 : vector<16xf32>
    %1419 = vector.shape_cast %1418 : vector<16xf32> to vector<1x1x16xf32>
    %1420 = vector.broadcast %1419 : vector<1x1x16xf32> to vector<2x16x16xf32>
    %1421 = arith.mulf %1406, %1420 : vector<2x16x16xf32>
    %c6_234 = arith.constant 6 : index
    %1422 = memref.load %arg4[%c6_234] : memref<8xf32, #tpu.memory_space<smem>>
    %1423 = vector.broadcast %1422 : f32 to vector<2x16x16xf32>
    %1424 = arith.addf %1421, %1423 : vector<2x16x16xf32>
    %cst_235 = arith.constant 0.000000e+00 : f32
    %1425 = vector.broadcast %cst_235 : f32 to vector<2x16x16xf32>
    %1426 = arith.maximumf %1424, %1425 : vector<2x16x16xf32>
    %c0_236 = arith.constant 0 : index
    %c6_237 = arith.constant 6 : index
    %c0_238 = arith.constant 0 : index
    %c0_239 = arith.constant 0 : index
    %1427 = vector.load %arg5[%c0_236, %c6_237, %c0_238, %c0_239] : memref<2x8x16x16xf32, #tpu.memory_space<vmem>>, vector<2x1x16x16xf32>
    %1428 = vector.shape_cast %1427 : vector<2x1x16x16xf32> to vector<2x16x16xf32>
    %1429 = vector.shape_cast %1426 : vector<2x16x16xf32> to vector<2x1x16x16xf32>
    tpu.vector_store %arg5[%c0_236, %c6_237, %c0_238, %c0_239], %1429 {strides = array<i32>} : memref<2x8x16x16xf32, #tpu.memory_space<vmem>>, vector<2x1x16x16xf32>,
    %1430 = vector.shape_cast %1219 : vector<2x16x16xf32> to vector<1x2x16x16xf32>
    %cst_240 = arith.constant dense<0.000000e+00> : vector<1xf32>
    %1431 = vector.multi_reduction <add>, %1430, %cst_240 [1, 2, 3] : vector<1x2x16x16xf32> to vector<1xf32>
    %1432 = vector.shape_cast %1431 : vector<1xf32> to vector<1x1x1x1xf32>
    %1433 = vector.extract %1432[0, 0, 0, 0] : f32 from vector<1x1x1x1xf32>
    %cst_241 = arith.constant 0.001953125 : f32
    %1434 = arith.mulf %1433, %cst_241 : f32
    %1435 = vector.broadcast %1434 : f32 to vector<2x16x16xf32>
    %1436 = arith.subf %1219, %1435 : vector<2x16x16xf32>
    %1437 = arith.mulf %1436, %1436 : vector<2x16x16xf32>
    %1438 = vector.shape_cast %1437 : vector<2x16x16xf32> to vector<1x2x16x16xf32>
    %cst_242 = arith.constant dense<0.000000e+00> : vector<1xf32>
    %1439 = vector.multi_reduction <add>, %1438, %cst_242 [1, 2, 3] : vector<1x2x16x16xf32> to vector<1xf32>
    %1440 = vector.shape_cast %1439 : vector<1xf32> to vector<1x1x1x1xf32>
    %1441 = vector.extract %1440[0, 0, 0, 0] : f32 from vector<1x1x1x1xf32>
    %cst_243 = arith.constant 0.001953125 : f32
    %1442 = arith.mulf %1441, %cst_243 : f32
    %cst_244 = arith.constant 9.99999974E-6 : f32
    %1443 = arith.addf %1442, %cst_244 : f32
    %1444 = vector.broadcast %1443 : f32 to vector<16xf32>
    %1445 = math.rsqrt %1444 : vector<16xf32>
    %c7_245 = arith.constant 7 : index
    %1446 = memref.load %arg3[%c7_245] : memref<8xf32, #tpu.memory_space<smem>>
    %1447 = vector.broadcast %1446 : f32 to vector<16xf32>
    %1448 = arith.mulf %1445, %1447 : vector<16xf32>
    %1449 = vector.shape_cast %1448 : vector<16xf32> to vector<1x1x16xf32>
    %1450 = vector.broadcast %1449 : vector<1x1x16xf32> to vector<2x16x16xf32>
    %1451 = arith.mulf %1436, %1450 : vector<2x16x16xf32>
    %c7_246 = arith.constant 7 : index
    %1452 = memref.load %arg4[%c7_246] : memref<8xf32, #tpu.memory_space<smem>>
    %1453 = vector.broadcast %1452 : f32 to vector<2x16x16xf32>
    %1454 = arith.addf %1451, %1453 : vector<2x16x16xf32>
    %cst_247 = arith.constant 0.000000e+00 : f32
    %1455 = vector.broadcast %cst_247 : f32 to vector<2x16x16xf32>
    %1456 = arith.maximumf %1454, %1455 : vector<2x16x16xf32>
    %c0_248 = arith.constant 0 : index
    %c7_249 = arith.constant 7 : index
    %c0_250 = arith.constant 0 : index
    %c0_251 = arith.constant 0 : index
    %1457 = vector.load %arg5[%c0_248, %c7_249, %c0_250, %c0_251] : memref<2x8x16x16xf32, #tpu.memory_space<vmem>>, vector<2x1x16x16xf32>
    %1458 = vector.shape_cast %1457 : vector<2x1x16x16xf32> to vector<2x16x16xf32>
    %1459 = vector.shape_cast %1456 : vector<2x16x16xf32> to vector<2x1x16x16xf32>
    tpu.vector_store %arg5[%c0_248, %c7_249, %c0_250, %c0_251], %1459 {strides = array<i32>} : memref<2x8x16x16xf32, #tpu.memory_space<vmem>>, vector<2x1x16x16xf32>,
    return
  }
  func.func @transform_0(%arg0: i32) -> (i32, i32, i32, i32) {
    %c0_i32 = arith.constant 0 : i32
    %c0_i32_0 = arith.constant 0 : i32
    %c0_i32_1 = arith.constant 0 : i32
    %c0_i32_2 = arith.constant 0 : i32
    %c0_i32_3 = arith.constant 0 : i32
    return %c0_i32, %c0_i32_0, %c0_i32_1, %c0_i32_2 : i32, i32, i32, i32
  }
  func.func @transform_1(%arg0: i32) -> i32 {
    %c0_i32 = arith.constant 0 : i32
    %c0_i32_0 = arith.constant 0 : i32
    return %c0_i32 : i32
  }
  func.func @transform_2(%arg0: i32) -> i32 {
    %c0_i32 = arith.constant 0 : i32
    %c0_i32_0 = arith.constant 0 : i32
    return %c0_i32 : i32
  }
  func.func @transform_3(%arg0: i32) -> i32 {
    %c0_i32 = arith.constant 0 : i32
    %c0_i32_0 = arith.constant 0 : i32
    return %c0_i32 : i32
  }
  func.func @transform_4(%arg0: i32) -> (i32, i32, i32, i32) {
    %c0_i32 = arith.constant 0 : i32
    %c0_i32_0 = arith.constant 0 : i32
    %c0_i32_1 = arith.constant 0 : i32
    %c0_i32_2 = arith.constant 0 : i32
    %c0_i32_3 = arith.constant 0 : i32
    return %c0_i32, %c0_i32_0, %c0_i32_1, %c0_i32_2 : i32, i32, i32, i32
  }
}

</mosaic_0001>

<llo_original>
// kernel: encoder_block_forward.1
$region0: #{encoder_block_forward.1}
  #allocation0 [shape = 'u32[]', space=smem, size = 0x4, offset = 0x4, fixed_abs, tag = 'smem constant byte address 0x4 - core index']
  #allocation1 [shape = 'u32[72,128]{1,0:T(1,128)}', space=vmem, size = 0x9000, scoped, tag = 'internal scratch']
  #allocation2 [shape = 'f32[2,4,18,18]{3,2,1,0:T(8,128)}', space=vmem, size = 0x18000, scoped, tag = 'scratch operand']
  %s0 = inlined_call_operand.vmem [shape: f32[2,4,16,16], index: 0, kind: input, shape index: {}]
  %s1 = inlined_call_operand.vmem [shape: f32[288], index: 1, kind: input, shape index: {}]
  %s2 = inlined_call_operand.vmem [shape: f32[8], index: 2, kind: input, shape index: {}]
  %s3 = inlined_call_operand.vmem [shape: f32[8], index: 3, kind: input, shape index: {}]
  %s4 = inlined_call_operand.hbm [shape: f32[2,8,16,16], index: 4, kind: output, shape index: {}]
  %s5 = sld [smem:[#allocation0]]
  $region38: #{encoder_block_forward.1} parent=0
    _
  %s7 = ssub.s32 1, %s5
  %s8 = scalar_select 0, %s7, %s5
  $region1: #{encoder_block_forward.1} parent=0
    #allocation3 [shape = 'u8[1536]{0}', space=smem, size = 0x600, scoped, tag = 'input window, operand 1, single buffered']
    #allocation4 [shape = 's32[1]{0}', space=sflag, size = 0x4, scoped, tag = 'scoped memory for encoder_block_forward.1']
    #allocation5 [shape = 's32[1]{0}', space=sflag, size = 0x4, scoped, tag = 'scoped memory for encoder_block_forward.1']
    #allocation6 [shape = 'u8[512]{0}', space=smem, size = 0x200, scoped, tag = 'input window, operand 2, single buffered']
    #allocation7 [shape = 's32[1]{0}', space=sflag, size = 0x4, scoped, tag = 'scoped memory for encoder_block_forward.1']
    #allocation8 [shape = 'u8[512]{0}', space=smem, size = 0x200, scoped, tag = 'input window, operand 3, single buffered']
    #allocation9 [shape = 'u8[131072]{0}', space=vmem, size = 0x20000, scoped, tag = 'output window, operand 0, single buffered']
    %9 = vsyncpa [#allocation5], 0
    %10 = vsyncpa [#allocation7], 0
    %11 = vsyncpa [#allocation4], 0
    // Predicated region
    $region2: #{encoder_block_forward.1} parent=1 // pred_check
      _
    $region3: #{encoder_block_forward.1} parent=1 // pred_check_branch
      %13 = sbr.rel (0) target = $region5
    $region4: #{encoder_block_forward.1} parent=1 // pred_region
      _
    $region5: #{encoder_block_forward.1} parent=1 // pred_fallthru
      _
    // Predicated region
    $region6: #{encoder_block_forward.1} parent=1 // pred_check
      _
    $region7: #{encoder_block_forward.1} parent=1 // pred_check_branch
      %15 = sbr.rel (0) target = $region9
    $region8: #{encoder_block_forward.1} parent=1 // pred_region
      %17 = vsyncadd [#allocation5], 0
      %s19 = sshll.u32 %s1, 4
      %s20 = int_to_ptr.vmem [resolvable:$true] %s19
      %22 = dma.vmem_to_smem %s20, 48, [#allocation3], [#allocation5]
    $region9: #{encoder_block_forward.1} parent=1 // pred_fallthru
      _
    // Predicated region
    $region10: #{encoder_block_forward.1} parent=1 // pred_check
      _
    $region11: #{encoder_block_forward.1} parent=1 // pred_check_branch
      %24 = sbr.rel (0) target = $region13
    $region12: #{encoder_block_forward.1} parent=1 // pred_region
      %26 = vsyncadd [#allocation7], 0
      %s28 = sshll.u32 %s2, 4
      %s29 = int_to_ptr.vmem [resolvable:$true] %s28
      %31 = dma.vmem_to_smem %s29, 16, [#allocation6], [#allocation7]
    $region13: #{encoder_block_forward.1} parent=1 // pred_fallthru
      _
    // Predicated region
    $region14: #{encoder_block_forward.1} parent=1 // pred_check
      _
    $region15: #{encoder_block_forward.1} parent=1 // pred_check_branch
      %33 = sbr.rel (0) target = $region17
    $region16: #{encoder_block_forward.1} parent=1 // pred_region
      %35 = vsyncadd [#allocation7], 0
      %s37 = sshll.u32 %s3, 4
      %s38 = int_to_ptr.vmem [resolvable:$true] %s37
      %40 = dma.vmem_to_smem %s38, 16, [#allocation8], [#allocation7]
    $region17: #{encoder_block_forward.1} parent=1 // pred_fallthru
      _
    // Predicated region
    $region18: #{encoder_block_forward.1} parent=1 // pred_check
      _
    $region19: #{encoder_block_forward.1} parent=1 // pred_check_branch
      %42 = sbr.rel (0) target = $region21
    $region20: #{encoder_block_forward.1} parent=1 // pred_region
      %44 = dma.done [#allocation5], 48
    $region21: #{encoder_block_forward.1} parent=1 // pred_fallthru
      _
    // Predicated region
    $region22: #{encoder_block_forward.1} parent=1 // pred_check
      _
    $region23: #{encoder_block_forward.1} parent=1 // pred_check_branch
      %46 = sbr.rel (0) target = $region25
    $region24: #{encoder_block_forward.1} parent=1 // pred_region
      %48 = dma.done [#allocation7], 16
    $region25: #{encoder_block_forward.1} parent=1 // pred_fallthru
      _
    // Predicated region
    $region26: #{encoder_block_forward.1} parent=1 // pred_check
      _
    $region27: #{encoder_block_forward.1} parent=1 // pred_check_branch
      %50 = sbr.rel (0) target = $region29
    $region28: #{encoder_block_forward.1} parent=1 // pred_region
      %52 = dma.done [#allocation7], 16
    $region29: #{encoder_block_forward.1} parent=1 // pred_fallthru
      _
    %53 = sfence
    %vm54 = vcmask 146432
    %55 = vst.msk [vmem:[#allocation2] sm:$0xff] %vm54, 0.0
    %56 = vst.msk [vmem:[#allocation2 + $0x8] sm:$0xff] %vm54, 0.0
    %vm57 = vcmask 140288
    %58 = vst.msk [vmem:[#allocation2 + $0x10] sm:$0x3] %vm57, 0.0
    %59 = vst.msk [vmem:[#allocation2 + $0x18] sm:$0xff] %vm54, 0.0
    %60 = vst.msk [vmem:[#allocation2 + $0x20] sm:$0xff] %vm54, 0.0
    %61 = vst.msk [vmem:[#allocation2 + $0x28] sm:$0x3] %vm57, 0.0
    %62 = vst.msk [vmem:[#allocation2 + $0x30] sm:$0xff] %vm54, 0.0
    %63 = vst.msk [vmem:[#allocation2 + $0x38] sm:$0xff] %vm54, 0.0
    %64 = vst.msk [vmem:[#allocation2 + $0x40] sm:$0x3] %vm57, 0.0
    %65 = vst.msk [vmem:[#allocation2 + $0x48] sm:$0xff] %vm54, 0.0
    %66 = vst.msk [vmem:[#allocation2 + $0x50] sm:$0xff] %vm54, 0.0
    %67 = vst.msk [vmem:[#allocation2 + $0x58] sm:$0x3] %vm57, 0.0
    %68 = vst.msk [vmem:[#allocation2 + $0x60] sm:$0xff] %vm54, 0.0
    %69 = vst.msk [vmem:[#allocation2 + $0x68] sm:$0xff] %vm54, 0.0
    %70 = vst.msk [vmem:[#allocation2 + $0x70] sm:$0x3] %vm57, 0.0
    %71 = vst.msk [vmem:[#allocation2 + $0x78] sm:$0xff] %vm54, 0.0
    %72 = vst.msk [vmem:[#allocation2 + $0x80] sm:$0xff] %vm54, 0.0
    %73 = vst.msk [vmem:[#allocation2 + $0x88] sm:$0x3] %vm57, 0.0
    %74 = vst.msk [vmem:[#allocation2 + $0x90] sm:$0xff] %vm54, 0.0
    %75 = vst.msk [vmem:[#allocation2 + $0x98] sm:$0xff] %vm54, 0.0
    %76 = vst.msk [vmem:[#allocation2 + $0xa0] sm:$0x3] %vm57, 0.0
    %77 = vst.msk [vmem:[#allocation2 + $0xa8] sm:$0xff] %vm54, 0.0
    %78 = vst.msk [vmem:[#allocation2 + $0xb0] sm:$0xff] %vm54, 0.0
    %79 = vst.msk [vmem:[#allocation2 + $0xb8] sm:$0x3] %vm57, 0.0
    %v80 = vld [vmem:[%s0] sm:$0xff]
    %v81 = vld [vmem:[%s0 + $0x8] sm:$0xff]
    %v82 = vld [vmem:[%s0 + $0x10] sm:$0xff]
    %v83 = vld [vmem:[%s0 + $0x18] sm:$0xff]
    %v84 = vld [vmem:[%s0 + $0x20] sm:$0xff]
    %v85 = vld [vmem:[%s0 + $0x28] sm:$0xff]
    %v86 = vld [vmem:[%s0 + $0x30] sm:$0xff]
    %v87 = vld [vmem:[%s0 + $0x38] sm:$0xff]
    %v88 = vld [vmem:[%s0 + $0x40] sm:$0xff]
    %v89 = vld [vmem:[%s0 + $0x48] sm:$0xff]
    %v90 = vld [vmem:[%s0 + $0x50] sm:$0xff]
    %v91 = vld [vmem:[%s0 + $0x58] sm:$0xff]
    %v92 = vld [vmem:[%s0 + $0x60] sm:$0xff]
    %v93 = vld [vmem:[%s0 + $0x68] sm:$0xff]
    %v94 = vld [vmem:[%s0 + $0x70] sm:$0xff]
    %v95 = vld [vmem:[%s0 + $0x78] sm:$0xff]
    %112 = vrot.lane.b32.xlu0 %v80, 1
    %v113 = vpop.permute.xlu0 %112
    %114 = vrot.lane.b32.xlu0 %v81, 1
    %v115 = vpop.permute.xlu0 %114
    %116 = vrot.lane.b32.xlu0 %v82, 1
    %v117 = vpop.permute.xlu0 %116
    %118 = vrot.lane.b32.xlu0 %v83, 1
    %v119 = vpop.permute.xlu0 %118
    %120 = vrot.lane.b32.xlu0 %v84, 1
    %v121 = vpop.permute.xlu0 %120
    %122 = vrot.lane.b32.xlu0 %v85, 1
    %v123 = vpop.permute.xlu0 %122
    %124 = vrot.lane.b32.xlu0 %v86, 1
    %v125 = vpop.permute.xlu0 %124
    %126 = vrot.lane.b32.xlu0 %v87, 1
    %v127 = vpop.permute.xlu0 %126
    %128 = vrot.lane.b32.xlu0 %v88, 1
    %v129 = vpop.permute.xlu0 %128
    %130 = vrot.lane.b32.xlu0 %v89, 1
    %v131 = vpop.permute.xlu0 %130
    %132 = vrot.lane.b32.xlu0 %v90, 1
    %v133 = vpop.permute.xlu0 %132
    %134 = vrot.lane.b32.xlu0 %v91, 1
    %v135 = vpop.permute.xlu0 %134
    %136 = vrot.lane.b32.xlu0 %v92, 1
    %v137 = vpop.permute.xlu0 %136
    %138 = vrot.lane.b32.xlu0 %v93, 1
    %v139 = vpop.permute.xlu0 %138
    %140 = vrot.lane.b32.xlu0 %v94, 1
    %v141 = vpop.permute.xlu0 %140
    %142 = vrot.lane.b32.xlu0 %v95, 1
    %v143 = vpop.permute.xlu0 %142
    %vm160 = vcmask 138248
    %161 = vst.msk [vmem:[#allocation2 + $0x1] sm:$0xff] %vm160, %v113
    %162 = vst.msk [vmem:[#allocation2 + $0x9] sm:$0xff] %vm160, %v115
    %163 = vst.msk [vmem:[#allocation2 + $0x19] sm:$0xff] %vm160, %v117
    %164 = vst.msk [vmem:[#allocation2 + $0x21] sm:$0xff] %vm160, %v119
    %165 = vst.msk [vmem:[#allocation2 + $0x31] sm:$0xff] %vm160, %v121
    %166 = vst.msk [vmem:[#allocation2 + $0x39] sm:$0xff] %vm160, %v123
    %167 = vst.msk [vmem:[#allocation2 + $0x49] sm:$0xff] %vm160, %v125
    %168 = vst.msk [vmem:[#allocation2 + $0x51] sm:$0xff] %vm160, %v127
    %169 = vst.msk [vmem:[#allocation2 + $0x61] sm:$0xff] %vm160, %v129
    %170 = vst.msk [vmem:[#allocation2 + $0x69] sm:$0xff] %vm160, %v131
    %171 = vst.msk [vmem:[#allocation2 + $0x79] sm:$0xff] %vm160, %v133
    %172 = vst.msk [vmem:[#allocation2 + $0x81] sm:$0xff] %vm160, %v135
    %173 = vst.msk [vmem:[#allocation2 + $0x91] sm:$0xff] %vm160, %v137
    %174 = vst.msk [vmem:[#allocation2 + $0x99] sm:$0xff] %vm160, %v139
    %175 = vst.msk [vmem:[#allocation2 + $0xa9] sm:$0xff] %vm160, %v141
    %176 = vst.msk [vmem:[#allocation2 + $0xb1] sm:$0xff] %vm160, %v143
    %v177 = vld [vmem:[#allocation2] sm:$0xff]
    %v178 = vld [vmem:[#allocation2 + $0x8] sm:$0xff]
    %v179 = vld [vmem:[#allocation2 + $0x60] sm:$0xff]
    %v180 = vld [vmem:[#allocation2 + $0x68] sm:$0xff]
    %s181 = sld [smem:[#allocation3]]
    %v182 = vstv %s181
    %v183 = vmul.f32 %v182, %v177
    %v184 = vmul.f32 %v182, %v178
    %v185 = vmul.f32 %v182, %v179
    %v186 = vmul.f32 %v182, %v180
    %s187 = sld [smem:[#allocation3 + $0x24]]
    %v188 = vstv %s187
    %v189 = vmul.f32 %v188, %v177
    %v190 = vmul.f32 %v188, %v178
    %v191 = vmul.f32 %v188, %v179
    %v192 = vmul.f32 %v188, %v180
    %s193 = sld [smem:[#allocation3 + $0x48]]
    %v194 = vstv %s193
    %v195 = vmul.f32 %v194, %v177
    %v196 = vmul.f32 %v194, %v178
    %v197 = vmul.f32 %v194, %v179
    %v198 = vmul.f32 %v194, %v180
    %s199 = sld [smem:[#allocation3 + $0x6c]]
    %v200 = vstv %s199
    %v201 = vmul.f32 %v200, %v177
    %v202 = vmul.f32 %v200, %v178
    %v203 = vmul.f32 %v200, %v179
    %v204 = vmul.f32 %v200, %v180
    %s205 = sld [smem:[#allocation3 + $0x90]]
    %v206 = vstv %s205
    %v207 = vmul.f32 %v206, %v177
    %v208 = vmul.f32 %v206, %v178
    %v209 = vmul.f32 %v206, %v179
    %v210 = vmul.f32 %v206, %v180
    %s211 = sld [smem:[#allocation3 + $0xb4]]
    %v212 = vstv %s211
    %v213 = vmul.f32 %v212, %v177
    %v214 = vmul.f32 %v212, %v178
    %v215 = vmul.f32 %v212, %v179
    %v216 = vmul.f32 %v212, %v180
    %s217 = sld [smem:[#allocation3 + $0xd8]]
    %v218 = vstv %s217
    %v219 = vmul.f32 %v218, %v177
    %v220 = vmul.f32 %v218, %v178
    %v221 = vmul.f32 %v218, %v179
    %v222 = vmul.f32 %v218, %v180
    %s223 = sld [smem:[#allocation3 + $0xfc]]
    %v224 = vstv %s223
    %v225 = vmul.f32 %v224, %v177
    %v226 = vmul.f32 %v224, %v178
    %v227 = vmul.f32 %v224, %v179
    %v228 = vmul.f32 %v224, %v180
    %s229 = sld [smem:[#allocation3 + $0x1]]
    %v230 = vstv %s229
    %v231 = vmul.f32 %v230, %v177
    %v232 = vmul.f32 %v230, %v178
    %v233 = vmul.f32 %v230, %v179
    %v234 = vmul.f32 %v230, %v180
    %239 = vrot.lane.b32.xlu0 %v231, 127
    %v240 = vpop.permute.xlu0 %239
    %241 = vrot.lane.b32.xlu0 %v232, 127
    %v242 = vpop.permute.xlu0 %241
    %243 = vrot.lane.b32.xlu0 %v233, 127
    %v244 = vpop.permute.xlu0 %243
    %245 = vrot.lane.b32.xlu0 %v234, 127
    %v246 = vpop.permute.xlu0 %245
    %v251 = vadd.f32 %v183, %v240
    %v252 = vadd.f32 %v184, %v242
    %v253 = vadd.f32 %v185, %v244
    %v254 = vadd.f32 %v186, %v246
    %s255 = sld [smem:[#allocation3 + $0x25]]
    %v256 = vstv %s255
    %v257 = vmul.f32 %v256, %v177
    %v258 = vmul.f32 %v256, %v178
    %v259 = vmul.f32 %v256, %v179
    %v260 = vmul.f32 %v256, %v180
    %265 = vrot.lane.b32.xlu0 %v257, 127
    %v266 = vpop.permute.xlu0 %265
    %267 = vrot.lane.b32.xlu0 %v258, 127
    %v268 = vpop.permute.xlu0 %267
    %269 = vrot.lane.b32.xlu0 %v259, 127
    %v270 = vpop.permute.xlu0 %269
    %271 = vrot.lane.b32.xlu0 %v260, 127
    %v272 = vpop.permute.xlu0 %271
    %v277 = vadd.f32 %v189, %v266
    %v278 = vadd.f32 %v190, %v268
    %v279 = vadd.f32 %v191, %v270
    %v280 = vadd.f32 %v192, %v272
    %s281 = sld [smem:[#allocation3 + $0x49]]
    %v282 = vstv %s281
    %v283 = vmul.f32 %v282, %v177
    %v284 = vmul.f32 %v282, %v178
    %v285 = vmul.f32 %v282, %v179
    %v286 = vmul.f32 %v282, %v180
    %291 = vrot.lane.b32.xlu0 %v283, 127
    %v292 = vpop.permute.xlu0 %291
    %293 = vrot.lane.b32.xlu0 %v284, 127
    %v294 = vpop.permute.xlu0 %293
    %295 = vrot.lane.b32.xlu0 %v285, 127
    %v296 = vpop.permute.xlu0 %295
    %297 = vrot.lane.b32.xlu0 %v286, 127
    %v298 = vpop.permute.xlu0 %297
    %v303 = vadd.f32 %v195, %v292
    %v304 = vadd.f32 %v196, %v294
    %v305 = vadd.f32 %v197, %v296
    %v306 = vadd.f32 %v198, %v298
    %s307 = sld [smem:[#allocation3 + $0x6d]]
    %v308 = vstv %s307
    %v309 = vmul.f32 %v308, %v177
    %v310 = vmul.f32 %v308, %v178
    %v311 = vmul.f32 %v308, %v179
    %v312 = vmul.f32 %v308, %v180
    %317 = vrot.lane.b32.xlu0 %v309, 127
    %v318 = vpop.permute.xlu0 %317
    %319 = vrot.lane.b32.xlu0 %v310, 127
    %v320 = vpop.permute.xlu0 %319
    %321 = vrot.lane.b32.xlu0 %v311, 127
    %v322 = vpop.permute.xlu0 %321
    %323 = vrot.lane.b32.xlu0 %v312, 127
    %v324 = vpop.permute.xlu0 %323
    %v329 = vadd.f32 %v201, %v318
    %v330 = vadd.f32 %v202, %v320
    %v331 = vadd.f32 %v203, %v322
    %v332 = vadd.f32 %v204, %v324
    %s333 = sld [smem:[#allocation3 + $0x91]]
    %v334 = vstv %s333
    %v335 = vmul.f32 %v334, %v177
    %v336 = vmul.f32 %v334, %v178
    %v337 = vmul.f32 %v334, %v179
    %v338 = vmul.f32 %v334, %v180
    %343 = vrot.lane.b32.xlu0 %v335, 127
    %v344 = vpop.permute.xlu0 %343
    %345 = vrot.lane.b32.xlu0 %v336, 127
    %v346 = vpop.permute.xlu0 %345
    %347 = vrot.lane.b32.xlu0 %v337, 127
    %v348 = vpop.permute.xlu0 %347
    %349 = vrot.lane.b32.xlu0 %v338, 127
    %v350 = vpop.permute.xlu0 %349
    %v355 = vadd.f32 %v207, %v344
    %v356 = vadd.f32 %v208, %v346
    %v357 = vadd.f32 %v209, %v348
    %v358 = vadd.f32 %v210, %v350
    %s359 = sld [smem:[#allocation3 + $0xb5]]
    %v360 = vstv %s359
    %v361 = vmul.f32 %v360, %v177
    %v362 = vmul.f32 %v360, %v178
    %v363 = vmul.f32 %v360, %v179
    %v364 = vmul.f32 %v360, %v180
    %369 = vrot.lane.b32.xlu0 %v361, 127
    %v370 = vpop.permute.xlu0 %369
    %371 = vrot.lane.b32.xlu0 %v362, 127
    %v372 = vpop.permute.xlu0 %371
    %373 = vrot.lane.b32.xlu0 %v363, 127
    %v374 = vpop.permute.xlu0 %373
    %375 = vrot.lane.b32.xlu0 %v364, 127
    %v376 = vpop.permute.xlu0 %375
    %v381 = vadd.f32 %v213, %v370
    %v382 = vadd.f32 %v214, %v372
    %v383 = vadd.f32 %v215, %v374
    %v384 = vadd.f32 %v216, %v376
    %s385 = sld [smem:[#allocation3 + $0xd9]]
    %v386 = vstv %s385
    %v387 = vmul.f32 %v386, %v177
    %v388 = vmul.f32 %v386, %v178
    %v389 = vmul.f32 %v386, %v179
    %v390 = vmul.f32 %v386, %v180
    %395 = vrot.lane.b32.xlu0 %v387, 127
    %v396 = vpop.permute.xlu0 %395
    %397 = vrot.lane.b32.xlu0 %v388, 127
    %v398 = vpop.permute.xlu0 %397
    %399 = vrot.lane.b32.xlu0 %v389, 127
    %v400 = vpop.permute.xlu0 %399
    %401 = vrot.lane.b32.xlu0 %v390, 127
    %v402 = vpop.permute.xlu0 %401
    %v407 = vadd.f32 %v219, %v396
    %v408 = vadd.f32 %v220, %v398
    %v409 = vadd.f32 %v221, %v400
    %v410 = vadd.f32 %v222, %v402
    %s411 = sld [smem:[#allocation3 + $0xfd]]
    %v412 = vstv %s411
    %v413 = vmul.f32 %v412, %v177
    %v414 = vmul.f32 %v412, %v178
    %v415 = vmul.f32 %v412, %v179
    %v416 = vmul.f32 %v412, %v180
    %421 = vrot.lane.b32.xlu0 %v413, 127
    %v422 = vpop.permute.xlu0 %421
    %423 = vrot.lane.b32.xlu0 %v414, 127
    %v424 = vpop.permute.xlu0 %423
    %425 = vrot.lane.b32.xlu0 %v415, 127
    %v426 = vpop.permute.xlu0 %425
    %427 = vrot.lane.b32.xlu0 %v416, 127
    %v428 = vpop.permute.xlu0 %427
    %v433 = vadd.f32 %v225, %v422
    %v434 = vadd.f32 %v226, %v424
    %v435 = vadd.f32 %v227, %v426
    %v436 = vadd.f32 %v228, %v428
    %s437 = sld [smem:[#allocation3 + $0x2]]
    %v438 = vstv %s437
    %v439 = vmul.f32 %v438, %v177
    %v440 = vmul.f32 %v438, %v178
    %v441 = vmul.f32 %v438, %v179
    %v442 = vmul.f32 %v438, %v180
    %447 = vrot.lane.b32.xlu0 %v439, 126
    %v448 = vpop.permute.xlu0 %447
    %449 = vrot.lane.b32.xlu0 %v440, 126
    %v450 = vpop.permute.xlu0 %449
    %451 = vrot.lane.b32.xlu0 %v441, 126
    %v452 = vpop.permute.xlu0 %451
    %453 = vrot.lane.b32.xlu0 %v442, 126
    %v454 = vpop.permute.xlu0 %453
    %v459 = vadd.f32 %v251, %v448
    %v460 = vadd.f32 %v252, %v450
    %v461 = vadd.f32 %v253, %v452
    %v462 = vadd.f32 %v254, %v454
    %s463 = sld [smem:[#allocation3 + $0x26]]
    %v464 = vstv %s463
    %v465 = vmul.f32 %v464, %v177
    %v466 = vmul.f32 %v464, %v178
    %v467 = vmul.f32 %v464, %v179
    %v468 = vmul.f32 %v464, %v180
    %473 = vrot.lane.b32.xlu0 %v465, 126
    %v474 = vpop.permute.xlu0 %473
    %475 = vrot.lane.b32.xlu0 %v466, 126
    %v476 = vpop.permute.xlu0 %475
    %477 = vrot.lane.b32.xlu0 %v467, 126
    %v478 = vpop.permute.xlu0 %477
    %479 = vrot.lane.b32.xlu0 %v468, 126
    %v480 = vpop.permute.xlu0 %479
    %v485 = vadd.f32 %v277, %v474
    %v486 = vadd.f32 %v278, %v476
    %v487 = vadd.f32 %v279, %v478
    %v488 = vadd.f32 %v280, %v480
    %s489 = sld [smem:[#allocation3 + $0x4a]]
    %v490 = vstv %s489
    %v491 = vmul.f32 %v490, %v177
    %v492 = vmul.f32 %v490, %v178
    %v493 = vmul.f32 %v490, %v179
    %v494 = vmul.f32 %v490, %v180
    %499 = vrot.lane.b32.xlu0 %v491, 126
    %v500 = vpop.permute.xlu0 %499
    %501 = vrot.lane.b32.xlu0 %v492, 126
    %v502 = vpop.permute.xlu0 %501
    %503 = vrot.lane.b32.xlu0 %v493, 126
    %v504 = vpop.permute.xlu0 %503
    %505 = vrot.lane.b32.xlu0 %v494, 126
    %v506 = vpop.permute.xlu0 %505
    %v511 = vadd.f32 %v303, %v500
    %v512 = vadd.f32 %v304, %v502
    %v513 = vadd.f32 %v305, %v504
    %v514 = vadd.f32 %v306, %v506
    %s515 = sld [smem:[#allocation3 + $0x6e]]
    %v516 = vstv %s515
    %v517 = vmul.f32 %v516, %v177
    %v518 = vmul.f32 %v516, %v178
    %v519 = vmul.f32 %v516, %v179
    %v520 = vmul.f32 %v516, %v180
    %525 = vrot.lane.b32.xlu0 %v517, 126
    %v526 = vpop.permute.xlu0 %525
    %527 = vrot.lane.b32.xlu0 %v518, 126
    %v528 = vpop.permute.xlu0 %527
    %529 = vrot.lane.b32.xlu0 %v519, 126
    %v530 = vpop.permute.xlu0 %529
    %531 = vrot.lane.b32.xlu0 %v520, 126
    %v532 = vpop.permute.xlu0 %531
    %v537 = vadd.f32 %v329, %v526
    %v538 = vadd.f32 %v330, %v528
    %v539 = vadd.f32 %v331, %v530
    %v540 = vadd.f32 %v332, %v532
    %s541 = sld [smem:[#allocation3 + $0x92]]
    %v542 = vstv %s541
    %v543 = vmul.f32 %v542, %v177
    %v544 = vmul.f32 %v542, %v178
    %v545 = vmul.f32 %v542, %v179
    %v546 = vmul.f32 %v542, %v180
    %551 = vrot.lane.b32.xlu0 %v543, 126
    %v552 = vpop.permute.xlu0 %551
    %553 = vrot.lane.b32.xlu0 %v544, 126
    %v554 = vpop.permute.xlu0 %553
    %555 = vrot.lane.b32.xlu0 %v545, 126
    %v556 = vpop.permute.xlu0 %555
    %557 = vrot.lane.b32.xlu0 %v546, 126
    %v558 = vpop.permute.xlu0 %557
    %v563 = vadd.f32 %v355, %v552
    %v564 = vadd.f32 %v356, %v554
    %v565 = vadd.f32 %v357, %v556
    %v566 = vadd.f32 %v358, %v558
    %s567 = sld [smem:[#allocation3 + $0xb6]]
    %v568 = vstv %s567
    %v569 = vmul.f32 %v568, %v177
    %v570 = vmul.f32 %v568, %v178
    %v571 = vmul.f32 %v568, %v179
    %v572 = vmul.f32 %v568, %v180
    %577 = vrot.lane.b32.xlu0 %v569, 126
    %v578 = vpop.permute.xlu0 %577
    %579 = vrot.lane.b32.xlu0 %v570, 126
    %v580 = vpop.permute.xlu0 %579
    %581 = vrot.lane.b32.xlu0 %v571, 126
    %v582 = vpop.permute.xlu0 %581
    %583 = vrot.lane.b32.xlu0 %v572, 126
    %v584 = vpop.permute.xlu0 %583
    %v589 = vadd.f32 %v381, %v578
    %v590 = vadd.f32 %v382, %v580
    %v591 = vadd.f32 %v383, %v582
    %v592 = vadd.f32 %v384, %v584
    %s593 = sld [smem:[#allocation3 + $0xda]]
    %v594 = vstv %s593
    %v595 = vmul.f32 %v594, %v177
    %v596 = vmul.f32 %v594, %v178
    %v597 = vmul.f32 %v594, %v179
    %v598 = vmul.f32 %v594, %v180
    %603 = vrot.lane.b32.xlu0 %v595, 126
    %v604 = vpop.permute.xlu0 %603
    %605 = vrot.lane.b32.xlu0 %v596, 126
    %v606 = vpop.permute.xlu0 %605
    %607 = vrot.lane.b32.xlu0 %v597, 126
    %v608 = vpop.permute.xlu0 %607
    %609 = vrot.lane.b32.xlu0 %v598, 126
    %v610 = vpop.permute.xlu0 %609
    %v615 = vadd.f32 %v407, %v604
    %v616 = vadd.f32 %v408, %v606
    %v617 = vadd.f32 %v409, %v608
    %v618 = vadd.f32 %v410, %v610
    %s619 = sld [smem:[#allocation3 + $0xfe]]
    %v620 = vstv %s619
    %v621 = vmul.f32 %v620, %v177
    %v622 = vmul.f32 %v620, %v178
    %v623 = vmul.f32 %v620, %v179
    %v624 = vmul.f32 %v620, %v180
    %629 = vrot.lane.b32.xlu0 %v621, 126
    %v630 = vpop.permute.xlu0 %629
    %631 = vrot.lane.b32.xlu0 %v622, 126
    %v632 = vpop.permute.xlu0 %631
    %633 = vrot.lane.b32.xlu0 %v623, 126
    %v634 = vpop.permute.xlu0 %633
    %635 = vrot.lane.b32.xlu0 %v624, 126
    %v636 = vpop.permute.xlu0 %635
    %v641 = vadd.f32 %v433, %v630
    %v642 = vadd.f32 %v434, %v632
    %v643 = vadd.f32 %v435, %v634
    %v644 = vadd.f32 %v436, %v636
    %v645 = vld [vmem:[#allocation2 + $0x1] sm:$0xff]
    %v646 = vld [vmem:[#allocation2 + $0x9] sm:$0xff]
    %v647 = vld [vmem:[#allocation2 + $0x61] sm:$0xff]
    %v648 = vld [vmem:[#allocation2 + $0x69] sm:$0xff]
    %s649 = sld [smem:[#allocation3 + $0x3]]
    %v650 = vstv %s649
    %v651 = vmul.f32 %v650, %v645
    %v652 = vmul.f32 %v650, %v646
    %v653 = vmul.f32 %v650, %v647
    %v654 = vmul.f32 %v650, %v648
    %v655 = vadd.f32 %v459, %v651
    %v656 = vadd.f32 %v460, %v652
    %v657 = vadd.f32 %v461, %v653
    %v658 = vadd.f32 %v462, %v654
    %s659 = sld [smem:[#allocation3 + $0x27]]
    %v660 = vstv %s659
    %v661 = vmul.f32 %v660, %v645
    %v662 = vmul.f32 %v660, %v646
    %v663 = vmul.f32 %v660, %v647
    %v664 = vmul.f32 %v660, %v648
    %v665 = vadd.f32 %v485, %v661
    %v666 = vadd.f32 %v486, %v662
    %v667 = vadd.f32 %v487, %v663
    %v668 = vadd.f32 %v488, %v664
    %s669 = sld [smem:[#allocation3 + $0x4b]]
    %v670 = vstv %s669
    %v671 = vmul.f32 %v670, %v645
    %v672 = vmul.f32 %v670, %v646
    %v673 = vmul.f32 %v670, %v647
    %v674 = vmul.f32 %v670, %v648
    %v675 = vadd.f32 %v511, %v671
    %v676 = vadd.f32 %v512, %v672
    %v677 = vadd.f32 %v513, %v673
    %v678 = vadd.f32 %v514, %v674
    %s679 = sld [smem:[#allocation3 + $0x6f]]
    %v680 = vstv %s679
    %v681 = vmul.f32 %v680, %v645
    %v682 = vmul.f32 %v680, %v646
    %v683 = vmul.f32 %v680, %v647
    %v684 = vmul.f32 %v680, %v648
    %v685 = vadd.f32 %v537, %v681
    %v686 = vadd.f32 %v538, %v682
    %v687 = vadd.f32 %v539, %v683
    %v688 = vadd.f32 %v540, %v684
    %s689 = sld [smem:[#allocation3 + $0x93]]
    %v690 = vstv %s689
    %v691 = vmul.f32 %v690, %v645
    %v692 = vmul.f32 %v690, %v646
    %v693 = vmul.f32 %v690, %v647
    %v694 = vmul.f32 %v690, %v648
    %v695 = vadd.f32 %v563, %v691
    %v696 = vadd.f32 %v564, %v692
    %v697 = vadd.f32 %v565, %v693
    %v698 = vadd.f32 %v566, %v694
    %s699 = sld [smem:[#allocation3 + $0xb7]]
    %v700 = vstv %s699
    %v701 = vmul.f32 %v700, %v645
    %v702 = vmul.f32 %v700, %v646
    %v703 = vmul.f32 %v700, %v647
    %v704 = vmul.f32 %v700, %v648
    %v705 = vadd.f32 %v589, %v701
    %v706 = vadd.f32 %v590, %v702
    %v707 = vadd.f32 %v591, %v703
    %v708 = vadd.f32 %v592, %v704
    %s709 = sld [smem:[#allocation3 + $0xdb]]
    %v710 = vstv %s709
    %v711 = vmul.f32 %v710, %v645
    %v712 = vmul.f32 %v710, %v646
    %v713 = vmul.f32 %v710, %v647
    %v714 = vmul.f32 %v710, %v648
    %v715 = vadd.f32 %v615, %v711
    %v716 = vadd.f32 %v616, %v712
    %v717 = vadd.f32 %v617, %v713
    %v718 = vadd.f32 %v618, %v714
    %s719 = sld [smem:[#allocation3 + $0xff]]
    %v720 = vstv %s719
    %v721 = vmul.f32 %v720, %v645
    %v722 = vmul.f32 %v720, %v646
    %v723 = vmul.f32 %v720, %v647
    %v724 = vmul.f32 %v720, %v648
    %v725 = vadd.f32 %v641, %v721
    %v726 = vadd.f32 %v642, %v722
    %v727 = vadd.f32 %v643, %v723
    %v728 = vadd.f32 %v644, %v724
    %s729 = sld [smem:[#allocation3 + $0x4]]
    %v730 = vstv %s729
    %v731 = vmul.f32 %v730, %v645
    %v732 = vmul.f32 %v730, %v646
    %v733 = vmul.f32 %v730, %v647
    %v734 = vmul.f32 %v730, %v648
    %739 = vrot.lane.b32.xlu0 %v731, 127
    %v740 = vpop.permute.xlu0 %739
    %741 = vrot.lane.b32.xlu0 %v732, 127
    %v742 = vpop.permute.xlu0 %741
    %743 = vrot.lane.b32.xlu0 %v733, 127
    %v744 = vpop.permute.xlu0 %743
    %745 = vrot.lane.b32.xlu0 %v734, 127
    %v746 = vpop.permute.xlu0 %745
    %v751 = vadd.f32 %v655, %v740
    %v752 = vadd.f32 %v656, %v742
    %v753 = vadd.f32 %v657, %v744
    %v754 = vadd.f32 %v658, %v746
    %s755 = sld [smem:[#allocation3 + $0x28]]
    %v756 = vstv %s755
    %v757 = vmul.f32 %v756, %v645
    %v758 = vmul.f32 %v756, %v646
    %v759 = vmul.f32 %v756, %v647
    %v760 = vmul.f32 %v756, %v648
    %765 = vrot.lane.b32.xlu0 %v757, 127
    %v766 = vpop.permute.xlu0 %765
    %767 = vrot.lane.b32.xlu0 %v758, 127
    %v768 = vpop.permute.xlu0 %767
    %769 = vrot.lane.b32.xlu0 %v759, 127
    %v770 = vpop.permute.xlu0 %769
    %771 = vrot.lane.b32.xlu0 %v760, 127
    %v772 = vpop.permute.xlu0 %771
    %v777 = vadd.f32 %v665, %v766
    %v778 = vadd.f32 %v666, %v768
    %v779 = vadd.f32 %v667, %v770
    %v780 = vadd.f32 %v668, %v772
    %s781 = sld [smem:[#allocation3 + $0x4c]]
    %v782 = vstv %s781
    %v783 = vmul.f32 %v782, %v645
    %v784 = vmul.f32 %v782, %v646
    %v785 = vmul.f32 %v782, %v647
    %v786 = vmul.f32 %v782, %v648
    %791 = vrot.lane.b32.xlu0 %v783, 127
    %v792 = vpop.permute.xlu0 %791
    %793 = vrot.lane.b32.xlu0 %v784, 127
    %v794 = vpop.permute.xlu0 %793
    %795 = vrot.lane.b32.xlu0 %v785, 127
    %v796 = vpop.permute.xlu0 %795
    %797 = vrot.lane.b32.xlu0 %v786, 127
    %v798 = vpop.permute.xlu0 %797
    %v803 = vadd.f32 %v675, %v792
    %v804 = vadd.f32 %v676, %v794
    %v805 = vadd.f32 %v677, %v796
    %v806 = vadd.f32 %v678, %v798
    %s807 = sld [smem:[#allocation3 + $0x70]]
    %v808 = vstv %s807
    %v809 = vmul.f32 %v808, %v645
    %v810 = vmul.f32 %v808, %v646
    %v811 = vmul.f32 %v808, %v647
    %v812 = vmul.f32 %v808, %v648
    %817 = vrot.lane.b32.xlu0 %v809, 127
    %v818 = vpop.permute.xlu0 %817
    %819 = vrot.lane.b32.xlu0 %v810, 127
    %v820 = vpop.permute.xlu0 %819
    %821 = vrot.lane.b32.xlu0 %v811, 127
    %v822 = vpop.permute.xlu0 %821
    %823 = vrot.lane.b32.xlu0 %v812, 127
    %v824 = vpop.permute.xlu0 %823
    %v829 = vadd.f32 %v685, %v818
    %v830 = vadd.f32 %v686, %v820
    %v831 = vadd.f32 %v687, %v822
    %v832 = vadd.f32 %v688, %v824
    %s833 = sld [smem:[#allocation3 + $0x94]]
    %v834 = vstv %s833
    %v835 = vmul.f32 %v834, %v645
    %v836 = vmul.f32 %v834, %v646
    %v837 = vmul.f32 %v834, %v647
    %v838 = vmul.f32 %v834, %v648
    %843 = vrot.lane.b32.xlu0 %v835, 127
    %v844 = vpop.permute.xlu0 %843
    %845 = vrot.lane.b32.xlu0 %v836, 127
    %v846 = vpop.permute.xlu0 %845
    %847 = vrot.lane.b32.xlu0 %v837, 127
    %v848 = vpop.permute.xlu0 %847
    %849 = vrot.lane.b32.xlu0 %v838, 127
    %v850 = vpop.permute.xlu0 %849
    %v855 = vadd.f32 %v695, %v844
    %v856 = vadd.f32 %v696, %v846
    %v857 = vadd.f32 %v697, %v848
    %v858 = vadd.f32 %v698, %v850
    %s859 = sld [smem:[#allocation3 + $0xb8]]
    %v860 = vstv %s859
    %v861 = vmul.f32 %v860, %v645
    %v862 = vmul.f32 %v860, %v646
    %v863 = vmul.f32 %v860, %v647
    %v864 = vmul.f32 %v860, %v648
    %869 = vrot.lane.b32.xlu0 %v861, 127
    %v870 = vpop.permute.xlu0 %869
    %871 = vrot.lane.b32.xlu0 %v862, 127
    %v872 = vpop.permute.xlu0 %871
    %873 = vrot.lane.b32.xlu0 %v863, 127
    %v874 = vpop.permute.xlu0 %873
    %875 = vrot.lane.b32.xlu0 %v864, 127
    %v876 = vpop.permute.xlu0 %875
    %v881 = vadd.f32 %v705, %v870
    %v882 = vadd.f32 %v706, %v872
    %v883 = vadd.f32 %v707, %v874
    %v884 = vadd.f32 %v708, %v876
    %s885 = sld [smem:[#allocation3 + $0xdc]]
    %v886 = vstv %s885
    %v887 = vmul.f32 %v886, %v645
    %v888 = vmul.f32 %v886, %v646
    %v889 = vmul.f32 %v886, %v647
    %v890 = vmul.f32 %v886, %v648
    %895 = vrot.lane.b32.xlu0 %v887, 127
    %v896 = vpop.permute.xlu0 %895
    %897 = vrot.lane.b32.xlu0 %v888, 127
    %v898 = vpop.permute.xlu0 %897
    %899 = vrot.lane.b32.xlu0 %v889, 127
    %v900 = vpop.permute.xlu0 %899
    %901 = vrot.lane.b32.xlu0 %v890, 127
    %v902 = vpop.permute.xlu0 %901
    %v907 = vadd.f32 %v715, %v896
    %v908 = vadd.f32 %v716, %v898
    %v909 = vadd.f32 %v717, %v900
    %v910 = vadd.f32 %v718, %v902
    %s911 = sld [smem:[#allocation3 + $0x100]]
    %v912 = vstv %s911
    %v913 = vmul.f32 %v912, %v645
    %v914 = vmul.f32 %v912, %v646
    %v915 = vmul.f32 %v912, %v647
    %v916 = vmul.f32 %v912, %v648
    %921 = vrot.lane.b32.xlu0 %v913, 127
    %v922 = vpop.permute.xlu0 %921
    %923 = vrot.lane.b32.xlu0 %v914, 127
    %v924 = vpop.permute.xlu0 %923
    %925 = vrot.lane.b32.xlu0 %v915, 127
    %v926 = vpop.permute.xlu0 %925
    %927 = vrot.lane.b32.xlu0 %v916, 127
    %v928 = vpop.permute.xlu0 %927
    %v933 = vadd.f32 %v725, %v922
    %v934 = vadd.f32 %v726, %v924
    %v935 = vadd.f32 %v727, %v926
    %v936 = vadd.f32 %v728, %v928
    %s937 = sld [smem:[#allocation3 + $0x5]]
    %v938 = vstv %s937
    %v939 = vmul.f32 %v938, %v645
    %v940 = vmul.f32 %v938, %v646
    %v941 = vmul.f32 %v938, %v647
    %v942 = vmul.f32 %v938, %v648
    %947 = vrot.lane.b32.xlu0 %v939, 126
    %v948 = vpop.permute.xlu0 %947
    %949 = vrot.lane.b32.xlu0 %v940, 126
    %v950 = vpop.permute.xlu0 %949
    %951 = vrot.lane.b32.xlu0 %v941, 126
    %v952 = vpop.permute.xlu0 %951
    %953 = vrot.lane.b32.xlu0 %v942, 126
    %v954 = vpop.permute.xlu0 %953
    %v959 = vadd.f32 %v751, %v948
    %v960 = vadd.f32 %v752, %v950
    %v961 = vadd.f32 %v753, %v952
    %v962 = vadd.f32 %v754, %v954
    %s963 = sld [smem:[#allocation3 + $0x29]]
    %v964 = vstv %s963
    %v965 = vmul.f32 %v964, %v645
    %v966 = vmul.f32 %v964, %v646
    %v967 = vmul.f32 %v964, %v647
    %v968 = vmul.f32 %v964, %v648
    %973 = vrot.lane.b32.xlu0 %v965, 126
    %v974 = vpop.permute.xlu0 %973
    %975 = vrot.lane.b32.xlu0 %v966, 126
    %v976 = vpop.permute.xlu0 %975
    %977 = vrot.lane.b32.xlu0 %v967, 126
    %v978 = vpop.permute.xlu0 %977
    %979 = vrot.lane.b32.xlu0 %v968, 126
    %v980 = vpop.permute.xlu0 %979
    %v985 = vadd.f32 %v777, %v974
    %v986 = vadd.f32 %v778, %v976
    %v987 = vadd.f32 %v779, %v978
    %v988 = vadd.f32 %v780, %v980
    %s989 = sld [smem:[#allocation3 + $0x4d]]
    %v990 = vstv %s989
    %v991 = vmul.f32 %v990, %v645
    %v992 = vmul.f32 %v990, %v646
    %v993 = vmul.f32 %v990, %v647
    %v994 = vmul.f32 %v990, %v648
    %999 = vrot.lane.b32.xlu0 %v991, 126
    %v1000 = vpop.permute.xlu0 %999
    %1001 = vrot.lane.b32.xlu0 %v992, 126
    %v1002 = vpop.permute.xlu0 %1001
    %1003 = vrot.lane.b32.xlu0 %v993, 126
    %v1004 = vpop.permute.xlu0 %1003
    %1005 = vrot.lane.b32.xlu0 %v994, 126
    %v1006 = vpop.permute.xlu0 %1005
    %v1011 = vadd.f32 %v803, %v1000
    %v1012 = vadd.f32 %v804, %v1002
    %v1013 = vadd.f32 %v805, %v1004
    %v1014 = vadd.f32 %v806, %v1006
    %s1015 = sld [smem:[#allocation3 + $0x71]]
    %v1016 = vstv %s1015
    %v1017 = vmul.f32 %v1016, %v645
    %v1018 = vmul.f32 %v1016, %v646
    %v1019 = vmul.f32 %v1016, %v647
    %v1020 = vmul.f32 %v1016, %v648
    %1025 = vrot.lane.b32.xlu0 %v1017, 126
    %v1026 = vpop.permute.xlu0 %1025
    %1027 = vrot.lane.b32.xlu0 %v1018, 126
    %v1028 = vpop.permute.xlu0 %1027
    %1029 = vrot.lane.b32.xlu0 %v1019, 126
    %v1030 = vpop.permute.xlu0 %1029
    %1031 = vrot.lane.b32.xlu0 %v1020, 126
    %v1032 = vpop.permute.xlu0 %1031
    %v1037 = vadd.f32 %v829, %v1026
    %v1038 = vadd.f32 %v830, %v1028
    %v1039 = vadd.f32 %v831, %v1030
    %v1040 = vadd.f32 %v832, %v1032
    %s1041 = sld [smem:[#allocation3 + $0x95]]
    %v1042 = vstv %s1041
    %v1043 = vmul.f32 %v1042, %v645
    %v1044 = vmul.f32 %v1042, %v646
    %v1045 = vmul.f32 %v1042, %v647
    %v1046 = vmul.f32 %v1042, %v648
    %1051 = vrot.lane.b32.xlu0 %v1043, 126
    %v1052 = vpop.permute.xlu0 %1051
    %1053 = vrot.lane.b32.xlu0 %v1044, 126
    %v1054 = vpop.permute.xlu0 %1053
    %1055 = vrot.lane.b32.xlu0 %v1045, 126
    %v1056 = vpop.permute.xlu0 %1055
    %1057 = vrot.lane.b32.xlu0 %v1046, 126
    %v1058 = vpop.permute.xlu0 %1057
    %v1063 = vadd.f32 %v855, %v1052
    %v1064 = vadd.f32 %v856, %v1054
    %v1065 = vadd.f32 %v857, %v1056
    %v1066 = vadd.f32 %v858, %v1058
    %s1067 = sld [smem:[#allocation3 + $0xb9]]
    %v1068 = vstv %s1067
    %v1069 = vmul.f32 %v1068, %v645
    %v1070 = vmul.f32 %v1068, %v646
    %v1071 = vmul.f32 %v1068, %v647
    %v1072 = vmul.f32 %v1068, %v648
    %1077 = vrot.lane.b32.xlu0 %v1069, 126
    %v1078 = vpop.permute.xlu0 %1077
    %1079 = vrot.lane.b32.xlu0 %v1070, 126
    %v1080 = vpop.permute.xlu0 %1079
    %1081 = vrot.lane.b32.xlu0 %v1071, 126
    %v1082 = vpop.permute.xlu0 %1081
    %1083 = vrot.lane.b32.xlu0 %v1072, 126
    %v1084 = vpop.permute.xlu0 %1083
    %v1089 = vadd.f32 %v881, %v1078
    %v1090 = vadd.f32 %v882, %v1080
    %v1091 = vadd.f32 %v883, %v1082
    %v1092 = vadd.f32 %v884, %v1084
    %s1093 = sld [smem:[#allocation3 + $0xdd]]
    %v1094 = vstv %s1093
    %v1095 = vmul.f32 %v1094, %v645
    %v1096 = vmul.f32 %v1094, %v646
    %v1097 = vmul.f32 %v1094, %v647
    %v1098 = vmul.f32 %v1094, %v648
    %1103 = vrot.lane.b32.xlu0 %v1095, 126
    %v1104 = vpop.permute.xlu0 %1103
    %1105 = vrot.lane.b32.xlu0 %v1096, 126
    %v1106 = vpop.permute.xlu0 %1105
    %1107 = vrot.lane.b32.xlu0 %v1097, 126
    %v1108 = vpop.permute.xlu0 %1107
    %1109 = vrot.lane.b32.xlu0 %v1098, 126
    %v1110 = vpop.permute.xlu0 %1109
    %v1115 = vadd.f32 %v907, %v1104
    %v1116 = vadd.f32 %v908, %v1106
    %v1117 = vadd.f32 %v909, %v1108
    %v1118 = vadd.f32 %v910, %v1110
    %s1119 = sld [smem:[#allocation3 + $0x101]]
    %v1120 = vstv %s1119
    %v1121 = vmul.f32 %v1120, %v645
    %v1122 = vmul.f32 %v1120, %v646
    %v1123 = vmul.f32 %v1120, %v647
    %v1124 = vmul.f32 %v1120, %v648
    %1129 = vrot.lane.b32.xlu0 %v1121, 126
    %v1130 = vpop.permute.xlu0 %1129
    %1131 = vrot.lane.b32.xlu0 %v1122, 126
    %v1132 = vpop.permute.xlu0 %1131
    %1133 = vrot.lane.b32.xlu0 %v1123, 126
    %v1134 = vpop.permute.xlu0 %1133
    %1135 = vrot.lane.b32.xlu0 %v1124, 126
    %v1136 = vpop.permute.xlu0 %1135
    %v1141 = vadd.f32 %v933, %v1130
    %v1142 = vadd.f32 %v934, %v1132
    %v1143 = vadd.f32 %v935, %v1134
    %v1144 = vadd.f32 %v936, %v1136
    %v1145 = vld [vmem:[#allocation2 + $0x2] sm:$0xff]
    %v1146 = vld [vmem:[#allocation2 + $0xa] sm:$0xff]
    %v1147 = vld [vmem:[#allocation2 + $0x62] sm:$0xff]
    %v1148 = vld [vmem:[#allocation2 + $0x6a] sm:$0xff]
    %s1149 = sld [smem:[#allocation3 + $0x6]]
    %v1150 = vstv %s1149
    %v1151 = vmul.f32 %v1150, %v1145
    %v1152 = vmul.f32 %v1150, %v1146
    %v1153 = vmul.f32 %v1150, %v1147
    %v1154 = vmul.f32 %v1150, %v1148
    %v1155 = vadd.f32 %v959, %v1151
    %v1156 = vadd.f32 %v960, %v1152
    %v1157 = vadd.f32 %v961, %v1153
    %v1158 = vadd.f32 %v962, %v1154
    %s1159 = sld [smem:[#allocation3 + $0x2a]]
    %v1160 = vstv %s1159
    %v1161 = vmul.f32 %v1160, %v1145
    %v1162 = vmul.f32 %v1160, %v1146
    %v1163 = vmul.f32 %v1160, %v1147
    %v1164 = vmul.f32 %v1160, %v1148
    %v1165 = vadd.f32 %v985, %v1161
    %v1166 = vadd.f32 %v986, %v1162
    %v1167 = vadd.f32 %v987, %v1163
    %v1168 = vadd.f32 %v988, %v1164
    %s1169 = sld [smem:[#allocation3 + $0x4e]]
    %v1170 = vstv %s1169
    %v1171 = vmul.f32 %v1170, %v1145
    %v1172 = vmul.f32 %v1170, %v1146
    %v1173 = vmul.f32 %v1170, %v1147
    %v1174 = vmul.f32 %v1170, %v1148
    %v1175 = vadd.f32 %v1011, %v1171
    %v1176 = vadd.f32 %v1012, %v1172
    %v1177 = vadd.f32 %v1013, %v1173
    %v1178 = vadd.f32 %v1014, %v1174
    %s1179 = sld [smem:[#allocation3 + $0x72]]
    %v1180 = vstv %s1179
    %v1181 = vmul.f32 %v1180, %v1145
    %v1182 = vmul.f32 %v1180, %v1146
    %v1183 = vmul.f32 %v1180, %v1147
    %v1184 = vmul.f32 %v1180, %v1148
    %v1185 = vadd.f32 %v1037, %v1181
    %v1186 = vadd.f32 %v1038, %v1182
    %v1187 = vadd.f32 %v1039, %v1183
    %v1188 = vadd.f32 %v1040, %v1184
    %s1189 = sld [smem:[#allocation3 + $0x96]]
    %v1190 = vstv %s1189
    %v1191 = vmul.f32 %v1190, %v1145
    %v1192 = vmul.f32 %v1190, %v1146
    %v1193 = vmul.f32 %v1190, %v1147
    %v1194 = vmul.f32 %v1190, %v1148
    %v1195 = vadd.f32 %v1063, %v1191
    %v1196 = vadd.f32 %v1064, %v1192
    %v1197 = vadd.f32 %v1065, %v1193
    %v1198 = vadd.f32 %v1066, %v1194
    %s1199 = sld [smem:[#allocation3 + $0xba]]
    %v1200 = vstv %s1199
    %v1201 = vmul.f32 %v1200, %v1145
    %v1202 = vmul.f32 %v1200, %v1146
    %v1203 = vmul.f32 %v1200, %v1147
    %v1204 = vmul.f32 %v1200, %v1148
    %v1205 = vadd.f32 %v1089, %v1201
    %v1206 = vadd.f32 %v1090, %v1202
    %v1207 = vadd.f32 %v1091, %v1203
    %v1208 = vadd.f32 %v1092, %v1204
    %s1209 = sld [smem:[#allocation3 + $0xde]]
    %v1210 = vstv %s1209
    %v1211 = vmul.f32 %v1210, %v1145
    %v1212 = vmul.f32 %v1210, %v1146
    %v1213 = vmul.f32 %v1210, %v1147
    %v1214 = vmul.f32 %v1210, %v1148
    %v1215 = vadd.f32 %v1115, %v1211
    %v1216 = vadd.f32 %v1116, %v1212
    %v1217 = vadd.f32 %v1117, %v1213
    %v1218 = vadd.f32 %v1118, %v1214
    %s1219 = sld [smem:[#allocation3 + $0x102]]
    %v1220 = vstv %s1219
    %v1221 = vmul.f32 %v1220, %v1145
    %v1222 = vmul.f32 %v1220, %v1146
    %v1223 = vmul.f32 %v1220, %v1147
    %v1224 = vmul.f32 %v1220, %v1148
    %v1225 = vadd.f32 %v1141, %v1221
    %v1226 = vadd.f32 %v1142, %v1222
    %v1227 = vadd.f32 %v1143, %v1223
    %v1228 = vadd.f32 %v1144, %v1224
    %s1229 = sld [smem:[#allocation3 + $0x7]]
    %v1230 = vstv %s1229
    %v1231 = vmul.f32 %v1230, %v1145
    %v1232 = vmul.f32 %v1230, %v1146
    %v1233 = vmul.f32 %v1230, %v1147
    %v1234 = vmul.f32 %v1230, %v1148
    %1239 = vrot.lane.b32.xlu0 %v1231, 127
    %v1240 = vpop.permute.xlu0 %1239
    %1241 = vrot.lane.b32.xlu0 %v1232, 127
    %v1242 = vpop.permute.xlu0 %1241
    %1243 = vrot.lane.b32.xlu0 %v1233, 127
    %v1244 = vpop.permute.xlu0 %1243
    %1245 = vrot.lane.b32.xlu0 %v1234, 127
    %v1246 = vpop.permute.xlu0 %1245
    %v1251 = vadd.f32 %v1155, %v1240
    %v1252 = vadd.f32 %v1156, %v1242
    %v1253 = vadd.f32 %v1157, %v1244
    %v1254 = vadd.f32 %v1158, %v1246
    %s1255 = sld [smem:[#allocation3 + $0x2b]]
    %v1256 = vstv %s1255
    %v1257 = vmul.f32 %v1256, %v1145
    %v1258 = vmul.f32 %v1256, %v1146
    %v1259 = vmul.f32 %v1256, %v1147
    %v1260 = vmul.f32 %v1256, %v1148
    %1265 = vrot.lane.b32.xlu0 %v1257, 127
    %v1266 = vpop.permute.xlu0 %1265
    %1267 = vrot.lane.b32.xlu0 %v1258, 127
    %v1268 = vpop.permute.xlu0 %1267
    %1269 = vrot.lane.b32.xlu0 %v1259, 127
    %v1270 = vpop.permute.xlu0 %1269
    %1271 = vrot.lane.b32.xlu0 %v1260, 127
    %v1272 = vpop.permute.xlu0 %1271
    %v1277 = vadd.f32 %v1165, %v1266
    %v1278 = vadd.f32 %v1166, %v1268
    %v1279 = vadd.f32 %v1167, %v1270
    %v1280 = vadd.f32 %v1168, %v1272
    %s1281 = sld [smem:[#allocation3 + $0x4f]]
    %v1282 = vstv %s1281
    %v1283 = vmul.f32 %v1282, %v1145
    %v1284 = vmul.f32 %v1282, %v1146
    %v1285 = vmul.f32 %v1282, %v1147
    %v1286 = vmul.f32 %v1282, %v1148
    %1291 = vrot.lane.b32.xlu0 %v1283, 127
    %v1292 = vpop.permute.xlu0 %1291
    %1293 = vrot.lane.b32.xlu0 %v1284, 127
    %v1294 = vpop.permute.xlu0 %1293
    %1295 = vrot.lane.b32.xlu0 %v1285, 127
    %v1296 = vpop.permute.xlu0 %1295
    %1297 = vrot.lane.b32.xlu0 %v1286, 127
    %v1298 = vpop.permute.xlu0 %1297
    %v1303 = vadd.f32 %v1175, %v1292
    %v1304 = vadd.f32 %v1176, %v1294
    %v1305 = vadd.f32 %v1177, %v1296
    %v1306 = vadd.f32 %v1178, %v1298
    %s1307 = sld [smem:[#allocation3 + $0x73]]
    %v1308 = vstv %s1307
    %v1309 = vmul.f32 %v1308, %v1145
    %v1310 = vmul.f32 %v1308, %v1146
    %v1311 = vmul.f32 %v1308, %v1147
    %v1312 = vmul.f32 %v1308, %v1148
    %1317 = vrot.lane.b32.xlu0 %v1309, 127
    %v1318 = vpop.permute.xlu0 %1317
    %1319 = vrot.lane.b32.xlu0 %v1310, 127
    %v1320 = vpop.permute.xlu0 %1319
    %1321 = vrot.lane.b32.xlu0 %v1311, 127
    %v1322 = vpop.permute.xlu0 %1321
    %1323 = vrot.lane.b32.xlu0 %v1312, 127
    %v1324 = vpop.permute.xlu0 %1323
    %v1329 = vadd.f32 %v1185, %v1318
    %v1330 = vadd.f32 %v1186, %v1320
    %v1331 = vadd.f32 %v1187, %v1322
    %v1332 = vadd.f32 %v1188, %v1324
    %s1333 = sld [smem:[#allocation3 + $0x97]]
    %v1334 = vstv %s1333
    %v1335 = vmul.f32 %v1334, %v1145
    %v1336 = vmul.f32 %v1334, %v1146
    %v1337 = vmul.f32 %v1334, %v1147
    %v1338 = vmul.f32 %v1334, %v1148
    %1343 = vrot.lane.b32.xlu0 %v1335, 127
    %v1344 = vpop.permute.xlu0 %1343
    %1345 = vrot.lane.b32.xlu0 %v1336, 127
    %v1346 = vpop.permute.xlu0 %1345
    %1347 = vrot.lane.b32.xlu0 %v1337, 127
    %v1348 = vpop.permute.xlu0 %1347
    %1349 = vrot.lane.b32.xlu0 %v1338, 127
    %v1350 = vpop.permute.xlu0 %1349
    %v1355 = vadd.f32 %v1195, %v1344
    %v1356 = vadd.f32 %v1196, %v1346
    %v1357 = vadd.f32 %v1197, %v1348
    %v1358 = vadd.f32 %v1198, %v1350
    %s1359 = sld [smem:[#allocation3 + $0xbb]]
    %v1360 = vstv %s1359
    %v1361 = vmul.f32 %v1360, %v1145
    %v1362 = vmul.f32 %v1360, %v1146
    %v1363 = vmul.f32 %v1360, %v1147
    %v1364 = vmul.f32 %v1360, %v1148
    %1369 = vrot.lane.b32.xlu0 %v1361, 127
    %v1370 = vpop.permute.xlu0 %1369
    %1371 = vrot.lane.b32.xlu0 %v1362, 127
    %v1372 = vpop.permute.xlu0 %1371
    %1373 = vrot.lane.b32.xlu0 %v1363, 127
    %v1374 = vpop.permute.xlu0 %1373
    %1375 = vrot.lane.b32.xlu0 %v1364, 127
    %v1376 = vpop.permute.xlu0 %1375
    %v1381 = vadd.f32 %v1205, %v1370
    %v1382 = vadd.f32 %v1206, %v1372
    %v1383 = vadd.f32 %v1207, %v1374
    %v1384 = vadd.f32 %v1208, %v1376
    %s1385 = sld [smem:[#allocation3 + $0xdf]]
    %v1386 = vstv %s1385
    %v1387 = vmul.f32 %v1386, %v1145
    %v1388 = vmul.f32 %v1386, %v1146
    %v1389 = vmul.f32 %v1386, %v1147
    %v1390 = vmul.f32 %v1386, %v1148
    %1395 = vrot.lane.b32.xlu0 %v1387, 127
    %v1396 = vpop.permute.xlu0 %1395
    %1397 = vrot.lane.b32.xlu0 %v1388, 127
    %v1398 = vpop.permute.xlu0 %1397
    %1399 = vrot.lane.b32.xlu0 %v1389, 127
    %v1400 = vpop.permute.xlu0 %1399
    %1401 = vrot.lane.b32.xlu0 %v1390, 127
    %v1402 = vpop.permute.xlu0 %1401
    %v1407 = vadd.f32 %v1215, %v1396
    %v1408 = vadd.f32 %v1216, %v1398
    %v1409 = vadd.f32 %v1217, %v1400
    %v1410 = vadd.f32 %v1218, %v1402
    %s1411 = sld [smem:[#allocation3 + $0x103]]
    %v1412 = vstv %s1411
    %v1413 = vmul.f32 %v1412, %v1145
    %v1414 = vmul.f32 %v1412, %v1146
    %v1415 = vmul.f32 %v1412, %v1147
    %v1416 = vmul.f32 %v1412, %v1148
    %1421 = vrot.lane.b32.xlu0 %v1413, 127
    %v1422 = vpop.permute.xlu0 %1421
    %1423 = vrot.lane.b32.xlu0 %v1414, 127
    %v1424 = vpop.permute.xlu0 %1423
    %1425 = vrot.lane.b32.xlu0 %v1415, 127
    %v1426 = vpop.permute.xlu0 %1425
    %1427 = vrot.lane.b32.xlu0 %v1416, 127
    %v1428 = vpop.permute.xlu0 %1427
    %v1433 = vadd.f32 %v1225, %v1422
    %v1434 = vadd.f32 %v1226, %v1424
    %v1435 = vadd.f32 %v1227, %v1426
    %v1436 = vadd.f32 %v1228, %v1428
    %s1437 = sld [smem:[#allocation3 + $0x8]]
    %v1438 = vstv %s1437
    %v1439 = vmul.f32 %v1438, %v1145
    %v1440 = vmul.f32 %v1438, %v1146
    %v1441 = vmul.f32 %v1438, %v1147
    %v1442 = vmul.f32 %v1438, %v1148
    %1447 = vrot.lane.b32.xlu0 %v1439, 126
    %v1448 = vpop.permute.xlu0 %1447
    %1449 = vrot.lane.b32.xlu0 %v1440, 126
    %v1450 = vpop.permute.xlu0 %1449
    %1451 = vrot.lane.b32.xlu0 %v1441, 126
    %v1452 = vpop.permute.xlu0 %1451
    %1453 = vrot.lane.b32.xlu0 %v1442, 126
    %v1454 = vpop.permute.xlu0 %1453
    %v1459 = vadd.f32 %v1251, %v1448
    %v1460 = vadd.f32 %v1252, %v1450
    %v1461 = vadd.f32 %v1253, %v1452
    %v1462 = vadd.f32 %v1254, %v1454
    %s1463 = sld [smem:[#allocation3 + $0x2c]]
    %v1464 = vstv %s1463
    %v1465 = vmul.f32 %v1464, %v1145
    %v1466 = vmul.f32 %v1464, %v1146
    %v1467 = vmul.f32 %v1464, %v1147
    %v1468 = vmul.f32 %v1464, %v1148
    %1473 = vrot.lane.b32.xlu0 %v1465, 126
    %v1474 = vpop.permute.xlu0 %1473
    %1475 = vrot.lane.b32.xlu0 %v1466, 126
    %v1476 = vpop.permute.xlu0 %1475
    %1477 = vrot.lane.b32.xlu0 %v1467, 126
    %v1478 = vpop.permute.xlu0 %1477
    %1479 = vrot.lane.b32.xlu0 %v1468, 126
    %v1480 = vpop.permute.xlu0 %1479
    %v1485 = vadd.f32 %v1277, %v1474
    %v1486 = vadd.f32 %v1278, %v1476
    %v1487 = vadd.f32 %v1279, %v1478
    %v1488 = vadd.f32 %v1280, %v1480
    %s1489 = sld [smem:[#allocation3 + $0x50]]
    %v1490 = vstv %s1489
    %v1491 = vmul.f32 %v1490, %v1145
    %v1492 = vmul.f32 %v1490, %v1146
    %v1493 = vmul.f32 %v1490, %v1147
    %v1494 = vmul.f32 %v1490, %v1148
    %1499 = vrot.lane.b32.xlu0 %v1491, 126
    %v1500 = vpop.permute.xlu0 %1499
    %1501 = vrot.lane.b32.xlu0 %v1492, 126
    %v1502 = vpop.permute.xlu0 %1501
    %1503 = vrot.lane.b32.xlu0 %v1493, 126
    %v1504 = vpop.permute.xlu0 %1503
    %1505 = vrot.lane.b32.xlu0 %v1494, 126
    %v1506 = vpop.permute.xlu0 %1505
    %v1511 = vadd.f32 %v1303, %v1500
    %v1512 = vadd.f32 %v1304, %v1502
    %v1513 = vadd.f32 %v1305, %v1504
    %v1514 = vadd.f32 %v1306, %v1506
    %s1515 = sld [smem:[#allocation3 + $0x74]]
    %v1516 = vstv %s1515
    %v1517 = vmul.f32 %v1516, %v1145
    %v1518 = vmul.f32 %v1516, %v1146
    %v1519 = vmul.f32 %v1516, %v1147
    %v1520 = vmul.f32 %v1516, %v1148
    %1525 = vrot.lane.b32.xlu0 %v1517, 126
    %v1526 = vpop.permute.xlu0 %1525
    %1527 = vrot.lane.b32.xlu0 %v1518, 126
    %v1528 = vpop.permute.xlu0 %1527
    %1529 = vrot.lane.b32.xlu0 %v1519, 126
    %v1530 = vpop.permute.xlu0 %1529
    %1531 = vrot.lane.b32.xlu0 %v1520, 126
    %v1532 = vpop.permute.xlu0 %1531
    %v1537 = vadd.f32 %v1329, %v1526
    %v1538 = vadd.f32 %v1330, %v1528
    %v1539 = vadd.f32 %v1331, %v1530
    %v1540 = vadd.f32 %v1332, %v1532
    %s1541 = sld [smem:[#allocation3 + $0x98]]
    %v1542 = vstv %s1541
    %v1543 = vmul.f32 %v1542, %v1145
    %v1544 = vmul.f32 %v1542, %v1146
    %v1545 = vmul.f32 %v1542, %v1147
    %v1546 = vmul.f32 %v1542, %v1148
    %1551 = vrot.lane.b32.xlu0 %v1543, 126
    %v1552 = vpop.permute.xlu0 %1551
    %1553 = vrot.lane.b32.xlu0 %v1544, 126
    %v1554 = vpop.permute.xlu0 %1553
    %1555 = vrot.lane.b32.xlu0 %v1545, 126
    %v1556 = vpop.permute.xlu0 %1555
    %1557 = vrot.lane.b32.xlu0 %v1546, 126
    %v1558 = vpop.permute.xlu0 %1557
    %v1563 = vadd.f32 %v1355, %v1552
    %v1564 = vadd.f32 %v1356, %v1554
    %v1565 = vadd.f32 %v1357, %v1556
    %v1566 = vadd.f32 %v1358, %v1558
    %s1567 = sld [smem:[#allocation3 + $0xbc]]
    %v1568 = vstv %s1567
    %v1569 = vmul.f32 %v1568, %v1145
    %v1570 = vmul.f32 %v1568, %v1146
    %v1571 = vmul.f32 %v1568, %v1147
    %v1572 = vmul.f32 %v1568, %v1148
    %1577 = vrot.lane.b32.xlu0 %v1569, 126
    %v1578 = vpop.permute.xlu0 %1577
    %1579 = vrot.lane.b32.xlu0 %v1570, 126
    %v1580 = vpop.permute.xlu0 %1579
    %1581 = vrot.lane.b32.xlu0 %v1571, 126
    %v1582 = vpop.permute.xlu0 %1581
    %1583 = vrot.lane.b32.xlu0 %v1572, 126
    %v1584 = vpop.permute.xlu0 %1583
    %v1589 = vadd.f32 %v1381, %v1578
    %v1590 = vadd.f32 %v1382, %v1580
    %v1591 = vadd.f32 %v1383, %v1582
    %v1592 = vadd.f32 %v1384, %v1584
    %s1593 = sld [smem:[#allocation3 + $0xe0]]
    %v1594 = vstv %s1593
    %v1595 = vmul.f32 %v1594, %v1145
    %v1596 = vmul.f32 %v1594, %v1146
    %v1597 = vmul.f32 %v1594, %v1147
    %v1598 = vmul.f32 %v1594, %v1148
    %1603 = vrot.lane.b32.xlu0 %v1595, 126
    %v1604 = vpop.permute.xlu0 %1603
    %1605 = vrot.lane.b32.xlu0 %v1596, 126
    %v1606 = vpop.permute.xlu0 %1605
    %1607 = vrot.lane.b32.xlu0 %v1597, 126
    %v1608 = vpop.permute.xlu0 %1607
    %1609 = vrot.lane.b32.xlu0 %v1598, 126
    %v1610 = vpop.permute.xlu0 %1609
    %v1615 = vadd.f32 %v1407, %v1604
    %v1616 = vadd.f32 %v1408, %v1606
    %v1617 = vadd.f32 %v1409, %v1608
    %v1618 = vadd.f32 %v1410, %v1610
    %s1619 = sld [smem:[#allocation3 + $0x104]]
    %v1620 = vstv %s1619
    %v1621 = vmul.f32 %v1620, %v1145
    %v1622 = vmul.f32 %v1620, %v1146
    %v1623 = vmul.f32 %v1620, %v1147
    %v1624 = vmul.f32 %v1620, %v1148
    %1629 = vrot.lane.b32.xlu0 %v1621, 126
    %v1630 = vpop.permute.xlu0 %1629
    %1631 = vrot.lane.b32.xlu0 %v1622, 126
    %v1632 = vpop.permute.xlu0 %1631
    %1633 = vrot.lane.b32.xlu0 %v1623, 126
    %v1634 = vpop.permute.xlu0 %1633
    %1635 = vrot.lane.b32.xlu0 %v1624, 126
    %v1636 = vpop.permute.xlu0 %1635
    %v1641 = vadd.f32 %v1433, %v1630
    %v1642 = vadd.f32 %v1434, %v1632
    %v1643 = vadd.f32 %v1435, %v1634
    %v1644 = vadd.f32 %v1436, %v1636
    %s1645 = scalar_lea.vmem [#allocation2], 24
    %v1646 = vld [vmem:[%s1645] sm:$0xff]
    %v1647 = vld [vmem:[%s1645 + $0x8] sm:$0xff]
    %v1648 = vld [vmem:[%s1645 + $0x60] sm:$0xff]
    %v1649 = vld [vmem:[%s1645 + $0x68] sm:$0xff]
    %s1650 = sld [smem:[#allocation3 + $0x9]]
    %v1651 = vstv %s1650
    %v1652 = vmul.f32 %v1651, %v1646
    %v1653 = vmul.f32 %v1651, %v1647
    %v1654 = vmul.f32 %v1651, %v1648
    %v1655 = vmul.f32 %v1651, %v1649
    %v1656 = vadd.f32 %v1459, %v1652
    %v1657 = vadd.f32 %v1460, %v1653
    %v1658 = vadd.f32 %v1461, %v1654
    %v1659 = vadd.f32 %v1462, %v1655
    %s1660 = sld [smem:[#allocation3 + $0x2d]]
    %v1661 = vstv %s1660
    %v1662 = vmul.f32 %v1661, %v1646
    %v1663 = vmul.f32 %v1661, %v1647
    %v1664 = vmul.f32 %v1661, %v1648
    %v1665 = vmul.f32 %v1661, %v1649
    %v1666 = vadd.f32 %v1485, %v1662
    %v1667 = vadd.f32 %v1486, %v1663
    %v1668 = vadd.f32 %v1487, %v1664
    %v1669 = vadd.f32 %v1488, %v1665
    %s1670 = sld [smem:[#allocation3 + $0x51]]
    %v1671 = vstv %s1670
    %v1672 = vmul.f32 %v1671, %v1646
    %v1673 = vmul.f32 %v1671, %v1647
    %v1674 = vmul.f32 %v1671, %v1648
    %v1675 = vmul.f32 %v1671, %v1649
    %v1676 = vadd.f32 %v1511, %v1672
    %v1677 = vadd.f32 %v1512, %v1673
    %v1678 = vadd.f32 %v1513, %v1674
    %v1679 = vadd.f32 %v1514, %v1675
    %s1680 = sld [smem:[#allocation3 + $0x75]]
    %v1681 = vstv %s1680
    %v1682 = vmul.f32 %v1681, %v1646
    %v1683 = vmul.f32 %v1681, %v1647
    %v1684 = vmul.f32 %v1681, %v1648
    %v1685 = vmul.f32 %v1681, %v1649
    %v1686 = vadd.f32 %v1537, %v1682
    %v1687 = vadd.f32 %v1538, %v1683
    %v1688 = vadd.f32 %v1539, %v1684
    %v1689 = vadd.f32 %v1540, %v1685
    %s1690 = sld [smem:[#allocation3 + $0x99]]
    %v1691 = vstv %s1690
    %v1692 = vmul.f32 %v1691, %v1646
    %v1693 = vmul.f32 %v1691, %v1647
    %v1694 = vmul.f32 %v1691, %v1648
    %v1695 = vmul.f32 %v1691, %v1649
    %v1696 = vadd.f32 %v1563, %v1692
    %v1697 = vadd.f32 %v1564, %v1693
    %v1698 = vadd.f32 %v1565, %v1694
    %v1699 = vadd.f32 %v1566, %v1695
    %s1700 = sld [smem:[#allocation3 + $0xbd]]
    %v1701 = vstv %s1700
    %v1702 = vmul.f32 %v1701, %v1646
    %v1703 = vmul.f32 %v1701, %v1647
    %v1704 = vmul.f32 %v1701, %v1648
    %v1705 = vmul.f32 %v1701, %v1649
    %v1706 = vadd.f32 %v1589, %v1702
    %v1707 = vadd.f32 %v1590, %v1703
    %v1708 = vadd.f32 %v1591, %v1704
    %v1709 = vadd.f32 %v1592, %v1705
    %s1710 = sld [smem:[#allocation3 + $0xe1]]
    %v1711 = vstv %s1710
    %v1712 = vmul.f32 %v1711, %v1646
    %v1713 = vmul.f32 %v1711, %v1647
    %v1714 = vmul.f32 %v1711, %v1648
    %v1715 = vmul.f32 %v1711, %v1649
    %v1716 = vadd.f32 %v1615, %v1712
    %v1717 = vadd.f32 %v1616, %v1713
    %v1718 = vadd.f32 %v1617, %v1714
    %v1719 = vadd.f32 %v1618, %v1715
    %s1720 = sld [smem:[#allocation3 + $0x105]]
    %v1721 = vstv %s1720
    %v1722 = vmul.f32 %v1721, %v1646
    %v1723 = vmul.f32 %v1721, %v1647
    %v1724 = vmul.f32 %v1721, %v1648
    %v1725 = vmul.f32 %v1721, %v1649
    %v1726 = vadd.f32 %v1641, %v1722
    %v1727 = vadd.f32 %v1642, %v1723
    %v1728 = vadd.f32 %v1643, %v1724
    %v1729 = vadd.f32 %v1644, %v1725
    %s1730 = sld [smem:[#allocation3 + $0xa]]
    %v1731 = vstv %s1730
    %v1732 = vmul.f32 %v1731, %v1646
    %v1733 = vmul.f32 %v1731, %v1647
    %v1734 = vmul.f32 %v1731, %v1648
    %v1735 = vmul.f32 %v1731, %v1649
    %1740 = vrot.lane.b32.xlu0 %v1732, 127
    %v1741 = vpop.permute.xlu0 %1740
    %1742 = vrot.lane.b32.xlu0 %v1733, 127
    %v1743 = vpop.permute.xlu0 %1742
    %1744 = vrot.lane.b32.xlu0 %v1734, 127
    %v1745 = vpop.permute.xlu0 %1744
    %1746 = vrot.lane.b32.xlu0 %v1735, 127
    %v1747 = vpop.permute.xlu0 %1746
    %v1752 = vadd.f32 %v1656, %v1741
    %v1753 = vadd.f32 %v1657, %v1743
    %v1754 = vadd.f32 %v1658, %v1745
    %v1755 = vadd.f32 %v1659, %v1747
    %s1756 = sld [smem:[#allocation3 + $0x2e]]
    %v1757 = vstv %s1756
    %v1758 = vmul.f32 %v1757, %v1646
    %v1759 = vmul.f32 %v1757, %v1647
    %v1760 = vmul.f32 %v1757, %v1648
    %v1761 = vmul.f32 %v1757, %v1649
    %1766 = vrot.lane.b32.xlu0 %v1758, 127
    %v1767 = vpop.permute.xlu0 %1766
    %1768 = vrot.lane.b32.xlu0 %v1759, 127
    %v1769 = vpop.permute.xlu0 %1768
    %1770 = vrot.lane.b32.xlu0 %v1760, 127
    %v1771 = vpop.permute.xlu0 %1770
    %1772 = vrot.lane.b32.xlu0 %v1761, 127
    %v1773 = vpop.permute.xlu0 %1772
    %v1778 = vadd.f32 %v1666, %v1767
    %v1779 = vadd.f32 %v1667, %v1769
    %v1780 = vadd.f32 %v1668, %v1771
    %v1781 = vadd.f32 %v1669, %v1773
    %s1782 = sld [smem:[#allocation3 + $0x52]]
    %v1783 = vstv %s1782
    %v1784 = vmul.f32 %v1783, %v1646
    %v1785 = vmul.f32 %v1783, %v1647
    %v1786 = vmul.f32 %v1783, %v1648
    %v1787 = vmul.f32 %v1783, %v1649
    %1792 = vrot.lane.b32.xlu0 %v1784, 127
    %v1793 = vpop.permute.xlu0 %1792
    %1794 = vrot.lane.b32.xlu0 %v1785, 127
    %v1795 = vpop.permute.xlu0 %1794
    %1796 = vrot.lane.b32.xlu0 %v1786, 127
    %v1797 = vpop.permute.xlu0 %1796
    %1798 = vrot.lane.b32.xlu0 %v1787, 127
    %v1799 = vpop.permute.xlu0 %1798
    %v1804 = vadd.f32 %v1676, %v1793
    %v1805 = vadd.f32 %v1677, %v1795
    %v1806 = vadd.f32 %v1678, %v1797
    %v1807 = vadd.f32 %v1679, %v1799
    %s1808 = sld [smem:[#allocation3 + $0x76]]
    %v1809 = vstv %s1808
    %v1810 = vmul.f32 %v1809, %v1646
    %v1811 = vmul.f32 %v1809, %v1647
    %v1812 = vmul.f32 %v1809, %v1648
    %v1813 = vmul.f32 %v1809, %v1649
    %1818 = vrot.lane.b32.xlu0 %v1810, 127
    %v1819 = vpop.permute.xlu0 %1818
    %1820 = vrot.lane.b32.xlu0 %v1811, 127
    %v1821 = vpop.permute.xlu0 %1820
    %1822 = vrot.lane.b32.xlu0 %v1812, 127
    %v1823 = vpop.permute.xlu0 %1822
    %1824 = vrot.lane.b32.xlu0 %v1813, 127
    %v1825 = vpop.permute.xlu0 %1824
    %v1830 = vadd.f32 %v1686, %v1819
    %v1831 = vadd.f32 %v1687, %v1821
    %v1832 = vadd.f32 %v1688, %v1823
    %v1833 = vadd.f32 %v1689, %v1825
    %s1834 = sld [smem:[#allocation3 + $0x9a]]
    %v1835 = vstv %s1834
    %v1836 = vmul.f32 %v1835, %v1646
    %v1837 = vmul.f32 %v1835, %v1647
    %v1838 = vmul.f32 %v1835, %v1648
    %v1839 = vmul.f32 %v1835, %v1649
    %1844 = vrot.lane.b32.xlu0 %v1836, 127
    %v1845 = vpop.permute.xlu0 %1844
    %1846 = vrot.lane.b32.xlu0 %v1837, 127
    %v1847 = vpop.permute.xlu0 %1846
    %1848 = vrot.lane.b32.xlu0 %v1838, 127
    %v1849 = vpop.permute.xlu0 %1848
    %1850 = vrot.lane.b32.xlu0 %v1839, 127
    %v1851 = vpop.permute.xlu0 %1850
    %v1856 = vadd.f32 %v1696, %v1845
    %v1857 = vadd.f32 %v1697, %v1847
    %v1858 = vadd.f32 %v1698, %v1849
    %v1859 = vadd.f32 %v1699, %v1851
    %s1860 = sld [smem:[#allocation3 + $0xbe]]
    %v1861 = vstv %s1860
    %v1862 = vmul.f32 %v1861, %v1646
    %v1863 = vmul.f32 %v1861, %v1647
    %v1864 = vmul.f32 %v1861, %v1648
    %v1865 = vmul.f32 %v1861, %v1649
    %1870 = vrot.lane.b32.xlu0 %v1862, 127
    %v1871 = vpop.permute.xlu0 %1870
    %1872 = vrot.lane.b32.xlu0 %v1863, 127
    %v1873 = vpop.permute.xlu0 %1872
    %1874 = vrot.lane.b32.xlu0 %v1864, 127
    %v1875 = vpop.permute.xlu0 %1874
    %1876 = vrot.lane.b32.xlu0 %v1865, 127
    %v1877 = vpop.permute.xlu0 %1876
    %v1882 = vadd.f32 %v1706, %v1871
    %v1883 = vadd.f32 %v1707, %v1873
    %v1884 = vadd.f32 %v1708, %v1875
    %v1885 = vadd.f32 %v1709, %v1877
    %s1886 = sld [smem:[#allocation3 + $0xe2]]
    %v1887 = vstv %s1886
    %v1888 = vmul.f32 %v1887, %v1646
    %v1889 = vmul.f32 %v1887, %v1647
    %v1890 = vmul.f32 %v1887, %v1648
    %v1891 = vmul.f32 %v1887, %v1649
    %1896 = vrot.lane.b32.xlu0 %v1888, 127
    %v1897 = vpop.permute.xlu0 %1896
    %1898 = vrot.lane.b32.xlu0 %v1889, 127
    %v1899 = vpop.permute.xlu0 %1898
    %1900 = vrot.lane.b32.xlu0 %v1890, 127
    %v1901 = vpop.permute.xlu0 %1900
    %1902 = vrot.lane.b32.xlu0 %v1891, 127
    %v1903 = vpop.permute.xlu0 %1902
    %v1908 = vadd.f32 %v1716, %v1897
    %v1909 = vadd.f32 %v1717, %v1899
    %v1910 = vadd.f32 %v1718, %v1901
    %v1911 = vadd.f32 %v1719, %v1903
    %s1912 = sld [smem:[#allocation3 + $0x106]]
    %v1913 = vstv %s1912
    %v1914 = vmul.f32 %v1913, %v1646
    %v1915 = vmul.f32 %v1913, %v1647
    %v1916 = vmul.f32 %v1913, %v1648
    %v1917 = vmul.f32 %v1913, %v1649
    %1922 = vrot.lane.b32.xlu0 %v1914, 127
    %v1923 = vpop.permute.xlu0 %1922
    %1924 = vrot.lane.b32.xlu0 %v1915, 127
    %v1925 = vpop.permute.xlu0 %1924
    %1926 = vrot.lane.b32.xlu0 %v1916, 127
    %v1927 = vpop.permute.xlu0 %1926
    %1928 = vrot.lane.b32.xlu0 %v1917, 127
    %v1929 = vpop.permute.xlu0 %1928
    %v1934 = vadd.f32 %v1726, %v1923
    %v1935 = vadd.f32 %v1727, %v1925
    %v1936 = vadd.f32 %v1728, %v1927
    %v1937 = vadd.f32 %v1729, %v1929
    %s1938 = sld [smem:[#allocation3 + $0xb]]
    %v1939 = vstv %s1938
    %v1940 = vmul.f32 %v1939, %v1646
    %v1941 = vmul.f32 %v1939, %v1647
    %v1942 = vmul.f32 %v1939, %v1648
    %v1943 = vmul.f32 %v1939, %v1649
    %1948 = vrot.lane.b32.xlu0 %v1940, 126
    %v1949 = vpop.permute.xlu0 %1948
    %1950 = vrot.lane.b32.xlu0 %v1941, 126
    %v1951 = vpop.permute.xlu0 %1950
    %1952 = vrot.lane.b32.xlu0 %v1942, 126
    %v1953 = vpop.permute.xlu0 %1952
    %1954 = vrot.lane.b32.xlu0 %v1943, 126
    %v1955 = vpop.permute.xlu0 %1954
    %v1960 = vadd.f32 %v1752, %v1949
    %v1961 = vadd.f32 %v1753, %v1951
    %v1962 = vadd.f32 %v1754, %v1953
    %v1963 = vadd.f32 %v1755, %v1955
    %s1964 = sld [smem:[#allocation3 + $0x2f]]
    %v1965 = vstv %s1964
    %v1966 = vmul.f32 %v1965, %v1646
    %v1967 = vmul.f32 %v1965, %v1647
    %v1968 = vmul.f32 %v1965, %v1648
    %v1969 = vmul.f32 %v1965, %v1649
    %1974 = vrot.lane.b32.xlu0 %v1966, 126
    %v1975 = vpop.permute.xlu0 %1974
    %1976 = vrot.lane.b32.xlu0 %v1967, 126
    %v1977 = vpop.permute.xlu0 %1976
    %1978 = vrot.lane.b32.xlu0 %v1968, 126
    %v1979 = vpop.permute.xlu0 %1978
    %1980 = vrot.lane.b32.xlu0 %v1969, 126
    %v1981 = vpop.permute.xlu0 %1980
    %v1986 = vadd.f32 %v1778, %v1975
    %v1987 = vadd.f32 %v1779, %v1977
    %v1988 = vadd.f32 %v1780, %v1979
    %v1989 = vadd.f32 %v1781, %v1981
    %s1990 = sld [smem:[#allocation3 + $0x53]]
    %v1991 = vstv %s1990
    %v1992 = vmul.f32 %v1991, %v1646
    %v1993 = vmul.f32 %v1991, %v1647
    %v1994 = vmul.f32 %v1991, %v1648
    %v1995 = vmul.f32 %v1991, %v1649
    %2000 = vrot.lane.b32.xlu0 %v1992, 126
    %v2001 = vpop.permute.xlu0 %2000
    %2002 = vrot.lane.b32.xlu0 %v1993, 126
    %v2003 = vpop.permute.xlu0 %2002
    %2004 = vrot.lane.b32.xlu0 %v1994, 126
    %v2005 = vpop.permute.xlu0 %2004
    %2006 = vrot.lane.b32.xlu0 %v1995, 126
    %v2007 = vpop.permute.xlu0 %2006
    %v2012 = vadd.f32 %v1804, %v2001
    %v2013 = vadd.f32 %v1805, %v2003
    %v2014 = vadd.f32 %v1806, %v2005
    %v2015 = vadd.f32 %v1807, %v2007
    %s2016 = sld [smem:[#allocation3 + $0x77]]
    %v2017 = vstv %s2016
    %v2018 = vmul.f32 %v2017, %v1646
    %v2019 = vmul.f32 %v2017, %v1647
    %v2020 = vmul.f32 %v2017, %v1648
    %v2021 = vmul.f32 %v2017, %v1649
    %2026 = vrot.lane.b32.xlu0 %v2018, 126
    %v2027 = vpop.permute.xlu0 %2026
    %2028 = vrot.lane.b32.xlu0 %v2019, 126
    %v2029 = vpop.permute.xlu0 %2028
    %2030 = vrot.lane.b32.xlu0 %v2020, 126
    %v2031 = vpop.permute.xlu0 %2030
    %2032 = vrot.lane.b32.xlu0 %v2021, 126
    %v2033 = vpop.permute.xlu0 %2032
    %v2038 = vadd.f32 %v1830, %v2027
    %v2039 = vadd.f32 %v1831, %v2029
    %v2040 = vadd.f32 %v1832, %v2031
    %v2041 = vadd.f32 %v1833, %v2033
    %s2042 = sld [smem:[#allocation3 + $0x9b]]
    %v2043 = vstv %s2042
    %v2044 = vmul.f32 %v2043, %v1646
    %v2045 = vmul.f32 %v2043, %v1647
    %v2046 = vmul.f32 %v2043, %v1648
    %v2047 = vmul.f32 %v2043, %v1649
    %2052 = vrot.lane.b32.xlu0 %v2044, 126
    %v2053 = vpop.permute.xlu0 %2052
    %2054 = vrot.lane.b32.xlu0 %v2045, 126
    %v2055 = vpop.permute.xlu0 %2054
    %2056 = vrot.lane.b32.xlu0 %v2046, 126
    %v2057 = vpop.permute.xlu0 %2056
    %2058 = vrot.lane.b32.xlu0 %v2047, 126
    %v2059 = vpop.permute.xlu0 %2058
    %v2064 = vadd.f32 %v1856, %v2053
    %v2065 = vadd.f32 %v1857, %v2055
    %v2066 = vadd.f32 %v1858, %v2057
    %v2067 = vadd.f32 %v1859, %v2059
    %s2068 = sld [smem:[#allocation3 + $0xbf]]
    %v2069 = vstv %s2068
    %v2070 = vmul.f32 %v2069, %v1646
    %v2071 = vmul.f32 %v2069, %v1647
    %v2072 = vmul.f32 %v2069, %v1648
    %v2073 = vmul.f32 %v2069, %v1649
    %2078 = vrot.lane.b32.xlu0 %v2070, 126
    %v2079 = vpop.permute.xlu0 %2078
    %2080 = vrot.lane.b32.xlu0 %v2071, 126
    %v2081 = vpop.permute.xlu0 %2080
    %2082 = vrot.lane.b32.xlu0 %v2072, 126
    %v2083 = vpop.permute.xlu0 %2082
    %2084 = vrot.lane.b32.xlu0 %v2073, 126
    %v2085 = vpop.permute.xlu0 %2084
    %v2090 = vadd.f32 %v1882, %v2079
    %v2091 = vadd.f32 %v1883, %v2081
    %v2092 = vadd.f32 %v1884, %v2083
    %v2093 = vadd.f32 %v1885, %v2085
    %s2094 = sld [smem:[#allocation3 + $0xe3]]
    %v2095 = vstv %s2094
    %v2096 = vmul.f32 %v2095, %v1646
    %v2097 = vmul.f32 %v2095, %v1647
    %v2098 = vmul.f32 %v2095, %v1648
    %v2099 = vmul.f32 %v2095, %v1649
    %2104 = vrot.lane.b32.xlu0 %v2096, 126
    %v2105 = vpop.permute.xlu0 %2104
    %2106 = vrot.lane.b32.xlu0 %v2097, 126
    %v2107 = vpop.permute.xlu0 %2106
    %2108 = vrot.lane.b32.xlu0 %v2098, 126
    %v2109 = vpop.permute.xlu0 %2108
    %2110 = vrot.lane.b32.xlu0 %v2099, 126
    %v2111 = vpop.permute.xlu0 %2110
    %v2116 = vadd.f32 %v1908, %v2105
    %v2117 = vadd.f32 %v1909, %v2107
    %v2118 = vadd.f32 %v1910, %v2109
    %v2119 = vadd.f32 %v1911, %v2111
    %s2120 = sld [smem:[#allocation3 + $0x107]]
    %v2121 = vstv %s2120
    %v2122 = vmul.f32 %v2121, %v1646
    %v2123 = vmul.f32 %v2121, %v1647
    %v2124 = vmul.f32 %v2121, %v1648
    %v2125 = vmul.f32 %v2121, %v1649
    %2130 = vrot.lane.b32.xlu0 %v2122, 126
    %v2131 = vpop.permute.xlu0 %2130
    %2132 = vrot.lane.b32.xlu0 %v2123, 126
    %v2133 = vpop.permute.xlu0 %2132
    %2134 = vrot.lane.b32.xlu0 %v2124, 126
    %v2135 = vpop.permute.xlu0 %2134
    %2136 = vrot.lane.b32.xlu0 %v2125, 126
    %v2137 = vpop.permute.xlu0 %2136
    %v2142 = vadd.f32 %v1934, %v2131
    %v2143 = vadd.f32 %v1935, %v2133
    %v2144 = vadd.f32 %v1936, %v2135
    %v2145 = vadd.f32 %v1937, %v2137
    %v2146 = vld [vmem:[%s1645 + $0x1] sm:$0xff]
    %v2147 = vld [vmem:[%s1645 + $0x9] sm:$0xff]
    %v2148 = vld [vmem:[%s1645 + $0x61] sm:$0xff]
    %v2149 = vld [vmem:[%s1645 + $0x69] sm:$0xff]
    %s2150 = sld [smem:[#allocation3 + $0xc]]
    %v2151 = vstv %s2150
    %v2152 = vmul.f32 %v2151, %v2146
    %v2153 = vmul.f32 %v2151, %v2147
    %v2154 = vmul.f32 %v2151, %v2148
    %v2155 = vmul.f32 %v2151, %v2149
    %v2156 = vadd.f32 %v1960, %v2152
    %v2157 = vadd.f32 %v1961, %v2153
    %v2158 = vadd.f32 %v1962, %v2154
    %v2159 = vadd.f32 %v1963, %v2155
    %s2160 = sld [smem:[#allocation3 + $0x30]]
    %v2161 = vstv %s2160
    %v2162 = vmul.f32 %v2161, %v2146
    %v2163 = vmul.f32 %v2161, %v2147
    %v2164 = vmul.f32 %v2161, %v2148
    %v2165 = vmul.f32 %v2161, %v2149
    %v2166 = vadd.f32 %v1986, %v2162
    %v2167 = vadd.f32 %v1987, %v2163
    %v2168 = vadd.f32 %v1988, %v2164
    %v2169 = vadd.f32 %v1989, %v2165
    %s2170 = sld [smem:[#allocation3 + $0x54]]
    %v2171 = vstv %s2170
    %v2172 = vmul.f32 %v2171, %v2146
    %v2173 = vmul.f32 %v2171, %v2147
    %v2174 = vmul.f32 %v2171, %v2148
    %v2175 = vmul.f32 %v2171, %v2149
    %v2176 = vadd.f32 %v2012, %v2172
    %v2177 = vadd.f32 %v2013, %v2173
    %v2178 = vadd.f32 %v2014, %v2174
    %v2179 = vadd.f32 %v2015, %v2175
    %s2180 = sld [smem:[#allocation3 + $0x78]]
    %v2181 = vstv %s2180
    %v2182 = vmul.f32 %v2181, %v2146
    %v2183 = vmul.f32 %v2181, %v2147
    %v2184 = vmul.f32 %v2181, %v2148
    %v2185 = vmul.f32 %v2181, %v2149
    %v2186 = vadd.f32 %v2038, %v2182
    %v2187 = vadd.f32 %v2039, %v2183
    %v2188 = vadd.f32 %v2040, %v2184
    %v2189 = vadd.f32 %v2041, %v2185
    %s2190 = sld [smem:[#allocation3 + $0x9c]]
    %v2191 = vstv %s2190
    %v2192 = vmul.f32 %v2191, %v2146
    %v2193 = vmul.f32 %v2191, %v2147
    %v2194 = vmul.f32 %v2191, %v2148
    %v2195 = vmul.f32 %v2191, %v2149
    %v2196 = vadd.f32 %v2064, %v2192
    %v2197 = vadd.f32 %v2065, %v2193
    %v2198 = vadd.f32 %v2066, %v2194
    %v2199 = vadd.f32 %v2067, %v2195
    %s2200 = sld [smem:[#allocation3 + $0xc0]]
    %v2201 = vstv %s2200
    %v2202 = vmul.f32 %v2201, %v2146
    %v2203 = vmul.f32 %v2201, %v2147
    %v2204 = vmul.f32 %v2201, %v2148
    %v2205 = vmul.f32 %v2201, %v2149
    %v2206 = vadd.f32 %v2090, %v2202
    %v2207 = vadd.f32 %v2091, %v2203
    %v2208 = vadd.f32 %v2092, %v2204
    %v2209 = vadd.f32 %v2093, %v2205
    %s2210 = sld [smem:[#allocation3 + $0xe4]]
    %v2211 = vstv %s2210
    %v2212 = vmul.f32 %v2211, %v2146
    %v2213 = vmul.f32 %v2211, %v2147
    %v2214 = vmul.f32 %v2211, %v2148
    %v2215 = vmul.f32 %v2211, %v2149
    %v2216 = vadd.f32 %v2116, %v2212
    %v2217 = vadd.f32 %v2117, %v2213
    %v2218 = vadd.f32 %v2118, %v2214
    %v2219 = vadd.f32 %v2119, %v2215
    %s2220 = sld [smem:[#allocation3 + $0x108]]
    %v2221 = vstv %s2220
    %v2222 = vmul.f32 %v2221, %v2146
    %v2223 = vmul.f32 %v2221, %v2147
    %v2224 = vmul.f32 %v2221, %v2148
    %v2225 = vmul.f32 %v2221, %v2149
    %v2226 = vadd.f32 %v2142, %v2222
    %v2227 = vadd.f32 %v2143, %v2223
    %v2228 = vadd.f32 %v2144, %v2224
    %v2229 = vadd.f32 %v2145, %v2225
    %s2230 = sld [smem:[#allocation3 + $0xd]]
    %v2231 = vstv %s2230
    %v2232 = vmul.f32 %v2231, %v2146
    %v2233 = vmul.f32 %v2231, %v2147
    %v2234 = vmul.f32 %v2231, %v2148
    %v2235 = vmul.f32 %v2231, %v2149
    %2240 = vrot.lane.b32.xlu0 %v2232, 127
    %v2241 = vpop.permute.xlu0 %2240
    %2242 = vrot.lane.b32.xlu0 %v2233, 127
    %v2243 = vpop.permute.xlu0 %2242
    %2244 = vrot.lane.b32.xlu0 %v2234, 127
    %v2245 = vpop.permute.xlu0 %2244
    %2246 = vrot.lane.b32.xlu0 %v2235, 127
    %v2247 = vpop.permute.xlu0 %2246
    %v2252 = vadd.f32 %v2156, %v2241
    %v2253 = vadd.f32 %v2157, %v2243
    %v2254 = vadd.f32 %v2158, %v2245
    %v2255 = vadd.f32 %v2159, %v2247
    %s2256 = sld [smem:[#allocation3 + $0x31]]
    %v2257 = vstv %s2256
    %v2258 = vmul.f32 %v2257, %v2146
    %v2259 = vmul.f32 %v2257, %v2147
    %v2260 = vmul.f32 %v2257, %v2148
    %v2261 = vmul.f32 %v2257, %v2149
    %2266 = vrot.lane.b32.xlu0 %v2258, 127
    %v2267 = vpop.permute.xlu0 %2266
    %2268 = vrot.lane.b32.xlu0 %v2259, 127
    %v2269 = vpop.permute.xlu0 %2268
    %2270 = vrot.lane.b32.xlu0 %v2260, 127
    %v2271 = vpop.permute.xlu0 %2270
    %2272 = vrot.lane.b32.xlu0 %v2261, 127
    %v2273 = vpop.permute.xlu0 %2272
    %v2278 = vadd.f32 %v2166, %v2267
    %v2279 = vadd.f32 %v2167, %v2269
    %v2280 = vadd.f32 %v2168, %v2271
    %v2281 = vadd.f32 %v2169, %v2273
    %s2282 = sld [smem:[#allocation3 + $0x55]]
    %v2283 = vstv %s2282
    %v2284 = vmul.f32 %v2283, %v2146
    %v2285 = vmul.f32 %v2283, %v2147
    %v2286 = vmul.f32 %v2283, %v2148
    %v2287 = vmul.f32 %v2283, %v2149
    %2292 = vrot.lane.b32.xlu0 %v2284, 127
    %v2293 = vpop.permute.xlu0 %2292
    %2294 = vrot.lane.b32.xlu0 %v2285, 127
    %v2295 = vpop.permute.xlu0 %2294
    %2296 = vrot.lane.b32.xlu0 %v2286, 127
    %v2297 = vpop.permute.xlu0 %2296
    %2298 = vrot.lane.b32.xlu0 %v2287, 127
    %v2299 = vpop.permute.xlu0 %2298
    %v2304 = vadd.f32 %v2176, %v2293
    %v2305 = vadd.f32 %v2177, %v2295
    %v2306 = vadd.f32 %v2178, %v2297
    %v2307 = vadd.f32 %v2179, %v2299
    %s2308 = sld [smem:[#allocation3 + $0x79]]
    %v2309 = vstv %s2308
    %v2310 = vmul.f32 %v2309, %v2146
    %v2311 = vmul.f32 %v2309, %v2147
    %v2312 = vmul.f32 %v2309, %v2148
    %v2313 = vmul.f32 %v2309, %v2149
    %2318 = vrot.lane.b32.xlu0 %v2310, 127
    %v2319 = vpop.permute.xlu0 %2318
    %2320 = vrot.lane.b32.xlu0 %v2311, 127
    %v2321 = vpop.permute.xlu0 %2320
    %2322 = vrot.lane.b32.xlu0 %v2312, 127
    %v2323 = vpop.permute.xlu0 %2322
    %2324 = vrot.lane.b32.xlu0 %v2313, 127
    %v2325 = vpop.permute.xlu0 %2324
    %v2330 = vadd.f32 %v2186, %v2319
    %v2331 = vadd.f32 %v2187, %v2321
    %v2332 = vadd.f32 %v2188, %v2323
    %v2333 = vadd.f32 %v2189, %v2325
    %s2334 = sld [smem:[#allocation3 + $0x9d]]
    %v2335 = vstv %s2334
    %v2336 = vmul.f32 %v2335, %v2146
    %v2337 = vmul.f32 %v2335, %v2147
    %v2338 = vmul.f32 %v2335, %v2148
    %v2339 = vmul.f32 %v2335, %v2149
    %2344 = vrot.lane.b32.xlu0 %v2336, 127
    %v2345 = vpop.permute.xlu0 %2344
    %2346 = vrot.lane.b32.xlu0 %v2337, 127
    %v2347 = vpop.permute.xlu0 %2346
    %2348 = vrot.lane.b32.xlu0 %v2338, 127
    %v2349 = vpop.permute.xlu0 %2348
    %2350 = vrot.lane.b32.xlu0 %v2339, 127
    %v2351 = vpop.permute.xlu0 %2350
    %v2356 = vadd.f32 %v2196, %v2345
    %v2357 = vadd.f32 %v2197, %v2347
    %v2358 = vadd.f32 %v2198, %v2349
    %v2359 = vadd.f32 %v2199, %v2351
    %s2360 = sld [smem:[#allocation3 + $0xc1]]
    %v2361 = vstv %s2360
    %v2362 = vmul.f32 %v2361, %v2146
    %v2363 = vmul.f32 %v2361, %v2147
    %v2364 = vmul.f32 %v2361, %v2148
    %v2365 = vmul.f32 %v2361, %v2149
    %2370 = vrot.lane.b32.xlu0 %v2362, 127
    %v2371 = vpop.permute.xlu0 %2370
    %2372 = vrot.lane.b32.xlu0 %v2363, 127
    %v2373 = vpop.permute.xlu0 %2372
    %2374 = vrot.lane.b32.xlu0 %v2364, 127
    %v2375 = vpop.permute.xlu0 %2374
    %2376 = vrot.lane.b32.xlu0 %v2365, 127
    %v2377 = vpop.permute.xlu0 %2376
    %v2382 = vadd.f32 %v2206, %v2371
    %v2383 = vadd.f32 %v2207, %v2373
    %v2384 = vadd.f32 %v2208, %v2375
    %v2385 = vadd.f32 %v2209, %v2377
    %s2386 = sld [smem:[#allocation3 + $0xe5]]
    %v2387 = vstv %s2386
    %v2388 = vmul.f32 %v2387, %v2146
    %v2389 = vmul.f32 %v2387, %v2147
    %v2390 = vmul.f32 %v2387, %v2148
    %v2391 = vmul.f32 %v2387, %v2149
    %2396 = vrot.lane.b32.xlu0 %v2388, 127
    %v2397 = vpop.permute.xlu0 %2396
    %2398 = vrot.lane.b32.xlu0 %v2389, 127
    %v2399 = vpop.permute.xlu0 %2398
    %2400 = vrot.lane.b32.xlu0 %v2390, 127
    %v2401 = vpop.permute.xlu0 %2400
    %2402 = vrot.lane.b32.xlu0 %v2391, 127
    %v2403 = vpop.permute.xlu0 %2402
    %v2408 = vadd.f32 %v2216, %v2397
    %v2409 = vadd.f32 %v2217, %v2399
    %v2410 = vadd.f32 %v2218, %v2401
    %v2411 = vadd.f32 %v2219, %v2403
    %s2412 = sld [smem:[#allocation3 + $0x109]]
    %v2413 = vstv %s2412
    %v2414 = vmul.f32 %v2413, %v2146
    %v2415 = vmul.f32 %v2413, %v2147
    %v2416 = vmul.f32 %v2413, %v2148
    %v2417 = vmul.f32 %v2413, %v2149
    %2422 = vrot.lane.b32.xlu0 %v2414, 127
    %v2423 = vpop.permute.xlu0 %2422
    %2424 = vrot.lane.b32.xlu0 %v2415, 127
    %v2425 = vpop.permute.xlu0 %2424
    %2426 = vrot.lane.b32.xlu0 %v2416, 127
    %v2427 = vpop.permute.xlu0 %2426
    %2428 = vrot.lane.b32.xlu0 %v2417, 127
    %v2429 = vpop.permute.xlu0 %2428
    %v2434 = vadd.f32 %v2226, %v2423
    %v2435 = vadd.f32 %v2227, %v2425
    %v2436 = vadd.f32 %v2228, %v2427
    %v2437 = vadd.f32 %v2229, %v2429
    %s2438 = sld [smem:[#allocation3 + $0xe]]
    %v2439 = vstv %s2438
    %v2440 = vmul.f32 %v2439, %v2146
    %v2441 = vmul.f32 %v2439, %v2147
    %v2442 = vmul.f32 %v2439, %v2148
    %v2443 = vmul.f32 %v2439, %v2149
    %2448 = vrot.lane.b32.xlu0 %v2440, 126
    %v2449 = vpop.permute.xlu0 %2448
    %2450 = vrot.lane.b32.xlu0 %v2441, 126
    %v2451 = vpop.permute.xlu0 %2450
    %2452 = vrot.lane.b32.xlu0 %v2442, 126
    %v2453 = vpop.permute.xlu0 %2452
    %2454 = vrot.lane.b32.xlu0 %v2443, 126
    %v2455 = vpop.permute.xlu0 %2454
    %v2460 = vadd.f32 %v2252, %v2449
    %v2461 = vadd.f32 %v2253, %v2451
    %v2462 = vadd.f32 %v2254, %v2453
    %v2463 = vadd.f32 %v2255, %v2455
    %s2464 = sld [smem:[#allocation3 + $0x32]]
    %v2465 = vstv %s2464
    %v2466 = vmul.f32 %v2465, %v2146
    %v2467 = vmul.f32 %v2465, %v2147
    %v2468 = vmul.f32 %v2465, %v2148
    %v2469 = vmul.f32 %v2465, %v2149
    %2474 = vrot.lane.b32.xlu0 %v2466, 126
    %v2475 = vpop.permute.xlu0 %2474
    %2476 = vrot.lane.b32.xlu0 %v2467, 126
    %v2477 = vpop.permute.xlu0 %2476
    %2478 = vrot.lane.b32.xlu0 %v2468, 126
    %v2479 = vpop.permute.xlu0 %2478
    %2480 = vrot.lane.b32.xlu0 %v2469, 126
    %v2481 = vpop.permute.xlu0 %2480
    %v2486 = vadd.f32 %v2278, %v2475
    %v2487 = vadd.f32 %v2279, %v2477
    %v2488 = vadd.f32 %v2280, %v2479
    %v2489 = vadd.f32 %v2281, %v2481
    %s2490 = sld [smem:[#allocation3 + $0x56]]
    %v2491 = vstv %s2490
    %v2492 = vmul.f32 %v2491, %v2146
    %v2493 = vmul.f32 %v2491, %v2147
    %v2494 = vmul.f32 %v2491, %v2148
    %v2495 = vmul.f32 %v2491, %v2149
    %2500 = vrot.lane.b32.xlu0 %v2492, 126
    %v2501 = vpop.permute.xlu0 %2500
    %2502 = vrot.lane.b32.xlu0 %v2493, 126
    %v2503 = vpop.permute.xlu0 %2502
    %2504 = vrot.lane.b32.xlu0 %v2494, 126
    %v2505 = vpop.permute.xlu0 %2504
    %2506 = vrot.lane.b32.xlu0 %v2495, 126
    %v2507 = vpop.permute.xlu0 %2506
    %v2512 = vadd.f32 %v2304, %v2501
    %v2513 = vadd.f32 %v2305, %v2503
    %v2514 = vadd.f32 %v2306, %v2505
    %v2515 = vadd.f32 %v2307, %v2507
    %s2516 = sld [smem:[#allocation3 + $0x7a]]
    %v2517 = vstv %s2516
    %v2518 = vmul.f32 %v2517, %v2146
    %v2519 = vmul.f32 %v2517, %v2147
    %v2520 = vmul.f32 %v2517, %v2148
    %v2521 = vmul.f32 %v2517, %v2149
    %2526 = vrot.lane.b32.xlu0 %v2518, 126
    %v2527 = vpop.permute.xlu0 %2526
    %2528 = vrot.lane.b32.xlu0 %v2519, 126
    %v2529 = vpop.permute.xlu0 %2528
    %2530 = vrot.lane.b32.xlu0 %v2520, 126
    %v2531 = vpop.permute.xlu0 %2530
    %2532 = vrot.lane.b32.xlu0 %v2521, 126
    %v2533 = vpop.permute.xlu0 %2532
    %v2538 = vadd.f32 %v2330, %v2527
    %v2539 = vadd.f32 %v2331, %v2529
    %v2540 = vadd.f32 %v2332, %v2531
    %v2541 = vadd.f32 %v2333, %v2533
    %s2542 = sld [smem:[#allocation3 + $0x9e]]
    %v2543 = vstv %s2542
    %v2544 = vmul.f32 %v2543, %v2146
    %v2545 = vmul.f32 %v2543, %v2147
    %v2546 = vmul.f32 %v2543, %v2148
    %v2547 = vmul.f32 %v2543, %v2149
    %2552 = vrot.lane.b32.xlu0 %v2544, 126
    %v2553 = vpop.permute.xlu0 %2552
    %2554 = vrot.lane.b32.xlu0 %v2545, 126
    %v2555 = vpop.permute.xlu0 %2554
    %2556 = vrot.lane.b32.xlu0 %v2546, 126
    %v2557 = vpop.permute.xlu0 %2556
    %2558 = vrot.lane.b32.xlu0 %v2547, 126
    %v2559 = vpop.permute.xlu0 %2558
    %v2564 = vadd.f32 %v2356, %v2553
    %v2565 = vadd.f32 %v2357, %v2555
    %v2566 = vadd.f32 %v2358, %v2557
    %v2567 = vadd.f32 %v2359, %v2559
    %s2568 = sld [smem:[#allocation3 + $0xc2]]
    %v2569 = vstv %s2568
    %v2570 = vmul.f32 %v2569, %v2146
    %v2571 = vmul.f32 %v2569, %v2147
    %v2572 = vmul.f32 %v2569, %v2148
    %v2573 = vmul.f32 %v2569, %v2149
    %2578 = vrot.lane.b32.xlu0 %v2570, 126
    %v2579 = vpop.permute.xlu0 %2578
    %2580 = vrot.lane.b32.xlu0 %v2571, 126
    %v2581 = vpop.permute.xlu0 %2580
    %2582 = vrot.lane.b32.xlu0 %v2572, 126
    %v2583 = vpop.permute.xlu0 %2582
    %2584 = vrot.lane.b32.xlu0 %v2573, 126
    %v2585 = vpop.permute.xlu0 %2584
    %v2590 = vadd.f32 %v2382, %v2579
    %v2591 = vadd.f32 %v2383, %v2581
    %v2592 = vadd.f32 %v2384, %v2583
    %v2593 = vadd.f32 %v2385, %v2585
    %s2594 = sld [smem:[#allocation3 + $0xe6]]
    %v2595 = vstv %s2594
    %v2596 = vmul.f32 %v2595, %v2146
    %v2597 = vmul.f32 %v2595, %v2147
    %v2598 = vmul.f32 %v2595, %v2148
    %v2599 = vmul.f32 %v2595, %v2149
    %2604 = vrot.lane.b32.xlu0 %v2596, 126
    %v2605 = vpop.permute.xlu0 %2604
    %2606 = vrot.lane.b32.xlu0 %v2597, 126
    %v2607 = vpop.permute.xlu0 %2606
    %2608 = vrot.lane.b32.xlu0 %v2598, 126
    %v2609 = vpop.permute.xlu0 %2608
    %2610 = vrot.lane.b32.xlu0 %v2599, 126
    %v2611 = vpop.permute.xlu0 %2610
    %v2616 = vadd.f32 %v2408, %v2605
    %v2617 = vadd.f32 %v2409, %v2607
    %v2618 = vadd.f32 %v2410, %v2609
    %v2619 = vadd.f32 %v2411, %v2611
    %s2620 = sld [smem:[#allocation3 + $0x10a]]
    %v2621 = vstv %s2620
    %v2622 = vmul.f32 %v2621, %v2146
    %v2623 = vmul.f32 %v2621, %v2147
    %v2624 = vmul.f32 %v2621, %v2148
    %v2625 = vmul.f32 %v2621, %v2149
    %2630 = vrot.lane.b32.xlu0 %v2622, 126
    %v2631 = vpop.permute.xlu0 %2630
    %2632 = vrot.lane.b32.xlu0 %v2623, 126
    %v2633 = vpop.permute.xlu0 %2632
    %2634 = vrot.lane.b32.xlu0 %v2624, 126
    %v2635 = vpop.permute.xlu0 %2634
    %2636 = vrot.lane.b32.xlu0 %v2625, 126
    %v2637 = vpop.permute.xlu0 %2636
    %v2642 = vadd.f32 %v2434, %v2631
    %v2643 = vadd.f32 %v2435, %v2633
    %v2644 = vadd.f32 %v2436, %v2635
    %v2645 = vadd.f32 %v2437, %v2637
    %v2646 = vld [vmem:[%s1645 + $0x2] sm:$0xff]
    %v2647 = vld [vmem:[%s1645 + $0xa] sm:$0xff]
    %v2648 = vld [vmem:[%s1645 + $0x62] sm:$0xff]
    %v2649 = vld [vmem:[%s1645 + $0x6a] sm:$0xff]
    %s2650 = sld [smem:[#allocation3 + $0xf]]
    %v2651 = vstv %s2650
    %v2652 = vmul.f32 %v2651, %v2646
    %v2653 = vmul.f32 %v2651, %v2647
    %v2654 = vmul.f32 %v2651, %v2648
    %v2655 = vmul.f32 %v2651, %v2649
    %v2656 = vadd.f32 %v2460, %v2652
    %v2657 = vadd.f32 %v2461, %v2653
    %v2658 = vadd.f32 %v2462, %v2654
    %v2659 = vadd.f32 %v2463, %v2655
    %s2660 = sld [smem:[#allocation3 + $0x33]]
    %v2661 = vstv %s2660
    %v2662 = vmul.f32 %v2661, %v2646
    %v2663 = vmul.f32 %v2661, %v2647
    %v2664 = vmul.f32 %v2661, %v2648
    %v2665 = vmul.f32 %v2661, %v2649
    %v2666 = vadd.f32 %v2486, %v2662
    %v2667 = vadd.f32 %v2487, %v2663
    %v2668 = vadd.f32 %v2488, %v2664
    %v2669 = vadd.f32 %v2489, %v2665
    %s2670 = sld [smem:[#allocation3 + $0x57]]
    %v2671 = vstv %s2670
    %v2672 = vmul.f32 %v2671, %v2646
    %v2673 = vmul.f32 %v2671, %v2647
    %v2674 = vmul.f32 %v2671, %v2648
    %v2675 = vmul.f32 %v2671, %v2649
    %v2676 = vadd.f32 %v2512, %v2672
    %v2677 = vadd.f32 %v2513, %v2673
    %v2678 = vadd.f32 %v2514, %v2674
    %v2679 = vadd.f32 %v2515, %v2675
    %s2680 = sld [smem:[#allocation3 + $0x7b]]
    %v2681 = vstv %s2680
    %v2682 = vmul.f32 %v2681, %v2646
    %v2683 = vmul.f32 %v2681, %v2647
    %v2684 = vmul.f32 %v2681, %v2648
    %v2685 = vmul.f32 %v2681, %v2649
    %v2686 = vadd.f32 %v2538, %v2682
    %v2687 = vadd.f32 %v2539, %v2683
    %v2688 = vadd.f32 %v2540, %v2684
    %v2689 = vadd.f32 %v2541, %v2685
    %s2690 = sld [smem:[#allocation3 + $0x9f]]
    %v2691 = vstv %s2690
    %v2692 = vmul.f32 %v2691, %v2646
    %v2693 = vmul.f32 %v2691, %v2647
    %v2694 = vmul.f32 %v2691, %v2648
    %v2695 = vmul.f32 %v2691, %v2649
    %v2696 = vadd.f32 %v2564, %v2692
    %v2697 = vadd.f32 %v2565, %v2693
    %v2698 = vadd.f32 %v2566, %v2694
    %v2699 = vadd.f32 %v2567, %v2695
    %s2700 = sld [smem:[#allocation3 + $0xc3]]
    %v2701 = vstv %s2700
    %v2702 = vmul.f32 %v2701, %v2646
    %v2703 = vmul.f32 %v2701, %v2647
    %v2704 = vmul.f32 %v2701, %v2648
    %v2705 = vmul.f32 %v2701, %v2649
    %v2706 = vadd.f32 %v2590, %v2702
    %v2707 = vadd.f32 %v2591, %v2703
    %v2708 = vadd.f32 %v2592, %v2704
    %v2709 = vadd.f32 %v2593, %v2705
    %s2710 = sld [smem:[#allocation3 + $0xe7]]
    %v2711 = vstv %s2710
    %v2712 = vmul.f32 %v2711, %v2646
    %v2713 = vmul.f32 %v2711, %v2647
    %v2714 = vmul.f32 %v2711, %v2648
    %v2715 = vmul.f32 %v2711, %v2649
    %v2716 = vadd.f32 %v2616, %v2712
    %v2717 = vadd.f32 %v2617, %v2713
    %v2718 = vadd.f32 %v2618, %v2714
    %v2719 = vadd.f32 %v2619, %v2715
    %s2720 = sld [smem:[#allocation3 + $0x10b]]
    %v2721 = vstv %s2720
    %v2722 = vmul.f32 %v2721, %v2646
    %v2723 = vmul.f32 %v2721, %v2647
    %v2724 = vmul.f32 %v2721, %v2648
    %v2725 = vmul.f32 %v2721, %v2649
    %v2726 = vadd.f32 %v2642, %v2722
    %v2727 = vadd.f32 %v2643, %v2723
    %v2728 = vadd.f32 %v2644, %v2724
    %v2729 = vadd.f32 %v2645, %v2725
    %s2730 = sld [smem:[#allocation3 + $0x10]]
    %v2731 = vstv %s2730
    %v2732 = vmul.f32 %v2731, %v2646
    %v2733 = vmul.f32 %v2731, %v2647
    %v2734 = vmul.f32 %v2731, %v2648
    %v2735 = vmul.f32 %v2731, %v2649
    %2740 = vrot.lane.b32.xlu0 %v2732, 127
    %v2741 = vpop.permute.xlu0 %2740
    %2742 = vrot.lane.b32.xlu0 %v2733, 127
    %v2743 = vpop.permute.xlu0 %2742
    %2744 = vrot.lane.b32.xlu0 %v2734, 127
    %v2745 = vpop.permute.xlu0 %2744
    %2746 = vrot.lane.b32.xlu0 %v2735, 127
    %v2747 = vpop.permute.xlu0 %2746
    %v2752 = vadd.f32 %v2656, %v2741
    %v2753 = vadd.f32 %v2657, %v2743
    %v2754 = vadd.f32 %v2658, %v2745
    %v2755 = vadd.f32 %v2659, %v2747
    %s2756 = sld [smem:[#allocation3 + $0x34]]
    %v2757 = vstv %s2756
    %v2758 = vmul.f32 %v2757, %v2646
    %v2759 = vmul.f32 %v2757, %v2647
    %v2760 = vmul.f32 %v2757, %v2648
    %v2761 = vmul.f32 %v2757, %v2649
    %2766 = vrot.lane.b32.xlu0 %v2758, 127
    %v2767 = vpop.permute.xlu0 %2766
    %2768 = vrot.lane.b32.xlu0 %v2759, 127
    %v2769 = vpop.permute.xlu0 %2768
    %2770 = vrot.lane.b32.xlu0 %v2760, 127
    %v2771 = vpop.permute.xlu0 %2770
    %2772 = vrot.lane.b32.xlu0 %v2761, 127
    %v2773 = vpop.permute.xlu0 %2772
    %v2778 = vadd.f32 %v2666, %v2767
    %v2779 = vadd.f32 %v2667, %v2769
    %v2780 = vadd.f32 %v2668, %v2771
    %v2781 = vadd.f32 %v2669, %v2773
    %s2782 = sld [smem:[#allocation3 + $0x58]]
    %v2783 = vstv %s2782
    %v2784 = vmul.f32 %v2783, %v2646
    %v2785 = vmul.f32 %v2783, %v2647
    %v2786 = vmul.f32 %v2783, %v2648
    %v2787 = vmul.f32 %v2783, %v2649
    %2792 = vrot.lane.b32.xlu0 %v2784, 127
    %v2793 = vpop.permute.xlu0 %2792
    %2794 = vrot.lane.b32.xlu0 %v2785, 127
    %v2795 = vpop.permute.xlu0 %2794
    %2796 = vrot.lane.b32.xlu0 %v2786, 127
    %v2797 = vpop.permute.xlu0 %2796
    %2798 = vrot.lane.b32.xlu0 %v2787, 127
    %v2799 = vpop.permute.xlu0 %2798
    %v2804 = vadd.f32 %v2676, %v2793
    %v2805 = vadd.f32 %v2677, %v2795
    %v2806 = vadd.f32 %v2678, %v2797
    %v2807 = vadd.f32 %v2679, %v2799
    %s2808 = sld [smem:[#allocation3 + $0x7c]]
    %v2809 = vstv %s2808
    %v2810 = vmul.f32 %v2809, %v2646
    %v2811 = vmul.f32 %v2809, %v2647
    %v2812 = vmul.f32 %v2809, %v2648
    %v2813 = vmul.f32 %v2809, %v2649
    %2818 = vrot.lane.b32.xlu0 %v2810, 127
    %v2819 = vpop.permute.xlu0 %2818
    %2820 = vrot.lane.b32.xlu0 %v2811, 127
    %v2821 = vpop.permute.xlu0 %2820
    %2822 = vrot.lane.b32.xlu0 %v2812, 127
    %v2823 = vpop.permute.xlu0 %2822
    %2824 = vrot.lane.b32.xlu0 %v2813, 127
    %v2825 = vpop.permute.xlu0 %2824
    %v2830 = vadd.f32 %v2686, %v2819
    %v2831 = vadd.f32 %v2687, %v2821
    %v2832 = vadd.f32 %v2688, %v2823
    %v2833 = vadd.f32 %v2689, %v2825
    %s2834 = sld [smem:[#allocation3 + $0xa0]]
    %v2835 = vstv %s2834
    %v2836 = vmul.f32 %v2835, %v2646
    %v2837 = vmul.f32 %v2835, %v2647
    %v2838 = vmul.f32 %v2835, %v2648
    %v2839 = vmul.f32 %v2835, %v2649
    %2844 = vrot.lane.b32.xlu0 %v2836, 127
    %v2845 = vpop.permute.xlu0 %2844
    %2846 = vrot.lane.b32.xlu0 %v2837, 127
    %v2847 = vpop.permute.xlu0 %2846
    %2848 = vrot.lane.b32.xlu0 %v2838, 127
    %v2849 = vpop.permute.xlu0 %2848
    %2850 = vrot.lane.b32.xlu0 %v2839, 127
    %v2851 = vpop.permute.xlu0 %2850
    %v2856 = vadd.f32 %v2696, %v2845
    %v2857 = vadd.f32 %v2697, %v2847
    %v2858 = vadd.f32 %v2698, %v2849
    %v2859 = vadd.f32 %v2699, %v2851
    %s2860 = sld [smem:[#allocation3 + $0xc4]]
    %v2861 = vstv %s2860
    %v2862 = vmul.f32 %v2861, %v2646
    %v2863 = vmul.f32 %v2861, %v2647
    %v2864 = vmul.f32 %v2861, %v2648
    %v2865 = vmul.f32 %v2861, %v2649
    %2870 = vrot.lane.b32.xlu0 %v2862, 127
    %v2871 = vpop.permute.xlu0 %2870
    %2872 = vrot.lane.b32.xlu0 %v2863, 127
    %v2873 = vpop.permute.xlu0 %2872
    %2874 = vrot.lane.b32.xlu0 %v2864, 127
    %v2875 = vpop.permute.xlu0 %2874
    %2876 = vrot.lane.b32.xlu0 %v2865, 127
    %v2877 = vpop.permute.xlu0 %2876
    %v2882 = vadd.f32 %v2706, %v2871
    %v2883 = vadd.f32 %v2707, %v2873
    %v2884 = vadd.f32 %v2708, %v2875
    %v2885 = vadd.f32 %v2709, %v2877
    %s2886 = sld [smem:[#allocation3 + $0xe8]]
    %v2887 = vstv %s2886
    %v2888 = vmul.f32 %v2887, %v2646
    %v2889 = vmul.f32 %v2887, %v2647
    %v2890 = vmul.f32 %v2887, %v2648
    %v2891 = vmul.f32 %v2887, %v2649
    %2896 = vrot.lane.b32.xlu0 %v2888, 127
    %v2897 = vpop.permute.xlu0 %2896
    %2898 = vrot.lane.b32.xlu0 %v2889, 127
    %v2899 = vpop.permute.xlu0 %2898
    %2900 = vrot.lane.b32.xlu0 %v2890, 127
    %v2901 = vpop.permute.xlu0 %2900
    %2902 = vrot.lane.b32.xlu0 %v2891, 127
    %v2903 = vpop.permute.xlu0 %2902
    %v2908 = vadd.f32 %v2716, %v2897
    %v2909 = vadd.f32 %v2717, %v2899
    %v2910 = vadd.f32 %v2718, %v2901
    %v2911 = vadd.f32 %v2719, %v2903
    %s2912 = sld [smem:[#allocation3 + $0x10c]]
    %v2913 = vstv %s2912
    %v2914 = vmul.f32 %v2913, %v2646
    %v2915 = vmul.f32 %v2913, %v2647
    %v2916 = vmul.f32 %v2913, %v2648
    %v2917 = vmul.f32 %v2913, %v2649
    %2922 = vrot.lane.b32.xlu0 %v2914, 127
    %v2923 = vpop.permute.xlu0 %2922
    %2924 = vrot.lane.b32.xlu0 %v2915, 127
    %v2925 = vpop.permute.xlu0 %2924
    %2926 = vrot.lane.b32.xlu0 %v2916, 127
    %v2927 = vpop.permute.xlu0 %2926
    %2928 = vrot.lane.b32.xlu0 %v2917, 127
    %v2929 = vpop.permute.xlu0 %2928
    %v2934 = vadd.f32 %v2726, %v2923
    %v2935 = vadd.f32 %v2727, %v2925
    %v2936 = vadd.f32 %v2728, %v2927
    %v2937 = vadd.f32 %v2729, %v2929
    %s2938 = sld [smem:[#allocation3 + $0x11]]
    %v2939 = vstv %s2938
    %v2940 = vmul.f32 %v2939, %v2646
    %v2941 = vmul.f32 %v2939, %v2647
    %v2942 = vmul.f32 %v2939, %v2648
    %v2943 = vmul.f32 %v2939, %v2649
    %2948 = vrot.lane.b32.xlu0 %v2940, 126
    %v2949 = vpop.permute.xlu0 %2948
    %2950 = vrot.lane.b32.xlu0 %v2941, 126
    %v2951 = vpop.permute.xlu0 %2950
    %2952 = vrot.lane.b32.xlu0 %v2942, 126
    %v2953 = vpop.permute.xlu0 %2952
    %2954 = vrot.lane.b32.xlu0 %v2943, 126
    %v2955 = vpop.permute.xlu0 %2954
    %v2960 = vadd.f32 %v2752, %v2949
    %v2961 = vadd.f32 %v2753, %v2951
    %v2962 = vadd.f32 %v2754, %v2953
    %v2963 = vadd.f32 %v2755, %v2955
    %s2964 = sld [smem:[#allocation3 + $0x35]]
    %v2965 = vstv %s2964
    %v2966 = vmul.f32 %v2965, %v2646
    %v2967 = vmul.f32 %v2965, %v2647
    %v2968 = vmul.f32 %v2965, %v2648
    %v2969 = vmul.f32 %v2965, %v2649
    %2974 = vrot.lane.b32.xlu0 %v2966, 126
    %v2975 = vpop.permute.xlu0 %2974
    %2976 = vrot.lane.b32.xlu0 %v2967, 126
    %v2977 = vpop.permute.xlu0 %2976
    %2978 = vrot.lane.b32.xlu0 %v2968, 126
    %v2979 = vpop.permute.xlu0 %2978
    %2980 = vrot.lane.b32.xlu0 %v2969, 126
    %v2981 = vpop.permute.xlu0 %2980
    %v2986 = vadd.f32 %v2778, %v2975
    %v2987 = vadd.f32 %v2779, %v2977
    %v2988 = vadd.f32 %v2780, %v2979
    %v2989 = vadd.f32 %v2781, %v2981
    %s2990 = sld [smem:[#allocation3 + $0x59]]
    %v2991 = vstv %s2990
    %v2992 = vmul.f32 %v2991, %v2646
    %v2993 = vmul.f32 %v2991, %v2647
    %v2994 = vmul.f32 %v2991, %v2648
    %v2995 = vmul.f32 %v2991, %v2649
    %3000 = vrot.lane.b32.xlu0 %v2992, 126
    %v3001 = vpop.permute.xlu0 %3000
    %3002 = vrot.lane.b32.xlu0 %v2993, 126
    %v3003 = vpop.permute.xlu0 %3002
    %3004 = vrot.lane.b32.xlu0 %v2994, 126
    %v3005 = vpop.permute.xlu0 %3004
    %3006 = vrot.lane.b32.xlu0 %v2995, 126
    %v3007 = vpop.permute.xlu0 %3006
    %v3012 = vadd.f32 %v2804, %v3001
    %v3013 = vadd.f32 %v2805, %v3003
    %v3014 = vadd.f32 %v2806, %v3005
    %v3015 = vadd.f32 %v2807, %v3007
    %s3016 = sld [smem:[#allocation3 + $0x7d]]
    %v3017 = vstv %s3016
    %v3018 = vmul.f32 %v3017, %v2646
    %v3019 = vmul.f32 %v3017, %v2647
    %v3020 = vmul.f32 %v3017, %v2648
    %v3021 = vmul.f32 %v3017, %v2649
    %3026 = vrot.lane.b32.xlu0 %v3018, 126
    %v3027 = vpop.permute.xlu0 %3026
    %3028 = vrot.lane.b32.xlu0 %v3019, 126
    %v3029 = vpop.permute.xlu0 %3028
    %3030 = vrot.lane.b32.xlu0 %v3020, 126
    %v3031 = vpop.permute.xlu0 %3030
    %3032 = vrot.lane.b32.xlu0 %v3021, 126
    %v3033 = vpop.permute.xlu0 %3032
    %v3038 = vadd.f32 %v2830, %v3027
    %v3039 = vadd.f32 %v2831, %v3029
    %v3040 = vadd.f32 %v2832, %v3031
    %v3041 = vadd.f32 %v2833, %v3033
    %s3042 = sld [smem:[#allocation3 + $0xa1]]
    %v3043 = vstv %s3042
    %v3044 = vmul.f32 %v3043, %v2646
    %v3045 = vmul.f32 %v3043, %v2647
    %v3046 = vmul.f32 %v3043, %v2648
    %v3047 = vmul.f32 %v3043, %v2649
    %3052 = vrot.lane.b32.xlu0 %v3044, 126
    %v3053 = vpop.permute.xlu0 %3052
    %3054 = vrot.lane.b32.xlu0 %v3045, 126
    %v3055 = vpop.permute.xlu0 %3054
    %3056 = vrot.lane.b32.xlu0 %v3046, 126
    %v3057 = vpop.permute.xlu0 %3056
    %3058 = vrot.lane.b32.xlu0 %v3047, 126
    %v3059 = vpop.permute.xlu0 %3058
    %v3064 = vadd.f32 %v2856, %v3053
    %v3065 = vadd.f32 %v2857, %v3055
    %v3066 = vadd.f32 %v2858, %v3057
    %v3067 = vadd.f32 %v2859, %v3059
    %s3068 = sld [smem:[#allocation3 + $0xc5]]
    %v3069 = vstv %s3068
    %v3070 = vmul.f32 %v3069, %v2646
    %v3071 = vmul.f32 %v3069, %v2647
    %v3072 = vmul.f32 %v3069, %v2648
    %v3073 = vmul.f32 %v3069, %v2649
    %3078 = vrot.lane.b32.xlu0 %v3070, 126
    %v3079 = vpop.permute.xlu0 %3078
    %3080 = vrot.lane.b32.xlu0 %v3071, 126
    %v3081 = vpop.permute.xlu0 %3080
    %3082 = vrot.lane.b32.xlu0 %v3072, 126
    %v3083 = vpop.permute.xlu0 %3082
    %3084 = vrot.lane.b32.xlu0 %v3073, 126
    %v3085 = vpop.permute.xlu0 %3084
    %v3090 = vadd.f32 %v2882, %v3079
    %v3091 = vadd.f32 %v2883, %v3081
    %v3092 = vadd.f32 %v2884, %v3083
    %v3093 = vadd.f32 %v2885, %v3085
    %s3094 = sld [smem:[#allocation3 + $0xe9]]
    %v3095 = vstv %s3094
    %v3096 = vmul.f32 %v3095, %v2646
    %v3097 = vmul.f32 %v3095, %v2647
    %v3098 = vmul.f32 %v3095, %v2648
    %v3099 = vmul.f32 %v3095, %v2649
    %3104 = vrot.lane.b32.xlu0 %v3096, 126
    %v3105 = vpop.permute.xlu0 %3104
    %3106 = vrot.lane.b32.xlu0 %v3097, 126
    %v3107 = vpop.permute.xlu0 %3106
    %3108 = vrot.lane.b32.xlu0 %v3098, 126
    %v3109 = vpop.permute.xlu0 %3108
    %3110 = vrot.lane.b32.xlu0 %v3099, 126
    %v3111 = vpop.permute.xlu0 %3110
    %v3116 = vadd.f32 %v2908, %v3105
    %v3117 = vadd.f32 %v2909, %v3107
    %v3118 = vadd.f32 %v2910, %v3109
    %v3119 = vadd.f32 %v2911, %v3111
    %s3120 = sld [smem:[#allocation3 + $0x10d]]
    %v3121 = vstv %s3120
    %v3122 = vmul.f32 %v3121, %v2646
    %v3123 = vmul.f32 %v3121, %v2647
    %v3124 = vmul.f32 %v3121, %v2648
    %v3125 = vmul.f32 %v3121, %v2649
    %3130 = vrot.lane.b32.xlu0 %v3122, 126
    %v3131 = vpop.permute.xlu0 %3130
    %3132 = vrot.lane.b32.xlu0 %v3123, 126
    %v3133 = vpop.permute.xlu0 %3132
    %3134 = vrot.lane.b32.xlu0 %v3124, 126
    %v3135 = vpop.permute.xlu0 %3134
    %3136 = vrot.lane.b32.xlu0 %v3125, 126
    %v3137 = vpop.permute.xlu0 %3136
    %v3142 = vadd.f32 %v2934, %v3131
    %v3143 = vadd.f32 %v2935, %v3133
    %v3144 = vadd.f32 %v2936, %v3135
    %v3145 = vadd.f32 %v2937, %v3137
    %s3146 = scalar_lea.vmem [#allocation2], 48
    %v3147 = vld [vmem:[%s3146] sm:$0xff]
    %v3148 = vld [vmem:[%s3146 + $0x8] sm:$0xff]
    %v3149 = vld [vmem:[%s3146 + $0x60] sm:$0xff]
    %v3150 = vld [vmem:[%s3146 + $0x68] sm:$0xff]
    %s3151 = sld [smem:[#allocation3 + $0x12]]
    %v3152 = vstv %s3151
    %v3153 = vmul.f32 %v3152, %v3147
    %v3154 = vmul.f32 %v3152, %v3148
    %v3155 = vmul.f32 %v3152, %v3149
    %v3156 = vmul.f32 %v3152, %v3150
    %v3157 = vadd.f32 %v2960, %v3153
    %v3158 = vadd.f32 %v2961, %v3154
    %v3159 = vadd.f32 %v2962, %v3155
    %v3160 = vadd.f32 %v2963, %v3156
    %s3161 = sld [smem:[#allocation3 + $0x36]]
    %v3162 = vstv %s3161
    %v3163 = vmul.f32 %v3162, %v3147
    %v3164 = vmul.f32 %v3162, %v3148
    %v3165 = vmul.f32 %v3162, %v3149
    %v3166 = vmul.f32 %v3162, %v3150
    %v3167 = vadd.f32 %v2986, %v3163
    %v3168 = vadd.f32 %v2987, %v3164
    %v3169 = vadd.f32 %v2988, %v3165
    %v3170 = vadd.f32 %v2989, %v3166
    %s3171 = sld [smem:[#allocation3 + $0x5a]]
    %v3172 = vstv %s3171
    %v3173 = vmul.f32 %v3172, %v3147
    %v3174 = vmul.f32 %v3172, %v3148
    %v3175 = vmul.f32 %v3172, %v3149
    %v3176 = vmul.f32 %v3172, %v3150
    %v3177 = vadd.f32 %v3012, %v3173
    %v3178 = vadd.f32 %v3013, %v3174
    %v3179 = vadd.f32 %v3014, %v3175
    %v3180 = vadd.f32 %v3015, %v3176
    %s3181 = sld [smem:[#allocation3 + $0x7e]]
    %v3182 = vstv %s3181
    %v3183 = vmul.f32 %v3182, %v3147
    %v3184 = vmul.f32 %v3182, %v3148
    %v3185 = vmul.f32 %v3182, %v3149
    %v3186 = vmul.f32 %v3182, %v3150
    %v3187 = vadd.f32 %v3038, %v3183
    %v3188 = vadd.f32 %v3039, %v3184
    %v3189 = vadd.f32 %v3040, %v3185
    %v3190 = vadd.f32 %v3041, %v3186
    %s3191 = sld [smem:[#allocation3 + $0xa2]]
    %v3192 = vstv %s3191
    %v3193 = vmul.f32 %v3192, %v3147
    %v3194 = vmul.f32 %v3192, %v3148
    %v3195 = vmul.f32 %v3192, %v3149
    %v3196 = vmul.f32 %v3192, %v3150
    %v3197 = vadd.f32 %v3064, %v3193
    %v3198 = vadd.f32 %v3065, %v3194
    %v3199 = vadd.f32 %v3066, %v3195
    %v3200 = vadd.f32 %v3067, %v3196
    %s3201 = sld [smem:[#allocation3 + $0xc6]]
    %v3202 = vstv %s3201
    %v3203 = vmul.f32 %v3202, %v3147
    %v3204 = vmul.f32 %v3202, %v3148
    %v3205 = vmul.f32 %v3202, %v3149
    %v3206 = vmul.f32 %v3202, %v3150
    %v3207 = vadd.f32 %v3090, %v3203
    %v3208 = vadd.f32 %v3091, %v3204
    %v3209 = vadd.f32 %v3092, %v3205
    %v3210 = vadd.f32 %v3093, %v3206
    %s3211 = sld [smem:[#allocation3 + $0xea]]
    %v3212 = vstv %s3211
    %v3213 = vmul.f32 %v3212, %v3147
    %v3214 = vmul.f32 %v3212, %v3148
    %v3215 = vmul.f32 %v3212, %v3149
    %v3216 = vmul.f32 %v3212, %v3150
    %v3217 = vadd.f32 %v3116, %v3213
    %v3218 = vadd.f32 %v3117, %v3214
    %v3219 = vadd.f32 %v3118, %v3215
    %v3220 = vadd.f32 %v3119, %v3216
    %s3221 = sld [smem:[#allocation3 + $0x10e]]
    %v3222 = vstv %s3221
    %v3223 = vmul.f32 %v3222, %v3147
    %v3224 = vmul.f32 %v3222, %v3148
    %v3225 = vmul.f32 %v3222, %v3149
    %v3226 = vmul.f32 %v3222, %v3150
    %v3227 = vadd.f32 %v3142, %v3223
    %v3228 = vadd.f32 %v3143, %v3224
    %v3229 = vadd.f32 %v3144, %v3225
    %v3230 = vadd.f32 %v3145, %v3226
    %s3231 = sld [smem:[#allocation3 + $0x13]]
    %v3232 = vstv %s3231
    %v3233 = vmul.f32 %v3232, %v3147
    %v3234 = vmul.f32 %v3232, %v3148
    %v3235 = vmul.f32 %v3232, %v3149
    %v3236 = vmul.f32 %v3232, %v3150
    %3241 = vrot.lane.b32.xlu0 %v3233, 127
    %v3242 = vpop.permute.xlu0 %3241
    %3243 = vrot.lane.b32.xlu0 %v3234, 127
    %v3244 = vpop.permute.xlu0 %3243
    %3245 = vrot.lane.b32.xlu0 %v3235, 127
    %v3246 = vpop.permute.xlu0 %3245
    %3247 = vrot.lane.b32.xlu0 %v3236, 127
    %v3248 = vpop.permute.xlu0 %3247
    %v3253 = vadd.f32 %v3157, %v3242
    %v3254 = vadd.f32 %v3158, %v3244
    %v3255 = vadd.f32 %v3159, %v3246
    %v3256 = vadd.f32 %v3160, %v3248
    %s3257 = sld [smem:[#allocation3 + $0x37]]
    %v3258 = vstv %s3257
    %v3259 = vmul.f32 %v3258, %v3147
    %v3260 = vmul.f32 %v3258, %v3148
    %v3261 = vmul.f32 %v3258, %v3149
    %v3262 = vmul.f32 %v3258, %v3150
    %3267 = vrot.lane.b32.xlu0 %v3259, 127
    %v3268 = vpop.permute.xlu0 %3267
    %3269 = vrot.lane.b32.xlu0 %v3260, 127
    %v3270 = vpop.permute.xlu0 %3269
    %3271 = vrot.lane.b32.xlu0 %v3261, 127
    %v3272 = vpop.permute.xlu0 %3271
    %3273 = vrot.lane.b32.xlu0 %v3262, 127
    %v3274 = vpop.permute.xlu0 %3273
    %v3279 = vadd.f32 %v3167, %v3268
    %v3280 = vadd.f32 %v3168, %v3270
    %v3281 = vadd.f32 %v3169, %v3272
    %v3282 = vadd.f32 %v3170, %v3274
    %s3283 = sld [smem:[#allocation3 + $0x5b]]
    %v3284 = vstv %s3283
    %v3285 = vmul.f32 %v3284, %v3147
    %v3286 = vmul.f32 %v3284, %v3148
    %v3287 = vmul.f32 %v3284, %v3149
    %v3288 = vmul.f32 %v3284, %v3150
    %3293 = vrot.lane.b32.xlu0 %v3285, 127
    %v3294 = vpop.permute.xlu0 %3293
    %3295 = vrot.lane.b32.xlu0 %v3286, 127
    %v3296 = vpop.permute.xlu0 %3295
    %3297 = vrot.lane.b32.xlu0 %v3287, 127
    %v3298 = vpop.permute.xlu0 %3297
    %3299 = vrot.lane.b32.xlu0 %v3288, 127
    %v3300 = vpop.permute.xlu0 %3299
    %v3305 = vadd.f32 %v3177, %v3294
    %v3306 = vadd.f32 %v3178, %v3296
    %v3307 = vadd.f32 %v3179, %v3298
    %v3308 = vadd.f32 %v3180, %v3300
    %s3309 = sld [smem:[#allocation3 + $0x7f]]
    %v3310 = vstv %s3309
    %v3311 = vmul.f32 %v3310, %v3147
    %v3312 = vmul.f32 %v3310, %v3148
    %v3313 = vmul.f32 %v3310, %v3149
    %v3314 = vmul.f32 %v3310, %v3150
    %3319 = vrot.lane.b32.xlu0 %v3311, 127
    %v3320 = vpop.permute.xlu0 %3319
    %3321 = vrot.lane.b32.xlu0 %v3312, 127
    %v3322 = vpop.permute.xlu0 %3321
    %3323 = vrot.lane.b32.xlu0 %v3313, 127
    %v3324 = vpop.permute.xlu0 %3323
    %3325 = vrot.lane.b32.xlu0 %v3314, 127
    %v3326 = vpop.permute.xlu0 %3325
    %v3331 = vadd.f32 %v3187, %v3320
    %v3332 = vadd.f32 %v3188, %v3322
    %v3333 = vadd.f32 %v3189, %v3324
    %v3334 = vadd.f32 %v3190, %v3326
    %s3335 = sld [smem:[#allocation3 + $0xa3]]
    %v3336 = vstv %s3335
    %v3337 = vmul.f32 %v3336, %v3147
    %v3338 = vmul.f32 %v3336, %v3148
    %v3339 = vmul.f32 %v3336, %v3149
    %v3340 = vmul.f32 %v3336, %v3150
    %3345 = vrot.lane.b32.xlu0 %v3337, 127
    %v3346 = vpop.permute.xlu0 %3345
    %3347 = vrot.lane.b32.xlu0 %v3338, 127
    %v3348 = vpop.permute.xlu0 %3347
    %3349 = vrot.lane.b32.xlu0 %v3339, 127
    %v3350 = vpop.permute.xlu0 %3349
    %3351 = vrot.lane.b32.xlu0 %v3340, 127
    %v3352 = vpop.permute.xlu0 %3351
    %v3357 = vadd.f32 %v3197, %v3346
    %v3358 = vadd.f32 %v3198, %v3348
    %v3359 = vadd.f32 %v3199, %v3350
    %v3360 = vadd.f32 %v3200, %v3352
    %s3361 = sld [smem:[#allocation3 + $0xc7]]
    %v3362 = vstv %s3361
    %v3363 = vmul.f32 %v3362, %v3147
    %v3364 = vmul.f32 %v3362, %v3148
    %v3365 = vmul.f32 %v3362, %v3149
    %v3366 = vmul.f32 %v3362, %v3150
    %3371 = vrot.lane.b32.xlu0 %v3363, 127
    %v3372 = vpop.permute.xlu0 %3371
    %3373 = vrot.lane.b32.xlu0 %v3364, 127
    %v3374 = vpop.permute.xlu0 %3373
    %3375 = vrot.lane.b32.xlu0 %v3365, 127
    %v3376 = vpop.permute.xlu0 %3375
    %3377 = vrot.lane.b32.xlu0 %v3366, 127
    %v3378 = vpop.permute.xlu0 %3377
    %v3383 = vadd.f32 %v3207, %v3372
    %v3384 = vadd.f32 %v3208, %v3374
    %v3385 = vadd.f32 %v3209, %v3376
    %v3386 = vadd.f32 %v3210, %v3378
    %s3387 = sld [smem:[#allocation3 + $0xeb]]
    %v3388 = vstv %s3387
    %v3389 = vmul.f32 %v3388, %v3147
    %v3390 = vmul.f32 %v3388, %v3148
    %v3391 = vmul.f32 %v3388, %v3149
    %v3392 = vmul.f32 %v3388, %v3150
    %3397 = vrot.lane.b32.xlu0 %v3389, 127
    %v3398 = vpop.permute.xlu0 %3397
    %3399 = vrot.lane.b32.xlu0 %v3390, 127
    %v3400 = vpop.permute.xlu0 %3399
    %3401 = vrot.lane.b32.xlu0 %v3391, 127
    %v3402 = vpop.permute.xlu0 %3401
    %3403 = vrot.lane.b32.xlu0 %v3392, 127
    %v3404 = vpop.permute.xlu0 %3403
    %v3409 = vadd.f32 %v3217, %v3398
    %v3410 = vadd.f32 %v3218, %v3400
    %v3411 = vadd.f32 %v3219, %v3402
    %v3412 = vadd.f32 %v3220, %v3404
    %s3413 = sld [smem:[#allocation3 + $0x10f]]
    %v3414 = vstv %s3413
    %v3415 = vmul.f32 %v3414, %v3147
    %v3416 = vmul.f32 %v3414, %v3148
    %v3417 = vmul.f32 %v3414, %v3149
    %v3418 = vmul.f32 %v3414, %v3150
    %3423 = vrot.lane.b32.xlu0 %v3415, 127
    %v3424 = vpop.permute.xlu0 %3423
    %3425 = vrot.lane.b32.xlu0 %v3416, 127
    %v3426 = vpop.permute.xlu0 %3425
    %3427 = vrot.lane.b32.xlu0 %v3417, 127
    %v3428 = vpop.permute.xlu0 %3427
    %3429 = vrot.lane.b32.xlu0 %v3418, 127
    %v3430 = vpop.permute.xlu0 %3429
    %v3435 = vadd.f32 %v3227, %v3424
    %v3436 = vadd.f32 %v3228, %v3426
    %v3437 = vadd.f32 %v3229, %v3428
    %v3438 = vadd.f32 %v3230, %v3430
    %s3439 = sld [smem:[#allocation3 + $0x14]]
    %v3440 = vstv %s3439
    %v3441 = vmul.f32 %v3440, %v3147
    %v3442 = vmul.f32 %v3440, %v3148
    %v3443 = vmul.f32 %v3440, %v3149
    %v3444 = vmul.f32 %v3440, %v3150
    %3449 = vrot.lane.b32.xlu0 %v3441, 126
    %v3450 = vpop.permute.xlu0 %3449
    %3451 = vrot.lane.b32.xlu0 %v3442, 126
    %v3452 = vpop.permute.xlu0 %3451
    %3453 = vrot.lane.b32.xlu0 %v3443, 126
    %v3454 = vpop.permute.xlu0 %3453
    %3455 = vrot.lane.b32.xlu0 %v3444, 126
    %v3456 = vpop.permute.xlu0 %3455
    %v3461 = vadd.f32 %v3253, %v3450
    %v3462 = vadd.f32 %v3254, %v3452
    %v3463 = vadd.f32 %v3255, %v3454
    %v3464 = vadd.f32 %v3256, %v3456
    %s3465 = sld [smem:[#allocation3 + $0x38]]
    %v3466 = vstv %s3465
    %v3467 = vmul.f32 %v3466, %v3147
    %v3468 = vmul.f32 %v3466, %v3148
    %v3469 = vmul.f32 %v3466, %v3149
    %v3470 = vmul.f32 %v3466, %v3150
    %3475 = vrot.lane.b32.xlu0 %v3467, 126
    %v3476 = vpop.permute.xlu0 %3475
    %3477 = vrot.lane.b32.xlu0 %v3468, 126
    %v3478 = vpop.permute.xlu0 %3477
    %3479 = vrot.lane.b32.xlu0 %v3469, 126
    %v3480 = vpop.permute.xlu0 %3479
    %3481 = vrot.lane.b32.xlu0 %v3470, 126
    %v3482 = vpop.permute.xlu0 %3481
    %v3487 = vadd.f32 %v3279, %v3476
    %v3488 = vadd.f32 %v3280, %v3478
    %v3489 = vadd.f32 %v3281, %v3480
    %v3490 = vadd.f32 %v3282, %v3482
    %s3491 = sld [smem:[#allocation3 + $0x5c]]
    %v3492 = vstv %s3491
    %v3493 = vmul.f32 %v3492, %v3147
    %v3494 = vmul.f32 %v3492, %v3148
    %v3495 = vmul.f32 %v3492, %v3149
    %v3496 = vmul.f32 %v3492, %v3150
    %3501 = vrot.lane.b32.xlu0 %v3493, 126
    %v3502 = vpop.permute.xlu0 %3501
    %3503 = vrot.lane.b32.xlu0 %v3494, 126
    %v3504 = vpop.permute.xlu0 %3503
    %3505 = vrot.lane.b32.xlu0 %v3495, 126
    %v3506 = vpop.permute.xlu0 %3505
    %3507 = vrot.lane.b32.xlu0 %v3496, 126
    %v3508 = vpop.permute.xlu0 %3507
    %v3513 = vadd.f32 %v3305, %v3502
    %v3514 = vadd.f32 %v3306, %v3504
    %v3515 = vadd.f32 %v3307, %v3506
    %v3516 = vadd.f32 %v3308, %v3508
    %s3517 = sld [smem:[#allocation3 + $0x80]]
    %v3518 = vstv %s3517
    %v3519 = vmul.f32 %v3518, %v3147
    %v3520 = vmul.f32 %v3518, %v3148
    %v3521 = vmul.f32 %v3518, %v3149
    %v3522 = vmul.f32 %v3518, %v3150
    %3527 = vrot.lane.b32.xlu0 %v3519, 126
    %v3528 = vpop.permute.xlu0 %3527
    %3529 = vrot.lane.b32.xlu0 %v3520, 126
    %v3530 = vpop.permute.xlu0 %3529
    %3531 = vrot.lane.b32.xlu0 %v3521, 126
    %v3532 = vpop.permute.xlu0 %3531
    %3533 = vrot.lane.b32.xlu0 %v3522, 126
    %v3534 = vpop.permute.xlu0 %3533
    %v3539 = vadd.f32 %v3331, %v3528
    %v3540 = vadd.f32 %v3332, %v3530
    %v3541 = vadd.f32 %v3333, %v3532
    %v3542 = vadd.f32 %v3334, %v3534
    %s3543 = sld [smem:[#allocation3 + $0xa4]]
    %v3544 = vstv %s3543
    %v3545 = vmul.f32 %v3544, %v3147
    %v3546 = vmul.f32 %v3544, %v3148
    %v3547 = vmul.f32 %v3544, %v3149
    %v3548 = vmul.f32 %v3544, %v3150
    %3553 = vrot.lane.b32.xlu0 %v3545, 126
    %v3554 = vpop.permute.xlu0 %3553
    %3555 = vrot.lane.b32.xlu0 %v3546, 126
    %v3556 = vpop.permute.xlu0 %3555
    %3557 = vrot.lane.b32.xlu0 %v3547, 126
    %v3558 = vpop.permute.xlu0 %3557
    %3559 = vrot.lane.b32.xlu0 %v3548, 126
    %v3560 = vpop.permute.xlu0 %3559
    %v3565 = vadd.f32 %v3357, %v3554
    %v3566 = vadd.f32 %v3358, %v3556
    %v3567 = vadd.f32 %v3359, %v3558
    %v3568 = vadd.f32 %v3360, %v3560
    %s3569 = sld [smem:[#allocation3 + $0xc8]]
    %v3570 = vstv %s3569
    %v3571 = vmul.f32 %v3570, %v3147
    %v3572 = vmul.f32 %v3570, %v3148
    %v3573 = vmul.f32 %v3570, %v3149
    %v3574 = vmul.f32 %v3570, %v3150
    %3579 = vrot.lane.b32.xlu0 %v3571, 126
    %v3580 = vpop.permute.xlu0 %3579
    %3581 = vrot.lane.b32.xlu0 %v3572, 126
    %v3582 = vpop.permute.xlu0 %3581
    %3583 = vrot.lane.b32.xlu0 %v3573, 126
    %v3584 = vpop.permute.xlu0 %3583
    %3585 = vrot.lane.b32.xlu0 %v3574, 126
    %v3586 = vpop.permute.xlu0 %3585
    %v3591 = vadd.f32 %v3383, %v3580
    %v3592 = vadd.f32 %v3384, %v3582
    %v3593 = vadd.f32 %v3385, %v3584
    %v3594 = vadd.f32 %v3386, %v3586
    %s3595 = sld [smem:[#allocation3 + $0xec]]
    %v3596 = vstv %s3595
    %v3597 = vmul.f32 %v3596, %v3147
    %v3598 = vmul.f32 %v3596, %v3148
    %v3599 = vmul.f32 %v3596, %v3149
    %v3600 = vmul.f32 %v3596, %v3150
    %3605 = vrot.lane.b32.xlu0 %v3597, 126
    %v3606 = vpop.permute.xlu0 %3605
    %3607 = vrot.lane.b32.xlu0 %v3598, 126
    %v3608 = vpop.permute.xlu0 %3607
    %3609 = vrot.lane.b32.xlu0 %v3599, 126
    %v3610 = vpop.permute.xlu0 %3609
    %3611 = vrot.lane.b32.xlu0 %v3600, 126
    %v3612 = vpop.permute.xlu0 %3611
    %v3617 = vadd.f32 %v3409, %v3606
    %v3618 = vadd.f32 %v3410, %v3608
    %v3619 = vadd.f32 %v3411, %v3610
    %v3620 = vadd.f32 %v3412, %v3612
    %s3621 = sld [smem:[#allocation3 + $0x110]]
    %v3622 = vstv %s3621
    %v3623 = vmul.f32 %v3622, %v3147
    %v3624 = vmul.f32 %v3622, %v3148
    %v3625 = vmul.f32 %v3622, %v3149
    %v3626 = vmul.f32 %v3622, %v3150
    %3631 = vrot.lane.b32.xlu0 %v3623, 126
    %v3632 = vpop.permute.xlu0 %3631
    %3633 = vrot.lane.b32.xlu0 %v3624, 126
    %v3634 = vpop.permute.xlu0 %3633
    %3635 = vrot.lane.b32.xlu0 %v3625, 126
    %v3636 = vpop.permute.xlu0 %3635
    %3637 = vrot.lane.b32.xlu0 %v3626, 126
    %v3638 = vpop.permute.xlu0 %3637
    %v3643 = vadd.f32 %v3435, %v3632
    %v3644 = vadd.f32 %v3436, %v3634
    %v3645 = vadd.f32 %v3437, %v3636
    %v3646 = vadd.f32 %v3438, %v3638
    %v3647 = vld [vmem:[%s3146 + $0x1] sm:$0xff]
    %v3648 = vld [vmem:[%s3146 + $0x9] sm:$0xff]
    %v3649 = vld [vmem:[%s3146 + $0x61] sm:$0xff]
    %v3650 = vld [vmem:[%s3146 + $0x69] sm:$0xff]
    %s3651 = sld [smem:[#allocation3 + $0x15]]
    %v3652 = vstv %s3651
    %v3653 = vmul.f32 %v3652, %v3647
    %v3654 = vmul.f32 %v3652, %v3648
    %v3655 = vmul.f32 %v3652, %v3649
    %v3656 = vmul.f32 %v3652, %v3650
    %v3657 = vadd.f32 %v3461, %v3653
    %v3658 = vadd.f32 %v3462, %v3654
    %v3659 = vadd.f32 %v3463, %v3655
    %v3660 = vadd.f32 %v3464, %v3656
    %s3661 = sld [smem:[#allocation3 + $0x39]]
    %v3662 = vstv %s3661
    %v3663 = vmul.f32 %v3662, %v3647
    %v3664 = vmul.f32 %v3662, %v3648
    %v3665 = vmul.f32 %v3662, %v3649
    %v3666 = vmul.f32 %v3662, %v3650
    %v3667 = vadd.f32 %v3487, %v3663
    %v3668 = vadd.f32 %v3488, %v3664
    %v3669 = vadd.f32 %v3489, %v3665
    %v3670 = vadd.f32 %v3490, %v3666
    %s3671 = sld [smem:[#allocation3 + $0x5d]]
    %v3672 = vstv %s3671
    %v3673 = vmul.f32 %v3672, %v3647
    %v3674 = vmul.f32 %v3672, %v3648
    %v3675 = vmul.f32 %v3672, %v3649
    %v3676 = vmul.f32 %v3672, %v3650
    %v3677 = vadd.f32 %v3513, %v3673
    %v3678 = vadd.f32 %v3514, %v3674
    %v3679 = vadd.f32 %v3515, %v3675
    %v3680 = vadd.f32 %v3516, %v3676
    %s3681 = sld [smem:[#allocation3 + $0x81]]
    %v3682 = vstv %s3681
    %v3683 = vmul.f32 %v3682, %v3647
    %v3684 = vmul.f32 %v3682, %v3648
    %v3685 = vmul.f32 %v3682, %v3649
    %v3686 = vmul.f32 %v3682, %v3650
    %v3687 = vadd.f32 %v3539, %v3683
    %v3688 = vadd.f32 %v3540, %v3684
    %v3689 = vadd.f32 %v3541, %v3685
    %v3690 = vadd.f32 %v3542, %v3686
    %s3691 = sld [smem:[#allocation3 + $0xa5]]
    %v3692 = vstv %s3691
    %v3693 = vmul.f32 %v3692, %v3647
    %v3694 = vmul.f32 %v3692, %v3648
    %v3695 = vmul.f32 %v3692, %v3649
    %v3696 = vmul.f32 %v3692, %v3650
    %v3697 = vadd.f32 %v3565, %v3693
    %v3698 = vadd.f32 %v3566, %v3694
    %v3699 = vadd.f32 %v3567, %v3695
    %v3700 = vadd.f32 %v3568, %v3696
    %s3701 = sld [smem:[#allocation3 + $0xc9]]
    %v3702 = vstv %s3701
    %v3703 = vmul.f32 %v3702, %v3647
    %v3704 = vmul.f32 %v3702, %v3648
    %v3705 = vmul.f32 %v3702, %v3649
    %v3706 = vmul.f32 %v3702, %v3650
    %v3707 = vadd.f32 %v3591, %v3703
    %v3708 = vadd.f32 %v3592, %v3704
    %v3709 = vadd.f32 %v3593, %v3705
    %v3710 = vadd.f32 %v3594, %v3706
    %s3711 = sld [smem:[#allocation3 + $0xed]]
    %v3712 = vstv %s3711
    %v3713 = vmul.f32 %v3712, %v3647
    %v3714 = vmul.f32 %v3712, %v3648
    %v3715 = vmul.f32 %v3712, %v3649
    %v3716 = vmul.f32 %v3712, %v3650
    %v3717 = vadd.f32 %v3617, %v3713
    %v3718 = vadd.f32 %v3618, %v3714
    %v3719 = vadd.f32 %v3619, %v3715
    %v3720 = vadd.f32 %v3620, %v3716
    %s3721 = sld [smem:[#allocation3 + $0x111]]
    %v3722 = vstv %s3721
    %v3723 = vmul.f32 %v3722, %v3647
    %v3724 = vmul.f32 %v3722, %v3648
    %v3725 = vmul.f32 %v3722, %v3649
    %v3726 = vmul.f32 %v3722, %v3650
    %v3727 = vadd.f32 %v3643, %v3723
    %v3728 = vadd.f32 %v3644, %v3724
    %v3729 = vadd.f32 %v3645, %v3725
    %v3730 = vadd.f32 %v3646, %v3726
    %s3731 = sld [smem:[#allocation3 + $0x16]]
    %v3732 = vstv %s3731
    %v3733 = vmul.f32 %v3732, %v3647
    %v3734 = vmul.f32 %v3732, %v3648
    %v3735 = vmul.f32 %v3732, %v3649
    %v3736 = vmul.f32 %v3732, %v3650
    %3741 = vrot.lane.b32.xlu0 %v3733, 127
    %v3742 = vpop.permute.xlu0 %3741
    %3743 = vrot.lane.b32.xlu0 %v3734, 127
    %v3744 = vpop.permute.xlu0 %3743
    %3745 = vrot.lane.b32.xlu0 %v3735, 127
    %v3746 = vpop.permute.xlu0 %3745
    %3747 = vrot.lane.b32.xlu0 %v3736, 127
    %v3748 = vpop.permute.xlu0 %3747
    %v3753 = vadd.f32 %v3657, %v3742
    %v3754 = vadd.f32 %v3658, %v3744
    %v3755 = vadd.f32 %v3659, %v3746
    %v3756 = vadd.f32 %v3660, %v3748
    %s3757 = sld [smem:[#allocation3 + $0x3a]]
    %v3758 = vstv %s3757
    %v3759 = vmul.f32 %v3758, %v3647
    %v3760 = vmul.f32 %v3758, %v3648
    %v3761 = vmul.f32 %v3758, %v3649
    %v3762 = vmul.f32 %v3758, %v3650
    %3767 = vrot.lane.b32.xlu0 %v3759, 127
    %v3768 = vpop.permute.xlu0 %3767
    %3769 = vrot.lane.b32.xlu0 %v3760, 127
    %v3770 = vpop.permute.xlu0 %3769
    %3771 = vrot.lane.b32.xlu0 %v3761, 127
    %v3772 = vpop.permute.xlu0 %3771
    %3773 = vrot.lane.b32.xlu0 %v3762, 127
    %v3774 = vpop.permute.xlu0 %3773
    %v3779 = vadd.f32 %v3667, %v3768
    %v3780 = vadd.f32 %v3668, %v3770
    %v3781 = vadd.f32 %v3669, %v3772
    %v3782 = vadd.f32 %v3670, %v3774
    %s3783 = sld [smem:[#allocation3 + $0x5e]]
    %v3784 = vstv %s3783
    %v3785 = vmul.f32 %v3784, %v3647
    %v3786 = vmul.f32 %v3784, %v3648
    %v3787 = vmul.f32 %v3784, %v3649
    %v3788 = vmul.f32 %v3784, %v3650
    %3793 = vrot.lane.b32.xlu0 %v3785, 127
    %v3794 = vpop.permute.xlu0 %3793
    %3795 = vrot.lane.b32.xlu0 %v3786, 127
    %v3796 = vpop.permute.xlu0 %3795
    %3797 = vrot.lane.b32.xlu0 %v3787, 127
    %v3798 = vpop.permute.xlu0 %3797
    %3799 = vrot.lane.b32.xlu0 %v3788, 127
    %v3800 = vpop.permute.xlu0 %3799
    %v3805 = vadd.f32 %v3677, %v3794
    %v3806 = vadd.f32 %v3678, %v3796
    %v3807 = vadd.f32 %v3679, %v3798
    %v3808 = vadd.f32 %v3680, %v3800
    %s3809 = sld [smem:[#allocation3 + $0x82]]
    %v3810 = vstv %s3809
    %v3811 = vmul.f32 %v3810, %v3647
    %v3812 = vmul.f32 %v3810, %v3648
    %v3813 = vmul.f32 %v3810, %v3649
    %v3814 = vmul.f32 %v3810, %v3650
    %3819 = vrot.lane.b32.xlu0 %v3811, 127
    %v3820 = vpop.permute.xlu0 %3819
    %3821 = vrot.lane.b32.xlu0 %v3812, 127
    %v3822 = vpop.permute.xlu0 %3821
    %3823 = vrot.lane.b32.xlu0 %v3813, 127
    %v3824 = vpop.permute.xlu0 %3823
    %3825 = vrot.lane.b32.xlu0 %v3814, 127
    %v3826 = vpop.permute.xlu0 %3825
    %v3831 = vadd.f32 %v3687, %v3820
    %v3832 = vadd.f32 %v3688, %v3822
    %v3833 = vadd.f32 %v3689, %v3824
    %v3834 = vadd.f32 %v3690, %v3826
    %s3835 = sld [smem:[#allocation3 + $0xa6]]
    %v3836 = vstv %s3835
    %v3837 = vmul.f32 %v3836, %v3647
    %v3838 = vmul.f32 %v3836, %v3648
    %v3839 = vmul.f32 %v3836, %v3649
    %v3840 = vmul.f32 %v3836, %v3650
    %3845 = vrot.lane.b32.xlu0 %v3837, 127
    %v3846 = vpop.permute.xlu0 %3845
    %3847 = vrot.lane.b32.xlu0 %v3838, 127
    %v3848 = vpop.permute.xlu0 %3847
    %3849 = vrot.lane.b32.xlu0 %v3839, 127
    %v3850 = vpop.permute.xlu0 %3849
    %3851 = vrot.lane.b32.xlu0 %v3840, 127
    %v3852 = vpop.permute.xlu0 %3851
    %v3857 = vadd.f32 %v3697, %v3846
    %v3858 = vadd.f32 %v3698, %v3848
    %v3859 = vadd.f32 %v3699, %v3850
    %v3860 = vadd.f32 %v3700, %v3852
    %s3861 = sld [smem:[#allocation3 + $0xca]]
    %v3862 = vstv %s3861
    %v3863 = vmul.f32 %v3862, %v3647
    %v3864 = vmul.f32 %v3862, %v3648
    %v3865 = vmul.f32 %v3862, %v3649
    %v3866 = vmul.f32 %v3862, %v3650
    %3871 = vrot.lane.b32.xlu0 %v3863, 127
    %v3872 = vpop.permute.xlu0 %3871
    %3873 = vrot.lane.b32.xlu0 %v3864, 127
    %v3874 = vpop.permute.xlu0 %3873
    %3875 = vrot.lane.b32.xlu0 %v3865, 127
    %v3876 = vpop.permute.xlu0 %3875
    %3877 = vrot.lane.b32.xlu0 %v3866, 127
    %v3878 = vpop.permute.xlu0 %3877
    %v3883 = vadd.f32 %v3707, %v3872
    %v3884 = vadd.f32 %v3708, %v3874
    %v3885 = vadd.f32 %v3709, %v3876
    %v3886 = vadd.f32 %v3710, %v3878
    %s3887 = sld [smem:[#allocation3 + $0xee]]
    %v3888 = vstv %s3887
    %v3889 = vmul.f32 %v3888, %v3647
    %v3890 = vmul.f32 %v3888, %v3648
    %v3891 = vmul.f32 %v3888, %v3649
    %v3892 = vmul.f32 %v3888, %v3650
    %3897 = vrot.lane.b32.xlu0 %v3889, 127
    %v3898 = vpop.permute.xlu0 %3897
    %3899 = vrot.lane.b32.xlu0 %v3890, 127
    %v3900 = vpop.permute.xlu0 %3899
    %3901 = vrot.lane.b32.xlu0 %v3891, 127
    %v3902 = vpop.permute.xlu0 %3901
    %3903 = vrot.lane.b32.xlu0 %v3892, 127
    %v3904 = vpop.permute.xlu0 %3903
    %v3909 = vadd.f32 %v3717, %v3898
    %v3910 = vadd.f32 %v3718, %v3900
    %v3911 = vadd.f32 %v3719, %v3902
    %v3912 = vadd.f32 %v3720, %v3904
    %s3913 = sld [smem:[#allocation3 + $0x112]]
    %v3914 = vstv %s3913
    %v3915 = vmul.f32 %v3914, %v3647
    %v3916 = vmul.f32 %v3914, %v3648
    %v3917 = vmul.f32 %v3914, %v3649
    %v3918 = vmul.f32 %v3914, %v3650
    %3923 = vrot.lane.b32.xlu0 %v3915, 127
    %v3924 = vpop.permute.xlu0 %3923
    %3925 = vrot.lane.b32.xlu0 %v3916, 127
    %v3926 = vpop.permute.xlu0 %3925
    %3927 = vrot.lane.b32.xlu0 %v3917, 127
    %v3928 = vpop.permute.xlu0 %3927
    %3929 = vrot.lane.b32.xlu0 %v3918, 127
    %v3930 = vpop.permute.xlu0 %3929
    %v3935 = vadd.f32 %v3727, %v3924
    %v3936 = vadd.f32 %v3728, %v3926
    %v3937 = vadd.f32 %v3729, %v3928
    %v3938 = vadd.f32 %v3730, %v3930
    %s3939 = sld [smem:[#allocation3 + $0x17]]
    %v3940 = vstv %s3939
    %v3941 = vmul.f32 %v3940, %v3647
    %v3942 = vmul.f32 %v3940, %v3648
    %v3943 = vmul.f32 %v3940, %v3649
    %v3944 = vmul.f32 %v3940, %v3650
    %3949 = vrot.lane.b32.xlu0 %v3941, 126
    %v3950 = vpop.permute.xlu0 %3949
    %3951 = vrot.lane.b32.xlu0 %v3942, 126
    %v3952 = vpop.permute.xlu0 %3951
    %3953 = vrot.lane.b32.xlu0 %v3943, 126
    %v3954 = vpop.permute.xlu0 %3953
    %3955 = vrot.lane.b32.xlu0 %v3944, 126
    %v3956 = vpop.permute.xlu0 %3955
    %v3961 = vadd.f32 %v3753, %v3950
    %v3962 = vadd.f32 %v3754, %v3952
    %v3963 = vadd.f32 %v3755, %v3954
    %v3964 = vadd.f32 %v3756, %v3956
    %s3965 = sld [smem:[#allocation3 + $0x3b]]
    %v3966 = vstv %s3965
    %v3967 = vmul.f32 %v3966, %v3647
    %v3968 = vmul.f32 %v3966, %v3648
    %v3969 = vmul.f32 %v3966, %v3649
    %v3970 = vmul.f32 %v3966, %v3650
    %3975 = vrot.lane.b32.xlu0 %v3967, 126
    %v3976 = vpop.permute.xlu0 %3975
    %3977 = vrot.lane.b32.xlu0 %v3968, 126
    %v3978 = vpop.permute.xlu0 %3977
    %3979 = vrot.lane.b32.xlu0 %v3969, 126
    %v3980 = vpop.permute.xlu0 %3979
    %3981 = vrot.lane.b32.xlu0 %v3970, 126
    %v3982 = vpop.permute.xlu0 %3981
    %v3987 = vadd.f32 %v3779, %v3976
    %v3988 = vadd.f32 %v3780, %v3978
    %v3989 = vadd.f32 %v3781, %v3980
    %v3990 = vadd.f32 %v3782, %v3982
    %s3991 = sld [smem:[#allocation3 + $0x5f]]
    %v3992 = vstv %s3991
    %v3993 = vmul.f32 %v3992, %v3647
    %v3994 = vmul.f32 %v3992, %v3648
    %v3995 = vmul.f32 %v3992, %v3649
    %v3996 = vmul.f32 %v3992, %v3650
    %4001 = vrot.lane.b32.xlu0 %v3993, 126
    %v4002 = vpop.permute.xlu0 %4001
    %4003 = vrot.lane.b32.xlu0 %v3994, 126
    %v4004 = vpop.permute.xlu0 %4003
    %4005 = vrot.lane.b32.xlu0 %v3995, 126
    %v4006 = vpop.permute.xlu0 %4005
    %4007 = vrot.lane.b32.xlu0 %v3996, 126
    %v4008 = vpop.permute.xlu0 %4007
    %v4013 = vadd.f32 %v3805, %v4002
    %v4014 = vadd.f32 %v3806, %v4004
    %v4015 = vadd.f32 %v3807, %v4006
    %v4016 = vadd.f32 %v3808, %v4008
    %s4017 = sld [smem:[#allocation3 + $0x83]]
    %v4018 = vstv %s4017
    %v4019 = vmul.f32 %v4018, %v3647
    %v4020 = vmul.f32 %v4018, %v3648
    %v4021 = vmul.f32 %v4018, %v3649
    %v4022 = vmul.f32 %v4018, %v3650
    %4027 = vrot.lane.b32.xlu0 %v4019, 126
    %v4028 = vpop.permute.xlu0 %4027
    %4029 = vrot.lane.b32.xlu0 %v4020, 126
    %v4030 = vpop.permute.xlu0 %4029
    %4031 = vrot.lane.b32.xlu0 %v4021, 126
    %v4032 = vpop.permute.xlu0 %4031
    %4033 = vrot.lane.b32.xlu0 %v4022, 126
    %v4034 = vpop.permute.xlu0 %4033
    %v4039 = vadd.f32 %v3831, %v4028
    %v4040 = vadd.f32 %v3832, %v4030
    %v4041 = vadd.f32 %v3833, %v4032
    %v4042 = vadd.f32 %v3834, %v4034
    %s4043 = sld [smem:[#allocation3 + $0xa7]]
    %v4044 = vstv %s4043
    %v4045 = vmul.f32 %v4044, %v3647
    %v4046 = vmul.f32 %v4044, %v3648
    %v4047 = vmul.f32 %v4044, %v3649
    %v4048 = vmul.f32 %v4044, %v3650
    %4053 = vrot.lane.b32.xlu0 %v4045, 126
    %v4054 = vpop.permute.xlu0 %4053
    %4055 = vrot.lane.b32.xlu0 %v4046, 126
    %v4056 = vpop.permute.xlu0 %4055
    %4057 = vrot.lane.b32.xlu0 %v4047, 126
    %v4058 = vpop.permute.xlu0 %4057
    %4059 = vrot.lane.b32.xlu0 %v4048, 126
    %v4060 = vpop.permute.xlu0 %4059
    %v4065 = vadd.f32 %v3857, %v4054
    %v4066 = vadd.f32 %v3858, %v4056
    %v4067 = vadd.f32 %v3859, %v4058
    %v4068 = vadd.f32 %v3860, %v4060
    %s4069 = sld [smem:[#allocation3 + $0xcb]]
    %v4070 = vstv %s4069
    %v4071 = vmul.f32 %v4070, %v3647
    %v4072 = vmul.f32 %v4070, %v3648
    %v4073 = vmul.f32 %v4070, %v3649
    %v4074 = vmul.f32 %v4070, %v3650
    %4079 = vrot.lane.b32.xlu0 %v4071, 126
    %v4080 = vpop.permute.xlu0 %4079
    %4081 = vrot.lane.b32.xlu0 %v4072, 126
    %v4082 = vpop.permute.xlu0 %4081
    %4083 = vrot.lane.b32.xlu0 %v4073, 126
    %v4084 = vpop.permute.xlu0 %4083
    %4085 = vrot.lane.b32.xlu0 %v4074, 126
    %v4086 = vpop.permute.xlu0 %4085
    %v4091 = vadd.f32 %v3883, %v4080
    %v4092 = vadd.f32 %v3884, %v4082
    %v4093 = vadd.f32 %v3885, %v4084
    %v4094 = vadd.f32 %v3886, %v4086
    %s4095 = sld [smem:[#allocation3 + $0xef]]
    %v4096 = vstv %s4095
    %v4097 = vmul.f32 %v4096, %v3647
    %v4098 = vmul.f32 %v4096, %v3648
    %v4099 = vmul.f32 %v4096, %v3649
    %v4100 = vmul.f32 %v4096, %v3650
    %4105 = vrot.lane.b32.xlu0 %v4097, 126
    %v4106 = vpop.permute.xlu0 %4105
    %4107 = vrot.lane.b32.xlu0 %v4098, 126
    %v4108 = vpop.permute.xlu0 %4107
    %4109 = vrot.lane.b32.xlu0 %v4099, 126
    %v4110 = vpop.permute.xlu0 %4109
    %4111 = vrot.lane.b32.xlu0 %v4100, 126
    %v4112 = vpop.permute.xlu0 %4111
    %v4117 = vadd.f32 %v3909, %v4106
    %v4118 = vadd.f32 %v3910, %v4108
    %v4119 = vadd.f32 %v3911, %v4110
    %v4120 = vadd.f32 %v3912, %v4112
    %s4121 = sld [smem:[#allocation3 + $0x113]]
    %v4122 = vstv %s4121
    %v4123 = vmul.f32 %v4122, %v3647
    %v4124 = vmul.f32 %v4122, %v3648
    %v4125 = vmul.f32 %v4122, %v3649
    %v4126 = vmul.f32 %v4122, %v3650
    %4131 = vrot.lane.b32.xlu0 %v4123, 126
    %v4132 = vpop.permute.xlu0 %4131
    %4133 = vrot.lane.b32.xlu0 %v4124, 126
    %v4134 = vpop.permute.xlu0 %4133
    %4135 = vrot.lane.b32.xlu0 %v4125, 126
    %v4136 = vpop.permute.xlu0 %4135
    %4137 = vrot.lane.b32.xlu0 %v4126, 126
    %v4138 = vpop.permute.xlu0 %4137
    %v4143 = vadd.f32 %v3935, %v4132
    %v4144 = vadd.f32 %v3936, %v4134
    %v4145 = vadd.f32 %v3937, %v4136
    %v4146 = vadd.f32 %v3938, %v4138
    %v4147 = vld [vmem:[%s3146 + $0x2] sm:$0xff]
    %v4148 = vld [vmem:[%s3146 + $0xa] sm:$0xff]
    %v4149 = vld [vmem:[%s3146 + $0x62] sm:$0xff]
    %v4150 = vld [vmem:[%s3146 + $0x6a] sm:$0xff]
    %s4151 = sld [smem:[#allocation3 + $0x18]]
    %v4152 = vstv %s4151
    %v4153 = vmul.f32 %v4152, %v4147
    %v4154 = vmul.f32 %v4152, %v4148
    %v4155 = vmul.f32 %v4152, %v4149
    %v4156 = vmul.f32 %v4152, %v4150
    %v4157 = vadd.f32 %v3961, %v4153
    %v4158 = vadd.f32 %v3962, %v4154
    %v4159 = vadd.f32 %v3963, %v4155
    %v4160 = vadd.f32 %v3964, %v4156
    %s4161 = sld [smem:[#allocation3 + $0x3c]]
    %v4162 = vstv %s4161
    %v4163 = vmul.f32 %v4162, %v4147
    %v4164 = vmul.f32 %v4162, %v4148
    %v4165 = vmul.f32 %v4162, %v4149
    %v4166 = vmul.f32 %v4162, %v4150
    %v4167 = vadd.f32 %v3987, %v4163
    %v4168 = vadd.f32 %v3988, %v4164
    %v4169 = vadd.f32 %v3989, %v4165
    %v4170 = vadd.f32 %v3990, %v4166
    %s4171 = sld [smem:[#allocation3 + $0x60]]
    %v4172 = vstv %s4171
    %v4173 = vmul.f32 %v4172, %v4147
    %v4174 = vmul.f32 %v4172, %v4148
    %v4175 = vmul.f32 %v4172, %v4149
    %v4176 = vmul.f32 %v4172, %v4150
    %v4177 = vadd.f32 %v4013, %v4173
    %v4178 = vadd.f32 %v4014, %v4174
    %v4179 = vadd.f32 %v4015, %v4175
    %v4180 = vadd.f32 %v4016, %v4176
    %s4181 = sld [smem:[#allocation3 + $0x84]]
    %v4182 = vstv %s4181
    %v4183 = vmul.f32 %v4182, %v4147
    %v4184 = vmul.f32 %v4182, %v4148
    %v4185 = vmul.f32 %v4182, %v4149
    %v4186 = vmul.f32 %v4182, %v4150
    %v4187 = vadd.f32 %v4039, %v4183
    %v4188 = vadd.f32 %v4040, %v4184
    %v4189 = vadd.f32 %v4041, %v4185
    %v4190 = vadd.f32 %v4042, %v4186
    %s4191 = sld [smem:[#allocation3 + $0xa8]]
    %v4192 = vstv %s4191
    %v4193 = vmul.f32 %v4192, %v4147
    %v4194 = vmul.f32 %v4192, %v4148
    %v4195 = vmul.f32 %v4192, %v4149
    %v4196 = vmul.f32 %v4192, %v4150
    %v4197 = vadd.f32 %v4065, %v4193
    %v4198 = vadd.f32 %v4066, %v4194
    %v4199 = vadd.f32 %v4067, %v4195
    %v4200 = vadd.f32 %v4068, %v4196
    %s4201 = sld [smem:[#allocation3 + $0xcc]]
    %v4202 = vstv %s4201
    %v4203 = vmul.f32 %v4202, %v4147
    %v4204 = vmul.f32 %v4202, %v4148
    %v4205 = vmul.f32 %v4202, %v4149
    %v4206 = vmul.f32 %v4202, %v4150
    %v4207 = vadd.f32 %v4091, %v4203
    %v4208 = vadd.f32 %v4092, %v4204
    %v4209 = vadd.f32 %v4093, %v4205
    %v4210 = vadd.f32 %v4094, %v4206
    %s4211 = sld [smem:[#allocation3 + $0xf0]]
    %v4212 = vstv %s4211
    %v4213 = vmul.f32 %v4212, %v4147
    %v4214 = vmul.f32 %v4212, %v4148
    %v4215 = vmul.f32 %v4212, %v4149
    %v4216 = vmul.f32 %v4212, %v4150
    %v4217 = vadd.f32 %v4117, %v4213
    %v4218 = vadd.f32 %v4118, %v4214
    %v4219 = vadd.f32 %v4119, %v4215
    %v4220 = vadd.f32 %v4120, %v4216
    %s4221 = sld [smem:[#allocation3 + $0x114]]
    %v4222 = vstv %s4221
    %v4223 = vmul.f32 %v4222, %v4147
    %v4224 = vmul.f32 %v4222, %v4148
    %v4225 = vmul.f32 %v4222, %v4149
    %v4226 = vmul.f32 %v4222, %v4150
    %v4227 = vadd.f32 %v4143, %v4223
    %v4228 = vadd.f32 %v4144, %v4224
    %v4229 = vadd.f32 %v4145, %v4225
    %v4230 = vadd.f32 %v4146, %v4226
    %s4231 = sld [smem:[#allocation3 + $0x19]]
    %v4232 = vstv %s4231
    %v4233 = vmul.f32 %v4232, %v4147
    %v4234 = vmul.f32 %v4232, %v4148
    %v4235 = vmul.f32 %v4232, %v4149
    %v4236 = vmul.f32 %v4232, %v4150
    %4241 = vrot.lane.b32.xlu0 %v4233, 127
    %v4242 = vpop.permute.xlu0 %4241
    %4243 = vrot.lane.b32.xlu0 %v4234, 127
    %v4244 = vpop.permute.xlu0 %4243
    %4245 = vrot.lane.b32.xlu0 %v4235, 127
    %v4246 = vpop.permute.xlu0 %4245
    %4247 = vrot.lane.b32.xlu0 %v4236, 127
    %v4248 = vpop.permute.xlu0 %4247
    %v4253 = vadd.f32 %v4157, %v4242
    %v4254 = vadd.f32 %v4158, %v4244
    %v4255 = vadd.f32 %v4159, %v4246
    %v4256 = vadd.f32 %v4160, %v4248
    %s4257 = sld [smem:[#allocation3 + $0x3d]]
    %v4258 = vstv %s4257
    %v4259 = vmul.f32 %v4258, %v4147
    %v4260 = vmul.f32 %v4258, %v4148
    %v4261 = vmul.f32 %v4258, %v4149
    %v4262 = vmul.f32 %v4258, %v4150
    %4267 = vrot.lane.b32.xlu0 %v4259, 127
    %v4268 = vpop.permute.xlu0 %4267
    %4269 = vrot.lane.b32.xlu0 %v4260, 127
    %v4270 = vpop.permute.xlu0 %4269
    %4271 = vrot.lane.b32.xlu0 %v4261, 127
    %v4272 = vpop.permute.xlu0 %4271
    %4273 = vrot.lane.b32.xlu0 %v4262, 127
    %v4274 = vpop.permute.xlu0 %4273
    %v4279 = vadd.f32 %v4167, %v4268
    %v4280 = vadd.f32 %v4168, %v4270
    %v4281 = vadd.f32 %v4169, %v4272
    %v4282 = vadd.f32 %v4170, %v4274
    %s4283 = sld [smem:[#allocation3 + $0x61]]
    %v4284 = vstv %s4283
    %v4285 = vmul.f32 %v4284, %v4147
    %v4286 = vmul.f32 %v4284, %v4148
    %v4287 = vmul.f32 %v4284, %v4149
    %v4288 = vmul.f32 %v4284, %v4150
    %4293 = vrot.lane.b32.xlu0 %v4285, 127
    %v4294 = vpop.permute.xlu0 %4293
    %4295 = vrot.lane.b32.xlu0 %v4286, 127
    %v4296 = vpop.permute.xlu0 %4295
    %4297 = vrot.lane.b32.xlu0 %v4287, 127
    %v4298 = vpop.permute.xlu0 %4297
    %4299 = vrot.lane.b32.xlu0 %v4288, 127
    %v4300 = vpop.permute.xlu0 %4299
    %v4305 = vadd.f32 %v4177, %v4294
    %v4306 = vadd.f32 %v4178, %v4296
    %v4307 = vadd.f32 %v4179, %v4298
    %v4308 = vadd.f32 %v4180, %v4300
    %s4309 = sld [smem:[#allocation3 + $0x85]]
    %v4310 = vstv %s4309
    %v4311 = vmul.f32 %v4310, %v4147
    %v4312 = vmul.f32 %v4310, %v4148
    %v4313 = vmul.f32 %v4310, %v4149
    %v4314 = vmul.f32 %v4310, %v4150
    %4319 = vrot.lane.b32.xlu0 %v4311, 127
    %v4320 = vpop.permute.xlu0 %4319
    %4321 = vrot.lane.b32.xlu0 %v4312, 127
    %v4322 = vpop.permute.xlu0 %4321
    %4323 = vrot.lane.b32.xlu0 %v4313, 127
    %v4324 = vpop.permute.xlu0 %4323
    %4325 = vrot.lane.b32.xlu0 %v4314, 127
    %v4326 = vpop.permute.xlu0 %4325
    %v4331 = vadd.f32 %v4187, %v4320
    %v4332 = vadd.f32 %v4188, %v4322
    %v4333 = vadd.f32 %v4189, %v4324
    %v4334 = vadd.f32 %v4190, %v4326
    %s4335 = sld [smem:[#allocation3 + $0xa9]]
    %v4336 = vstv %s4335
    %v4337 = vmul.f32 %v4336, %v4147
    %v4338 = vmul.f32 %v4336, %v4148
    %v4339 = vmul.f32 %v4336, %v4149
    %v4340 = vmul.f32 %v4336, %v4150
    %4345 = vrot.lane.b32.xlu0 %v4337, 127
    %v4346 = vpop.permute.xlu0 %4345
    %4347 = vrot.lane.b32.xlu0 %v4338, 127
    %v4348 = vpop.permute.xlu0 %4347
    %4349 = vrot.lane.b32.xlu0 %v4339, 127
    %v4350 = vpop.permute.xlu0 %4349
    %4351 = vrot.lane.b32.xlu0 %v4340, 127
    %v4352 = vpop.permute.xlu0 %4351
    %v4357 = vadd.f32 %v4197, %v4346
    %v4358 = vadd.f32 %v4198, %v4348
    %v4359 = vadd.f32 %v4199, %v4350
    %v4360 = vadd.f32 %v4200, %v4352
    %s4361 = sld [smem:[#allocation3 + $0xcd]]
    %v4362 = vstv %s4361
    %v4363 = vmul.f32 %v4362, %v4147
    %v4364 = vmul.f32 %v4362, %v4148
    %v4365 = vmul.f32 %v4362, %v4149
    %v4366 = vmul.f32 %v4362, %v4150
    %4371 = vrot.lane.b32.xlu0 %v4363, 127
    %v4372 = vpop.permute.xlu0 %4371
    %4373 = vrot.lane.b32.xlu0 %v4364, 127
    %v4374 = vpop.permute.xlu0 %4373
    %4375 = vrot.lane.b32.xlu0 %v4365, 127
    %v4376 = vpop.permute.xlu0 %4375
    %4377 = vrot.lane.b32.xlu0 %v4366, 127
    %v4378 = vpop.permute.xlu0 %4377
    %v4383 = vadd.f32 %v4207, %v4372
    %v4384 = vadd.f32 %v4208, %v4374
    %v4385 = vadd.f32 %v4209, %v4376
    %v4386 = vadd.f32 %v4210, %v4378
    %s4387 = sld [smem:[#allocation3 + $0xf1]]
    %v4388 = vstv %s4387
    %v4389 = vmul.f32 %v4388, %v4147
    %v4390 = vmul.f32 %v4388, %v4148
    %v4391 = vmul.f32 %v4388, %v4149
    %v4392 = vmul.f32 %v4388, %v4150
    %4397 = vrot.lane.b32.xlu0 %v4389, 127
    %v4398 = vpop.permute.xlu0 %4397
    %4399 = vrot.lane.b32.xlu0 %v4390, 127
    %v4400 = vpop.permute.xlu0 %4399
    %4401 = vrot.lane.b32.xlu0 %v4391, 127
    %v4402 = vpop.permute.xlu0 %4401
    %4403 = vrot.lane.b32.xlu0 %v4392, 127
    %v4404 = vpop.permute.xlu0 %4403
    %v4409 = vadd.f32 %v4217, %v4398
    %v4410 = vadd.f32 %v4218, %v4400
    %v4411 = vadd.f32 %v4219, %v4402
    %v4412 = vadd.f32 %v4220, %v4404
    %s4413 = sld [smem:[#allocation3 + $0x115]]
    %v4414 = vstv %s4413
    %v4415 = vmul.f32 %v4414, %v4147
    %v4416 = vmul.f32 %v4414, %v4148
    %v4417 = vmul.f32 %v4414, %v4149
    %v4418 = vmul.f32 %v4414, %v4150
    %4423 = vrot.lane.b32.xlu0 %v4415, 127
    %v4424 = vpop.permute.xlu0 %4423
    %4425 = vrot.lane.b32.xlu0 %v4416, 127
    %v4426 = vpop.permute.xlu0 %4425
    %4427 = vrot.lane.b32.xlu0 %v4417, 127
    %v4428 = vpop.permute.xlu0 %4427
    %4429 = vrot.lane.b32.xlu0 %v4418, 127
    %v4430 = vpop.permute.xlu0 %4429
    %v4435 = vadd.f32 %v4227, %v4424
    %v4436 = vadd.f32 %v4228, %v4426
    %v4437 = vadd.f32 %v4229, %v4428
    %v4438 = vadd.f32 %v4230, %v4430
    %s4439 = sld [smem:[#allocation3 + $0x1a]]
    %v4440 = vstv %s4439
    %v4441 = vmul.f32 %v4440, %v4147
    %v4442 = vmul.f32 %v4440, %v4148
    %v4443 = vmul.f32 %v4440, %v4149
    %v4444 = vmul.f32 %v4440, %v4150
    %4449 = vrot.lane.b32.xlu0 %v4441, 126
    %v4450 = vpop.permute.xlu0 %4449
    %4451 = vrot.lane.b32.xlu0 %v4442, 126
    %v4452 = vpop.permute.xlu0 %4451
    %4453 = vrot.lane.b32.xlu0 %v4443, 126
    %v4454 = vpop.permute.xlu0 %4453
    %4455 = vrot.lane.b32.xlu0 %v4444, 126
    %v4456 = vpop.permute.xlu0 %4455
    %v4461 = vadd.f32 %v4253, %v4450
    %v4462 = vadd.f32 %v4254, %v4452
    %v4463 = vadd.f32 %v4255, %v4454
    %v4464 = vadd.f32 %v4256, %v4456
    %s4465 = sld [smem:[#allocation3 + $0x3e]]
    %v4466 = vstv %s4465
    %v4467 = vmul.f32 %v4466, %v4147
    %v4468 = vmul.f32 %v4466, %v4148
    %v4469 = vmul.f32 %v4466, %v4149
    %v4470 = vmul.f32 %v4466, %v4150
    %4475 = vrot.lane.b32.xlu0 %v4467, 126
    %v4476 = vpop.permute.xlu0 %4475
    %4477 = vrot.lane.b32.xlu0 %v4468, 126
    %v4478 = vpop.permute.xlu0 %4477
    %4479 = vrot.lane.b32.xlu0 %v4469, 126
    %v4480 = vpop.permute.xlu0 %4479
    %4481 = vrot.lane.b32.xlu0 %v4470, 126
    %v4482 = vpop.permute.xlu0 %4481
    %v4487 = vadd.f32 %v4279, %v4476
    %v4488 = vadd.f32 %v4280, %v4478
    %v4489 = vadd.f32 %v4281, %v4480
    %v4490 = vadd.f32 %v4282, %v4482
    %s4491 = sld [smem:[#allocation3 + $0x62]]
    %v4492 = vstv %s4491
    %v4493 = vmul.f32 %v4492, %v4147
    %v4494 = vmul.f32 %v4492, %v4148
    %v4495 = vmul.f32 %v4492, %v4149
    %v4496 = vmul.f32 %v4492, %v4150
    %4501 = vrot.lane.b32.xlu0 %v4493, 126
    %v4502 = vpop.permute.xlu0 %4501
    %4503 = vrot.lane.b32.xlu0 %v4494, 126
    %v4504 = vpop.permute.xlu0 %4503
    %4505 = vrot.lane.b32.xlu0 %v4495, 126
    %v4506 = vpop.permute.xlu0 %4505
    %4507 = vrot.lane.b32.xlu0 %v4496, 126
    %v4508 = vpop.permute.xlu0 %4507
    %v4513 = vadd.f32 %v4305, %v4502
    %v4514 = vadd.f32 %v4306, %v4504
    %v4515 = vadd.f32 %v4307, %v4506
    %v4516 = vadd.f32 %v4308, %v4508
    %s4517 = sld [smem:[#allocation3 + $0x86]]
    %v4518 = vstv %s4517
    %v4519 = vmul.f32 %v4518, %v4147
    %v4520 = vmul.f32 %v4518, %v4148
    %v4521 = vmul.f32 %v4518, %v4149
    %v4522 = vmul.f32 %v4518, %v4150
    %4527 = vrot.lane.b32.xlu0 %v4519, 126
    %v4528 = vpop.permute.xlu0 %4527
    %4529 = vrot.lane.b32.xlu0 %v4520, 126
    %v4530 = vpop.permute.xlu0 %4529
    %4531 = vrot.lane.b32.xlu0 %v4521, 126
    %v4532 = vpop.permute.xlu0 %4531
    %4533 = vrot.lane.b32.xlu0 %v4522, 126
    %v4534 = vpop.permute.xlu0 %4533
    %v4539 = vadd.f32 %v4331, %v4528
    %v4540 = vadd.f32 %v4332, %v4530
    %v4541 = vadd.f32 %v4333, %v4532
    %v4542 = vadd.f32 %v4334, %v4534
    %s4543 = sld [smem:[#allocation3 + $0xaa]]
    %v4544 = vstv %s4543
    %v4545 = vmul.f32 %v4544, %v4147
    %v4546 = vmul.f32 %v4544, %v4148
    %v4547 = vmul.f32 %v4544, %v4149
    %v4548 = vmul.f32 %v4544, %v4150
    %4553 = vrot.lane.b32.xlu0 %v4545, 126
    %v4554 = vpop.permute.xlu0 %4553
    %4555 = vrot.lane.b32.xlu0 %v4546, 126
    %v4556 = vpop.permute.xlu0 %4555
    %4557 = vrot.lane.b32.xlu0 %v4547, 126
    %v4558 = vpop.permute.xlu0 %4557
    %4559 = vrot.lane.b32.xlu0 %v4548, 126
    %v4560 = vpop.permute.xlu0 %4559
    %v4565 = vadd.f32 %v4357, %v4554
    %v4566 = vadd.f32 %v4358, %v4556
    %v4567 = vadd.f32 %v4359, %v4558
    %v4568 = vadd.f32 %v4360, %v4560
    %s4569 = sld [smem:[#allocation3 + $0xce]]
    %v4570 = vstv %s4569
    %v4571 = vmul.f32 %v4570, %v4147
    %v4572 = vmul.f32 %v4570, %v4148
    %v4573 = vmul.f32 %v4570, %v4149
    %v4574 = vmul.f32 %v4570, %v4150
    %4579 = vrot.lane.b32.xlu0 %v4571, 126
    %v4580 = vpop.permute.xlu0 %4579
    %4581 = vrot.lane.b32.xlu0 %v4572, 126
    %v4582 = vpop.permute.xlu0 %4581
    %4583 = vrot.lane.b32.xlu0 %v4573, 126
    %v4584 = vpop.permute.xlu0 %4583
    %4585 = vrot.lane.b32.xlu0 %v4574, 126
    %v4586 = vpop.permute.xlu0 %4585
    %v4591 = vadd.f32 %v4383, %v4580
    %v4592 = vadd.f32 %v4384, %v4582
    %v4593 = vadd.f32 %v4385, %v4584
    %v4594 = vadd.f32 %v4386, %v4586
    %s4595 = sld [smem:[#allocation3 + $0xf2]]
    %v4596 = vstv %s4595
    %v4597 = vmul.f32 %v4596, %v4147
    %v4598 = vmul.f32 %v4596, %v4148
    %v4599 = vmul.f32 %v4596, %v4149
    %v4600 = vmul.f32 %v4596, %v4150
    %4605 = vrot.lane.b32.xlu0 %v4597, 126
    %v4606 = vpop.permute.xlu0 %4605
    %4607 = vrot.lane.b32.xlu0 %v4598, 126
    %v4608 = vpop.permute.xlu0 %4607
    %4609 = vrot.lane.b32.xlu0 %v4599, 126
    %v4610 = vpop.permute.xlu0 %4609
    %4611 = vrot.lane.b32.xlu0 %v4600, 126
    %v4612 = vpop.permute.xlu0 %4611
    %v4617 = vadd.f32 %v4409, %v4606
    %v4618 = vadd.f32 %v4410, %v4608
    %v4619 = vadd.f32 %v4411, %v4610
    %v4620 = vadd.f32 %v4412, %v4612
    %s4621 = sld [smem:[#allocation3 + $0x116]]
    %v4622 = vstv %s4621
    %v4623 = vmul.f32 %v4622, %v4147
    %v4624 = vmul.f32 %v4622, %v4148
    %v4625 = vmul.f32 %v4622, %v4149
    %v4626 = vmul.f32 %v4622, %v4150
    %4631 = vrot.lane.b32.xlu0 %v4623, 126
    %v4632 = vpop.permute.xlu0 %4631
    %4633 = vrot.lane.b32.xlu0 %v4624, 126
    %v4634 = vpop.permute.xlu0 %4633
    %4635 = vrot.lane.b32.xlu0 %v4625, 126
    %v4636 = vpop.permute.xlu0 %4635
    %4637 = vrot.lane.b32.xlu0 %v4626, 126
    %v4638 = vpop.permute.xlu0 %4637
    %v4643 = vadd.f32 %v4435, %v4632
    %v4644 = vadd.f32 %v4436, %v4634
    %v4645 = vadd.f32 %v4437, %v4636
    %v4646 = vadd.f32 %v4438, %v4638
    %s4647 = scalar_lea.vmem [#allocation2], 72
    %v4648 = vld [vmem:[%s4647] sm:$0xff]
    %v4649 = vld [vmem:[%s4647 + $0x8] sm:$0xff]
    %v4650 = vld [vmem:[%s4647 + $0x60] sm:$0xff]
    %v4651 = vld [vmem:[%s4647 + $0x68] sm:$0xff]
    %s4652 = sld [smem:[#allocation3 + $0x1b]]
    %v4653 = vstv %s4652
    %v4654 = vmul.f32 %v4653, %v4648
    %v4655 = vmul.f32 %v4653, %v4649
    %v4656 = vmul.f32 %v4653, %v4650
    %v4657 = vmul.f32 %v4653, %v4651
    %v4658 = vadd.f32 %v4461, %v4654
    %v4659 = vadd.f32 %v4462, %v4655
    %v4660 = vadd.f32 %v4463, %v4656
    %v4661 = vadd.f32 %v4464, %v4657
    %s4662 = sld [smem:[#allocation3 + $0x3f]]
    %v4663 = vstv %s4662
    %v4664 = vmul.f32 %v4663, %v4648
    %v4665 = vmul.f32 %v4663, %v4649
    %v4666 = vmul.f32 %v4663, %v4650
    %v4667 = vmul.f32 %v4663, %v4651
    %v4668 = vadd.f32 %v4487, %v4664
    %v4669 = vadd.f32 %v4488, %v4665
    %v4670 = vadd.f32 %v4489, %v4666
    %v4671 = vadd.f32 %v4490, %v4667
    %s4672 = sld [smem:[#allocation3 + $0x63]]
    %v4673 = vstv %s4672
    %v4674 = vmul.f32 %v4673, %v4648
    %v4675 = vmul.f32 %v4673, %v4649
    %v4676 = vmul.f32 %v4673, %v4650
    %v4677 = vmul.f32 %v4673, %v4651
    %v4678 = vadd.f32 %v4513, %v4674
    %v4679 = vadd.f32 %v4514, %v4675
    %v4680 = vadd.f32 %v4515, %v4676
    %v4681 = vadd.f32 %v4516, %v4677
    %s4682 = sld [smem:[#allocation3 + $0x87]]
    %v4683 = vstv %s4682
    %v4684 = vmul.f32 %v4683, %v4648
    %v4685 = vmul.f32 %v4683, %v4649
    %v4686 = vmul.f32 %v4683, %v4650
    %v4687 = vmul.f32 %v4683, %v4651
    %v4688 = vadd.f32 %v4539, %v4684
    %v4689 = vadd.f32 %v4540, %v4685
    %v4690 = vadd.f32 %v4541, %v4686
    %v4691 = vadd.f32 %v4542, %v4687
    %s4692 = sld [smem:[#allocation3 + $0xab]]
    %v4693 = vstv %s4692
    %v4694 = vmul.f32 %v4693, %v4648
    %v4695 = vmul.f32 %v4693, %v4649
    %v4696 = vmul.f32 %v4693, %v4650
    %v4697 = vmul.f32 %v4693, %v4651
    %v4698 = vadd.f32 %v4565, %v4694
    %v4699 = vadd.f32 %v4566, %v4695
    %v4700 = vadd.f32 %v4567, %v4696
    %v4701 = vadd.f32 %v4568, %v4697
    %s4702 = sld [smem:[#allocation3 + $0xcf]]
    %v4703 = vstv %s4702
    %v4704 = vmul.f32 %v4703, %v4648
    %v4705 = vmul.f32 %v4703, %v4649
    %v4706 = vmul.f32 %v4703, %v4650
    %v4707 = vmul.f32 %v4703, %v4651
    %v4708 = vadd.f32 %v4591, %v4704
    %v4709 = vadd.f32 %v4592, %v4705
    %v4710 = vadd.f32 %v4593, %v4706
    %v4711 = vadd.f32 %v4594, %v4707
    %s4712 = sld [smem:[#allocation3 + $0xf3]]
    %v4713 = vstv %s4712
    %v4714 = vmul.f32 %v4713, %v4648
    %v4715 = vmul.f32 %v4713, %v4649
    %v4716 = vmul.f32 %v4713, %v4650
    %v4717 = vmul.f32 %v4713, %v4651
    %v4718 = vadd.f32 %v4617, %v4714
    %v4719 = vadd.f32 %v4618, %v4715
    %v4720 = vadd.f32 %v4619, %v4716
    %v4721 = vadd.f32 %v4620, %v4717
    %s4722 = sld [smem:[#allocation3 + $0x117]]
    %v4723 = vstv %s4722
    %v4724 = vmul.f32 %v4723, %v4648
    %v4725 = vmul.f32 %v4723, %v4649
    %v4726 = vmul.f32 %v4723, %v4650
    %v4727 = vmul.f32 %v4723, %v4651
    %v4728 = vadd.f32 %v4643, %v4724
    %v4729 = vadd.f32 %v4644, %v4725
    %v4730 = vadd.f32 %v4645, %v4726
    %v4731 = vadd.f32 %v4646, %v4727
    %s4732 = sld [smem:[#allocation3 + $0x1c]]
    %v4733 = vstv %s4732
    %v4734 = vmul.f32 %v4733, %v4648
    %v4735 = vmul.f32 %v4733, %v4649
    %v4736 = vmul.f32 %v4733, %v4650
    %v4737 = vmul.f32 %v4733, %v4651
    %4742 = vrot.lane.b32.xlu0 %v4734, 127
    %v4743 = vpop.permute.xlu0 %4742
    %4744 = vrot.lane.b32.xlu0 %v4735, 127
    %v4745 = vpop.permute.xlu0 %4744
    %4746 = vrot.lane.b32.xlu0 %v4736, 127
    %v4747 = vpop.permute.xlu0 %4746
    %4748 = vrot.lane.b32.xlu0 %v4737, 127
    %v4749 = vpop.permute.xlu0 %4748
    %v4754 = vadd.f32 %v4658, %v4743
    %v4755 = vadd.f32 %v4659, %v4745
    %v4756 = vadd.f32 %v4660, %v4747
    %v4757 = vadd.f32 %v4661, %v4749
    %s4758 = sld [smem:[#allocation3 + $0x40]]
    %v4759 = vstv %s4758
    %v4760 = vmul.f32 %v4759, %v4648
    %v4761 = vmul.f32 %v4759, %v4649
    %v4762 = vmul.f32 %v4759, %v4650
    %v4763 = vmul.f32 %v4759, %v4651
    %4768 = vrot.lane.b32.xlu0 %v4760, 127
    %v4769 = vpop.permute.xlu0 %4768
    %4770 = vrot.lane.b32.xlu0 %v4761, 127
    %v4771 = vpop.permute.xlu0 %4770
    %4772 = vrot.lane.b32.xlu0 %v4762, 127
    %v4773 = vpop.permute.xlu0 %4772
    %4774 = vrot.lane.b32.xlu0 %v4763, 127
    %v4775 = vpop.permute.xlu0 %4774
    %v4780 = vadd.f32 %v4668, %v4769
    %v4781 = vadd.f32 %v4669, %v4771
    %v4782 = vadd.f32 %v4670, %v4773
    %v4783 = vadd.f32 %v4671, %v4775
    %s4784 = sld [smem:[#allocation3 + $0x64]]
    %v4785 = vstv %s4784
    %v4786 = vmul.f32 %v4785, %v4648
    %v4787 = vmul.f32 %v4785, %v4649
    %v4788 = vmul.f32 %v4785, %v4650
    %v4789 = vmul.f32 %v4785, %v4651
    %4794 = vrot.lane.b32.xlu0 %v4786, 127
    %v4795 = vpop.permute.xlu0 %4794
    %4796 = vrot.lane.b32.xlu0 %v4787, 127
    %v4797 = vpop.permute.xlu0 %4796
    %4798 = vrot.lane.b32.xlu0 %v4788, 127
    %v4799 = vpop.permute.xlu0 %4798
    %4800 = vrot.lane.b32.xlu0 %v4789, 127
    %v4801 = vpop.permute.xlu0 %4800
    %v4806 = vadd.f32 %v4678, %v4795
    %v4807 = vadd.f32 %v4679, %v4797
    %v4808 = vadd.f32 %v4680, %v4799
    %v4809 = vadd.f32 %v4681, %v4801
    %s4810 = sld [smem:[#allocation3 + $0x88]]
    %v4811 = vstv %s4810
    %v4812 = vmul.f32 %v4811, %v4648
    %v4813 = vmul.f32 %v4811, %v4649
    %v4814 = vmul.f32 %v4811, %v4650
    %v4815 = vmul.f32 %v4811, %v4651
    %4820 = vrot.lane.b32.xlu0 %v4812, 127
    %v4821 = vpop.permute.xlu0 %4820
    %4822 = vrot.lane.b32.xlu0 %v4813, 127
    %v4823 = vpop.permute.xlu0 %4822
    %4824 = vrot.lane.b32.xlu0 %v4814, 127
    %v4825 = vpop.permute.xlu0 %4824
    %4826 = vrot.lane.b32.xlu0 %v4815, 127
    %v4827 = vpop.permute.xlu0 %4826
    %v4832 = vadd.f32 %v4688, %v4821
    %v4833 = vadd.f32 %v4689, %v4823
    %v4834 = vadd.f32 %v4690, %v4825
    %v4835 = vadd.f32 %v4691, %v4827
    %s4836 = sld [smem:[#allocation3 + $0xac]]
    %v4837 = vstv %s4836
    %v4838 = vmul.f32 %v4837, %v4648
    %v4839 = vmul.f32 %v4837, %v4649
    %v4840 = vmul.f32 %v4837, %v4650
    %v4841 = vmul.f32 %v4837, %v4651
    %4846 = vrot.lane.b32.xlu0 %v4838, 127
    %v4847 = vpop.permute.xlu0 %4846
    %4848 = vrot.lane.b32.xlu0 %v4839, 127
    %v4849 = vpop.permute.xlu0 %4848
    %4850 = vrot.lane.b32.xlu0 %v4840, 127
    %v4851 = vpop.permute.xlu0 %4850
    %4852 = vrot.lane.b32.xlu0 %v4841, 127
    %v4853 = vpop.permute.xlu0 %4852
    %v4858 = vadd.f32 %v4698, %v4847
    %v4859 = vadd.f32 %v4699, %v4849
    %v4860 = vadd.f32 %v4700, %v4851
    %v4861 = vadd.f32 %v4701, %v4853
    %s4862 = sld [smem:[#allocation3 + $0xd0]]
    %v4863 = vstv %s4862
    %v4864 = vmul.f32 %v4863, %v4648
    %v4865 = vmul.f32 %v4863, %v4649
    %v4866 = vmul.f32 %v4863, %v4650
    %v4867 = vmul.f32 %v4863, %v4651
    %4872 = vrot.lane.b32.xlu0 %v4864, 127
    %v4873 = vpop.permute.xlu0 %4872
    %4874 = vrot.lane.b32.xlu0 %v4865, 127
    %v4875 = vpop.permute.xlu0 %4874
    %4876 = vrot.lane.b32.xlu0 %v4866, 127
    %v4877 = vpop.permute.xlu0 %4876
    %4878 = vrot.lane.b32.xlu0 %v4867, 127
    %v4879 = vpop.permute.xlu0 %4878
    %v4884 = vadd.f32 %v4708, %v4873
    %v4885 = vadd.f32 %v4709, %v4875
    %v4886 = vadd.f32 %v4710, %v4877
    %v4887 = vadd.f32 %v4711, %v4879
    %s4888 = sld [smem:[#allocation3 + $0xf4]]
    %v4889 = vstv %s4888
    %v4890 = vmul.f32 %v4889, %v4648
    %v4891 = vmul.f32 %v4889, %v4649
    %v4892 = vmul.f32 %v4889, %v4650
    %v4893 = vmul.f32 %v4889, %v4651
    %4898 = vrot.lane.b32.xlu0 %v4890, 127
    %v4899 = vpop.permute.xlu0 %4898
    %4900 = vrot.lane.b32.xlu0 %v4891, 127
    %v4901 = vpop.permute.xlu0 %4900
    %4902 = vrot.lane.b32.xlu0 %v4892, 127
    %v4903 = vpop.permute.xlu0 %4902
    %4904 = vrot.lane.b32.xlu0 %v4893, 127
    %v4905 = vpop.permute.xlu0 %4904
    %v4910 = vadd.f32 %v4718, %v4899
    %v4911 = vadd.f32 %v4719, %v4901
    %v4912 = vadd.f32 %v4720, %v4903
    %v4913 = vadd.f32 %v4721, %v4905
    %s4914 = sld [smem:[#allocation3 + $0x118]]
    %v4915 = vstv %s4914
    %v4916 = vmul.f32 %v4915, %v4648
    %v4917 = vmul.f32 %v4915, %v4649
    %v4918 = vmul.f32 %v4915, %v4650
    %v4919 = vmul.f32 %v4915, %v4651
    %4924 = vrot.lane.b32.xlu0 %v4916, 127
    %v4925 = vpop.permute.xlu0 %4924
    %4926 = vrot.lane.b32.xlu0 %v4917, 127
    %v4927 = vpop.permute.xlu0 %4926
    %4928 = vrot.lane.b32.xlu0 %v4918, 127
    %v4929 = vpop.permute.xlu0 %4928
    %4930 = vrot.lane.b32.xlu0 %v4919, 127
    %v4931 = vpop.permute.xlu0 %4930
    %v4936 = vadd.f32 %v4728, %v4925
    %v4937 = vadd.f32 %v4729, %v4927
    %v4938 = vadd.f32 %v4730, %v4929
    %v4939 = vadd.f32 %v4731, %v4931
    %s4940 = sld [smem:[#allocation3 + $0x1d]]
    %v4941 = vstv %s4940
    %v4942 = vmul.f32 %v4941, %v4648
    %v4943 = vmul.f32 %v4941, %v4649
    %v4944 = vmul.f32 %v4941, %v4650
    %v4945 = vmul.f32 %v4941, %v4651
    %4950 = vrot.lane.b32.xlu0 %v4942, 126
    %v4951 = vpop.permute.xlu0 %4950
    %4952 = vrot.lane.b32.xlu0 %v4943, 126
    %v4953 = vpop.permute.xlu0 %4952
    %4954 = vrot.lane.b32.xlu0 %v4944, 126
    %v4955 = vpop.permute.xlu0 %4954
    %4956 = vrot.lane.b32.xlu0 %v4945, 126
    %v4957 = vpop.permute.xlu0 %4956
    %v4962 = vadd.f32 %v4754, %v4951
    %v4963 = vadd.f32 %v4755, %v4953
    %v4964 = vadd.f32 %v4756, %v4955
    %v4965 = vadd.f32 %v4757, %v4957
    %s4966 = sld [smem:[#allocation3 + $0x41]]
    %v4967 = vstv %s4966
    %v4968 = vmul.f32 %v4967, %v4648
    %v4969 = vmul.f32 %v4967, %v4649
    %v4970 = vmul.f32 %v4967, %v4650
    %v4971 = vmul.f32 %v4967, %v4651
    %4976 = vrot.lane.b32.xlu0 %v4968, 126
    %v4977 = vpop.permute.xlu0 %4976
    %4978 = vrot.lane.b32.xlu0 %v4969, 126
    %v4979 = vpop.permute.xlu0 %4978
    %4980 = vrot.lane.b32.xlu0 %v4970, 126
    %v4981 = vpop.permute.xlu0 %4980
    %4982 = vrot.lane.b32.xlu0 %v4971, 126
    %v4983 = vpop.permute.xlu0 %4982
    %v4988 = vadd.f32 %v4780, %v4977
    %v4989 = vadd.f32 %v4781, %v4979
    %v4990 = vadd.f32 %v4782, %v4981
    %v4991 = vadd.f32 %v4783, %v4983
    %s4992 = sld [smem:[#allocation3 + $0x65]]
    %v4993 = vstv %s4992
    %v4994 = vmul.f32 %v4993, %v4648
    %v4995 = vmul.f32 %v4993, %v4649
    %v4996 = vmul.f32 %v4993, %v4650
    %v4997 = vmul.f32 %v4993, %v4651
    %5002 = vrot.lane.b32.xlu0 %v4994, 126
    %v5003 = vpop.permute.xlu0 %5002
    %5004 = vrot.lane.b32.xlu0 %v4995, 126
    %v5005 = vpop.permute.xlu0 %5004
    %5006 = vrot.lane.b32.xlu0 %v4996, 126
    %v5007 = vpop.permute.xlu0 %5006
    %5008 = vrot.lane.b32.xlu0 %v4997, 126
    %v5009 = vpop.permute.xlu0 %5008
    %v5014 = vadd.f32 %v4806, %v5003
    %v5015 = vadd.f32 %v4807, %v5005
    %v5016 = vadd.f32 %v4808, %v5007
    %v5017 = vadd.f32 %v4809, %v5009
    %s5018 = sld [smem:[#allocation3 + $0x89]]
    %v5019 = vstv %s5018
    %v5020 = vmul.f32 %v5019, %v4648
    %v5021 = vmul.f32 %v5019, %v4649
    %v5022 = vmul.f32 %v5019, %v4650
    %v5023 = vmul.f32 %v5019, %v4651
    %5028 = vrot.lane.b32.xlu0 %v5020, 126
    %v5029 = vpop.permute.xlu0 %5028
    %5030 = vrot.lane.b32.xlu0 %v5021, 126
    %v5031 = vpop.permute.xlu0 %5030
    %5032 = vrot.lane.b32.xlu0 %v5022, 126
    %v5033 = vpop.permute.xlu0 %5032
    %5034 = vrot.lane.b32.xlu0 %v5023, 126
    %v5035 = vpop.permute.xlu0 %5034
    %v5040 = vadd.f32 %v4832, %v5029
    %v5041 = vadd.f32 %v4833, %v5031
    %v5042 = vadd.f32 %v4834, %v5033
    %v5043 = vadd.f32 %v4835, %v5035
    %s5044 = sld [smem:[#allocation3 + $0xad]]
    %v5045 = vstv %s5044
    %v5046 = vmul.f32 %v5045, %v4648
    %v5047 = vmul.f32 %v5045, %v4649
    %v5048 = vmul.f32 %v5045, %v4650
    %v5049 = vmul.f32 %v5045, %v4651
    %5054 = vrot.lane.b32.xlu0 %v5046, 126
    %v5055 = vpop.permute.xlu0 %5054
    %5056 = vrot.lane.b32.xlu0 %v5047, 126
    %v5057 = vpop.permute.xlu0 %5056
    %5058 = vrot.lane.b32.xlu0 %v5048, 126
    %v5059 = vpop.permute.xlu0 %5058
    %5060 = vrot.lane.b32.xlu0 %v5049, 126
    %v5061 = vpop.permute.xlu0 %5060
    %v5066 = vadd.f32 %v4858, %v5055
    %v5067 = vadd.f32 %v4859, %v5057
    %v5068 = vadd.f32 %v4860, %v5059
    %v5069 = vadd.f32 %v4861, %v5061
    %s5070 = sld [smem:[#allocation3 + $0xd1]]
    %v5071 = vstv %s5070
    %v5072 = vmul.f32 %v5071, %v4648
    %v5073 = vmul.f32 %v5071, %v4649
    %v5074 = vmul.f32 %v5071, %v4650
    %v5075 = vmul.f32 %v5071, %v4651
    %5080 = vrot.lane.b32.xlu0 %v5072, 126
    %v5081 = vpop.permute.xlu0 %5080
    %5082 = vrot.lane.b32.xlu0 %v5073, 126
    %v5083 = vpop.permute.xlu0 %5082
    %5084 = vrot.lane.b32.xlu0 %v5074, 126
    %v5085 = vpop.permute.xlu0 %5084
    %5086 = vrot.lane.b32.xlu0 %v5075, 126
    %v5087 = vpop.permute.xlu0 %5086
    %v5092 = vadd.f32 %v4884, %v5081
    %v5093 = vadd.f32 %v4885, %v5083
    %v5094 = vadd.f32 %v4886, %v5085
    %v5095 = vadd.f32 %v4887, %v5087
    %s5096 = sld [smem:[#allocation3 + $0xf5]]
    %v5097 = vstv %s5096
    %v5098 = vmul.f32 %v5097, %v4648
    %v5099 = vmul.f32 %v5097, %v4649
    %v5100 = vmul.f32 %v5097, %v4650
    %v5101 = vmul.f32 %v5097, %v4651
    %5106 = vrot.lane.b32.xlu0 %v5098, 126
    %v5107 = vpop.permute.xlu0 %5106
    %5108 = vrot.lane.b32.xlu0 %v5099, 126
    %v5109 = vpop.permute.xlu0 %5108
    %5110 = vrot.lane.b32.xlu0 %v5100, 126
    %v5111 = vpop.permute.xlu0 %5110
    %5112 = vrot.lane.b32.xlu0 %v5101, 126
    %v5113 = vpop.permute.xlu0 %5112
    %v5118 = vadd.f32 %v4910, %v5107
    %v5119 = vadd.f32 %v4911, %v5109
    %v5120 = vadd.f32 %v4912, %v5111
    %v5121 = vadd.f32 %v4913, %v5113
    %s5122 = sld [smem:[#allocation3 + $0x119]]
    %v5123 = vstv %s5122
    %v5124 = vmul.f32 %v5123, %v4648
    %v5125 = vmul.f32 %v5123, %v4649
    %v5126 = vmul.f32 %v5123, %v4650
    %v5127 = vmul.f32 %v5123, %v4651
    %5132 = vrot.lane.b32.xlu0 %v5124, 126
    %v5133 = vpop.permute.xlu0 %5132
    %5134 = vrot.lane.b32.xlu0 %v5125, 126
    %v5135 = vpop.permute.xlu0 %5134
    %5136 = vrot.lane.b32.xlu0 %v5126, 126
    %v5137 = vpop.permute.xlu0 %5136
    %5138 = vrot.lane.b32.xlu0 %v5127, 126
    %v5139 = vpop.permute.xlu0 %5138
    %v5144 = vadd.f32 %v4936, %v5133
    %v5145 = vadd.f32 %v4937, %v5135
    %v5146 = vadd.f32 %v4938, %v5137
    %v5147 = vadd.f32 %v4939, %v5139
    %v5148 = vld [vmem:[%s4647 + $0x1] sm:$0xff]
    %v5149 = vld [vmem:[%s4647 + $0x9] sm:$0xff]
    %v5150 = vld [vmem:[%s4647 + $0x61] sm:$0xff]
    %v5151 = vld [vmem:[%s4647 + $0x69] sm:$0xff]
    %s5152 = sld [smem:[#allocation3 + $0x1e]]
    %v5153 = vstv %s5152
    %v5154 = vmul.f32 %v5153, %v5148
    %v5155 = vmul.f32 %v5153, %v5149
    %v5156 = vmul.f32 %v5153, %v5150
    %v5157 = vmul.f32 %v5153, %v5151
    %v5158 = vadd.f32 %v4962, %v5154
    %v5159 = vadd.f32 %v4963, %v5155
    %v5160 = vadd.f32 %v4964, %v5156
    %v5161 = vadd.f32 %v4965, %v5157
    %s5162 = sld [smem:[#allocation3 + $0x42]]
    %v5163 = vstv %s5162
    %v5164 = vmul.f32 %v5163, %v5148
    %v5165 = vmul.f32 %v5163, %v5149
    %v5166 = vmul.f32 %v5163, %v5150
    %v5167 = vmul.f32 %v5163, %v5151
    %v5168 = vadd.f32 %v4988, %v5164
    %v5169 = vadd.f32 %v4989, %v5165
    %v5170 = vadd.f32 %v4990, %v5166
    %v5171 = vadd.f32 %v4991, %v5167
    %s5172 = sld [smem:[#allocation3 + $0x66]]
    %v5173 = vstv %s5172
    %v5174 = vmul.f32 %v5173, %v5148
    %v5175 = vmul.f32 %v5173, %v5149
    %v5176 = vmul.f32 %v5173, %v5150
    %v5177 = vmul.f32 %v5173, %v5151
    %v5178 = vadd.f32 %v5014, %v5174
    %v5179 = vadd.f32 %v5015, %v5175
    %v5180 = vadd.f32 %v5016, %v5176
    %v5181 = vadd.f32 %v5017, %v5177
    %s5182 = sld [smem:[#allocation3 + $0x8a]]
    %v5183 = vstv %s5182
    %v5184 = vmul.f32 %v5183, %v5148
    %v5185 = vmul.f32 %v5183, %v5149
    %v5186 = vmul.f32 %v5183, %v5150
    %v5187 = vmul.f32 %v5183, %v5151
    %v5188 = vadd.f32 %v5040, %v5184
    %v5189 = vadd.f32 %v5041, %v5185
    %v5190 = vadd.f32 %v5042, %v5186
    %v5191 = vadd.f32 %v5043, %v5187
    %s5192 = sld [smem:[#allocation3 + $0xae]]
    %v5193 = vstv %s5192
    %v5194 = vmul.f32 %v5193, %v5148
    %v5195 = vmul.f32 %v5193, %v5149
    %v5196 = vmul.f32 %v5193, %v5150
    %v5197 = vmul.f32 %v5193, %v5151
    %v5198 = vadd.f32 %v5066, %v5194
    %v5199 = vadd.f32 %v5067, %v5195
    %v5200 = vadd.f32 %v5068, %v5196
    %v5201 = vadd.f32 %v5069, %v5197
    %s5202 = sld [smem:[#allocation3 + $0xd2]]
    %v5203 = vstv %s5202
    %v5204 = vmul.f32 %v5203, %v5148
    %v5205 = vmul.f32 %v5203, %v5149
    %v5206 = vmul.f32 %v5203, %v5150
    %v5207 = vmul.f32 %v5203, %v5151
    %v5208 = vadd.f32 %v5092, %v5204
    %v5209 = vadd.f32 %v5093, %v5205
    %v5210 = vadd.f32 %v5094, %v5206
    %v5211 = vadd.f32 %v5095, %v5207
    %s5212 = sld [smem:[#allocation3 + $0xf6]]
    %v5213 = vstv %s5212
    %v5214 = vmul.f32 %v5213, %v5148
    %v5215 = vmul.f32 %v5213, %v5149
    %v5216 = vmul.f32 %v5213, %v5150
    %v5217 = vmul.f32 %v5213, %v5151
    %v5218 = vadd.f32 %v5118, %v5214
    %v5219 = vadd.f32 %v5119, %v5215
    %v5220 = vadd.f32 %v5120, %v5216
    %v5221 = vadd.f32 %v5121, %v5217
    %s5222 = sld [smem:[#allocation3 + $0x11a]]
    %v5223 = vstv %s5222
    %v5224 = vmul.f32 %v5223, %v5148
    %v5225 = vmul.f32 %v5223, %v5149
    %v5226 = vmul.f32 %v5223, %v5150
    %v5227 = vmul.f32 %v5223, %v5151
    %v5228 = vadd.f32 %v5144, %v5224
    %v5229 = vadd.f32 %v5145, %v5225
    %v5230 = vadd.f32 %v5146, %v5226
    %v5231 = vadd.f32 %v5147, %v5227
    %s5232 = sld [smem:[#allocation3 + $0x1f]]
    %v5233 = vstv %s5232
    %v5234 = vmul.f32 %v5233, %v5148
    %v5235 = vmul.f32 %v5233, %v5149
    %v5236 = vmul.f32 %v5233, %v5150
    %v5237 = vmul.f32 %v5233, %v5151
    %5242 = vrot.lane.b32.xlu0 %v5234, 127
    %v5243 = vpop.permute.xlu0 %5242
    %5244 = vrot.lane.b32.xlu0 %v5235, 127
    %v5245 = vpop.permute.xlu0 %5244
    %5246 = vrot.lane.b32.xlu0 %v5236, 127
    %v5247 = vpop.permute.xlu0 %5246
    %5248 = vrot.lane.b32.xlu0 %v5237, 127
    %v5249 = vpop.permute.xlu0 %5248
    %v5254 = vadd.f32 %v5158, %v5243
    %v5255 = vadd.f32 %v5159, %v5245
    %v5256 = vadd.f32 %v5160, %v5247
    %v5257 = vadd.f32 %v5161, %v5249
    %s5258 = sld [smem:[#allocation3 + $0x43]]
    %v5259 = vstv %s5258
    %v5260 = vmul.f32 %v5259, %v5148
    %v5261 = vmul.f32 %v5259, %v5149
    %v5262 = vmul.f32 %v5259, %v5150
    %v5263 = vmul.f32 %v5259, %v5151
    %5268 = vrot.lane.b32.xlu0 %v5260, 127
    %v5269 = vpop.permute.xlu0 %5268
    %5270 = vrot.lane.b32.xlu0 %v5261, 127
    %v5271 = vpop.permute.xlu0 %5270
    %5272 = vrot.lane.b32.xlu0 %v5262, 127
    %v5273 = vpop.permute.xlu0 %5272
    %5274 = vrot.lane.b32.xlu0 %v5263, 127
    %v5275 = vpop.permute.xlu0 %5274
    %v5280 = vadd.f32 %v5168, %v5269
    %v5281 = vadd.f32 %v5169, %v5271
    %v5282 = vadd.f32 %v5170, %v5273
    %v5283 = vadd.f32 %v5171, %v5275
    %s5284 = sld [smem:[#allocation3 + $0x67]]
    %v5285 = vstv %s5284
    %v5286 = vmul.f32 %v5285, %v5148
    %v5287 = vmul.f32 %v5285, %v5149
    %v5288 = vmul.f32 %v5285, %v5150
    %v5289 = vmul.f32 %v5285, %v5151
    %5294 = vrot.lane.b32.xlu0 %v5286, 127
    %v5295 = vpop.permute.xlu0 %5294
    %5296 = vrot.lane.b32.xlu0 %v5287, 127
    %v5297 = vpop.permute.xlu0 %5296
    %5298 = vrot.lane.b32.xlu0 %v5288, 127
    %v5299 = vpop.permute.xlu0 %5298
    %5300 = vrot.lane.b32.xlu0 %v5289, 127
    %v5301 = vpop.permute.xlu0 %5300
    %v5306 = vadd.f32 %v5178, %v5295
    %v5307 = vadd.f32 %v5179, %v5297
    %v5308 = vadd.f32 %v5180, %v5299
    %v5309 = vadd.f32 %v5181, %v5301
    %s5310 = sld [smem:[#allocation3 + $0x8b]]
    %v5311 = vstv %s5310
    %v5312 = vmul.f32 %v5311, %v5148
    %v5313 = vmul.f32 %v5311, %v5149
    %v5314 = vmul.f32 %v5311, %v5150
    %v5315 = vmul.f32 %v5311, %v5151
    %5320 = vrot.lane.b32.xlu0 %v5312, 127
    %v5321 = vpop.permute.xlu0 %5320
    %5322 = vrot.lane.b32.xlu0 %v5313, 127
    %v5323 = vpop.permute.xlu0 %5322
    %5324 = vrot.lane.b32.xlu0 %v5314, 127
    %v5325 = vpop.permute.xlu0 %5324
    %5326 = vrot.lane.b32.xlu0 %v5315, 127
    %v5327 = vpop.permute.xlu0 %5326
    %v5332 = vadd.f32 %v5188, %v5321
    %v5333 = vadd.f32 %v5189, %v5323
    %v5334 = vadd.f32 %v5190, %v5325
    %v5335 = vadd.f32 %v5191, %v5327
    %s5336 = sld [smem:[#allocation3 + $0xaf]]
    %v5337 = vstv %s5336
    %v5338 = vmul.f32 %v5337, %v5148
    %v5339 = vmul.f32 %v5337, %v5149
    %v5340 = vmul.f32 %v5337, %v5150
    %v5341 = vmul.f32 %v5337, %v5151
    %5346 = vrot.lane.b32.xlu0 %v5338, 127
    %v5347 = vpop.permute.xlu0 %5346
    %5348 = vrot.lane.b32.xlu0 %v5339, 127
    %v5349 = vpop.permute.xlu0 %5348
    %5350 = vrot.lane.b32.xlu0 %v5340, 127
    %v5351 = vpop.permute.xlu0 %5350
    %5352 = vrot.lane.b32.xlu0 %v5341, 127
    %v5353 = vpop.permute.xlu0 %5352
    %v5358 = vadd.f32 %v5198, %v5347
    %v5359 = vadd.f32 %v5199, %v5349
    %v5360 = vadd.f32 %v5200, %v5351
    %v5361 = vadd.f32 %v5201, %v5353
    %s5362 = sld [smem:[#allocation3 + $0xd3]]
    %v5363 = vstv %s5362
    %v5364 = vmul.f32 %v5363, %v5148
    %v5365 = vmul.f32 %v5363, %v5149
    %v5366 = vmul.f32 %v5363, %v5150
    %v5367 = vmul.f32 %v5363, %v5151
    %5372 = vrot.lane.b32.xlu0 %v5364, 127
    %v5373 = vpop.permute.xlu0 %5372
    %5374 = vrot.lane.b32.xlu0 %v5365, 127
    %v5375 = vpop.permute.xlu0 %5374
    %5376 = vrot.lane.b32.xlu0 %v5366, 127
    %v5377 = vpop.permute.xlu0 %5376
    %5378 = vrot.lane.b32.xlu0 %v5367, 127
    %v5379 = vpop.permute.xlu0 %5378
    %v5384 = vadd.f32 %v5208, %v5373
    %v5385 = vadd.f32 %v5209, %v5375
    %v5386 = vadd.f32 %v5210, %v5377
    %v5387 = vadd.f32 %v5211, %v5379
    %s5388 = sld [smem:[#allocation3 + $0xf7]]
    %v5389 = vstv %s5388
    %v5390 = vmul.f32 %v5389, %v5148
    %v5391 = vmul.f32 %v5389, %v5149
    %v5392 = vmul.f32 %v5389, %v5150
    %v5393 = vmul.f32 %v5389, %v5151
    %5398 = vrot.lane.b32.xlu0 %v5390, 127
    %v5399 = vpop.permute.xlu0 %5398
    %5400 = vrot.lane.b32.xlu0 %v5391, 127
    %v5401 = vpop.permute.xlu0 %5400
    %5402 = vrot.lane.b32.xlu0 %v5392, 127
    %v5403 = vpop.permute.xlu0 %5402
    %5404 = vrot.lane.b32.xlu0 %v5393, 127
    %v5405 = vpop.permute.xlu0 %5404
    %v5410 = vadd.f32 %v5218, %v5399
    %v5411 = vadd.f32 %v5219, %v5401
    %v5412 = vadd.f32 %v5220, %v5403
    %v5413 = vadd.f32 %v5221, %v5405
    %s5414 = sld [smem:[#allocation3 + $0x11b]]
    %v5415 = vstv %s5414
    %v5416 = vmul.f32 %v5415, %v5148
    %v5417 = vmul.f32 %v5415, %v5149
    %v5418 = vmul.f32 %v5415, %v5150
    %v5419 = vmul.f32 %v5415, %v5151
    %5424 = vrot.lane.b32.xlu0 %v5416, 127
    %v5425 = vpop.permute.xlu0 %5424
    %5426 = vrot.lane.b32.xlu0 %v5417, 127
    %v5427 = vpop.permute.xlu0 %5426
    %5428 = vrot.lane.b32.xlu0 %v5418, 127
    %v5429 = vpop.permute.xlu0 %5428
    %5430 = vrot.lane.b32.xlu0 %v5419, 127
    %v5431 = vpop.permute.xlu0 %5430
    %v5436 = vadd.f32 %v5228, %v5425
    %v5437 = vadd.f32 %v5229, %v5427
    %v5438 = vadd.f32 %v5230, %v5429
    %v5439 = vadd.f32 %v5231, %v5431
    %s5440 = sld [smem:[#allocation3 + $0x20]]
    %v5441 = vstv %s5440
    %v5442 = vmul.f32 %v5441, %v5148
    %v5443 = vmul.f32 %v5441, %v5149
    %v5444 = vmul.f32 %v5441, %v5150
    %v5445 = vmul.f32 %v5441, %v5151
    %5450 = vrot.lane.b32.xlu0 %v5442, 126
    %v5451 = vpop.permute.xlu0 %5450
    %5452 = vrot.lane.b32.xlu0 %v5443, 126
    %v5453 = vpop.permute.xlu0 %5452
    %5454 = vrot.lane.b32.xlu0 %v5444, 126
    %v5455 = vpop.permute.xlu0 %5454
    %5456 = vrot.lane.b32.xlu0 %v5445, 126
    %v5457 = vpop.permute.xlu0 %5456
    %v5462 = vadd.f32 %v5254, %v5451
    %v5463 = vadd.f32 %v5255, %v5453
    %v5464 = vadd.f32 %v5256, %v5455
    %v5465 = vadd.f32 %v5257, %v5457
    %s5466 = sld [smem:[#allocation3 + $0x44]]
    %v5467 = vstv %s5466
    %v5468 = vmul.f32 %v5467, %v5148
    %v5469 = vmul.f32 %v5467, %v5149
    %v5470 = vmul.f32 %v5467, %v5150
    %v5471 = vmul.f32 %v5467, %v5151
    %5476 = vrot.lane.b32.xlu0 %v5468, 126
    %v5477 = vpop.permute.xlu0 %5476
    %5478 = vrot.lane.b32.xlu0 %v5469, 126
    %v5479 = vpop.permute.xlu0 %5478
    %5480 = vrot.lane.b32.xlu0 %v5470, 126
    %v5481 = vpop.permute.xlu0 %5480
    %5482 = vrot.lane.b32.xlu0 %v5471, 126
    %v5483 = vpop.permute.xlu0 %5482
    %v5488 = vadd.f32 %v5280, %v5477
    %v5489 = vadd.f32 %v5281, %v5479
    %v5490 = vadd.f32 %v5282, %v5481
    %v5491 = vadd.f32 %v5283, %v5483
    %s5492 = sld [smem:[#allocation3 + $0x68]]
    %v5493 = vstv %s5492
    %v5494 = vmul.f32 %v5493, %v5148
    %v5495 = vmul.f32 %v5493, %v5149
    %v5496 = vmul.f32 %v5493, %v5150
    %v5497 = vmul.f32 %v5493, %v5151
    %5502 = vrot.lane.b32.xlu0 %v5494, 126
    %v5503 = vpop.permute.xlu0 %5502
    %5504 = vrot.lane.b32.xlu0 %v5495, 126
    %v5505 = vpop.permute.xlu0 %5504
    %5506 = vrot.lane.b32.xlu0 %v5496, 126
    %v5507 = vpop.permute.xlu0 %5506
    %5508 = vrot.lane.b32.xlu0 %v5497, 126
    %v5509 = vpop.permute.xlu0 %5508
    %v5514 = vadd.f32 %v5306, %v5503
    %v5515 = vadd.f32 %v5307, %v5505
    %v5516 = vadd.f32 %v5308, %v5507
    %v5517 = vadd.f32 %v5309, %v5509
    %s5518 = sld [smem:[#allocation3 + $0x8c]]
    %v5519 = vstv %s5518
    %v5520 = vmul.f32 %v5519, %v5148
    %v5521 = vmul.f32 %v5519, %v5149
    %v5522 = vmul.f32 %v5519, %v5150
    %v5523 = vmul.f32 %v5519, %v5151
    %5528 = vrot.lane.b32.xlu0 %v5520, 126
    %v5529 = vpop.permute.xlu0 %5528
    %5530 = vrot.lane.b32.xlu0 %v5521, 126
    %v5531 = vpop.permute.xlu0 %5530
    %5532 = vrot.lane.b32.xlu0 %v5522, 126
    %v5533 = vpop.permute.xlu0 %5532
    %5534 = vrot.lane.b32.xlu0 %v5523, 126
    %v5535 = vpop.permute.xlu0 %5534
    %v5540 = vadd.f32 %v5332, %v5529
    %v5541 = vadd.f32 %v5333, %v5531
    %v5542 = vadd.f32 %v5334, %v5533
    %v5543 = vadd.f32 %v5335, %v5535
    %s5544 = sld [smem:[#allocation3 + $0xb0]]
    %v5545 = vstv %s5544
    %v5546 = vmul.f32 %v5545, %v5148
    %v5547 = vmul.f32 %v5545, %v5149
    %v5548 = vmul.f32 %v5545, %v5150
    %v5549 = vmul.f32 %v5545, %v5151
    %5554 = vrot.lane.b32.xlu0 %v5546, 126
    %v5555 = vpop.permute.xlu0 %5554
    %5556 = vrot.lane.b32.xlu0 %v5547, 126
    %v5557 = vpop.permute.xlu0 %5556
    %5558 = vrot.lane.b32.xlu0 %v5548, 126
    %v5559 = vpop.permute.xlu0 %5558
    %5560 = vrot.lane.b32.xlu0 %v5549, 126
    %v5561 = vpop.permute.xlu0 %5560
    %v5566 = vadd.f32 %v5358, %v5555
    %v5567 = vadd.f32 %v5359, %v5557
    %v5568 = vadd.f32 %v5360, %v5559
    %v5569 = vadd.f32 %v5361, %v5561
    %s5570 = sld [smem:[#allocation3 + $0xd4]]
    %v5571 = vstv %s5570
    %v5572 = vmul.f32 %v5571, %v5148
    %v5573 = vmul.f32 %v5571, %v5149
    %v5574 = vmul.f32 %v5571, %v5150
    %v5575 = vmul.f32 %v5571, %v5151
    %5580 = vrot.lane.b32.xlu0 %v5572, 126
    %v5581 = vpop.permute.xlu0 %5580
    %5582 = vrot.lane.b32.xlu0 %v5573, 126
    %v5583 = vpop.permute.xlu0 %5582
    %5584 = vrot.lane.b32.xlu0 %v5574, 126
    %v5585 = vpop.permute.xlu0 %5584
    %5586 = vrot.lane.b32.xlu0 %v5575, 126
    %v5587 = vpop.permute.xlu0 %5586
    %v5592 = vadd.f32 %v5384, %v5581
    %v5593 = vadd.f32 %v5385, %v5583
    %v5594 = vadd.f32 %v5386, %v5585
    %v5595 = vadd.f32 %v5387, %v5587
    %s5596 = sld [smem:[#allocation3 + $0xf8]]
    %v5597 = vstv %s5596
    %v5598 = vmul.f32 %v5597, %v5148
    %v5599 = vmul.f32 %v5597, %v5149
    %v5600 = vmul.f32 %v5597, %v5150
    %v5601 = vmul.f32 %v5597, %v5151
    %5606 = vrot.lane.b32.xlu0 %v5598, 126
    %v5607 = vpop.permute.xlu0 %5606
    %5608 = vrot.lane.b32.xlu0 %v5599, 126
    %v5609 = vpop.permute.xlu0 %5608
    %5610 = vrot.lane.b32.xlu0 %v5600, 126
    %v5611 = vpop.permute.xlu0 %5610
    %5612 = vrot.lane.b32.xlu0 %v5601, 126
    %v5613 = vpop.permute.xlu0 %5612
    %v5618 = vadd.f32 %v5410, %v5607
    %v5619 = vadd.f32 %v5411, %v5609
    %v5620 = vadd.f32 %v5412, %v5611
    %v5621 = vadd.f32 %v5413, %v5613
    %s5622 = sld [smem:[#allocation3 + $0x11c]]
    %v5623 = vstv %s5622
    %v5624 = vmul.f32 %v5623, %v5148
    %v5625 = vmul.f32 %v5623, %v5149
    %v5626 = vmul.f32 %v5623, %v5150
    %v5627 = vmul.f32 %v5623, %v5151
    %5632 = vrot.lane.b32.xlu0 %v5624, 126
    %v5633 = vpop.permute.xlu0 %5632
    %5634 = vrot.lane.b32.xlu0 %v5625, 126
    %v5635 = vpop.permute.xlu0 %5634
    %5636 = vrot.lane.b32.xlu0 %v5626, 126
    %v5637 = vpop.permute.xlu0 %5636
    %5638 = vrot.lane.b32.xlu0 %v5627, 126
    %v5639 = vpop.permute.xlu0 %5638
    %v5644 = vadd.f32 %v5436, %v5633
    %v5645 = vadd.f32 %v5437, %v5635
    %v5646 = vadd.f32 %v5438, %v5637
    %v5647 = vadd.f32 %v5439, %v5639
    %v5648 = vld [vmem:[%s4647 + $0x2] sm:$0xff]
    %v5649 = vld [vmem:[%s4647 + $0xa] sm:$0xff]
    %v5650 = vld [vmem:[%s4647 + $0x62] sm:$0xff]
    %v5651 = vld [vmem:[%s4647 + $0x6a] sm:$0xff]
    %s5652 = sld [smem:[#allocation3 + $0x21]]
    %v5653 = vstv %s5652
    %v5654 = vmul.f32 %v5653, %v5648
    %v5655 = vmul.f32 %v5653, %v5649
    %v5656 = vmul.f32 %v5653, %v5650
    %v5657 = vmul.f32 %v5653, %v5651
    %v5658 = vadd.f32 %v5462, %v5654
    %v5659 = vadd.f32 %v5463, %v5655
    %v5660 = vadd.f32 %v5464, %v5656
    %v5661 = vadd.f32 %v5465, %v5657
    %s5662 = sld [smem:[#allocation3 + $0x45]]
    %v5663 = vstv %s5662
    %v5664 = vmul.f32 %v5663, %v5648
    %v5665 = vmul.f32 %v5663, %v5649
    %v5666 = vmul.f32 %v5663, %v5650
    %v5667 = vmul.f32 %v5663, %v5651
    %v5668 = vadd.f32 %v5488, %v5664
    %v5669 = vadd.f32 %v5489, %v5665
    %v5670 = vadd.f32 %v5490, %v5666
    %v5671 = vadd.f32 %v5491, %v5667
    %s5672 = sld [smem:[#allocation3 + $0x69]]
    %v5673 = vstv %s5672
    %v5674 = vmul.f32 %v5673, %v5648
    %v5675 = vmul.f32 %v5673, %v5649
    %v5676 = vmul.f32 %v5673, %v5650
    %v5677 = vmul.f32 %v5673, %v5651
    %v5678 = vadd.f32 %v5514, %v5674
    %v5679 = vadd.f32 %v5515, %v5675
    %v5680 = vadd.f32 %v5516, %v5676
    %v5681 = vadd.f32 %v5517, %v5677
    %s5682 = sld [smem:[#allocation3 + $0x8d]]
    %v5683 = vstv %s5682
    %v5684 = vmul.f32 %v5683, %v5648
    %v5685 = vmul.f32 %v5683, %v5649
    %v5686 = vmul.f32 %v5683, %v5650
    %v5687 = vmul.f32 %v5683, %v5651
    %v5688 = vadd.f32 %v5540, %v5684
    %v5689 = vadd.f32 %v5541, %v5685
    %v5690 = vadd.f32 %v5542, %v5686
    %v5691 = vadd.f32 %v5543, %v5687
    %s5692 = sld [smem:[#allocation3 + $0xb1]]
    %v5693 = vstv %s5692
    %v5694 = vmul.f32 %v5693, %v5648
    %v5695 = vmul.f32 %v5693, %v5649
    %v5696 = vmul.f32 %v5693, %v5650
    %v5697 = vmul.f32 %v5693, %v5651
    %v5698 = vadd.f32 %v5566, %v5694
    %v5699 = vadd.f32 %v5567, %v5695
    %v5700 = vadd.f32 %v5568, %v5696
    %v5701 = vadd.f32 %v5569, %v5697
    %s5702 = sld [smem:[#allocation3 + $0xd5]]
    %v5703 = vstv %s5702
    %v5704 = vmul.f32 %v5703, %v5648
    %v5705 = vmul.f32 %v5703, %v5649
    %v5706 = vmul.f32 %v5703, %v5650
    %v5707 = vmul.f32 %v5703, %v5651
    %v5708 = vadd.f32 %v5592, %v5704
    %v5709 = vadd.f32 %v5593, %v5705
    %v5710 = vadd.f32 %v5594, %v5706
    %v5711 = vadd.f32 %v5595, %v5707
    %s5712 = sld [smem:[#allocation3 + $0xf9]]
    %v5713 = vstv %s5712
    %v5714 = vmul.f32 %v5713, %v5648
    %v5715 = vmul.f32 %v5713, %v5649
    %v5716 = vmul.f32 %v5713, %v5650
    %v5717 = vmul.f32 %v5713, %v5651
    %v5718 = vadd.f32 %v5618, %v5714
    %v5719 = vadd.f32 %v5619, %v5715
    %v5720 = vadd.f32 %v5620, %v5716
    %v5721 = vadd.f32 %v5621, %v5717
    %s5722 = sld [smem:[#allocation3 + $0x11d]]
    %v5723 = vstv %s5722
    %v5724 = vmul.f32 %v5723, %v5648
    %v5725 = vmul.f32 %v5723, %v5649
    %v5726 = vmul.f32 %v5723, %v5650
    %v5727 = vmul.f32 %v5723, %v5651
    %v5728 = vadd.f32 %v5644, %v5724
    %v5729 = vadd.f32 %v5645, %v5725
    %v5730 = vadd.f32 %v5646, %v5726
    %v5731 = vadd.f32 %v5647, %v5727
    %s5732 = sld [smem:[#allocation3 + $0x22]]
    %v5733 = vstv %s5732
    %v5734 = vmul.f32 %v5733, %v5648
    %v5735 = vmul.f32 %v5733, %v5649
    %v5736 = vmul.f32 %v5733, %v5650
    %v5737 = vmul.f32 %v5733, %v5651
    %5742 = vrot.lane.b32.xlu0 %v5734, 127
    %v5743 = vpop.permute.xlu0 %5742
    %5744 = vrot.lane.b32.xlu0 %v5735, 127
    %v5745 = vpop.permute.xlu0 %5744
    %5746 = vrot.lane.b32.xlu0 %v5736, 127
    %v5747 = vpop.permute.xlu0 %5746
    %5748 = vrot.lane.b32.xlu0 %v5737, 127
    %v5749 = vpop.permute.xlu0 %5748
    %v5754 = vadd.f32 %v5658, %v5743
    %v5755 = vadd.f32 %v5659, %v5745
    %v5756 = vadd.f32 %v5660, %v5747
    %v5757 = vadd.f32 %v5661, %v5749
    %s5758 = sld [smem:[#allocation3 + $0x46]]
    %v5759 = vstv %s5758
    %v5760 = vmul.f32 %v5759, %v5648
    %v5761 = vmul.f32 %v5759, %v5649
    %v5762 = vmul.f32 %v5759, %v5650
    %v5763 = vmul.f32 %v5759, %v5651
    %5768 = vrot.lane.b32.xlu0 %v5760, 127
    %v5769 = vpop.permute.xlu0 %5768
    %5770 = vrot.lane.b32.xlu0 %v5761, 127
    %v5771 = vpop.permute.xlu0 %5770
    %5772 = vrot.lane.b32.xlu0 %v5762, 127
    %v5773 = vpop.permute.xlu0 %5772
    %5774 = vrot.lane.b32.xlu0 %v5763, 127
    %v5775 = vpop.permute.xlu0 %5774
    %v5780 = vadd.f32 %v5668, %v5769
    %v5781 = vadd.f32 %v5669, %v5771
    %v5782 = vadd.f32 %v5670, %v5773
    %v5783 = vadd.f32 %v5671, %v5775
    %s5784 = sld [smem:[#allocation3 + $0x6a]]
    %v5785 = vstv %s5784
    %v5786 = vmul.f32 %v5785, %v5648
    %v5787 = vmul.f32 %v5785, %v5649
    %v5788 = vmul.f32 %v5785, %v5650
    %v5789 = vmul.f32 %v5785, %v5651
    %5794 = vrot.lane.b32.xlu0 %v5786, 127
    %v5795 = vpop.permute.xlu0 %5794
    %5796 = vrot.lane.b32.xlu0 %v5787, 127
    %v5797 = vpop.permute.xlu0 %5796
    %5798 = vrot.lane.b32.xlu0 %v5788, 127
    %v5799 = vpop.permute.xlu0 %5798
    %5800 = vrot.lane.b32.xlu0 %v5789, 127
    %v5801 = vpop.permute.xlu0 %5800
    %v5806 = vadd.f32 %v5678, %v5795
    %v5807 = vadd.f32 %v5679, %v5797
    %v5808 = vadd.f32 %v5680, %v5799
    %v5809 = vadd.f32 %v5681, %v5801
    %s5810 = sld [smem:[#allocation3 + $0x8e]]
    %v5811 = vstv %s5810
    %v5812 = vmul.f32 %v5811, %v5648
    %v5813 = vmul.f32 %v5811, %v5649
    %v5814 = vmul.f32 %v5811, %v5650
    %v5815 = vmul.f32 %v5811, %v5651
    %5820 = vrot.lane.b32.xlu0 %v5812, 127
    %v5821 = vpop.permute.xlu0 %5820
    %5822 = vrot.lane.b32.xlu0 %v5813, 127
    %v5823 = vpop.permute.xlu0 %5822
    %5824 = vrot.lane.b32.xlu0 %v5814, 127
    %v5825 = vpop.permute.xlu0 %5824
    %5826 = vrot.lane.b32.xlu0 %v5815, 127
    %v5827 = vpop.permute.xlu0 %5826
    %v5832 = vadd.f32 %v5688, %v5821
    %v5833 = vadd.f32 %v5689, %v5823
    %v5834 = vadd.f32 %v5690, %v5825
    %v5835 = vadd.f32 %v5691, %v5827
    %s5836 = sld [smem:[#allocation3 + $0xb2]]
    %v5837 = vstv %s5836
    %v5838 = vmul.f32 %v5837, %v5648
    %v5839 = vmul.f32 %v5837, %v5649
    %v5840 = vmul.f32 %v5837, %v5650
    %v5841 = vmul.f32 %v5837, %v5651
    %5846 = vrot.lane.b32.xlu0 %v5838, 127
    %v5847 = vpop.permute.xlu0 %5846
    %5848 = vrot.lane.b32.xlu0 %v5839, 127
    %v5849 = vpop.permute.xlu0 %5848
    %5850 = vrot.lane.b32.xlu0 %v5840, 127
    %v5851 = vpop.permute.xlu0 %5850
    %5852 = vrot.lane.b32.xlu0 %v5841, 127
    %v5853 = vpop.permute.xlu0 %5852
    %v5858 = vadd.f32 %v5698, %v5847
    %v5859 = vadd.f32 %v5699, %v5849
    %v5860 = vadd.f32 %v5700, %v5851
    %v5861 = vadd.f32 %v5701, %v5853
    %s5862 = sld [smem:[#allocation3 + $0xd6]]
    %v5863 = vstv %s5862
    %v5864 = vmul.f32 %v5863, %v5648
    %v5865 = vmul.f32 %v5863, %v5649
    %v5866 = vmul.f32 %v5863, %v5650
    %v5867 = vmul.f32 %v5863, %v5651
    %5872 = vrot.lane.b32.xlu0 %v5864, 127
    %v5873 = vpop.permute.xlu0 %5872
    %5874 = vrot.lane.b32.xlu0 %v5865, 127
    %v5875 = vpop.permute.xlu0 %5874
    %5876 = vrot.lane.b32.xlu0 %v5866, 127
    %v5877 = vpop.permute.xlu0 %5876
    %5878 = vrot.lane.b32.xlu0 %v5867, 127
    %v5879 = vpop.permute.xlu0 %5878
    %v5884 = vadd.f32 %v5708, %v5873
    %v5885 = vadd.f32 %v5709, %v5875
    %v5886 = vadd.f32 %v5710, %v5877
    %v5887 = vadd.f32 %v5711, %v5879
    %s5888 = sld [smem:[#allocation3 + $0xfa]]
    %v5889 = vstv %s5888
    %v5890 = vmul.f32 %v5889, %v5648
    %v5891 = vmul.f32 %v5889, %v5649
    %v5892 = vmul.f32 %v5889, %v5650
    %v5893 = vmul.f32 %v5889, %v5651
    %5898 = vrot.lane.b32.xlu0 %v5890, 127
    %v5899 = vpop.permute.xlu0 %5898
    %5900 = vrot.lane.b32.xlu0 %v5891, 127
    %v5901 = vpop.permute.xlu0 %5900
    %5902 = vrot.lane.b32.xlu0 %v5892, 127
    %v5903 = vpop.permute.xlu0 %5902
    %5904 = vrot.lane.b32.xlu0 %v5893, 127
    %v5905 = vpop.permute.xlu0 %5904
    %v5910 = vadd.f32 %v5718, %v5899
    %v5911 = vadd.f32 %v5719, %v5901
    %v5912 = vadd.f32 %v5720, %v5903
    %v5913 = vadd.f32 %v5721, %v5905
    %s5914 = sld [smem:[#allocation3 + $0x11e]]
    %v5915 = vstv %s5914
    %v5916 = vmul.f32 %v5915, %v5648
    %v5917 = vmul.f32 %v5915, %v5649
    %v5918 = vmul.f32 %v5915, %v5650
    %v5919 = vmul.f32 %v5915, %v5651
    %5924 = vrot.lane.b32.xlu0 %v5916, 127
    %v5925 = vpop.permute.xlu0 %5924
    %5926 = vrot.lane.b32.xlu0 %v5917, 127
    %v5927 = vpop.permute.xlu0 %5926
    %5928 = vrot.lane.b32.xlu0 %v5918, 127
    %v5929 = vpop.permute.xlu0 %5928
    %5930 = vrot.lane.b32.xlu0 %v5919, 127
    %v5931 = vpop.permute.xlu0 %5930
    %v5936 = vadd.f32 %v5728, %v5925
    %v5937 = vadd.f32 %v5729, %v5927
    %v5938 = vadd.f32 %v5730, %v5929
    %v5939 = vadd.f32 %v5731, %v5931
    %s5940 = sld [smem:[#allocation3 + $0x23]]
    %v5941 = vstv %s5940
    %v5942 = vmul.f32 %v5941, %v5648
    %v5943 = vmul.f32 %v5941, %v5649
    %v5944 = vmul.f32 %v5941, %v5650
    %v5945 = vmul.f32 %v5941, %v5651
    %5950 = vrot.lane.b32.xlu0 %v5942, 126
    %v5951 = vpop.permute.xlu0 %5950
    %5952 = vrot.lane.b32.xlu0 %v5943, 126
    %v5953 = vpop.permute.xlu0 %5952
    %5954 = vrot.lane.b32.xlu0 %v5944, 126
    %v5955 = vpop.permute.xlu0 %5954
    %5956 = vrot.lane.b32.xlu0 %v5945, 126
    %v5957 = vpop.permute.xlu0 %5956
    %v5962 = vadd.f32 %v5754, %v5951
    %v5963 = vadd.f32 %v5755, %v5953
    %v5964 = vadd.f32 %v5756, %v5955
    %v5965 = vadd.f32 %v5757, %v5957
    %s5966 = sld [smem:[#allocation3 + $0x47]]
    %v5967 = vstv %s5966
    %v5968 = vmul.f32 %v5967, %v5648
    %v5969 = vmul.f32 %v5967, %v5649
    %v5970 = vmul.f32 %v5967, %v5650
    %v5971 = vmul.f32 %v5967, %v5651
    %5976 = vrot.lane.b32.xlu0 %v5968, 126
    %v5977 = vpop.permute.xlu0 %5976
    %5978 = vrot.lane.b32.xlu0 %v5969, 126
    %v5979 = vpop.permute.xlu0 %5978
    %5980 = vrot.lane.b32.xlu0 %v5970, 126
    %v5981 = vpop.permute.xlu0 %5980
    %5982 = vrot.lane.b32.xlu0 %v5971, 126
    %v5983 = vpop.permute.xlu0 %5982
    %v5988 = vadd.f32 %v5780, %v5977
    %v5989 = vadd.f32 %v5781, %v5979
    %v5990 = vadd.f32 %v5782, %v5981
    %v5991 = vadd.f32 %v5783, %v5983
    %s5992 = sld [smem:[#allocation3 + $0x6b]]
    %v5993 = vstv %s5992
    %v5994 = vmul.f32 %v5993, %v5648
    %v5995 = vmul.f32 %v5993, %v5649
    %v5996 = vmul.f32 %v5993, %v5650
    %v5997 = vmul.f32 %v5993, %v5651
    %6002 = vrot.lane.b32.xlu0 %v5994, 126
    %v6003 = vpop.permute.xlu0 %6002
    %6004 = vrot.lane.b32.xlu0 %v5995, 126
    %v6005 = vpop.permute.xlu0 %6004
    %6006 = vrot.lane.b32.xlu0 %v5996, 126
    %v6007 = vpop.permute.xlu0 %6006
    %6008 = vrot.lane.b32.xlu0 %v5997, 126
    %v6009 = vpop.permute.xlu0 %6008
    %v6014 = vadd.f32 %v5806, %v6003
    %v6015 = vadd.f32 %v5807, %v6005
    %v6016 = vadd.f32 %v5808, %v6007
    %v6017 = vadd.f32 %v5809, %v6009
    %s6018 = sld [smem:[#allocation3 + $0x8f]]
    %v6019 = vstv %s6018
    %v6020 = vmul.f32 %v6019, %v5648
    %v6021 = vmul.f32 %v6019, %v5649
    %v6022 = vmul.f32 %v6019, %v5650
    %v6023 = vmul.f32 %v6019, %v5651
    %6028 = vrot.lane.b32.xlu0 %v6020, 126
    %v6029 = vpop.permute.xlu0 %6028
    %6030 = vrot.lane.b32.xlu0 %v6021, 126
    %v6031 = vpop.permute.xlu0 %6030
    %6032 = vrot.lane.b32.xlu0 %v6022, 126
    %v6033 = vpop.permute.xlu0 %6032
    %6034 = vrot.lane.b32.xlu0 %v6023, 126
    %v6035 = vpop.permute.xlu0 %6034
    %v6040 = vadd.f32 %v5832, %v6029
    %v6041 = vadd.f32 %v5833, %v6031
    %v6042 = vadd.f32 %v5834, %v6033
    %v6043 = vadd.f32 %v5835, %v6035
    %s6044 = sld [smem:[#allocation3 + $0xb3]]
    %v6045 = vstv %s6044
    %v6046 = vmul.f32 %v6045, %v5648
    %v6047 = vmul.f32 %v6045, %v5649
    %v6048 = vmul.f32 %v6045, %v5650
    %v6049 = vmul.f32 %v6045, %v5651
    %6054 = vrot.lane.b32.xlu0 %v6046, 126
    %v6055 = vpop.permute.xlu0 %6054
    %6056 = vrot.lane.b32.xlu0 %v6047, 126
    %v6057 = vpop.permute.xlu0 %6056
    %6058 = vrot.lane.b32.xlu0 %v6048, 126
    %v6059 = vpop.permute.xlu0 %6058
    %6060 = vrot.lane.b32.xlu0 %v6049, 126
    %v6061 = vpop.permute.xlu0 %6060
    %v6066 = vadd.f32 %v5858, %v6055
    %v6067 = vadd.f32 %v5859, %v6057
    %v6068 = vadd.f32 %v5860, %v6059
    %v6069 = vadd.f32 %v5861, %v6061
    %s6070 = sld [smem:[#allocation3 + $0xd7]]
    %v6071 = vstv %s6070
    %v6072 = vmul.f32 %v6071, %v5648
    %v6073 = vmul.f32 %v6071, %v5649
    %v6074 = vmul.f32 %v6071, %v5650
    %v6075 = vmul.f32 %v6071, %v5651
    %6080 = vrot.lane.b32.xlu0 %v6072, 126
    %v6081 = vpop.permute.xlu0 %6080
    %6082 = vrot.lane.b32.xlu0 %v6073, 126
    %v6083 = vpop.permute.xlu0 %6082
    %6084 = vrot.lane.b32.xlu0 %v6074, 126
    %v6085 = vpop.permute.xlu0 %6084
    %6086 = vrot.lane.b32.xlu0 %v6075, 126
    %v6087 = vpop.permute.xlu0 %6086
    %v6092 = vadd.f32 %v5884, %v6081
    %v6093 = vadd.f32 %v5885, %v6083
    %v6094 = vadd.f32 %v5886, %v6085
    %v6095 = vadd.f32 %v5887, %v6087
    %s6096 = sld [smem:[#allocation3 + $0xfb]]
    %v6097 = vstv %s6096
    %v6098 = vmul.f32 %v6097, %v5648
    %v6099 = vmul.f32 %v6097, %v5649
    %v6100 = vmul.f32 %v6097, %v5650
    %v6101 = vmul.f32 %v6097, %v5651
    %6106 = vrot.lane.b32.xlu0 %v6098, 126
    %v6107 = vpop.permute.xlu0 %6106
    %6108 = vrot.lane.b32.xlu0 %v6099, 126
    %v6109 = vpop.permute.xlu0 %6108
    %6110 = vrot.lane.b32.xlu0 %v6100, 126
    %v6111 = vpop.permute.xlu0 %6110
    %6112 = vrot.lane.b32.xlu0 %v6101, 126
    %v6113 = vpop.permute.xlu0 %6112
    %v6118 = vadd.f32 %v5910, %v6107
    %v6119 = vadd.f32 %v5911, %v6109
    %v6120 = vadd.f32 %v5912, %v6111
    %v6121 = vadd.f32 %v5913, %v6113
    %s6122 = sld [smem:[#allocation3 + $0x11f]]
    %v6123 = vstv %s6122
    %v6124 = vmul.f32 %v6123, %v5648
    %v6125 = vmul.f32 %v6123, %v5649
    %v6126 = vmul.f32 %v6123, %v5650
    %v6127 = vmul.f32 %v6123, %v5651
    %6132 = vrot.lane.b32.xlu0 %v6124, 126
    %v6133 = vpop.permute.xlu0 %6132
    %6134 = vrot.lane.b32.xlu0 %v6125, 126
    %v6135 = vpop.permute.xlu0 %6134
    %6136 = vrot.lane.b32.xlu0 %v6126, 126
    %v6137 = vpop.permute.xlu0 %6136
    %6138 = vrot.lane.b32.xlu0 %v6127, 126
    %v6139 = vpop.permute.xlu0 %6138
    %v6144 = vadd.f32 %v5936, %v6133
    %v6145 = vadd.f32 %v5937, %v6135
    %v6146 = vadd.f32 %v5938, %v6137
    %v6147 = vadd.f32 %v5939, %v6139
    %vm6148 = vcmask 130048
    %v6149 = vsel %vm6148, %v5962, 0.0
    %v6150 = vsel %vm6148, %v5963, 0.0
    %v6151 = vadd.f32 %v6149, %v6150
    %v6152 = vsel %vm6148, %v5964, 0.0
    %v6153 = vadd.f32 %v6151, %v6152
    %v6154 = vsel %vm6148, %v5965, 0.0
    %v6155 = vadd.f32 %v6153, %v6154
    %6156 = vadd.xlane.f32.xlu0 %v6155
    %v6157 = vpop.xlane.xlu0 %6156
    %v6158 = vrot.slane %v6157, 4
    %v6159 = vadd.f32 %v6157, %v6158
    %v6160 = vrot.slane %v6159, 2
    %v6161 = vadd.f32 %v6159, %v6160
    %v6162 = vrot.slane %v6161, 1
    %v6163 = vadd.f32 %v6161, %v6162
    %s6164 = vtos %v6163
    %s6165 = smul.f32 %s6164, 0.001953125
    %v6166 = vstv %s6165
    %v6167 = vsub.f32 %v5962, %v6166
    %v6168 = vsub.f32 %v5963, %v6166
    %v6169 = vsub.f32 %v5964, %v6166
    %v6170 = vsub.f32 %v5965, %v6166
    %v6171 = vmul.f32 %v6167, %v6167
    %v6172 = vmul.f32 %v6168, %v6168
    %v6173 = vmul.f32 %v6169, %v6169
    %v6174 = vmul.f32 %v6170, %v6170
    %v6175 = vsel %vm6148, %v6171, 0.0
    %v6176 = vsel %vm6148, %v6172, 0.0
    %v6177 = vadd.f32 %v6175, %v6176
    %v6178 = vsel %vm6148, %v6173, 0.0
    %v6179 = vadd.f32 %v6177, %v6178
    %v6180 = vsel %vm6148, %v6174, 0.0
    %v6181 = vadd.f32 %v6179, %v6180
    %6182 = vadd.xlane.f32.xlu0 %v6181
    %v6183 = vpop.xlane.xlu0 %6182
    %v6184 = vrot.slane %v6183, 4
    %v6185 = vadd.f32 %v6183, %v6184
    %v6186 = vrot.slane %v6185, 2
    %v6187 = vadd.f32 %v6185, %v6186
    %v6188 = vrot.slane %v6187, 1
    %v6189 = vadd.f32 %v6187, %v6188
    %s6190 = vtos %v6189
    %s6191 = smul.f32 %s6190, 0.001953125
    %s6192 = sadd.f32 %s6191, 1e-05
    %v6193 = vstv %s6192
    %v6194 = vrsqrt.pop %v6193
    %v6195 = vmul.f32 %v6194, %v6193
    %v6196 = vmul.f32 %v6195, %v6194
    %v6197 = vmul.f32 0.5, %v6196
    %v6198 = vsub.f32 1.5, %v6197
    %v6199 = vmul.f32 %v6194, %v6198
    %vm6200 = vweird.f32 %v6193
    %vm6201 = vweird.f32 %v6194
    %vm6202 = vmor %vm6200, %vm6201
    %v6203 = vsel %vm6202, %v6194, %v6199
    %s6204 = sld [smem:[#allocation6]]
    %v6205 = vstv %s6204
    %v6206 = vmul.f32 %v6203, %v6205
    %v6207 = vmul.f32 %v6167, %v6206
    %v6208 = vmul.f32 %v6168, %v6206
    %v6209 = vmul.f32 %v6169, %v6206
    %v6210 = vmul.f32 %v6170, %v6206
    %s6211 = sld [smem:[#allocation8]]
    %v6212 = vstv %s6211
    %v6213 = vadd.f32 %v6207, %v6212
    %v6214 = vadd.f32 %v6208, %v6212
    %v6215 = vadd.f32 %v6209, %v6212
    %v6216 = vadd.f32 %v6210, %v6212
    %v6217 = vmax.f32 %v6213, 0.0
    %v6218 = vmax.f32 %v6214, 0.0
    %v6219 = vmax.f32 %v6215, 0.0
    %v6220 = vmax.f32 %v6216, 0.0
    %6221 = vst.msk [vmem:[#allocation9] sm:$0xff] %vm6148, %v6217
    %6222 = vst.msk [vmem:[#allocation9 + $0x8] sm:$0xff] %vm6148, %v6218
    %6223 = vst.msk [vmem:[#allocation9 + $0x80] sm:$0xff] %vm6148, %v6219
    %6224 = vst.msk [vmem:[#allocation9 + $0x88] sm:$0xff] %vm6148, %v6220
    %v6225 = vsel %vm6148, %v5988, 0.0
    %v6226 = vsel %vm6148, %v5989, 0.0
    %v6227 = vadd.f32 %v6225, %v6226
    %v6228 = vsel %vm6148, %v5990, 0.0
    %v6229 = vadd.f32 %v6227, %v6228
    %v6230 = vsel %vm6148, %v5991, 0.0
    %v6231 = vadd.f32 %v6229, %v6230
    %6232 = vadd.xlane.f32.xlu0 %v6231
    %v6233 = vpop.xlane.xlu0 %6232
    %v6234 = vrot.slane %v6233, 4
    %v6235 = vadd.f32 %v6233, %v6234
    %v6236 = vrot.slane %v6235, 2
    %v6237 = vadd.f32 %v6235, %v6236
    %v6238 = vrot.slane %v6237, 1
    %v6239 = vadd.f32 %v6237, %v6238
    %s6240 = vtos %v6239
    %s6241 = smul.f32 %s6240, 0.001953125
    %v6242 = vstv %s6241
    %v6243 = vsub.f32 %v5988, %v6242
    %v6244 = vsub.f32 %v5989, %v6242
    %v6245 = vsub.f32 %v5990, %v6242
    %v6246 = vsub.f32 %v5991, %v6242
    %v6247 = vmul.f32 %v6243, %v6243
    %v6248 = vmul.f32 %v6244, %v6244
    %v6249 = vmul.f32 %v6245, %v6245
    %v6250 = vmul.f32 %v6246, %v6246
    %v6251 = vsel %vm6148, %v6247, 0.0
    %v6252 = vsel %vm6148, %v6248, 0.0
    %v6253 = vadd.f32 %v6251, %v6252
    %v6254 = vsel %vm6148, %v6249, 0.0
    %v6255 = vadd.f32 %v6253, %v6254
    %v6256 = vsel %vm6148, %v6250, 0.0
    %v6257 = vadd.f32 %v6255, %v6256
    %6258 = vadd.xlane.f32.xlu0 %v6257
    %v6259 = vpop.xlane.xlu0 %6258
    %v6260 = vrot.slane %v6259, 4
    %v6261 = vadd.f32 %v6259, %v6260
    %v6262 = vrot.slane %v6261, 2
    %v6263 = vadd.f32 %v6261, %v6262
    %v6264 = vrot.slane %v6263, 1
    %v6265 = vadd.f32 %v6263, %v6264
    %s6266 = vtos %v6265
    %s6267 = smul.f32 %s6266, 0.001953125
    %s6268 = sadd.f32 %s6267, 1e-05
    %v6269 = vstv %s6268
    %v6270 = vrsqrt.pop %v6269
    %v6271 = vmul.f32 %v6270, %v6269
    %v6272 = vmul.f32 %v6271, %v6270
    %v6273 = vmul.f32 0.5, %v6272
    %v6274 = vsub.f32 1.5, %v6273
    %v6275 = vmul.f32 %v6270, %v6274
    %vm6276 = vweird.f32 %v6269
    %vm6277 = vweird.f32 %v6270
    %vm6278 = vmor %vm6276, %vm6277
    %v6279 = vsel %vm6278, %v6270, %v6275
    %s6280 = sld [smem:[#allocation6 + $0x1]]
    %v6281 = vstv %s6280
    %v6282 = vmul.f32 %v6279, %v6281
    %v6283 = vmul.f32 %v6243, %v6282
    %v6284 = vmul.f32 %v6244, %v6282
    %v6285 = vmul.f32 %v6245, %v6282
    %v6286 = vmul.f32 %v6246, %v6282
    %s6287 = sld [smem:[#allocation8 + $0x1]]
    %v6288 = vstv %s6287
    %v6289 = vadd.f32 %v6283, %v6288
    %v6290 = vadd.f32 %v6284, %v6288
    %v6291 = vadd.f32 %v6285, %v6288
    %v6292 = vadd.f32 %v6286, %v6288
    %v6293 = vmax.f32 %v6289, 0.0
    %v6294 = vmax.f32 %v6290, 0.0
    %v6295 = vmax.f32 %v6291, 0.0
    %v6296 = vmax.f32 %v6292, 0.0
    %s6297 = scalar_lea.vmem [#allocation9], 16
    %6298 = vst.msk [vmem:[%s6297] sm:$0xff] %vm6148, %v6293
    %6299 = vst.msk [vmem:[%s6297 + $0x8] sm:$0xff] %vm6148, %v6294
    %6300 = vst.msk [vmem:[%s6297 + $0x80] sm:$0xff] %vm6148, %v6295
    %6301 = vst.msk [vmem:[%s6297 + $0x88] sm:$0xff] %vm6148, %v6296
    %v6302 = vsel %vm6148, %v6014, 0.0
    %v6303 = vsel %vm6148, %v6015, 0.0
    %v6304 = vadd.f32 %v6302, %v6303
    %v6305 = vsel %vm6148, %v6016, 0.0
    %v6306 = vadd.f32 %v6304, %v6305
    %v6307 = vsel %vm6148, %v6017, 0.0
    %v6308 = vadd.f32 %v6306, %v6307
    %6309 = vadd.xlane.f32.xlu0 %v6308
    %v6310 = vpop.xlane.xlu0 %6309
    %v6311 = vrot.slane %v6310, 4
    %v6312 = vadd.f32 %v6310, %v6311
    %v6313 = vrot.slane %v6312, 2
    %v6314 = vadd.f32 %v6312, %v6313
    %v6315 = vrot.slane %v6314, 1
    %v6316 = vadd.f32 %v6314, %v6315
    %s6317 = vtos %v6316
    %s6318 = smul.f32 %s6317, 0.001953125
    %v6319 = vstv %s6318
    %v6320 = vsub.f32 %v6014, %v6319
    %v6321 = vsub.f32 %v6015, %v6319
    %v6322 = vsub.f32 %v6016, %v6319
    %v6323 = vsub.f32 %v6017, %v6319
    %v6324 = vmul.f32 %v6320, %v6320
    %v6325 = vmul.f32 %v6321, %v6321
    %v6326 = vmul.f32 %v6322, %v6322
    %v6327 = vmul.f32 %v6323, %v6323
    %v6328 = vsel %vm6148, %v6324, 0.0
    %v6329 = vsel %vm6148, %v6325, 0.0
    %v6330 = vadd.f32 %v6328, %v6329
    %v6331 = vsel %vm6148, %v6326, 0.0
    %v6332 = vadd.f32 %v6330, %v6331
    %v6333 = vsel %vm6148, %v6327, 0.0
    %v6334 = vadd.f32 %v6332, %v6333
    %6335 = vadd.xlane.f32.xlu0 %v6334
    %v6336 = vpop.xlane.xlu0 %6335
    %v6337 = vrot.slane %v6336, 4
    %v6338 = vadd.f32 %v6336, %v6337
    %v6339 = vrot.slane %v6338, 2
    %v6340 = vadd.f32 %v6338, %v6339
    %v6341 = vrot.slane %v6340, 1
    %v6342 = vadd.f32 %v6340, %v6341
    %s6343 = vtos %v6342
    %s6344 = smul.f32 %s6343, 0.001953125
    %s6345 = sadd.f32 %s6344, 1e-05
    %v6346 = vstv %s6345
    %v6347 = vrsqrt.pop %v6346
    %v6348 = vmul.f32 %v6347, %v6346
    %v6349 = vmul.f32 %v6348, %v6347
    %v6350 = vmul.f32 0.5, %v6349
    %v6351 = vsub.f32 1.5, %v6350
    %v6352 = vmul.f32 %v6347, %v6351
    %vm6353 = vweird.f32 %v6346
    %vm6354 = vweird.f32 %v6347
    %vm6355 = vmor %vm6353, %vm6354
    %v6356 = vsel %vm6355, %v6347, %v6352
    %s6357 = sld [smem:[#allocation6 + $0x2]]
    %v6358 = vstv %s6357
    %v6359 = vmul.f32 %v6356, %v6358
    %v6360 = vmul.f32 %v6320, %v6359
    %v6361 = vmul.f32 %v6321, %v6359
    %v6362 = vmul.f32 %v6322, %v6359
    %v6363 = vmul.f32 %v6323, %v6359
    %s6364 = sld [smem:[#allocation8 + $0x2]]
    %v6365 = vstv %s6364
    %v6366 = vadd.f32 %v6360, %v6365
    %v6367 = vadd.f32 %v6361, %v6365
    %v6368 = vadd.f32 %v6362, %v6365
    %v6369 = vadd.f32 %v6363, %v6365
    %v6370 = vmax.f32 %v6366, 0.0
    %v6371 = vmax.f32 %v6367, 0.0
    %v6372 = vmax.f32 %v6368, 0.0
    %v6373 = vmax.f32 %v6369, 0.0
    %s6374 = scalar_lea.vmem [#allocation9], 32
    %6375 = vst.msk [vmem:[%s6374] sm:$0xff] %vm6148, %v6370
    %6376 = vst.msk [vmem:[%s6374 + $0x8] sm:$0xff] %vm6148, %v6371
    %6377 = vst.msk [vmem:[%s6374 + $0x80] sm:$0xff] %vm6148, %v6372
    %6378 = vst.msk [vmem:[%s6374 + $0x88] sm:$0xff] %vm6148, %v6373
    %v6379 = vsel %vm6148, %v6040, 0.0
    %v6380 = vsel %vm6148, %v6041, 0.0
    %v6381 = vadd.f32 %v6379, %v6380
    %v6382 = vsel %vm6148, %v6042, 0.0
    %v6383 = vadd.f32 %v6381, %v6382
    %v6384 = vsel %vm6148, %v6043, 0.0
    %v6385 = vadd.f32 %v6383, %v6384
    %6386 = vadd.xlane.f32.xlu0 %v6385
    %v6387 = vpop.xlane.xlu0 %6386
    %v6388 = vrot.slane %v6387, 4
    %v6389 = vadd.f32 %v6387, %v6388
    %v6390 = vrot.slane %v6389, 2
    %v6391 = vadd.f32 %v6389, %v6390
    %v6392 = vrot.slane %v6391, 1
    %v6393 = vadd.f32 %v6391, %v6392
    %s6394 = vtos %v6393
    %s6395 = smul.f32 %s6394, 0.001953125
    %v6396 = vstv %s6395
    %v6397 = vsub.f32 %v6040, %v6396
    %v6398 = vsub.f32 %v6041, %v6396
    %v6399 = vsub.f32 %v6042, %v6396
    %v6400 = vsub.f32 %v6043, %v6396
    %v6401 = vmul.f32 %v6397, %v6397
    %v6402 = vmul.f32 %v6398, %v6398
    %v6403 = vmul.f32 %v6399, %v6399
    %v6404 = vmul.f32 %v6400, %v6400
    %v6405 = vsel %vm6148, %v6401, 0.0
    %v6406 = vsel %vm6148, %v6402, 0.0
    %v6407 = vadd.f32 %v6405, %v6406
    %v6408 = vsel %vm6148, %v6403, 0.0
    %v6409 = vadd.f32 %v6407, %v6408
    %v6410 = vsel %vm6148, %v6404, 0.0
    %v6411 = vadd.f32 %v6409, %v6410
    %6412 = vadd.xlane.f32.xlu0 %v6411
    %v6413 = vpop.xlane.xlu0 %6412
    %v6414 = vrot.slane %v6413, 4
    %v6415 = vadd.f32 %v6413, %v6414
    %v6416 = vrot.slane %v6415, 2
    %v6417 = vadd.f32 %v6415, %v6416
    %v6418 = vrot.slane %v6417, 1
    %v6419 = vadd.f32 %v6417, %v6418
    %s6420 = vtos %v6419
    %s6421 = smul.f32 %s6420, 0.001953125
    %s6422 = sadd.f32 %s6421, 1e-05
    %v6423 = vstv %s6422
    %v6424 = vrsqrt.pop %v6423
    %v6425 = vmul.f32 %v6424, %v6423
    %v6426 = vmul.f32 %v6425, %v6424
    %v6427 = vmul.f32 0.5, %v6426
    %v6428 = vsub.f32 1.5, %v6427
    %v6429 = vmul.f32 %v6424, %v6428
    %vm6430 = vweird.f32 %v6423
    %vm6431 = vweird.f32 %v6424
    %vm6432 = vmor %vm6430, %vm6431
    %v6433 = vsel %vm6432, %v6424, %v6429
    %s6434 = sld [smem:[#allocation6 + $0x3]]
    %v6435 = vstv %s6434
    %v6436 = vmul.f32 %v6433, %v6435
    %v6437 = vmul.f32 %v6397, %v6436
    %v6438 = vmul.f32 %v6398, %v6436
    %v6439 = vmul.f32 %v6399, %v6436
    %v6440 = vmul.f32 %v6400, %v6436
    %s6441 = sld [smem:[#allocation8 + $0x3]]
    %v6442 = vstv %s6441
    %v6443 = vadd.f32 %v6437, %v6442
    %v6444 = vadd.f32 %v6438, %v6442
    %v6445 = vadd.f32 %v6439, %v6442
    %v6446 = vadd.f32 %v6440, %v6442
    %v6447 = vmax.f32 %v6443, 0.0
    %v6448 = vmax.f32 %v6444, 0.0
    %v6449 = vmax.f32 %v6445, 0.0
    %v6450 = vmax.f32 %v6446, 0.0
    %s6451 = scalar_lea.vmem [#allocation9], 48
    %6452 = vst.msk [vmem:[%s6451] sm:$0xff] %vm6148, %v6447
    %6453 = vst.msk [vmem:[%s6451 + $0x8] sm:$0xff] %vm6148, %v6448
    %6454 = vst.msk [vmem:[%s6451 + $0x80] sm:$0xff] %vm6148, %v6449
    %6455 = vst.msk [vmem:[%s6451 + $0x88] sm:$0xff] %vm6148, %v6450
    %v6456 = vsel %vm6148, %v6066, 0.0
    %v6457 = vsel %vm6148, %v6067, 0.0
    %v6458 = vadd.f32 %v6456, %v6457
    %v6459 = vsel %vm6148, %v6068, 0.0
    %v6460 = vadd.f32 %v6458, %v6459
    %v6461 = vsel %vm6148, %v6069, 0.0
    %v6462 = vadd.f32 %v6460, %v6461
    %6463 = vadd.xlane.f32.xlu0 %v6462
    %v6464 = vpop.xlane.xlu0 %6463
    %v6465 = vrot.slane %v6464, 4
    %v6466 = vadd.f32 %v6464, %v6465
    %v6467 = vrot.slane %v6466, 2
    %v6468 = vadd.f32 %v6466, %v6467
    %v6469 = vrot.slane %v6468, 1
    %v6470 = vadd.f32 %v6468, %v6469
    %s6471 = vtos %v6470
    %s6472 = smul.f32 %s6471, 0.001953125
    %v6473 = vstv %s6472
    %v6474 = vsub.f32 %v6066, %v6473
    %v6475 = vsub.f32 %v6067, %v6473
    %v6476 = vsub.f32 %v6068, %v6473
    %v6477 = vsub.f32 %v6069, %v6473
    %v6478 = vmul.f32 %v6474, %v6474
    %v6479 = vmul.f32 %v6475, %v6475
    %v6480 = vmul.f32 %v6476, %v6476
    %v6481 = vmul.f32 %v6477, %v6477
    %v6482 = vsel %vm6148, %v6478, 0.0
    %v6483 = vsel %vm6148, %v6479, 0.0
    %v6484 = vadd.f32 %v6482, %v6483
    %v6485 = vsel %vm6148, %v6480, 0.0
    %v6486 = vadd.f32 %v6484, %v6485
    %v6487 = vsel %vm6148, %v6481, 0.0
    %v6488 = vadd.f32 %v6486, %v6487
    %6489 = vadd.xlane.f32.xlu0 %v6488
    %v6490 = vpop.xlane.xlu0 %6489
    %v6491 = vrot.slane %v6490, 4
    %v6492 = vadd.f32 %v6490, %v6491
    %v6493 = vrot.slane %v6492, 2
    %v6494 = vadd.f32 %v6492, %v6493
    %v6495 = vrot.slane %v6494, 1
    %v6496 = vadd.f32 %v6494, %v6495
    %s6497 = vtos %v6496
    %s6498 = smul.f32 %s6497, 0.001953125
    %s6499 = sadd.f32 %s6498, 1e-05
    %v6500 = vstv %s6499
    %v6501 = vrsqrt.pop %v6500
    %v6502 = vmul.f32 %v6501, %v6500
    %v6503 = vmul.f32 %v6502, %v6501
    %v6504 = vmul.f32 0.5, %v6503
    %v6505 = vsub.f32 1.5, %v6504
    %v6506 = vmul.f32 %v6501, %v6505
    %vm6507 = vweird.f32 %v6500
    %vm6508 = vweird.f32 %v6501
    %vm6509 = vmor %vm6507, %vm6508
    %v6510 = vsel %vm6509, %v6501, %v6506
    %s6511 = sld [smem:[#allocation6 + $0x4]]
    %v6512 = vstv %s6511
    %v6513 = vmul.f32 %v6510, %v6512
    %v6514 = vmul.f32 %v6474, %v6513
    %v6515 = vmul.f32 %v6475, %v6513
    %v6516 = vmul.f32 %v6476, %v6513
    %v6517 = vmul.f32 %v6477, %v6513
    %s6518 = sld [smem:[#allocation8 + $0x4]]
    %v6519 = vstv %s6518
    %v6520 = vadd.f32 %v6514, %v6519
    %v6521 = vadd.f32 %v6515, %v6519
    %v6522 = vadd.f32 %v6516, %v6519
    %v6523 = vadd.f32 %v6517, %v6519
    %v6524 = vmax.f32 %v6520, 0.0
    %v6525 = vmax.f32 %v6521, 0.0
    %v6526 = vmax.f32 %v6522, 0.0
    %v6527 = vmax.f32 %v6523, 0.0
    %s6528 = scalar_lea.vmem [#allocation9], 64
    %6529 = vst.msk [vmem:[%s6528] sm:$0xff] %vm6148, %v6524
    %6530 = vst.msk [vmem:[%s6528 + $0x8] sm:$0xff] %vm6148, %v6525
    %6531 = vst.msk [vmem:[%s6528 + $0x80] sm:$0xff] %vm6148, %v6526
    %6532 = vst.msk [vmem:[%s6528 + $0x88] sm:$0xff] %vm6148, %v6527
    %v6533 = vsel %vm6148, %v6092, 0.0
    %v6534 = vsel %vm6148, %v6093, 0.0
    %v6535 = vadd.f32 %v6533, %v6534
    %v6536 = vsel %vm6148, %v6094, 0.0
    %v6537 = vadd.f32 %v6535, %v6536
    %v6538 = vsel %vm6148, %v6095, 0.0
    %v6539 = vadd.f32 %v6537, %v6538
    %6540 = vadd.xlane.f32.xlu0 %v6539
    %v6541 = vpop.xlane.xlu0 %6540
    %v6542 = vrot.slane %v6541, 4
    %v6543 = vadd.f32 %v6541, %v6542
    %v6544 = vrot.slane %v6543, 2
    %v6545 = vadd.f32 %v6543, %v6544
    %v6546 = vrot.slane %v6545, 1
    %v6547 = vadd.f32 %v6545, %v6546
    %s6548 = vtos %v6547
    %s6549 = smul.f32 %s6548, 0.001953125
    %v6550 = vstv %s6549
    %v6551 = vsub.f32 %v6092, %v6550
    %v6552 = vsub.f32 %v6093, %v6550
    %v6553 = vsub.f32 %v6094, %v6550
    %v6554 = vsub.f32 %v6095, %v6550
    %v6555 = vmul.f32 %v6551, %v6551
    %v6556 = vmul.f32 %v6552, %v6552
    %v6557 = vmul.f32 %v6553, %v6553
    %v6558 = vmul.f32 %v6554, %v6554
    %v6559 = vsel %vm6148, %v6555, 0.0
    %v6560 = vsel %vm6148, %v6556, 0.0
    %v6561 = vadd.f32 %v6559, %v6560
    %v6562 = vsel %vm6148, %v6557, 0.0
    %v6563 = vadd.f32 %v6561, %v6562
    %v6564 = vsel %vm6148, %v6558, 0.0
    %v6565 = vadd.f32 %v6563, %v6564
    %6566 = vadd.xlane.f32.xlu0 %v6565
    %v6567 = vpop.xlane.xlu0 %6566
    %v6568 = vrot.slane %v6567, 4
    %v6569 = vadd.f32 %v6567, %v6568
    %v6570 = vrot.slane %v6569, 2
    %v6571 = vadd.f32 %v6569, %v6570
    %v6572 = vrot.slane %v6571, 1
    %v6573 = vadd.f32 %v6571, %v6572
    %s6574 = vtos %v6573
    %s6575 = smul.f32 %s6574, 0.001953125
    %s6576 = sadd.f32 %s6575, 1e-05
    %v6577 = vstv %s6576
    %v6578 = vrsqrt.pop %v6577
    %v6579 = vmul.f32 %v6578, %v6577
    %v6580 = vmul.f32 %v6579, %v6578
    %v6581 = vmul.f32 0.5, %v6580
    %v6582 = vsub.f32 1.5, %v6581
    %v6583 = vmul.f32 %v6578, %v6582
    %vm6584 = vweird.f32 %v6577
    %vm6585 = vweird.f32 %v6578
    %vm6586 = vmor %vm6584, %vm6585
    %v6587 = vsel %vm6586, %v6578, %v6583
    %s6588 = sld [smem:[#allocation6 + $0x5]]
    %v6589 = vstv %s6588
    %v6590 = vmul.f32 %v6587, %v6589
    %v6591 = vmul.f32 %v6551, %v6590
    %v6592 = vmul.f32 %v6552, %v6590
    %v6593 = vmul.f32 %v6553, %v6590
    %v6594 = vmul.f32 %v6554, %v6590
    %s6595 = sld [smem:[#allocation8 + $0x5]]
    %v6596 = vstv %s6595
    %v6597 = vadd.f32 %v6591, %v6596
    %v6598 = vadd.f32 %v6592, %v6596
    %v6599 = vadd.f32 %v6593, %v6596
    %v6600 = vadd.f32 %v6594, %v6596
    %v6601 = vmax.f32 %v6597, 0.0
    %v6602 = vmax.f32 %v6598, 0.0
    %v6603 = vmax.f32 %v6599, 0.0
    %v6604 = vmax.f32 %v6600, 0.0
    %s6605 = scalar_lea.vmem [#allocation9], 80
    %6606 = vst.msk [vmem:[%s6605] sm:$0xff] %vm6148, %v6601
    %6607 = vst.msk [vmem:[%s6605 + $0x8] sm:$0xff] %vm6148, %v6602
    %6608 = vst.msk [vmem:[%s6605 + $0x80] sm:$0xff] %vm6148, %v6603
    %6609 = vst.msk [vmem:[%s6605 + $0x88] sm:$0xff] %vm6148, %v6604
    %v6610 = vsel %vm6148, %v6118, 0.0
    %v6611 = vsel %vm6148, %v6119, 0.0
    %v6612 = vadd.f32 %v6610, %v6611
    %v6613 = vsel %vm6148, %v6120, 0.0
    %v6614 = vadd.f32 %v6612, %v6613
    %v6615 = vsel %vm6148, %v6121, 0.0
    %v6616 = vadd.f32 %v6614, %v6615
    %6617 = vadd.xlane.f32.xlu0 %v6616
    %v6618 = vpop.xlane.xlu0 %6617
    %v6619 = vrot.slane %v6618, 4
    %v6620 = vadd.f32 %v6618, %v6619
    %v6621 = vrot.slane %v6620, 2
    %v6622 = vadd.f32 %v6620, %v6621
    %v6623 = vrot.slane %v6622, 1
    %v6624 = vadd.f32 %v6622, %v6623
    %s6625 = vtos %v6624
    %s6626 = smul.f32 %s6625, 0.001953125
    %v6627 = vstv %s6626
    %v6628 = vsub.f32 %v6118, %v6627
    %v6629 = vsub.f32 %v6119, %v6627
    %v6630 = vsub.f32 %v6120, %v6627
    %v6631 = vsub.f32 %v6121, %v6627
    %v6632 = vmul.f32 %v6628, %v6628
    %v6633 = vmul.f32 %v6629, %v6629
    %v6634 = vmul.f32 %v6630, %v6630
    %v6635 = vmul.f32 %v6631, %v6631
    %v6636 = vsel %vm6148, %v6632, 0.0
    %v6637 = vsel %vm6148, %v6633, 0.0
    %v6638 = vadd.f32 %v6636, %v6637
    %v6639 = vsel %vm6148, %v6634, 0.0
    %v6640 = vadd.f32 %v6638, %v6639
    %v6641 = vsel %vm6148, %v6635, 0.0
    %v6642 = vadd.f32 %v6640, %v6641
    %6643 = vadd.xlane.f32.xlu0 %v6642
    %v6644 = vpop.xlane.xlu0 %6643
    %v6645 = vrot.slane %v6644, 4
    %v6646 = vadd.f32 %v6644, %v6645
    %v6647 = vrot.slane %v6646, 2
    %v6648 = vadd.f32 %v6646, %v6647
    %v6649 = vrot.slane %v6648, 1
    %v6650 = vadd.f32 %v6648, %v6649
    %s6651 = vtos %v6650
    %s6652 = smul.f32 %s6651, 0.001953125
    %s6653 = sadd.f32 %s6652, 1e-05
    %v6654 = vstv %s6653
    %v6655 = vrsqrt.pop %v6654
    %v6656 = vmul.f32 %v6655, %v6654
    %v6657 = vmul.f32 %v6656, %v6655
    %v6658 = vmul.f32 0.5, %v6657
    %v6659 = vsub.f32 1.5, %v6658
    %v6660 = vmul.f32 %v6655, %v6659
    %vm6661 = vweird.f32 %v6654
    %vm6662 = vweird.f32 %v6655
    %vm6663 = vmor %vm6661, %vm6662
    %v6664 = vsel %vm6663, %v6655, %v6660
    %s6665 = sld [smem:[#allocation6 + $0x6]]
    %v6666 = vstv %s6665
    %v6667 = vmul.f32 %v6664, %v6666
    %v6668 = vmul.f32 %v6628, %v6667
    %v6669 = vmul.f32 %v6629, %v6667
    %v6670 = vmul.f32 %v6630, %v6667
    %v6671 = vmul.f32 %v6631, %v6667
    %s6672 = sld [smem:[#allocation8 + $0x6]]
    %v6673 = vstv %s6672
    %v6674 = vadd.f32 %v6668, %v6673
    %v6675 = vadd.f32 %v6669, %v6673
    %v6676 = vadd.f32 %v6670, %v6673
    %v6677 = vadd.f32 %v6671, %v6673
    %v6678 = vmax.f32 %v6674, 0.0
    %v6679 = vmax.f32 %v6675, 0.0
    %v6680 = vmax.f32 %v6676, 0.0
    %v6681 = vmax.f32 %v6677, 0.0
    %s6682 = scalar_lea.vmem [#allocation9], 96
    %6683 = vst.msk [vmem:[%s6682] sm:$0xff] %vm6148, %v6678
    %6684 = vst.msk [vmem:[%s6682 + $0x8] sm:$0xff] %vm6148, %v6679
    %6685 = vst.msk [vmem:[%s6682 + $0x80] sm:$0xff] %vm6148, %v6680
    %6686 = vst.msk [vmem:[%s6682 + $0x88] sm:$0xff] %vm6148, %v6681
    %v6687 = vsel %vm6148, %v6144, 0.0
    %v6688 = vsel %vm6148, %v6145, 0.0
    %v6689 = vadd.f32 %v6687, %v6688
    %v6690 = vsel %vm6148, %v6146, 0.0
    %v6691 = vadd.f32 %v6689, %v6690
    %v6692 = vsel %vm6148, %v6147, 0.0
    %v6693 = vadd.f32 %v6691, %v6692
    %6694 = vadd.xlane.f32.xlu0 %v6693
    %v6695 = vpop.xlane.xlu0 %6694
    %v6696 = vrot.slane %v6695, 4
    %v6697 = vadd.f32 %v6695, %v6696
    %v6698 = vrot.slane %v6697, 2
    %v6699 = vadd.f32 %v6697, %v6698
    %v6700 = vrot.slane %v6699, 1
    %v6701 = vadd.f32 %v6699, %v6700
    %s6702 = vtos %v6701
    %s6703 = smul.f32 %s6702, 0.001953125
    %v6704 = vstv %s6703
    %v6705 = vsub.f32 %v6144, %v6704
    %v6706 = vsub.f32 %v6145, %v6704
    %v6707 = vsub.f32 %v6146, %v6704
    %v6708 = vsub.f32 %v6147, %v6704
    %v6709 = vmul.f32 %v6705, %v6705
    %v6710 = vmul.f32 %v6706, %v6706
    %v6711 = vmul.f32 %v6707, %v6707
    %v6712 = vmul.f32 %v6708, %v6708
    %v6713 = vsel %vm6148, %v6709, 0.0
    %v6714 = vsel %vm6148, %v6710, 0.0
    %v6715 = vadd.f32 %v6713, %v6714
    %v6716 = vsel %vm6148, %v6711, 0.0
    %v6717 = vadd.f32 %v6715, %v6716
    %v6718 = vsel %vm6148, %v6712, 0.0
    %v6719 = vadd.f32 %v6717, %v6718
    %6720 = vadd.xlane.f32.xlu0 %v6719
    %v6721 = vpop.xlane.xlu0 %6720
    %v6722 = vrot.slane %v6721, 4
    %v6723 = vadd.f32 %v6721, %v6722
    %v6724 = vrot.slane %v6723, 2
    %v6725 = vadd.f32 %v6723, %v6724
    %v6726 = vrot.slane %v6725, 1
    %v6727 = vadd.f32 %v6725, %v6726
    %s6728 = vtos %v6727
    %s6729 = smul.f32 %s6728, 0.001953125
    %s6730 = sadd.f32 %s6729, 1e-05
    %v6731 = vstv %s6730
    %v6732 = vrsqrt.pop %v6731
    %v6733 = vmul.f32 %v6732, %v6731
    %v6734 = vmul.f32 %v6733, %v6732
    %v6735 = vmul.f32 0.5, %v6734
    %v6736 = vsub.f32 1.5, %v6735
    %v6737 = vmul.f32 %v6732, %v6736
    %vm6738 = vweird.f32 %v6731
    %vm6739 = vweird.f32 %v6732
    %vm6740 = vmor %vm6738, %vm6739
    %v6741 = vsel %vm6740, %v6732, %v6737
    %s6742 = sld [smem:[#allocation6 + $0x7]]
    %v6743 = vstv %s6742
    %v6744 = vmul.f32 %v6741, %v6743
    %v6745 = vmul.f32 %v6705, %v6744
    %v6746 = vmul.f32 %v6706, %v6744
    %v6747 = vmul.f32 %v6707, %v6744
    %v6748 = vmul.f32 %v6708, %v6744
    %s6749 = sld [smem:[#allocation8 + $0x7]]
    %v6750 = vstv %s6749
    %v6751 = vadd.f32 %v6745, %v6750
    %v6752 = vadd.f32 %v6746, %v6750
    %v6753 = vadd.f32 %v6747, %v6750
    %v6754 = vadd.f32 %v6748, %v6750
    %v6755 = vmax.f32 %v6751, 0.0
    %v6756 = vmax.f32 %v6752, 0.0
    %v6757 = vmax.f32 %v6753, 0.0
    %v6758 = vmax.f32 %v6754, 0.0
    %s6759 = scalar_lea.vmem [#allocation9], 112
    %6760 = vst.msk [vmem:[%s6759] sm:$0xff] %vm6148, %v6755
    %6761 = vst.msk [vmem:[%s6759 + $0x8] sm:$0xff] %vm6148, %v6756
    %6762 = vst.msk [vmem:[%s6759 + $0x80] sm:$0xff] %vm6148, %v6757
    %6763 = vst.msk [vmem:[%s6759 + $0x88] sm:$0xff] %vm6148, %v6758
    // Predicated region
    $region30: #{encoder_block_forward.1} parent=1 // pred_check
      _
    $region31: #{encoder_block_forward.1} parent=1 // pred_check_branch
      %6765 = sbr.rel (0) target = $region33
    $region32: #{encoder_block_forward.1} parent=1 // pred_region
      %6767 = vsyncadd [#allocation4], 0
      %s6768 = sshll.u32 [#allocation9], 4
      %s6769 = int_to_ptr.vmem [resolvable:$true] %s6768
      %s6770 = sshll.u32 %s4, 4
      %s6771 = int_to_ptr.hbm [resolvable:$true] %s6770
      %6776 = dma.vmem_to_hbm [thread:$0]  %s6769, 4096, %s6771, [#allocation4], 128, 128, 8
    $region33: #{encoder_block_forward.1} parent=1 // pred_fallthru
      _
    // Predicated region
    $region34: #{encoder_block_forward.1} parent=1 // pred_check
      _
    $region35: #{encoder_block_forward.1} parent=1 // pred_check_branch
      %6778 = sbr.rel (0) target = $region37
    $region36: #{encoder_block_forward.1} parent=1 // pred_region
      %6780 = dma.done [#allocation4], 4096
    $region37: #{encoder_block_forward.1} parent=1 // pred_fallthru
      _
    %6781 = vsyncpa [#allocation4], 1
    %6782 = vsyncpa [#allocation5], 1
    %6783 = vsyncpa [#allocation7], 1

</llo_original>
